<compile_context>
chip_gen: v7x
topology: tpu7x:2x2x1
jax: 0.10.0
libtpu: 0.0.40
codegen_flags: <defaults>
</compile_context>

<pallas_src>
import jax
import jax.numpy as jnp
from jax.experimental import pallas as pl
from jax.experimental.pallas import tpu as pltpu


def _pad_hw(x):
    """Zero-pad H and W by 1 on an (N, H, W, C) value, entirely in VMEM (no wrapper jnp.pad)."""
    n, h, w, c = x.shape
    zrow = jnp.zeros((n, 1, w, c), x.dtype)
    x = jnp.concatenate([zrow, x, zrow], axis=1)        # (n, h+2, w,   c)
    zcol = jnp.zeros((n, h + 2, 1, c), x.dtype)
    return jnp.concatenate([zcol, x, zcol], axis=2)     # (n, h+2, w+2, c)


def _im2col(xp, h, w):
    """(N, H+2, W+2, C) padded activations -> (N*H*W, 9*C) patch matrix for one matmul."""
    n, _, _, c = xp.shape
    cols = [xp[:, kh:kh + h, kw:kw + w, :] for kh in range(3) for kw in range(3)]
    patches = jnp.concatenate(cols, axis=-1)            # (n, h, w, 9*c), order (kh, kw, ci)
    return patches.reshape(n * h * w, 9 * c)


def _d_conv_layer_kernel(x_ref, w1_ref, s1_ref, b1_ref, w2_ref, s2_ref, b2_ref,
                         o_ref):
    """Fused (conv3x3 + Dropout2d[eval=identity] + BN affine + ReLU) x 2.

    x_ref:  (N, H, W, Cin)        unpadded NHWC input (whole batch, one grid step)
    w1_ref: (9*Cin, Cmid)         conv1 weights, HWIO flattened over (kh, kw, ci)
    s1_ref/b1_ref: (1, Cmid)      folded BN1 scale / bias (includes conv bias)
    w2_ref: (9*Cmid, Cout)        conv2 weights, flattened
    s2_ref/b2_ref: (1, Cout)      folded BN2 scale / bias
    o_ref:  (N*H, W*Cout)         lane-dense output slab
    """
    N, H, W, Cin = x_ref.shape
    Cmid = w1_ref.shape[1]
    Cout = w2_ref.shape[1]

    # ---- layer 1: conv3x3 -> (Dropout2d: identity in eval) -> BN affine -> ReLU
    p1 = _im2col(_pad_hw(x_ref[...]), H, W)                       # (N*H*W, 9*Cin)
    y1 = jnp.dot(p1, w1_ref[...], preferred_element_type=jnp.float32)
    y1 = jnp.maximum(y1 * s1_ref[...] + b1_ref[...], 0.0)         # (N*H*W, Cmid)

    # ---- layer 2: intermediate never leaves VMEM
    p2 = _im2col(_pad_hw(y1.reshape(N, H, W, Cmid)), H, W)        # (N*H*W, 9*Cmid)
    y2 = jnp.dot(p2, w2_ref[...], preferred_element_type=jnp.float32)
    y2 = jnp.maximum(y2 * s2_ref[...] + b2_ref[...], 0.0)         # (N*H*W, Cout)

    # ---- lane-dense store: pack (j, co) into the lane axis -> (N*H, W*Cout)
    y2 = y2.reshape(N * H, W, Cout)
    packed = jnp.concatenate([y2[:, j, :] for j in range(W)], axis=-1)
    o_ref[...] = packed.astype(o_ref.dtype)


def d_conv_layer_pallas(x_nhwc, w1_hwio, s1, b1, w2_hwio, s2, b2):
    """x_nhwc: (N, H, W, Cin) float32 -> (N, H, W, Cout) float32 (both convs fused)."""
    N, H, W, Cin = x_nhwc.shape
    Cmid = w1_hwio.shape[-1]
    Cout = w2_hwio.shape[-1]

    w1_2d = w1_hwio.reshape(9 * Cin, Cmid).astype(jnp.float32)
    w2_2d = w2_hwio.reshape(9 * Cmid, Cout).astype(jnp.float32)
    s1_2d = s1.reshape(1, Cmid).astype(jnp.float32)
    b1_2d = b1.reshape(1, Cmid).astype(jnp.float32)
    s2_2d = s2.reshape(1, Cout).astype(jnp.float32)
    b2_2d = b2.reshape(1, Cout).astype(jnp.float32)

    out = pl.pallas_call(
        _d_conv_layer_kernel,
        out_shape=jax.ShapeDtypeStruct((N * H, W * Cout), jnp.float32),
        grid=(1,),  # whole (tiny) batch in one step; batch is folded into matmul M
        in_specs=[
            pl.BlockSpec((N, H, W, Cin), lambda i: (0, 0, 0, 0)),
            pl.BlockSpec((9 * Cin, Cmid), lambda i: (0, 0)),
            pl.BlockSpec((1, Cmid), lambda i: (0, 0)),
            pl.BlockSpec((1, Cmid), lambda i: (0, 0)),
            pl.BlockSpec((9 * Cmid, Cout), lambda i: (0, 0)),
            pl.BlockSpec((1, Cout), lambda i: (0, 0)),
            pl.BlockSpec((1, Cout), lambda i: (0, 0)),
        ],
        out_specs=pl.BlockSpec((N * H, W * Cout), lambda i: (0, 0)),
        compiler_params=pltpu.CompilerParams(
            dimension_semantics=("arbitrary",)),
    )(x_nhwc.astype(jnp.float32), w1_2d, s1_2d, b1_2d, w2_2d, s2_2d, b2_2d)

    # (N*H, W*Cout) lane-dense slab -> (N, H, W, Cout); free row-major reshape in XLA.
    return out.reshape(N, H, W, Cout)


def init_d_conv_layer_params(key, in_ch, out_ch):
    """Deterministic synthetic parameters matching the PyTorch module shapes."""
    k1, k2, k3, k4 = jax.random.split(key, 4)
    eps = 1e-5

    def conv_params(kw_key, kb_key, cin, cout):
        fan_in = cin * 3 * 3
        bound = 1.0 / jnp.sqrt(fan_in)
        # PyTorch layout (cout, cin, 3, 3) -> HWIO (3, 3, cin, cout)
        w_oihw = jax.random.uniform(kw_key, (cout, cin, 3, 3),
                                    jnp.float32, -bound, bound)
        b = jax.random.uniform(kb_key, (cout,), jnp.float32, -bound, bound)
        w_hwio = jnp.transpose(w_oihw, (2, 3, 1, 0))
        return w_hwio, b

    w1, b1 = conv_params(k1, k2, in_ch, in_ch)
    w2, b2 = conv_params(k3, k4, in_ch, out_ch)

    def bn_fold(conv_bias, c):
        gamma = jnp.ones((c,), jnp.float32)
        beta = jnp.zeros((c,), jnp.float32)
        mean = jnp.zeros((c,), jnp.float32)
        var = jnp.ones((c,), jnp.float32)
        scale = gamma / jnp.sqrt(var + eps)
        bias = (conv_bias - mean) * scale + beta
        return scale, bias

    s1, fb1 = bn_fold(b1, in_ch)
    s2, fb2 = bn_fold(b2, out_ch)
    return dict(w1=w1, s1=s1, b1=fb1, w2=w2, s2=s2, b2=fb2)


@jax.jit
def d_conv_layer_forward(x_nchw, params):
    """Forward pass of D_ConvLayer. Input NCHW (PyTorch convention), output NCHW."""
    x = jnp.transpose(x_nchw, (0, 2, 3, 1)).astype(jnp.float32)   # -> NHWC
    y = d_conv_layer_pallas(x, params["w1"], params["s1"], params["b1"],
                            params["w2"], params["s2"], params["b2"])
    return jnp.transpose(y, (0, 3, 1, 2))                          # -> NCHW


def _reference_forward(x_nchw, params):
    """Pure-JAX reference using lax.conv_general_dilated (NHWC/HWIO)."""
    x = jnp.transpose(x_nchw, (0, 2, 3, 1)).astype(jnp.float32)

    def step(x, w, s, b):
        y = jax.lax.conv_general_dilated(
            x, w, window_strides=(1, 1), padding="SAME",
            dimension_numbers=("NHWC", "HWIO", "NHWC"))
        y = y * s.reshape(1, 1, 1, -1) + b.reshape(1, 1, 1, -1)
        return jnp.maximum(y, 0.0)

    y = step(x, params["w1"], params["s1"], params["b1"])
    y = step(y, params["w2"], params["s2"], params["b2"])
    return jnp.transpose(y, (0, 3, 1, 2))


if __name__ == "__main__":
    key = jax.random.PRNGKey(0)
    k_x, k_p = jax.random.split(key)

    in_ch, out_ch = 4, 8
    N, H, W = 2, 16, 16

    x = jax.random.normal(k_x, (N, in_ch, H, W), jnp.float32)   # NCHW like PyTorch
    params = init_d_conv_layer_params(k_p, in_ch, out_ch)

    out = d_conv_layer_forward(x, params)
    out = jax.block_until_ready(out)

    ref = _reference_forward(x, params)
    assert out.shape == (N, out_ch, H, W), out.shape
    assert jnp.allclose(out, ref, atol=1e-4, rtol=1e-4), float(jnp.max(jnp.abs(out - ref)))

    print("KERNEL_OK")
</pallas_src>

<mosaic_0001>
module attributes {stable_mosaic.version = 11 : i64} {
  func.func @_d_conv_layer_kernel(%arg0: i32, %arg1: memref<2x16x16x4xf32, #tpu.memory_space<vmem>>, %arg2: memref<36x4xf32, #tpu.memory_space<vmem>>, %arg3: memref<1x4xf32, #tpu.memory_space<vmem>>, %arg4: memref<1x4xf32, #tpu.memory_space<vmem>>, %arg5: memref<36x8xf32, #tpu.memory_space<vmem>>, %arg6: memref<1x8xf32, #tpu.memory_space<vmem>>, %arg7: memref<1x8xf32, #tpu.memory_space<vmem>>, %arg8: memref<32x128xf32, #tpu.memory_space<vmem>>) attributes {dimension_semantics = [#tpu.dimension_semantics<arbitrary>], iteration_bounds = array<i64: 1>, scalar_prefetch = 0 : i64, scratch_operands = 0 : i64, tpu.core_type = #tpu.core_type<tc>, window_params = [{pipeline_mode = #tpu.pipeline_mode<synchronous>, transform_indices = @transform_0, window_bounds = array<i64: 2, 16, 16, 4>}, {pipeline_mode = #tpu.pipeline_mode<synchronous>, transform_indices = @transform_1, window_bounds = array<i64: 36, 4>}, {pipeline_mode = #tpu.pipeline_mode<synchronous>, transform_indices = @transform_2, window_bounds = array<i64: 1, 4>}, {pipeline_mode = #tpu.pipeline_mode<synchronous>, transform_indices = @transform_3, window_bounds = array<i64: 1, 4>}, {pipeline_mode = #tpu.pipeline_mode<synchronous>, transform_indices = @transform_4, window_bounds = array<i64: 36, 8>}, {pipeline_mode = #tpu.pipeline_mode<synchronous>, transform_indices = @transform_5, window_bounds = array<i64: 1, 8>}, {pipeline_mode = #tpu.pipeline_mode<synchronous>, transform_indices = @transform_6, window_bounds = array<i64: 1, 8>}, {pipeline_mode = #tpu.pipeline_mode<synchronous>, transform_indices = @transform_7, window_bounds = array<i64: 32, 128>}]} {
    %c0 = arith.constant 0 : index
    %c0_0 = arith.constant 0 : index
    %c0_1 = arith.constant 0 : index
    %c0_2 = arith.constant 0 : index
    %0 = vector.load %arg1[%c0, %c0_0, %c0_1, %c0_2] : memref<2x16x16x4xf32, #tpu.memory_space<vmem>>, vector<2x16x16x4xf32>
    %cst = arith.constant 0.000000e+00 : f32
    %1 = vector.broadcast %cst : f32 to vector<2x1x16x4xf32>
    %2 = tpu.concatenate %1, %0, %1 in 1 : vector<2x1x16x4xf32>, vector<2x16x16x4xf32>, vector<2x1x16x4xf32> -> vector<2x18x16x4xf32>
    %cst_3 = arith.constant 0.000000e+00 : f32
    %3 = vector.broadcast %cst_3 : f32 to vector<2x18x1x4xf32>
    %4 = tpu.concatenate %3, %2, %3 in 2 : vector<2x18x1x4xf32>, vector<2x18x16x4xf32>, vector<2x18x1x4xf32> -> vector<2x18x18x4xf32>
    %5 = vector.extract_strided_slice %4 {offsets = [0, 0, 0, 0], sizes = [2, 16, 16, 4], strides = [1, 1, 1, 1]} : vector<2x18x18x4xf32> to vector<2x16x16x4xf32>
    %6 = vector.extract_strided_slice %4 {offsets = [0, 0, 1, 0], sizes = [2, 16, 16, 4], strides = [1, 1, 1, 1]} : vector<2x18x18x4xf32> to vector<2x16x16x4xf32>
    %7 = vector.extract_strided_slice %4 {offsets = [0, 0, 2, 0], sizes = [2, 16, 16, 4], strides = [1, 1, 1, 1]} : vector<2x18x18x4xf32> to vector<2x16x16x4xf32>
    %8 = vector.extract_strided_slice %4 {offsets = [0, 1, 0, 0], sizes = [2, 16, 16, 4], strides = [1, 1, 1, 1]} : vector<2x18x18x4xf32> to vector<2x16x16x4xf32>
    %9 = vector.extract_strided_slice %4 {offsets = [0, 1, 1, 0], sizes = [2, 16, 16, 4], strides = [1, 1, 1, 1]} : vector<2x18x18x4xf32> to vector<2x16x16x4xf32>
    %10 = vector.extract_strided_slice %4 {offsets = [0, 1, 2, 0], sizes = [2, 16, 16, 4], strides = [1, 1, 1, 1]} : vector<2x18x18x4xf32> to vector<2x16x16x4xf32>
    %11 = vector.extract_strided_slice %4 {offsets = [0, 2, 0, 0], sizes = [2, 16, 16, 4], strides = [1, 1, 1, 1]} : vector<2x18x18x4xf32> to vector<2x16x16x4xf32>
    %12 = vector.extract_strided_slice %4 {offsets = [0, 2, 1, 0], sizes = [2, 16, 16, 4], strides = [1, 1, 1, 1]} : vector<2x18x18x4xf32> to vector<2x16x16x4xf32>
    %13 = vector.extract_strided_slice %4 {offsets = [0, 2, 2, 0], sizes = [2, 16, 16, 4], strides = [1, 1, 1, 1]} : vector<2x18x18x4xf32> to vector<2x16x16x4xf32>
    %14 = tpu.concatenate %5, %6, %7, %8, %9, %10, %11, %12, %13 in 3 : vector<2x16x16x4xf32>, vector<2x16x16x4xf32>, vector<2x16x16x4xf32>, vector<2x16x16x4xf32>, vector<2x16x16x4xf32>, vector<2x16x16x4xf32>, vector<2x16x16x4xf32>, vector<2x16x16x4xf32>, vector<2x16x16x4xf32> -> vector<2x16x16x36xf32>
    %15 = vector.shape_cast %14 : vector<2x16x16x36xf32> to vector<512x36xf32>
    %c0_4 = arith.constant 0 : index
    %c0_5 = arith.constant 0 : index
    %16 = vector.load %arg2[%c0_4, %c0_5] : memref<36x4xf32, #tpu.memory_space<vmem>>, vector<36x4xf32>
    %cst_6 = arith.constant dense<0.000000e+00> : vector<512x4xf32>
    %17 = tpu.matmul %15, %16, %cst_6 {dimension_numbers = #tpu.dot_dimension_numbers<[1], [0], [0], [1], [0, 0, 1, 1], [], []>} : vector<512x36xf32>, vector<36x4xf32>, vector<512x4xf32> -> vector<512x4xf32>
    %c0_7 = arith.constant 0 : index
    %c0_8 = arith.constant 0 : index
    %18 = vector.load %arg3[%c0_7, %c0_8] : memref<1x4xf32, #tpu.memory_space<vmem>>, vector<1x4xf32>
    %19 = vector.broadcast %18 : vector<1x4xf32> to vector<512x4xf32>
    %20 = arith.mulf %17, %19 : vector<512x4xf32>
    %c0_9 = arith.constant 0 : index
    %c0_10 = arith.constant 0 : index
    %21 = vector.load %arg4[%c0_9, %c0_10] : memref<1x4xf32, #tpu.memory_space<vmem>>, vector<1x4xf32>
    %22 = vector.broadcast %21 : vector<1x4xf32> to vector<512x4xf32>
    %23 = arith.addf %20, %22 : vector<512x4xf32>
    %cst_11 = arith.constant 0.000000e+00 : f32
    %24 = vector.broadcast %cst_11 : f32 to vector<512x4xf32>
    %25 = arith.maximumf %23, %24 : vector<512x4xf32>
    %26 = vector.shape_cast %25 : vector<512x4xf32> to vector<2x16x16x4xf32>
    %cst_12 = arith.constant 0.000000e+00 : f32
    %27 = vector.broadcast %cst_12 : f32 to vector<2x1x16x4xf32>
    %28 = tpu.concatenate %27, %26, %27 in 1 : vector<2x1x16x4xf32>, vector<2x16x16x4xf32>, vector<2x1x16x4xf32> -> vector<2x18x16x4xf32>
    %cst_13 = arith.constant 0.000000e+00 : f32
    %29 = vector.broadcast %cst_13 : f32 to vector<2x18x1x4xf32>
    %30 = tpu.concatenate %29, %28, %29 in 2 : vector<2x18x1x4xf32>, vector<2x18x16x4xf32>, vector<2x18x1x4xf32> -> vector<2x18x18x4xf32>
    %31 = vector.extract_strided_slice %30 {offsets = [0, 0, 0, 0], sizes = [2, 16, 16, 4], strides = [1, 1, 1, 1]} : vector<2x18x18x4xf32> to vector<2x16x16x4xf32>
    %32 = vector.extract_strided_slice %30 {offsets = [0, 0, 1, 0], sizes = [2, 16, 16, 4], strides = [1, 1, 1, 1]} : vector<2x18x18x4xf32> to vector<2x16x16x4xf32>
    %33 = vector.extract_strided_slice %30 {offsets = [0, 0, 2, 0], sizes = [2, 16, 16, 4], strides = [1, 1, 1, 1]} : vector<2x18x18x4xf32> to vector<2x16x16x4xf32>
    %34 = vector.extract_strided_slice %30 {offsets = [0, 1, 0, 0], sizes = [2, 16, 16, 4], strides = [1, 1, 1, 1]} : vector<2x18x18x4xf32> to vector<2x16x16x4xf32>
    %35 = vector.extract_strided_slice %30 {offsets = [0, 1, 1, 0], sizes = [2, 16, 16, 4], strides = [1, 1, 1, 1]} : vector<2x18x18x4xf32> to vector<2x16x16x4xf32>
    %36 = vector.extract_strided_slice %30 {offsets = [0, 1, 2, 0], sizes = [2, 16, 16, 4], strides = [1, 1, 1, 1]} : vector<2x18x18x4xf32> to vector<2x16x16x4xf32>
    %37 = vector.extract_strided_slice %30 {offsets = [0, 2, 0, 0], sizes = [2, 16, 16, 4], strides = [1, 1, 1, 1]} : vector<2x18x18x4xf32> to vector<2x16x16x4xf32>
    %38 = vector.extract_strided_slice %30 {offsets = [0, 2, 1, 0], sizes = [2, 16, 16, 4], strides = [1, 1, 1, 1]} : vector<2x18x18x4xf32> to vector<2x16x16x4xf32>
    %39 = vector.extract_strided_slice %30 {offsets = [0, 2, 2, 0], sizes = [2, 16, 16, 4], strides = [1, 1, 1, 1]} : vector<2x18x18x4xf32> to vector<2x16x16x4xf32>
    %40 = tpu.concatenate %31, %32, %33, %34, %35, %36, %37, %38, %39 in 3 : vector<2x16x16x4xf32>, vector<2x16x16x4xf32>, vector<2x16x16x4xf32>, vector<2x16x16x4xf32>, vector<2x16x16x4xf32>, vector<2x16x16x4xf32>, vector<2x16x16x4xf32>, vector<2x16x16x4xf32>, vector<2x16x16x4xf32> -> vector<2x16x16x36xf32>
    %41 = vector.shape_cast %40 : vector<2x16x16x36xf32> to vector<512x36xf32>
    %c0_14 = arith.constant 0 : index
    %c0_15 = arith.constant 0 : index
    %42 = vector.load %arg5[%c0_14, %c0_15] : memref<36x8xf32, #tpu.memory_space<vmem>>, vector<36x8xf32>
    %cst_16 = arith.constant dense<0.000000e+00> : vector<512x8xf32>
    %43 = tpu.matmul %41, %42, %cst_16 {dimension_numbers = #tpu.dot_dimension_numbers<[1], [0], [0], [1], [0, 0, 1, 1], [], []>} : vector<512x36xf32>, vector<36x8xf32>, vector<512x8xf32> -> vector<512x8xf32>
    %c0_17 = arith.constant 0 : index
    %c0_18 = arith.constant 0 : index
    %44 = vector.load %arg6[%c0_17, %c0_18] : memref<1x8xf32, #tpu.memory_space<vmem>>, vector<1x8xf32>
    %45 = vector.broadcast %44 : vector<1x8xf32> to vector<512x8xf32>
    %46 = arith.mulf %43, %45 : vector<512x8xf32>
    %c0_19 = arith.constant 0 : index
    %c0_20 = arith.constant 0 : index
    %47 = vector.load %arg7[%c0_19, %c0_20] : memref<1x8xf32, #tpu.memory_space<vmem>>, vector<1x8xf32>
    %48 = vector.broadcast %47 : vector<1x8xf32> to vector<512x8xf32>
    %49 = arith.addf %46, %48 : vector<512x8xf32>
    %cst_21 = arith.constant 0.000000e+00 : f32
    %50 = vector.broadcast %cst_21 : f32 to vector<512x8xf32>
    %51 = arith.maximumf %49, %50 : vector<512x8xf32>
    %52 = vector.shape_cast %51 : vector<512x8xf32> to vector<32x16x8xf32>
    %53 = vector.extract_strided_slice %52 {offsets = [0, 0, 0], sizes = [32, 1, 8], strides = [1, 1, 1]} : vector<32x16x8xf32> to vector<32x1x8xf32>
    %54 = vector.shape_cast %53 : vector<32x1x8xf32> to vector<32x8xf32>
    %55 = vector.extract_strided_slice %52 {offsets = [0, 1, 0], sizes = [32, 1, 8], strides = [1, 1, 1]} : vector<32x16x8xf32> to vector<32x1x8xf32>
    %56 = vector.shape_cast %55 : vector<32x1x8xf32> to vector<32x8xf32>
    %57 = vector.extract_strided_slice %52 {offsets = [0, 2, 0], sizes = [32, 1, 8], strides = [1, 1, 1]} : vector<32x16x8xf32> to vector<32x1x8xf32>
    %58 = vector.shape_cast %57 : vector<32x1x8xf32> to vector<32x8xf32>
    %59 = vector.extract_strided_slice %52 {offsets = [0, 3, 0], sizes = [32, 1, 8], strides = [1, 1, 1]} : vector<32x16x8xf32> to vector<32x1x8xf32>
    %60 = vector.shape_cast %59 : vector<32x1x8xf32> to vector<32x8xf32>
    %61 = vector.extract_strided_slice %52 {offsets = [0, 4, 0], sizes = [32, 1, 8], strides = [1, 1, 1]} : vector<32x16x8xf32> to vector<32x1x8xf32>
    %62 = vector.shape_cast %61 : vector<32x1x8xf32> to vector<32x8xf32>
    %63 = vector.extract_strided_slice %52 {offsets = [0, 5, 0], sizes = [32, 1, 8], strides = [1, 1, 1]} : vector<32x16x8xf32> to vector<32x1x8xf32>
    %64 = vector.shape_cast %63 : vector<32x1x8xf32> to vector<32x8xf32>
    %65 = vector.extract_strided_slice %52 {offsets = [0, 6, 0], sizes = [32, 1, 8], strides = [1, 1, 1]} : vector<32x16x8xf32> to vector<32x1x8xf32>
    %66 = vector.shape_cast %65 : vector<32x1x8xf32> to vector<32x8xf32>
    %67 = vector.extract_strided_slice %52 {offsets = [0, 7, 0], sizes = [32, 1, 8], strides = [1, 1, 1]} : vector<32x16x8xf32> to vector<32x1x8xf32>
    %68 = vector.shape_cast %67 : vector<32x1x8xf32> to vector<32x8xf32>
    %69 = vector.extract_strided_slice %52 {offsets = [0, 8, 0], sizes = [32, 1, 8], strides = [1, 1, 1]} : vector<32x16x8xf32> to vector<32x1x8xf32>
    %70 = vector.shape_cast %69 : vector<32x1x8xf32> to vector<32x8xf32>
    %71 = vector.extract_strided_slice %52 {offsets = [0, 9, 0], sizes = [32, 1, 8], strides = [1, 1, 1]} : vector<32x16x8xf32> to vector<32x1x8xf32>
    %72 = vector.shape_cast %71 : vector<32x1x8xf32> to vector<32x8xf32>
    %73 = vector.extract_strided_slice %52 {offsets = [0, 10, 0], sizes = [32, 1, 8], strides = [1, 1, 1]} : vector<32x16x8xf32> to vector<32x1x8xf32>
    %74 = vector.shape_cast %73 : vector<32x1x8xf32> to vector<32x8xf32>
    %75 = vector.extract_strided_slice %52 {offsets = [0, 11, 0], sizes = [32, 1, 8], strides = [1, 1, 1]} : vector<32x16x8xf32> to vector<32x1x8xf32>
    %76 = vector.shape_cast %75 : vector<32x1x8xf32> to vector<32x8xf32>
    %77 = vector.extract_strided_slice %52 {offsets = [0, 12, 0], sizes = [32, 1, 8], strides = [1, 1, 1]} : vector<32x16x8xf32> to vector<32x1x8xf32>
    %78 = vector.shape_cast %77 : vector<32x1x8xf32> to vector<32x8xf32>
    %79 = vector.extract_strided_slice %52 {offsets = [0, 13, 0], sizes = [32, 1, 8], strides = [1, 1, 1]} : vector<32x16x8xf32> to vector<32x1x8xf32>
    %80 = vector.shape_cast %79 : vector<32x1x8xf32> to vector<32x8xf32>
    %81 = vector.extract_strided_slice %52 {offsets = [0, 14, 0], sizes = [32, 1, 8], strides = [1, 1, 1]} : vector<32x16x8xf32> to vector<32x1x8xf32>
    %82 = vector.shape_cast %81 : vector<32x1x8xf32> to vector<32x8xf32>
    %83 = vector.extract_strided_slice %52 {offsets = [0, 15, 0], sizes = [32, 1, 8], strides = [1, 1, 1]} : vector<32x16x8xf32> to vector<32x1x8xf32>
    %84 = vector.shape_cast %83 : vector<32x1x8xf32> to vector<32x8xf32>
    %85 = tpu.concatenate %54, %56, %58, %60, %62, %64, %66, %68, %70, %72, %74, %76, %78, %80, %82, %84 in 1 : vector<32x8xf32>, vector<32x8xf32>, vector<32x8xf32>, vector<32x8xf32>, vector<32x8xf32>, vector<32x8xf32>, vector<32x8xf32>, vector<32x8xf32>, vector<32x8xf32>, vector<32x8xf32>, vector<32x8xf32>, vector<32x8xf32>, vector<32x8xf32>, vector<32x8xf32>, vector<32x8xf32>, vector<32x8xf32> -> vector<32x128xf32>
    %c0_22 = arith.constant 0 : index
    %c0_23 = arith.constant 0 : index
    %86 = vector.load %arg8[%c0_22, %c0_23] : memref<32x128xf32, #tpu.memory_space<vmem>>, vector<32x128xf32>
    tpu.vector_store %arg8[%c0_22, %c0_23], %85 {strides = array<i32>} : memref<32x128xf32, #tpu.memory_space<vmem>>, vector<32x128xf32>,
    return
  }
  func.func @transform_0(%arg0: i32) -> (i32, i32, i32, i32) {
    %c0_i32 = arith.constant 0 : i32
    %c0_i32_0 = arith.constant 0 : i32
    %c0_i32_1 = arith.constant 0 : i32
    %c0_i32_2 = arith.constant 0 : i32
    %c0_i32_3 = arith.constant 0 : i32
    return %c0_i32, %c0_i32_0, %c0_i32_1, %c0_i32_2 : i32, i32, i32, i32
  }
  func.func @transform_1(%arg0: i32) -> (i32, i32) {
    %c0_i32 = arith.constant 0 : i32
    %c0_i32_0 = arith.constant 0 : i32
    %c0_i32_1 = arith.constant 0 : i32
    return %c0_i32, %c0_i32_0 : i32, i32
  }
  func.func @transform_2(%arg0: i32) -> (i32, i32) {
    %c0_i32 = arith.constant 0 : i32
    %c0_i32_0 = arith.constant 0 : i32
    %c0_i32_1 = arith.constant 0 : i32
    return %c0_i32, %c0_i32_0 : i32, i32
  }
  func.func @transform_3(%arg0: i32) -> (i32, i32) {
    %c0_i32 = arith.constant 0 : i32
    %c0_i32_0 = arith.constant 0 : i32
    %c0_i32_1 = arith.constant 0 : i32
    return %c0_i32, %c0_i32_0 : i32, i32
  }
  func.func @transform_4(%arg0: i32) -> (i32, i32) {
    %c0_i32 = arith.constant 0 : i32
    %c0_i32_0 = arith.constant 0 : i32
    %c0_i32_1 = arith.constant 0 : i32
    return %c0_i32, %c0_i32_0 : i32, i32
  }
  func.func @transform_5(%arg0: i32) -> (i32, i32) {
    %c0_i32 = arith.constant 0 : i32
    %c0_i32_0 = arith.constant 0 : i32
    %c0_i32_1 = arith.constant 0 : i32
    return %c0_i32, %c0_i32_0 : i32, i32
  }
  func.func @transform_6(%arg0: i32) -> (i32, i32) {
    %c0_i32 = arith.constant 0 : i32
    %c0_i32_0 = arith.constant 0 : i32
    %c0_i32_1 = arith.constant 0 : i32
    return %c0_i32, %c0_i32_0 : i32, i32
  }
  func.func @transform_7(%arg0: i32) -> (i32, i32) {
    %c0_i32 = arith.constant 0 : i32
    %c0_i32_0 = arith.constant 0 : i32
    %c0_i32_1 = arith.constant 0 : i32
    return %c0_i32, %c0_i32_0 : i32, i32
  }
}

</mosaic_0001>

<llo_original>
// kernel: d_conv_layer_forward.1
$region0: #{d_conv_layer_forward.1}
  #allocation0 [shape = 'u32[]', space=smem, size = 0x4, offset = 0x4, fixed_abs, tag = 'smem constant byte address 0x4 - core index']
  #allocation1 [shape = 'u32[144,128]{1,0:T(1,128)}', space=vmem, size = 0x12000, scoped, tag = 'internal scratch']
  %s0 = inlined_call_operand.vmem [shape: f32[2,16,16,4], index: 0, kind: input, shape index: {}]
  %s1 = inlined_call_operand.vmem [shape: f32[36,4], index: 1, kind: input, shape index: {}]
  %s2 = inlined_call_operand.vmem [shape: f32[1,4], index: 2, kind: input, shape index: {}]
  %s3 = inlined_call_operand.vmem [shape: f32[1,4], index: 3, kind: input, shape index: {}]
  %s4 = inlined_call_operand.vmem [shape: f32[36,8], index: 4, kind: input, shape index: {}]
  %s5 = inlined_call_operand.vmem [shape: f32[1,8], index: 5, kind: input, shape index: {}]
  %s6 = inlined_call_operand.vmem [shape: f32[1,8], index: 6, kind: input, shape index: {}]
  %s7 = inlined_call_operand.vmem [shape: f32[32,128], index: 7, kind: output, shape index: {}]
  %s8 = sld [smem:[#allocation0]]
  $region38: #{d_conv_layer_forward.1} parent=0
    _
  %s10 = ssub.s32 1, %s8
  %s11 = scalar_select 0, %s10, %s8
  // Predicated region
  $region2: #{d_conv_layer_forward.1} parent=0 // pred_check
    _
  $region3: #{d_conv_layer_forward.1} parent=0 // pred_check_branch
    %13 = sbr.rel (0) target = $region5
  $region4: #{d_conv_layer_forward.1} parent=0 // pred_region
    _
  $region5: #{d_conv_layer_forward.1} parent=0 // pred_fallthru
    _
  // Predicated region
  $region6: #{d_conv_layer_forward.1} parent=0 // pred_check
    _
  $region7: #{d_conv_layer_forward.1} parent=0 // pred_check_branch
    %15 = sbr.rel (0) target = $region9
  $region8: #{d_conv_layer_forward.1} parent=0 // pred_region
    _
  $region9: #{d_conv_layer_forward.1} parent=0 // pred_fallthru
    _
  // Predicated region
  $region10: #{d_conv_layer_forward.1} parent=0 // pred_check
    _
  $region11: #{d_conv_layer_forward.1} parent=0 // pred_check_branch
    %17 = sbr.rel (0) target = $region13
  $region12: #{d_conv_layer_forward.1} parent=0 // pred_region
    _
  $region13: #{d_conv_layer_forward.1} parent=0 // pred_fallthru
    _
  // Predicated region
  $region14: #{d_conv_layer_forward.1} parent=0 // pred_check
    _
  $region15: #{d_conv_layer_forward.1} parent=0 // pred_check_branch
    %19 = sbr.rel (0) target = $region17
  $region16: #{d_conv_layer_forward.1} parent=0 // pred_region
    _
  $region17: #{d_conv_layer_forward.1} parent=0 // pred_fallthru
    _
  // Predicated region
  $region18: #{d_conv_layer_forward.1} parent=0 // pred_check
    _
  $region19: #{d_conv_layer_forward.1} parent=0 // pred_check_branch
    %21 = sbr.rel (0) target = $region21
  $region20: #{d_conv_layer_forward.1} parent=0 // pred_region
    _
  $region21: #{d_conv_layer_forward.1} parent=0 // pred_fallthru
    _
  // Predicated region
  $region22: #{d_conv_layer_forward.1} parent=0 // pred_check
    _
  $region23: #{d_conv_layer_forward.1} parent=0 // pred_check_branch
    %23 = sbr.rel (0) target = $region25
  $region24: #{d_conv_layer_forward.1} parent=0 // pred_region
    _
  $region25: #{d_conv_layer_forward.1} parent=0 // pred_fallthru
    _
  // Predicated region
  $region26: #{d_conv_layer_forward.1} parent=0 // pred_check
    _
  $region27: #{d_conv_layer_forward.1} parent=0 // pred_check_branch
    %25 = sbr.rel (0) target = $region29
  $region28: #{d_conv_layer_forward.1} parent=0 // pred_region
    _
  $region29: #{d_conv_layer_forward.1} parent=0 // pred_fallthru
    _
  %v26 = vld [vmem:[%s0] sm:$0xff]
  %v27 = vld [vmem:[%s0 + $0x8] sm:$0xff]
  %v28 = vld [vmem:[%s0 + $0x10] sm:$0xff]
  %v29 = vld [vmem:[%s0 + $0x18] sm:$0xff]
  %v30 = vld [vmem:[%s0 + $0x20] sm:$0xff]
  %v31 = vld [vmem:[%s0 + $0x28] sm:$0xff]
  %v32 = vld [vmem:[%s0 + $0x30] sm:$0xff]
  %v33 = vld [vmem:[%s0 + $0x38] sm:$0xff]
  %v34 = vld [vmem:[%s0 + $0x40] sm:$0xff]
  %v35 = vld [vmem:[%s0 + $0x48] sm:$0xff]
  %v36 = vld [vmem:[%s0 + $0x50] sm:$0xff]
  %v37 = vld [vmem:[%s0 + $0x58] sm:$0xff]
  %v38 = vld [vmem:[%s0 + $0x60] sm:$0xff]
  %v39 = vld [vmem:[%s0 + $0x68] sm:$0xff]
  %v40 = vld [vmem:[%s0 + $0x70] sm:$0xff]
  %v41 = vld [vmem:[%s0 + $0x78] sm:$0xff]
  %v42 = vld [vmem:[%s0 + $0x80] sm:$0xff]
  %v43 = vld [vmem:[%s0 + $0x88] sm:$0xff]
  %v44 = vld [vmem:[%s0 + $0x90] sm:$0xff]
  %v45 = vld [vmem:[%s0 + $0x98] sm:$0xff]
  %v46 = vld [vmem:[%s0 + $0xa0] sm:$0xff]
  %v47 = vld [vmem:[%s0 + $0xa8] sm:$0xff]
  %v48 = vld [vmem:[%s0 + $0xb0] sm:$0xff]
  %v49 = vld [vmem:[%s0 + $0xb8] sm:$0xff]
  %v50 = vld [vmem:[%s0 + $0xc0] sm:$0xff]
  %v51 = vld [vmem:[%s0 + $0xc8] sm:$0xff]
  %v52 = vld [vmem:[%s0 + $0xd0] sm:$0xff]
  %v53 = vld [vmem:[%s0 + $0xd8] sm:$0xff]
  %v54 = vld [vmem:[%s0 + $0xe0] sm:$0xff]
  %v55 = vld [vmem:[%s0 + $0xe8] sm:$0xff]
  %v56 = vld [vmem:[%s0 + $0xf0] sm:$0xff]
  %v57 = vld [vmem:[%s0 + $0xf8] sm:$0xff]
  %v58 = vld [vmem:[%s0 + $0x100] sm:$0xff]
  %v59 = vld [vmem:[%s0 + $0x108] sm:$0xff]
  %v60 = vld [vmem:[%s0 + $0x110] sm:$0xff]
  %v61 = vld [vmem:[%s0 + $0x118] sm:$0xff]
  %v62 = vld [vmem:[%s0 + $0x120] sm:$0xff]
  %v63 = vld [vmem:[%s0 + $0x128] sm:$0xff]
  %v64 = vld [vmem:[%s0 + $0x130] sm:$0xff]
  %v65 = vld [vmem:[%s0 + $0x138] sm:$0xff]
  %v66 = vld [vmem:[%s0 + $0x140] sm:$0xff]
  %v67 = vld [vmem:[%s0 + $0x148] sm:$0xff]
  %v68 = vld [vmem:[%s0 + $0x150] sm:$0xff]
  %v69 = vld [vmem:[%s0 + $0x158] sm:$0xff]
  %v70 = vld [vmem:[%s0 + $0x160] sm:$0xff]
  %v71 = vld [vmem:[%s0 + $0x168] sm:$0xff]
  %v72 = vld [vmem:[%s0 + $0x170] sm:$0xff]
  %v73 = vld [vmem:[%s0 + $0x178] sm:$0xff]
  %v74 = vld [vmem:[%s0 + $0x180] sm:$0xff]
  %v75 = vld [vmem:[%s0 + $0x188] sm:$0xff]
  %v76 = vld [vmem:[%s0 + $0x190] sm:$0xff]
  %v77 = vld [vmem:[%s0 + $0x198] sm:$0xff]
  %v78 = vld [vmem:[%s0 + $0x1a0] sm:$0xff]
  %v79 = vld [vmem:[%s0 + $0x1a8] sm:$0xff]
  %v80 = vld [vmem:[%s0 + $0x1b0] sm:$0xff]
  %v81 = vld [vmem:[%s0 + $0x1b8] sm:$0xff]
  %v82 = vld [vmem:[%s0 + $0x1c0] sm:$0xff]
  %v83 = vld [vmem:[%s0 + $0x1c8] sm:$0xff]
  %v84 = vld [vmem:[%s0 + $0x1d0] sm:$0xff]
  %v85 = vld [vmem:[%s0 + $0x1d8] sm:$0xff]
  %v86 = vld [vmem:[%s0 + $0x1e0] sm:$0xff]
  %v87 = vld [vmem:[%s0 + $0x1e8] sm:$0xff]
  %v88 = vld [vmem:[%s0 + $0x1f0] sm:$0xff]
  %v89 = vld [vmem:[%s0 + $0x1f8] sm:$0xff]
  %vm155 = vcmask 1040384
  %v156 = vrot.slane 0.0, 7
  %v157 = vsel %vm155, %v156, %v156
  %v158 = vrot.slane %v26, 7
  %v159 = vrot.slane %v27, 7
  %v160 = vsel %vm155, %v158, %v159
  %v161 = vrot.slane %v28, 7
  %v162 = vrot.slane %v29, 7
  %v163 = vsel %vm155, %v161, %v162
  %v164 = vrot.slane %v30, 7
  %v165 = vrot.slane %v31, 7
  %v166 = vsel %vm155, %v164, %v165
  %v167 = vrot.slane %v32, 7
  %v168 = vrot.slane %v33, 7
  %v169 = vsel %vm155, %v167, %v168
  %v170 = vrot.slane %v34, 7
  %v171 = vrot.slane %v35, 7
  %v172 = vsel %vm155, %v170, %v171
  %v173 = vrot.slane %v36, 7
  %v174 = vrot.slane %v37, 7
  %v175 = vsel %vm155, %v173, %v174
  %v176 = vrot.slane %v38, 7
  %v177 = vrot.slane %v39, 7
  %v178 = vsel %vm155, %v176, %v177
  %v179 = vrot.slane %v40, 7
  %v180 = vrot.slane %v41, 7
  %v181 = vsel %vm155, %v179, %v180
  %v182 = vrot.slane %v42, 7
  %v183 = vrot.slane %v43, 7
  %v184 = vsel %vm155, %v182, %v183
  %v185 = vrot.slane %v44, 7
  %v186 = vrot.slane %v45, 7
  %v187 = vsel %vm155, %v185, %v186
  %v188 = vrot.slane %v46, 7
  %v189 = vrot.slane %v47, 7
  %v190 = vsel %vm155, %v188, %v189
  %v191 = vrot.slane %v48, 7
  %v192 = vrot.slane %v49, 7
  %v193 = vsel %vm155, %v191, %v192
  %v194 = vrot.slane %v50, 7
  %v195 = vrot.slane %v51, 7
  %v196 = vsel %vm155, %v194, %v195
  %v197 = vrot.slane %v52, 7
  %v198 = vrot.slane %v53, 7
  %v199 = vsel %vm155, %v197, %v198
  %v200 = vrot.slane %v54, 7
  %v201 = vrot.slane %v55, 7
  %v202 = vsel %vm155, %v200, %v201
  %v203 = vrot.slane %v56, 7
  %v204 = vrot.slane %v57, 7
  %v205 = vsel %vm155, %v203, %v204
  %v206 = vrot.slane %v58, 7
  %v207 = vrot.slane %v59, 7
  %v208 = vsel %vm155, %v206, %v207
  %v209 = vrot.slane %v60, 7
  %v210 = vrot.slane %v61, 7
  %v211 = vsel %vm155, %v209, %v210
  %v212 = vrot.slane %v62, 7
  %v213 = vrot.slane %v63, 7
  %v214 = vsel %vm155, %v212, %v213
  %v215 = vrot.slane %v64, 7
  %v216 = vrot.slane %v65, 7
  %v217 = vsel %vm155, %v215, %v216
  %v218 = vrot.slane %v66, 7
  %v219 = vrot.slane %v67, 7
  %v220 = vsel %vm155, %v218, %v219
  %v221 = vrot.slane %v68, 7
  %v222 = vrot.slane %v69, 7
  %v223 = vsel %vm155, %v221, %v222
  %v224 = vrot.slane %v70, 7
  %v225 = vrot.slane %v71, 7
  %v226 = vsel %vm155, %v224, %v225
  %v227 = vrot.slane %v72, 7
  %v228 = vrot.slane %v73, 7
  %v229 = vsel %vm155, %v227, %v228
  %v230 = vrot.slane %v74, 7
  %v231 = vrot.slane %v75, 7
  %v232 = vsel %vm155, %v230, %v231
  %v233 = vrot.slane %v76, 7
  %v234 = vrot.slane %v77, 7
  %v235 = vsel %vm155, %v233, %v234
  %v236 = vrot.slane %v78, 7
  %v237 = vrot.slane %v79, 7
  %v238 = vsel %vm155, %v236, %v237
  %v239 = vrot.slane %v80, 7
  %v240 = vrot.slane %v81, 7
  %v241 = vsel %vm155, %v239, %v240
  %v242 = vrot.slane %v82, 7
  %v243 = vrot.slane %v83, 7
  %v244 = vsel %vm155, %v242, %v243
  %v245 = vrot.slane %v84, 7
  %v246 = vrot.slane %v85, 7
  %v247 = vsel %vm155, %v245, %v246
  %v248 = vrot.slane %v86, 7
  %v249 = vrot.slane %v87, 7
  %v250 = vsel %vm155, %v248, %v249
  %v251 = vrot.slane %v88, 7
  %v252 = vrot.slane %v89, 7
  %v253 = vsel %vm155, %v251, %v252
  %v350 = vsel %vm155, 0.0, %v156
  %v351 = vsel %vm155, 0.0, %v158
  %v352 = vsel %vm155, 0.0, %v161
  %v353 = vsel %vm155, 0.0, %v164
  %v354 = vsel %vm155, 0.0, %v167
  %v355 = vsel %vm155, 0.0, %v170
  %v356 = vsel %vm155, 0.0, %v173
  %v357 = vsel %vm155, 0.0, %v176
  %v358 = vsel %vm155, 0.0, %v179
  %v359 = vsel %vm155, 0.0, %v182
  %v360 = vsel %vm155, 0.0, %v185
  %v361 = vsel %vm155, 0.0, %v188
  %v362 = vsel %vm155, 0.0, %v191
  %v363 = vsel %vm155, 0.0, %v194
  %v364 = vsel %vm155, 0.0, %v197
  %v365 = vsel %vm155, 0.0, %v200
  %v366 = vsel %vm155, 0.0, %v203
  %v367 = vsel %vm155, 0.0, %v206
  %v368 = vsel %vm155, 0.0, %v209
  %v369 = vsel %vm155, 0.0, %v212
  %v370 = vsel %vm155, 0.0, %v215
  %v371 = vsel %vm155, 0.0, %v218
  %v372 = vsel %vm155, 0.0, %v221
  %v373 = vsel %vm155, 0.0, %v224
  %v374 = vsel %vm155, 0.0, %v227
  %v375 = vsel %vm155, 0.0, %v230
  %v376 = vsel %vm155, 0.0, %v233
  %v377 = vsel %vm155, 0.0, %v236
  %v378 = vsel %vm155, 0.0, %v239
  %v379 = vsel %vm155, 0.0, %v242
  %v380 = vsel %vm155, 0.0, %v245
  %v381 = vsel %vm155, 0.0, %v248
  %v382 = vsel %vm155, 0.0, %v251
  %v383 = vsel %vm155, %v156, 0.0
  %v384 = vsel %vm155, %v159, 0.0
  %v385 = vsel %vm155, %v162, 0.0
  %v386 = vsel %vm155, %v165, 0.0
  %v387 = vsel %vm155, %v168, 0.0
  %v388 = vsel %vm155, %v171, 0.0
  %v389 = vsel %vm155, %v174, 0.0
  %v390 = vsel %vm155, %v177, 0.0
  %v391 = vsel %vm155, %v180, 0.0
  %v392 = vsel %vm155, %v183, 0.0
  %v393 = vsel %vm155, %v186, 0.0
  %v394 = vsel %vm155, %v189, 0.0
  %v395 = vsel %vm155, %v192, 0.0
  %v396 = vsel %vm155, %v195, 0.0
  %v397 = vsel %vm155, %v198, 0.0
  %v398 = vsel %vm155, %v201, 0.0
  %v399 = vsel %vm155, %v204, 0.0
  %v400 = vsel %vm155, %v207, 0.0
  %v401 = vsel %vm155, %v210, 0.0
  %v402 = vsel %vm155, %v213, 0.0
  %v403 = vsel %vm155, %v216, 0.0
  %v404 = vsel %vm155, %v219, 0.0
  %v405 = vsel %vm155, %v222, 0.0
  %v406 = vsel %vm155, %v225, 0.0
  %v407 = vsel %vm155, %v228, 0.0
  %v408 = vsel %vm155, %v231, 0.0
  %v409 = vsel %vm155, %v234, 0.0
  %v410 = vsel %vm155, %v237, 0.0
  %v411 = vsel %vm155, %v240, 0.0
  %v412 = vsel %vm155, %v243, 0.0
  %v413 = vsel %vm155, %v246, 0.0
  %v414 = vsel %vm155, %v249, 0.0
  %v415 = vsel %vm155, %v252, 0.0
  %vm478 = vcmask 1046528
  %v479 = vrot.slane %v350, 1
  %v480 = vrot.slane %v157, 1
  %v481 = vsel %vm478, %v479, %v480
  %v482 = vrot.slane %v383, 1
  %v483 = vsel %vm478, %v480, %v482
  %v484 = vrot.slane %v351, 1
  %v485 = vrot.slane %v160, 1
  %v486 = vsel %vm478, %v484, %v485
  %v487 = vrot.slane %v384, 1
  %v488 = vsel %vm478, %v485, %v487
  %v489 = vrot.slane %v352, 1
  %v490 = vrot.slane %v163, 1
  %v491 = vsel %vm478, %v489, %v490
  %v492 = vrot.slane %v385, 1
  %v493 = vsel %vm478, %v490, %v492
  %v494 = vrot.slane %v353, 1
  %v495 = vrot.slane %v166, 1
  %v496 = vsel %vm478, %v494, %v495
  %v497 = vrot.slane %v386, 1
  %v498 = vsel %vm478, %v495, %v497
  %v499 = vrot.slane %v354, 1
  %v500 = vrot.slane %v169, 1
  %v501 = vsel %vm478, %v499, %v500
  %v502 = vrot.slane %v387, 1
  %v503 = vsel %vm478, %v500, %v502
  %v504 = vrot.slane %v355, 1
  %v505 = vrot.slane %v172, 1
  %v506 = vsel %vm478, %v504, %v505
  %v507 = vrot.slane %v388, 1
  %v508 = vsel %vm478, %v505, %v507
  %v509 = vrot.slane %v356, 1
  %v510 = vrot.slane %v175, 1
  %v511 = vsel %vm478, %v509, %v510
  %v512 = vrot.slane %v389, 1
  %v513 = vsel %vm478, %v510, %v512
  %v514 = vrot.slane %v357, 1
  %v515 = vrot.slane %v178, 1
  %v516 = vsel %vm478, %v514, %v515
  %v517 = vrot.slane %v390, 1
  %v518 = vsel %vm478, %v515, %v517
  %v519 = vrot.slane %v358, 1
  %v520 = vrot.slane %v181, 1
  %v521 = vsel %vm478, %v519, %v520
  %v522 = vrot.slane %v391, 1
  %v523 = vsel %vm478, %v520, %v522
  %v524 = vrot.slane %v359, 1
  %v525 = vrot.slane %v184, 1
  %v526 = vsel %vm478, %v524, %v525
  %v527 = vrot.slane %v392, 1
  %v528 = vsel %vm478, %v525, %v527
  %v529 = vrot.slane %v360, 1
  %v530 = vrot.slane %v187, 1
  %v531 = vsel %vm478, %v529, %v530
  %v532 = vrot.slane %v393, 1
  %v533 = vsel %vm478, %v530, %v532
  %v534 = vrot.slane %v361, 1
  %v535 = vrot.slane %v190, 1
  %v536 = vsel %vm478, %v534, %v535
  %v537 = vrot.slane %v394, 1
  %v538 = vsel %vm478, %v535, %v537
  %v539 = vrot.slane %v362, 1
  %v540 = vrot.slane %v193, 1
  %v541 = vsel %vm478, %v539, %v540
  %v542 = vrot.slane %v395, 1
  %v543 = vsel %vm478, %v540, %v542
  %v544 = vrot.slane %v363, 1
  %v545 = vrot.slane %v196, 1
  %v546 = vsel %vm478, %v544, %v545
  %v547 = vrot.slane %v396, 1
  %v548 = vsel %vm478, %v545, %v547
  %v549 = vrot.slane %v364, 1
  %v550 = vrot.slane %v199, 1
  %v551 = vsel %vm478, %v549, %v550
  %v552 = vrot.slane %v397, 1
  %v553 = vsel %vm478, %v550, %v552
  %v554 = vrot.slane %v365, 1
  %v555 = vrot.slane %v202, 1
  %v556 = vsel %vm478, %v554, %v555
  %v557 = vrot.slane %v398, 1
  %v558 = vsel %vm478, %v555, %v557
  %v559 = vrot.slane %v367, 1
  %v560 = vrot.slane %v208, 1
  %v561 = vsel %vm478, %v559, %v560
  %v562 = vrot.slane %v400, 1
  %v563 = vsel %vm478, %v560, %v562
  %v564 = vrot.slane %v368, 1
  %v565 = vrot.slane %v211, 1
  %v566 = vsel %vm478, %v564, %v565
  %v567 = vrot.slane %v401, 1
  %v568 = vsel %vm478, %v565, %v567
  %v569 = vrot.slane %v369, 1
  %v570 = vrot.slane %v214, 1
  %v571 = vsel %vm478, %v569, %v570
  %v572 = vrot.slane %v402, 1
  %v573 = vsel %vm478, %v570, %v572
  %v574 = vrot.slane %v370, 1
  %v575 = vrot.slane %v217, 1
  %v576 = vsel %vm478, %v574, %v575
  %v577 = vrot.slane %v403, 1
  %v578 = vsel %vm478, %v575, %v577
  %v579 = vrot.slane %v371, 1
  %v580 = vrot.slane %v220, 1
  %v581 = vsel %vm478, %v579, %v580
  %v582 = vrot.slane %v404, 1
  %v583 = vsel %vm478, %v580, %v582
  %v584 = vrot.slane %v372, 1
  %v585 = vrot.slane %v223, 1
  %v586 = vsel %vm478, %v584, %v585
  %v587 = vrot.slane %v405, 1
  %v588 = vsel %vm478, %v585, %v587
  %v589 = vrot.slane %v373, 1
  %v590 = vrot.slane %v226, 1
  %v591 = vsel %vm478, %v589, %v590
  %v592 = vrot.slane %v406, 1
  %v593 = vsel %vm478, %v590, %v592
  %v594 = vrot.slane %v374, 1
  %v595 = vrot.slane %v229, 1
  %v596 = vsel %vm478, %v594, %v595
  %v597 = vrot.slane %v407, 1
  %v598 = vsel %vm478, %v595, %v597
  %v599 = vrot.slane %v375, 1
  %v600 = vrot.slane %v232, 1
  %v601 = vsel %vm478, %v599, %v600
  %v602 = vrot.slane %v408, 1
  %v603 = vsel %vm478, %v600, %v602
  %v604 = vrot.slane %v376, 1
  %v605 = vrot.slane %v235, 1
  %v606 = vsel %vm478, %v604, %v605
  %v607 = vrot.slane %v409, 1
  %v608 = vsel %vm478, %v605, %v607
  %v609 = vrot.slane %v377, 1
  %v610 = vrot.slane %v238, 1
  %v611 = vsel %vm478, %v609, %v610
  %v612 = vrot.slane %v410, 1
  %v613 = vsel %vm478, %v610, %v612
  %v614 = vrot.slane %v378, 1
  %v615 = vrot.slane %v241, 1
  %v616 = vsel %vm478, %v614, %v615
  %v617 = vrot.slane %v411, 1
  %v618 = vsel %vm478, %v615, %v617
  %v619 = vrot.slane %v379, 1
  %v620 = vrot.slane %v244, 1
  %v621 = vsel %vm478, %v619, %v620
  %v622 = vrot.slane %v412, 1
  %v623 = vsel %vm478, %v620, %v622
  %v624 = vrot.slane %v380, 1
  %v625 = vrot.slane %v247, 1
  %v626 = vsel %vm478, %v624, %v625
  %v627 = vrot.slane %v413, 1
  %v628 = vsel %vm478, %v625, %v627
  %v629 = vrot.slane %v381, 1
  %v630 = vrot.slane %v250, 1
  %v631 = vsel %vm478, %v629, %v630
  %v632 = vrot.slane %v414, 1
  %v633 = vsel %vm478, %v630, %v632
  %634 = vrot.lane.b32.xlu0 %v481, 4
  %v635 = vpop.permute.xlu0 %634
  %636 = vrot.lane.b32.xlu0 %v483, 4
  %v637 = vpop.permute.xlu0 %636
  %638 = vrot.lane.b32.xlu0 %v486, 4
  %v639 = vpop.permute.xlu0 %638
  %640 = vrot.lane.b32.xlu0 %v488, 4
  %v641 = vpop.permute.xlu0 %640
  %642 = vrot.lane.b32.xlu0 %v491, 4
  %v643 = vpop.permute.xlu0 %642
  %644 = vrot.lane.b32.xlu0 %v493, 4
  %v645 = vpop.permute.xlu0 %644
  %646 = vrot.lane.b32.xlu0 %v496, 4
  %v647 = vpop.permute.xlu0 %646
  %648 = vrot.lane.b32.xlu0 %v498, 4
  %v649 = vpop.permute.xlu0 %648
  %650 = vrot.lane.b32.xlu0 %v501, 4
  %v651 = vpop.permute.xlu0 %650
  %652 = vrot.lane.b32.xlu0 %v503, 4
  %v653 = vpop.permute.xlu0 %652
  %654 = vrot.lane.b32.xlu0 %v506, 4
  %v655 = vpop.permute.xlu0 %654
  %656 = vrot.lane.b32.xlu0 %v508, 4
  %v657 = vpop.permute.xlu0 %656
  %658 = vrot.lane.b32.xlu0 %v511, 4
  %v659 = vpop.permute.xlu0 %658
  %660 = vrot.lane.b32.xlu0 %v513, 4
  %v661 = vpop.permute.xlu0 %660
  %662 = vrot.lane.b32.xlu0 %v516, 4
  %v663 = vpop.permute.xlu0 %662
  %664 = vrot.lane.b32.xlu0 %v518, 4
  %v665 = vpop.permute.xlu0 %664
  %666 = vrot.lane.b32.xlu0 %v521, 4
  %v667 = vpop.permute.xlu0 %666
  %668 = vrot.lane.b32.xlu0 %v523, 4
  %v669 = vpop.permute.xlu0 %668
  %670 = vrot.lane.b32.xlu0 %v526, 4
  %v671 = vpop.permute.xlu0 %670
  %672 = vrot.lane.b32.xlu0 %v528, 4
  %v673 = vpop.permute.xlu0 %672
  %674 = vrot.lane.b32.xlu0 %v531, 4
  %v675 = vpop.permute.xlu0 %674
  %676 = vrot.lane.b32.xlu0 %v533, 4
  %v677 = vpop.permute.xlu0 %676
  %678 = vrot.lane.b32.xlu0 %v536, 4
  %v679 = vpop.permute.xlu0 %678
  %680 = vrot.lane.b32.xlu0 %v538, 4
  %v681 = vpop.permute.xlu0 %680
  %682 = vrot.lane.b32.xlu0 %v541, 4
  %v683 = vpop.permute.xlu0 %682
  %684 = vrot.lane.b32.xlu0 %v543, 4
  %v685 = vpop.permute.xlu0 %684
  %686 = vrot.lane.b32.xlu0 %v546, 4
  %v687 = vpop.permute.xlu0 %686
  %688 = vrot.lane.b32.xlu0 %v548, 4
  %v689 = vpop.permute.xlu0 %688
  %690 = vrot.lane.b32.xlu0 %v551, 4
  %v691 = vpop.permute.xlu0 %690
  %692 = vrot.lane.b32.xlu0 %v553, 4
  %v693 = vpop.permute.xlu0 %692
  %694 = vrot.lane.b32.xlu0 %v556, 4
  %v695 = vpop.permute.xlu0 %694
  %696 = vrot.lane.b32.xlu0 %v558, 4
  %v697 = vpop.permute.xlu0 %696
  %698 = vrot.lane.b32.xlu0 %v561, 4
  %v699 = vpop.permute.xlu0 %698
  %700 = vrot.lane.b32.xlu0 %v563, 4
  %v701 = vpop.permute.xlu0 %700
  %702 = vrot.lane.b32.xlu0 %v566, 4
  %v703 = vpop.permute.xlu0 %702
  %704 = vrot.lane.b32.xlu0 %v568, 4
  %v705 = vpop.permute.xlu0 %704
  %706 = vrot.lane.b32.xlu0 %v571, 4
  %v707 = vpop.permute.xlu0 %706
  %708 = vrot.lane.b32.xlu0 %v573, 4
  %v709 = vpop.permute.xlu0 %708
  %710 = vrot.lane.b32.xlu0 %v576, 4
  %v711 = vpop.permute.xlu0 %710
  %712 = vrot.lane.b32.xlu0 %v578, 4
  %v713 = vpop.permute.xlu0 %712
  %714 = vrot.lane.b32.xlu0 %v581, 4
  %v715 = vpop.permute.xlu0 %714
  %716 = vrot.lane.b32.xlu0 %v583, 4
  %v717 = vpop.permute.xlu0 %716
  %718 = vrot.lane.b32.xlu0 %v586, 4
  %v719 = vpop.permute.xlu0 %718
  %720 = vrot.lane.b32.xlu0 %v588, 4
  %v721 = vpop.permute.xlu0 %720
  %722 = vrot.lane.b32.xlu0 %v591, 4
  %v723 = vpop.permute.xlu0 %722
  %724 = vrot.lane.b32.xlu0 %v593, 4
  %v725 = vpop.permute.xlu0 %724
  %726 = vrot.lane.b32.xlu0 %v596, 4
  %v727 = vpop.permute.xlu0 %726
  %728 = vrot.lane.b32.xlu0 %v598, 4
  %v729 = vpop.permute.xlu0 %728
  %730 = vrot.lane.b32.xlu0 %v601, 4
  %v731 = vpop.permute.xlu0 %730
  %732 = vrot.lane.b32.xlu0 %v603, 4
  %v733 = vpop.permute.xlu0 %732
  %734 = vrot.lane.b32.xlu0 %v606, 4
  %v735 = vpop.permute.xlu0 %734
  %736 = vrot.lane.b32.xlu0 %v608, 4
  %v737 = vpop.permute.xlu0 %736
  %738 = vrot.lane.b32.xlu0 %v611, 4
  %v739 = vpop.permute.xlu0 %738
  %740 = vrot.lane.b32.xlu0 %v613, 4
  %v741 = vpop.permute.xlu0 %740
  %742 = vrot.lane.b32.xlu0 %v616, 4
  %v743 = vpop.permute.xlu0 %742
  %744 = vrot.lane.b32.xlu0 %v618, 4
  %v745 = vpop.permute.xlu0 %744
  %746 = vrot.lane.b32.xlu0 %v621, 4
  %v747 = vpop.permute.xlu0 %746
  %748 = vrot.lane.b32.xlu0 %v623, 4
  %v749 = vpop.permute.xlu0 %748
  %750 = vrot.lane.b32.xlu0 %v626, 4
  %v751 = vpop.permute.xlu0 %750
  %752 = vrot.lane.b32.xlu0 %v628, 4
  %v753 = vpop.permute.xlu0 %752
  %754 = vrot.lane.b32.xlu0 %v631, 4
  %v755 = vpop.permute.xlu0 %754
  %756 = vrot.lane.b32.xlu0 %v633, 4
  %v757 = vpop.permute.xlu0 %756
  %vm820 = vcmask 1045504
  %v821 = vrot.slane %v350, 2
  %v822 = vrot.slane %v157, 2
  %v823 = vsel %vm820, %v821, %v822
  %v824 = vrot.slane %v383, 2
  %v825 = vsel %vm820, %v822, %v824
  %v826 = vrot.slane %v351, 2
  %v827 = vrot.slane %v160, 2
  %v828 = vsel %vm820, %v826, %v827
  %v829 = vrot.slane %v384, 2
  %v830 = vsel %vm820, %v827, %v829
  %v831 = vrot.slane %v352, 2
  %v832 = vrot.slane %v163, 2
  %v833 = vsel %vm820, %v831, %v832
  %v834 = vrot.slane %v385, 2
  %v835 = vsel %vm820, %v832, %v834
  %v836 = vrot.slane %v353, 2
  %v837 = vrot.slane %v166, 2
  %v838 = vsel %vm820, %v836, %v837
  %v839 = vrot.slane %v386, 2
  %v840 = vsel %vm820, %v837, %v839
  %v841 = vrot.slane %v354, 2
  %v842 = vrot.slane %v169, 2
  %v843 = vsel %vm820, %v841, %v842
  %v844 = vrot.slane %v387, 2
  %v845 = vsel %vm820, %v842, %v844
  %v846 = vrot.slane %v355, 2
  %v847 = vrot.slane %v172, 2
  %v848 = vsel %vm820, %v846, %v847
  %v849 = vrot.slane %v388, 2
  %v850 = vsel %vm820, %v847, %v849
  %v851 = vrot.slane %v356, 2
  %v852 = vrot.slane %v175, 2
  %v853 = vsel %vm820, %v851, %v852
  %v854 = vrot.slane %v389, 2
  %v855 = vsel %vm820, %v852, %v854
  %v856 = vrot.slane %v357, 2
  %v857 = vrot.slane %v178, 2
  %v858 = vsel %vm820, %v856, %v857
  %v859 = vrot.slane %v390, 2
  %v860 = vsel %vm820, %v857, %v859
  %v861 = vrot.slane %v358, 2
  %v862 = vrot.slane %v181, 2
  %v863 = vsel %vm820, %v861, %v862
  %v864 = vrot.slane %v391, 2
  %v865 = vsel %vm820, %v862, %v864
  %v866 = vrot.slane %v359, 2
  %v867 = vrot.slane %v184, 2
  %v868 = vsel %vm820, %v866, %v867
  %v869 = vrot.slane %v392, 2
  %v870 = vsel %vm820, %v867, %v869
  %v871 = vrot.slane %v360, 2
  %v872 = vrot.slane %v187, 2
  %v873 = vsel %vm820, %v871, %v872
  %v874 = vrot.slane %v393, 2
  %v875 = vsel %vm820, %v872, %v874
  %v876 = vrot.slane %v361, 2
  %v877 = vrot.slane %v190, 2
  %v878 = vsel %vm820, %v876, %v877
  %v879 = vrot.slane %v394, 2
  %v880 = vsel %vm820, %v877, %v879
  %v881 = vrot.slane %v362, 2
  %v882 = vrot.slane %v193, 2
  %v883 = vsel %vm820, %v881, %v882
  %v884 = vrot.slane %v395, 2
  %v885 = vsel %vm820, %v882, %v884
  %v886 = vrot.slane %v363, 2
  %v887 = vrot.slane %v196, 2
  %v888 = vsel %vm820, %v886, %v887
  %v889 = vrot.slane %v396, 2
  %v890 = vsel %vm820, %v887, %v889
  %v891 = vrot.slane %v364, 2
  %v892 = vrot.slane %v199, 2
  %v893 = vsel %vm820, %v891, %v892
  %v894 = vrot.slane %v397, 2
  %v895 = vsel %vm820, %v892, %v894
  %v896 = vrot.slane %v365, 2
  %v897 = vrot.slane %v202, 2
  %v898 = vsel %vm820, %v896, %v897
  %v899 = vrot.slane %v398, 2
  %v900 = vsel %vm820, %v897, %v899
  %v901 = vrot.slane %v367, 2
  %v902 = vrot.slane %v208, 2
  %v903 = vsel %vm820, %v901, %v902
  %v904 = vrot.slane %v400, 2
  %v905 = vsel %vm820, %v902, %v904
  %v906 = vrot.slane %v368, 2
  %v907 = vrot.slane %v211, 2
  %v908 = vsel %vm820, %v906, %v907
  %v909 = vrot.slane %v401, 2
  %v910 = vsel %vm820, %v907, %v909
  %v911 = vrot.slane %v369, 2
  %v912 = vrot.slane %v214, 2
  %v913 = vsel %vm820, %v911, %v912
  %v914 = vrot.slane %v402, 2
  %v915 = vsel %vm820, %v912, %v914
  %v916 = vrot.slane %v370, 2
  %v917 = vrot.slane %v217, 2
  %v918 = vsel %vm820, %v916, %v917
  %v919 = vrot.slane %v403, 2
  %v920 = vsel %vm820, %v917, %v919
  %v921 = vrot.slane %v371, 2
  %v922 = vrot.slane %v220, 2
  %v923 = vsel %vm820, %v921, %v922
  %v924 = vrot.slane %v404, 2
  %v925 = vsel %vm820, %v922, %v924
  %v926 = vrot.slane %v372, 2
  %v927 = vrot.slane %v223, 2
  %v928 = vsel %vm820, %v926, %v927
  %v929 = vrot.slane %v405, 2
  %v930 = vsel %vm820, %v927, %v929
  %v931 = vrot.slane %v373, 2
  %v932 = vrot.slane %v226, 2
  %v933 = vsel %vm820, %v931, %v932
  %v934 = vrot.slane %v406, 2
  %v935 = vsel %vm820, %v932, %v934
  %v936 = vrot.slane %v374, 2
  %v937 = vrot.slane %v229, 2
  %v938 = vsel %vm820, %v936, %v937
  %v939 = vrot.slane %v407, 2
  %v940 = vsel %vm820, %v937, %v939
  %v941 = vrot.slane %v375, 2
  %v942 = vrot.slane %v232, 2
  %v943 = vsel %vm820, %v941, %v942
  %v944 = vrot.slane %v408, 2
  %v945 = vsel %vm820, %v942, %v944
  %v946 = vrot.slane %v376, 2
  %v947 = vrot.slane %v235, 2
  %v948 = vsel %vm820, %v946, %v947
  %v949 = vrot.slane %v409, 2
  %v950 = vsel %vm820, %v947, %v949
  %v951 = vrot.slane %v377, 2
  %v952 = vrot.slane %v238, 2
  %v953 = vsel %vm820, %v951, %v952
  %v954 = vrot.slane %v410, 2
  %v955 = vsel %vm820, %v952, %v954
  %v956 = vrot.slane %v378, 2
  %v957 = vrot.slane %v241, 2
  %v958 = vsel %vm820, %v956, %v957
  %v959 = vrot.slane %v411, 2
  %v960 = vsel %vm820, %v957, %v959
  %v961 = vrot.slane %v379, 2
  %v962 = vrot.slane %v244, 2
  %v963 = vsel %vm820, %v961, %v962
  %v964 = vrot.slane %v412, 2
  %v965 = vsel %vm820, %v962, %v964
  %v966 = vrot.slane %v380, 2
  %v967 = vrot.slane %v247, 2
  %v968 = vsel %vm820, %v966, %v967
  %v969 = vrot.slane %v413, 2
  %v970 = vsel %vm820, %v967, %v969
  %v971 = vrot.slane %v381, 2
  %v972 = vrot.slane %v250, 2
  %v973 = vsel %vm820, %v971, %v972
  %v974 = vrot.slane %v414, 2
  %v975 = vsel %vm820, %v972, %v974
  %976 = vrot.lane.b32.xlu0 %v823, 8
  %v977 = vpop.permute.xlu0 %976
  %978 = vrot.lane.b32.xlu0 %v825, 8
  %v979 = vpop.permute.xlu0 %978
  %980 = vrot.lane.b32.xlu0 %v828, 8
  %v981 = vpop.permute.xlu0 %980
  %982 = vrot.lane.b32.xlu0 %v830, 8
  %v983 = vpop.permute.xlu0 %982
  %984 = vrot.lane.b32.xlu0 %v833, 8
  %v985 = vpop.permute.xlu0 %984
  %986 = vrot.lane.b32.xlu0 %v835, 8
  %v987 = vpop.permute.xlu0 %986
  %988 = vrot.lane.b32.xlu0 %v838, 8
  %v989 = vpop.permute.xlu0 %988
  %990 = vrot.lane.b32.xlu0 %v840, 8
  %v991 = vpop.permute.xlu0 %990
  %992 = vrot.lane.b32.xlu0 %v843, 8
  %v993 = vpop.permute.xlu0 %992
  %994 = vrot.lane.b32.xlu0 %v845, 8
  %v995 = vpop.permute.xlu0 %994
  %996 = vrot.lane.b32.xlu0 %v848, 8
  %v997 = vpop.permute.xlu0 %996
  %998 = vrot.lane.b32.xlu0 %v850, 8
  %v999 = vpop.permute.xlu0 %998
  %1000 = vrot.lane.b32.xlu0 %v853, 8
  %v1001 = vpop.permute.xlu0 %1000
  %1002 = vrot.lane.b32.xlu0 %v855, 8
  %v1003 = vpop.permute.xlu0 %1002
  %1004 = vrot.lane.b32.xlu0 %v858, 8
  %v1005 = vpop.permute.xlu0 %1004
  %1006 = vrot.lane.b32.xlu0 %v860, 8
  %v1007 = vpop.permute.xlu0 %1006
  %1008 = vrot.lane.b32.xlu0 %v863, 8
  %v1009 = vpop.permute.xlu0 %1008
  %1010 = vrot.lane.b32.xlu0 %v865, 8
  %v1011 = vpop.permute.xlu0 %1010
  %1012 = vrot.lane.b32.xlu0 %v868, 8
  %v1013 = vpop.permute.xlu0 %1012
  %1014 = vrot.lane.b32.xlu0 %v870, 8
  %v1015 = vpop.permute.xlu0 %1014
  %1016 = vrot.lane.b32.xlu0 %v873, 8
  %v1017 = vpop.permute.xlu0 %1016
  %1018 = vrot.lane.b32.xlu0 %v875, 8
  %v1019 = vpop.permute.xlu0 %1018
  %1020 = vrot.lane.b32.xlu0 %v878, 8
  %v1021 = vpop.permute.xlu0 %1020
  %1022 = vrot.lane.b32.xlu0 %v880, 8
  %v1023 = vpop.permute.xlu0 %1022
  %1024 = vrot.lane.b32.xlu0 %v883, 8
  %v1025 = vpop.permute.xlu0 %1024
  %1026 = vrot.lane.b32.xlu0 %v885, 8
  %v1027 = vpop.permute.xlu0 %1026
  %1028 = vrot.lane.b32.xlu0 %v888, 8
  %v1029 = vpop.permute.xlu0 %1028
  %1030 = vrot.lane.b32.xlu0 %v890, 8
  %v1031 = vpop.permute.xlu0 %1030
  %1032 = vrot.lane.b32.xlu0 %v893, 8
  %v1033 = vpop.permute.xlu0 %1032
  %1034 = vrot.lane.b32.xlu0 %v895, 8
  %v1035 = vpop.permute.xlu0 %1034
  %1036 = vrot.lane.b32.xlu0 %v898, 8
  %v1037 = vpop.permute.xlu0 %1036
  %1038 = vrot.lane.b32.xlu0 %v900, 8
  %v1039 = vpop.permute.xlu0 %1038
  %1040 = vrot.lane.b32.xlu0 %v903, 8
  %v1041 = vpop.permute.xlu0 %1040
  %1042 = vrot.lane.b32.xlu0 %v905, 8
  %v1043 = vpop.permute.xlu0 %1042
  %1044 = vrot.lane.b32.xlu0 %v908, 8
  %v1045 = vpop.permute.xlu0 %1044
  %1046 = vrot.lane.b32.xlu0 %v910, 8
  %v1047 = vpop.permute.xlu0 %1046
  %1048 = vrot.lane.b32.xlu0 %v913, 8
  %v1049 = vpop.permute.xlu0 %1048
  %1050 = vrot.lane.b32.xlu0 %v915, 8
  %v1051 = vpop.permute.xlu0 %1050
  %1052 = vrot.lane.b32.xlu0 %v918, 8
  %v1053 = vpop.permute.xlu0 %1052
  %1054 = vrot.lane.b32.xlu0 %v920, 8
  %v1055 = vpop.permute.xlu0 %1054
  %1056 = vrot.lane.b32.xlu0 %v923, 8
  %v1057 = vpop.permute.xlu0 %1056
  %1058 = vrot.lane.b32.xlu0 %v925, 8
  %v1059 = vpop.permute.xlu0 %1058
  %1060 = vrot.lane.b32.xlu0 %v928, 8
  %v1061 = vpop.permute.xlu0 %1060
  %1062 = vrot.lane.b32.xlu0 %v930, 8
  %v1063 = vpop.permute.xlu0 %1062
  %1064 = vrot.lane.b32.xlu0 %v933, 8
  %v1065 = vpop.permute.xlu0 %1064
  %1066 = vrot.lane.b32.xlu0 %v935, 8
  %v1067 = vpop.permute.xlu0 %1066
  %1068 = vrot.lane.b32.xlu0 %v938, 8
  %v1069 = vpop.permute.xlu0 %1068
  %1070 = vrot.lane.b32.xlu0 %v940, 8
  %v1071 = vpop.permute.xlu0 %1070
  %1072 = vrot.lane.b32.xlu0 %v943, 8
  %v1073 = vpop.permute.xlu0 %1072
  %1074 = vrot.lane.b32.xlu0 %v945, 8
  %v1075 = vpop.permute.xlu0 %1074
  %1076 = vrot.lane.b32.xlu0 %v948, 8
  %v1077 = vpop.permute.xlu0 %1076
  %1078 = vrot.lane.b32.xlu0 %v950, 8
  %v1079 = vpop.permute.xlu0 %1078
  %1080 = vrot.lane.b32.xlu0 %v953, 8
  %v1081 = vpop.permute.xlu0 %1080
  %1082 = vrot.lane.b32.xlu0 %v955, 8
  %v1083 = vpop.permute.xlu0 %1082
  %1084 = vrot.lane.b32.xlu0 %v958, 8
  %v1085 = vpop.permute.xlu0 %1084
  %1086 = vrot.lane.b32.xlu0 %v960, 8
  %v1087 = vpop.permute.xlu0 %1086
  %1088 = vrot.lane.b32.xlu0 %v963, 8
  %v1089 = vpop.permute.xlu0 %1088
  %1090 = vrot.lane.b32.xlu0 %v965, 8
  %v1091 = vpop.permute.xlu0 %1090
  %1092 = vrot.lane.b32.xlu0 %v968, 8
  %v1093 = vpop.permute.xlu0 %1092
  %1094 = vrot.lane.b32.xlu0 %v970, 8
  %v1095 = vpop.permute.xlu0 %1094
  %1096 = vrot.lane.b32.xlu0 %v973, 8
  %v1097 = vpop.permute.xlu0 %1096
  %1098 = vrot.lane.b32.xlu0 %v975, 8
  %v1099 = vpop.permute.xlu0 %1098
  %1164 = vrot.lane.b32.xlu0 %v351, 12
  %v1165 = vpop.permute.xlu0 %1164
  %1166 = vrot.lane.b32.xlu0 %v160, 12
  %v1167 = vpop.permute.xlu0 %1166
  %1168 = vrot.lane.b32.xlu0 %v352, 12
  %v1169 = vpop.permute.xlu0 %1168
  %1170 = vrot.lane.b32.xlu0 %v163, 12
  %v1171 = vpop.permute.xlu0 %1170
  %1172 = vrot.lane.b32.xlu0 %v353, 12
  %v1173 = vpop.permute.xlu0 %1172
  %1174 = vrot.lane.b32.xlu0 %v166, 12
  %v1175 = vpop.permute.xlu0 %1174
  %1176 = vrot.lane.b32.xlu0 %v354, 12
  %v1177 = vpop.permute.xlu0 %1176
  %1178 = vrot.lane.b32.xlu0 %v169, 12
  %v1179 = vpop.permute.xlu0 %1178
  %1180 = vrot.lane.b32.xlu0 %v355, 12
  %v1181 = vpop.permute.xlu0 %1180
  %1182 = vrot.lane.b32.xlu0 %v172, 12
  %v1183 = vpop.permute.xlu0 %1182
  %1184 = vrot.lane.b32.xlu0 %v356, 12
  %v1185 = vpop.permute.xlu0 %1184
  %1186 = vrot.lane.b32.xlu0 %v175, 12
  %v1187 = vpop.permute.xlu0 %1186
  %1188 = vrot.lane.b32.xlu0 %v357, 12
  %v1189 = vpop.permute.xlu0 %1188
  %1190 = vrot.lane.b32.xlu0 %v178, 12
  %v1191 = vpop.permute.xlu0 %1190
  %1192 = vrot.lane.b32.xlu0 %v358, 12
  %v1193 = vpop.permute.xlu0 %1192
  %1194 = vrot.lane.b32.xlu0 %v181, 12
  %v1195 = vpop.permute.xlu0 %1194
  %1196 = vrot.lane.b32.xlu0 %v359, 12
  %v1197 = vpop.permute.xlu0 %1196
  %1198 = vrot.lane.b32.xlu0 %v184, 12
  %v1199 = vpop.permute.xlu0 %1198
  %1200 = vrot.lane.b32.xlu0 %v360, 12
  %v1201 = vpop.permute.xlu0 %1200
  %1202 = vrot.lane.b32.xlu0 %v187, 12
  %v1203 = vpop.permute.xlu0 %1202
  %1204 = vrot.lane.b32.xlu0 %v361, 12
  %v1205 = vpop.permute.xlu0 %1204
  %1206 = vrot.lane.b32.xlu0 %v190, 12
  %v1207 = vpop.permute.xlu0 %1206
  %1208 = vrot.lane.b32.xlu0 %v362, 12
  %v1209 = vpop.permute.xlu0 %1208
  %1210 = vrot.lane.b32.xlu0 %v193, 12
  %v1211 = vpop.permute.xlu0 %1210
  %1212 = vrot.lane.b32.xlu0 %v363, 12
  %v1213 = vpop.permute.xlu0 %1212
  %1214 = vrot.lane.b32.xlu0 %v196, 12
  %v1215 = vpop.permute.xlu0 %1214
  %1216 = vrot.lane.b32.xlu0 %v364, 12
  %v1217 = vpop.permute.xlu0 %1216
  %1218 = vrot.lane.b32.xlu0 %v199, 12
  %v1219 = vpop.permute.xlu0 %1218
  %1220 = vrot.lane.b32.xlu0 %v365, 12
  %v1221 = vpop.permute.xlu0 %1220
  %1222 = vrot.lane.b32.xlu0 %v202, 12
  %v1223 = vpop.permute.xlu0 %1222
  %1224 = vrot.lane.b32.xlu0 %v366, 12
  %v1225 = vpop.permute.xlu0 %1224
  %1226 = vrot.lane.b32.xlu0 %v205, 12
  %v1227 = vpop.permute.xlu0 %1226
  %1228 = vrot.lane.b32.xlu0 %v367, 12
  %v1229 = vpop.permute.xlu0 %1228
  %1230 = vrot.lane.b32.xlu0 %v208, 12
  %v1231 = vpop.permute.xlu0 %1230
  %1232 = vrot.lane.b32.xlu0 %v368, 12
  %v1233 = vpop.permute.xlu0 %1232
  %1234 = vrot.lane.b32.xlu0 %v211, 12
  %v1235 = vpop.permute.xlu0 %1234
  %1236 = vrot.lane.b32.xlu0 %v369, 12
  %v1237 = vpop.permute.xlu0 %1236
  %1238 = vrot.lane.b32.xlu0 %v214, 12
  %v1239 = vpop.permute.xlu0 %1238
  %1240 = vrot.lane.b32.xlu0 %v370, 12
  %v1241 = vpop.permute.xlu0 %1240
  %1242 = vrot.lane.b32.xlu0 %v217, 12
  %v1243 = vpop.permute.xlu0 %1242
  %1244 = vrot.lane.b32.xlu0 %v371, 12
  %v1245 = vpop.permute.xlu0 %1244
  %1246 = vrot.lane.b32.xlu0 %v220, 12
  %v1247 = vpop.permute.xlu0 %1246
  %1248 = vrot.lane.b32.xlu0 %v372, 12
  %v1249 = vpop.permute.xlu0 %1248
  %1250 = vrot.lane.b32.xlu0 %v223, 12
  %v1251 = vpop.permute.xlu0 %1250
  %1252 = vrot.lane.b32.xlu0 %v373, 12
  %v1253 = vpop.permute.xlu0 %1252
  %1254 = vrot.lane.b32.xlu0 %v226, 12
  %v1255 = vpop.permute.xlu0 %1254
  %1256 = vrot.lane.b32.xlu0 %v374, 12
  %v1257 = vpop.permute.xlu0 %1256
  %1258 = vrot.lane.b32.xlu0 %v229, 12
  %v1259 = vpop.permute.xlu0 %1258
  %1260 = vrot.lane.b32.xlu0 %v375, 12
  %v1261 = vpop.permute.xlu0 %1260
  %1262 = vrot.lane.b32.xlu0 %v232, 12
  %v1263 = vpop.permute.xlu0 %1262
  %1264 = vrot.lane.b32.xlu0 %v376, 12
  %v1265 = vpop.permute.xlu0 %1264
  %1266 = vrot.lane.b32.xlu0 %v235, 12
  %v1267 = vpop.permute.xlu0 %1266
  %1268 = vrot.lane.b32.xlu0 %v377, 12
  %v1269 = vpop.permute.xlu0 %1268
  %1270 = vrot.lane.b32.xlu0 %v238, 12
  %v1271 = vpop.permute.xlu0 %1270
  %1272 = vrot.lane.b32.xlu0 %v378, 12
  %v1273 = vpop.permute.xlu0 %1272
  %1274 = vrot.lane.b32.xlu0 %v241, 12
  %v1275 = vpop.permute.xlu0 %1274
  %1276 = vrot.lane.b32.xlu0 %v379, 12
  %v1277 = vpop.permute.xlu0 %1276
  %1278 = vrot.lane.b32.xlu0 %v244, 12
  %v1279 = vpop.permute.xlu0 %1278
  %1280 = vrot.lane.b32.xlu0 %v380, 12
  %v1281 = vpop.permute.xlu0 %1280
  %1282 = vrot.lane.b32.xlu0 %v247, 12
  %v1283 = vpop.permute.xlu0 %1282
  %1284 = vrot.lane.b32.xlu0 %v381, 12
  %v1285 = vpop.permute.xlu0 %1284
  %1286 = vrot.lane.b32.xlu0 %v250, 12
  %v1287 = vpop.permute.xlu0 %1286
  %1288 = vrot.lane.b32.xlu0 %v382, 12
  %v1289 = vpop.permute.xlu0 %1288
  %1290 = vrot.lane.b32.xlu0 %v253, 12
  %v1291 = vpop.permute.xlu0 %1290
  %v1358 = vrot.slane %v366, 1
  %v1359 = vrot.slane %v205, 1
  %v1360 = vsel %vm478, %v1358, %v1359
  %v1361 = vrot.slane %v399, 1
  %v1362 = vsel %vm478, %v1359, %v1361
  %v1363 = vrot.slane %v382, 1
  %v1364 = vrot.slane %v253, 1
  %v1365 = vsel %vm478, %v1363, %v1364
  %v1366 = vrot.slane %v415, 1
  %v1367 = vsel %vm478, %v1364, %v1366
  %1368 = vrot.lane.b32.xlu0 %v486, 16
  %v1369 = vpop.permute.xlu0 %1368
  %1370 = vrot.lane.b32.xlu0 %v488, 16
  %v1371 = vpop.permute.xlu0 %1370
  %1372 = vrot.lane.b32.xlu0 %v491, 16
  %v1373 = vpop.permute.xlu0 %1372
  %1374 = vrot.lane.b32.xlu0 %v493, 16
  %v1375 = vpop.permute.xlu0 %1374
  %1376 = vrot.lane.b32.xlu0 %v496, 16
  %v1377 = vpop.permute.xlu0 %1376
  %1378 = vrot.lane.b32.xlu0 %v498, 16
  %v1379 = vpop.permute.xlu0 %1378
  %1380 = vrot.lane.b32.xlu0 %v501, 16
  %v1381 = vpop.permute.xlu0 %1380
  %1382 = vrot.lane.b32.xlu0 %v503, 16
  %v1383 = vpop.permute.xlu0 %1382
  %1384 = vrot.lane.b32.xlu0 %v506, 16
  %v1385 = vpop.permute.xlu0 %1384
  %1386 = vrot.lane.b32.xlu0 %v508, 16
  %v1387 = vpop.permute.xlu0 %1386
  %1388 = vrot.lane.b32.xlu0 %v511, 16
  %v1389 = vpop.permute.xlu0 %1388
  %1390 = vrot.lane.b32.xlu0 %v513, 16
  %v1391 = vpop.permute.xlu0 %1390
  %1392 = vrot.lane.b32.xlu0 %v516, 16
  %v1393 = vpop.permute.xlu0 %1392
  %1394 = vrot.lane.b32.xlu0 %v518, 16
  %v1395 = vpop.permute.xlu0 %1394
  %1396 = vrot.lane.b32.xlu0 %v521, 16
  %v1397 = vpop.permute.xlu0 %1396
  %1398 = vrot.lane.b32.xlu0 %v523, 16
  %v1399 = vpop.permute.xlu0 %1398
  %1400 = vrot.lane.b32.xlu0 %v526, 16
  %v1401 = vpop.permute.xlu0 %1400
  %1402 = vrot.lane.b32.xlu0 %v528, 16
  %v1403 = vpop.permute.xlu0 %1402
  %1404 = vrot.lane.b32.xlu0 %v531, 16
  %v1405 = vpop.permute.xlu0 %1404
  %1406 = vrot.lane.b32.xlu0 %v533, 16
  %v1407 = vpop.permute.xlu0 %1406
  %1408 = vrot.lane.b32.xlu0 %v536, 16
  %v1409 = vpop.permute.xlu0 %1408
  %1410 = vrot.lane.b32.xlu0 %v538, 16
  %v1411 = vpop.permute.xlu0 %1410
  %1412 = vrot.lane.b32.xlu0 %v541, 16
  %v1413 = vpop.permute.xlu0 %1412
  %1414 = vrot.lane.b32.xlu0 %v543, 16
  %v1415 = vpop.permute.xlu0 %1414
  %1416 = vrot.lane.b32.xlu0 %v546, 16
  %v1417 = vpop.permute.xlu0 %1416
  %1418 = vrot.lane.b32.xlu0 %v548, 16
  %v1419 = vpop.permute.xlu0 %1418
  %1420 = vrot.lane.b32.xlu0 %v551, 16
  %v1421 = vpop.permute.xlu0 %1420
  %1422 = vrot.lane.b32.xlu0 %v553, 16
  %v1423 = vpop.permute.xlu0 %1422
  %1424 = vrot.lane.b32.xlu0 %v556, 16
  %v1425 = vpop.permute.xlu0 %1424
  %1426 = vrot.lane.b32.xlu0 %v558, 16
  %v1427 = vpop.permute.xlu0 %1426
  %1428 = vrot.lane.b32.xlu0 %v1360, 16
  %v1429 = vpop.permute.xlu0 %1428
  %1430 = vrot.lane.b32.xlu0 %v1362, 16
  %v1431 = vpop.permute.xlu0 %1430
  %1432 = vrot.lane.b32.xlu0 %v561, 16
  %v1433 = vpop.permute.xlu0 %1432
  %1434 = vrot.lane.b32.xlu0 %v563, 16
  %v1435 = vpop.permute.xlu0 %1434
  %1436 = vrot.lane.b32.xlu0 %v566, 16
  %v1437 = vpop.permute.xlu0 %1436
  %1438 = vrot.lane.b32.xlu0 %v568, 16
  %v1439 = vpop.permute.xlu0 %1438
  %1440 = vrot.lane.b32.xlu0 %v571, 16
  %v1441 = vpop.permute.xlu0 %1440
  %1442 = vrot.lane.b32.xlu0 %v573, 16
  %v1443 = vpop.permute.xlu0 %1442
  %1444 = vrot.lane.b32.xlu0 %v576, 16
  %v1445 = vpop.permute.xlu0 %1444
  %1446 = vrot.lane.b32.xlu0 %v578, 16
  %v1447 = vpop.permute.xlu0 %1446
  %1448 = vrot.lane.b32.xlu0 %v581, 16
  %v1449 = vpop.permute.xlu0 %1448
  %1450 = vrot.lane.b32.xlu0 %v583, 16
  %v1451 = vpop.permute.xlu0 %1450
  %1452 = vrot.lane.b32.xlu0 %v586, 16
  %v1453 = vpop.permute.xlu0 %1452
  %1454 = vrot.lane.b32.xlu0 %v588, 16
  %v1455 = vpop.permute.xlu0 %1454
  %1456 = vrot.lane.b32.xlu0 %v591, 16
  %v1457 = vpop.permute.xlu0 %1456
  %1458 = vrot.lane.b32.xlu0 %v593, 16
  %v1459 = vpop.permute.xlu0 %1458
  %1460 = vrot.lane.b32.xlu0 %v596, 16
  %v1461 = vpop.permute.xlu0 %1460
  %1462 = vrot.lane.b32.xlu0 %v598, 16
  %v1463 = vpop.permute.xlu0 %1462
  %1464 = vrot.lane.b32.xlu0 %v601, 16
  %v1465 = vpop.permute.xlu0 %1464
  %1466 = vrot.lane.b32.xlu0 %v603, 16
  %v1467 = vpop.permute.xlu0 %1466
  %1468 = vrot.lane.b32.xlu0 %v606, 16
  %v1469 = vpop.permute.xlu0 %1468
  %1470 = vrot.lane.b32.xlu0 %v608, 16
  %v1471 = vpop.permute.xlu0 %1470
  %1472 = vrot.lane.b32.xlu0 %v611, 16
  %v1473 = vpop.permute.xlu0 %1472
  %1474 = vrot.lane.b32.xlu0 %v613, 16
  %v1475 = vpop.permute.xlu0 %1474
  %1476 = vrot.lane.b32.xlu0 %v616, 16
  %v1477 = vpop.permute.xlu0 %1476
  %1478 = vrot.lane.b32.xlu0 %v618, 16
  %v1479 = vpop.permute.xlu0 %1478
  %1480 = vrot.lane.b32.xlu0 %v621, 16
  %v1481 = vpop.permute.xlu0 %1480
  %1482 = vrot.lane.b32.xlu0 %v623, 16
  %v1483 = vpop.permute.xlu0 %1482
  %1484 = vrot.lane.b32.xlu0 %v626, 16
  %v1485 = vpop.permute.xlu0 %1484
  %1486 = vrot.lane.b32.xlu0 %v628, 16
  %v1487 = vpop.permute.xlu0 %1486
  %1488 = vrot.lane.b32.xlu0 %v631, 16
  %v1489 = vpop.permute.xlu0 %1488
  %1490 = vrot.lane.b32.xlu0 %v633, 16
  %v1491 = vpop.permute.xlu0 %1490
  %1492 = vrot.lane.b32.xlu0 %v1365, 16
  %v1493 = vpop.permute.xlu0 %1492
  %1494 = vrot.lane.b32.xlu0 %v1367, 16
  %v1495 = vpop.permute.xlu0 %1494
  %v1560 = vrot.slane %v366, 2
  %v1561 = vrot.slane %v205, 2
  %v1562 = vsel %vm820, %v1560, %v1561
  %v1563 = vrot.slane %v399, 2
  %v1564 = vsel %vm820, %v1561, %v1563
  %v1565 = vrot.slane %v382, 2
  %v1566 = vrot.slane %v253, 2
  %v1567 = vsel %vm820, %v1565, %v1566
  %v1568 = vrot.slane %v415, 2
  %v1569 = vsel %vm820, %v1566, %v1568
  %1570 = vrot.lane.b32.xlu0 %v828, 20
  %v1571 = vpop.permute.xlu0 %1570
  %1572 = vrot.lane.b32.xlu0 %v830, 20
  %v1573 = vpop.permute.xlu0 %1572
  %1574 = vrot.lane.b32.xlu0 %v833, 20
  %v1575 = vpop.permute.xlu0 %1574
  %1576 = vrot.lane.b32.xlu0 %v835, 20
  %v1577 = vpop.permute.xlu0 %1576
  %1578 = vrot.lane.b32.xlu0 %v838, 20
  %v1579 = vpop.permute.xlu0 %1578
  %1580 = vrot.lane.b32.xlu0 %v840, 20
  %v1581 = vpop.permute.xlu0 %1580
  %1582 = vrot.lane.b32.xlu0 %v843, 20
  %v1583 = vpop.permute.xlu0 %1582
  %1584 = vrot.lane.b32.xlu0 %v845, 20
  %v1585 = vpop.permute.xlu0 %1584
  %1586 = vrot.lane.b32.xlu0 %v848, 20
  %v1587 = vpop.permute.xlu0 %1586
  %1588 = vrot.lane.b32.xlu0 %v850, 20
  %v1589 = vpop.permute.xlu0 %1588
  %1590 = vrot.lane.b32.xlu0 %v853, 20
  %v1591 = vpop.permute.xlu0 %1590
  %1592 = vrot.lane.b32.xlu0 %v855, 20
  %v1593 = vpop.permute.xlu0 %1592
  %1594 = vrot.lane.b32.xlu0 %v858, 20
  %v1595 = vpop.permute.xlu0 %1594
  %1596 = vrot.lane.b32.xlu0 %v860, 20
  %v1597 = vpop.permute.xlu0 %1596
  %1598 = vrot.lane.b32.xlu0 %v863, 20
  %v1599 = vpop.permute.xlu0 %1598
  %1600 = vrot.lane.b32.xlu0 %v865, 20
  %v1601 = vpop.permute.xlu0 %1600
  %1602 = vrot.lane.b32.xlu0 %v868, 20
  %v1603 = vpop.permute.xlu0 %1602
  %1604 = vrot.lane.b32.xlu0 %v870, 20
  %v1605 = vpop.permute.xlu0 %1604
  %1606 = vrot.lane.b32.xlu0 %v873, 20
  %v1607 = vpop.permute.xlu0 %1606
  %1608 = vrot.lane.b32.xlu0 %v875, 20
  %v1609 = vpop.permute.xlu0 %1608
  %1610 = vrot.lane.b32.xlu0 %v878, 20
  %v1611 = vpop.permute.xlu0 %1610
  %1612 = vrot.lane.b32.xlu0 %v880, 20
  %v1613 = vpop.permute.xlu0 %1612
  %1614 = vrot.lane.b32.xlu0 %v883, 20
  %v1615 = vpop.permute.xlu0 %1614
  %1616 = vrot.lane.b32.xlu0 %v885, 20
  %v1617 = vpop.permute.xlu0 %1616
  %1618 = vrot.lane.b32.xlu0 %v888, 20
  %v1619 = vpop.permute.xlu0 %1618
  %1620 = vrot.lane.b32.xlu0 %v890, 20
  %v1621 = vpop.permute.xlu0 %1620
  %1622 = vrot.lane.b32.xlu0 %v893, 20
  %v1623 = vpop.permute.xlu0 %1622
  %1624 = vrot.lane.b32.xlu0 %v895, 20
  %v1625 = vpop.permute.xlu0 %1624
  %1626 = vrot.lane.b32.xlu0 %v898, 20
  %v1627 = vpop.permute.xlu0 %1626
  %1628 = vrot.lane.b32.xlu0 %v900, 20
  %v1629 = vpop.permute.xlu0 %1628
  %1630 = vrot.lane.b32.xlu0 %v1562, 20
  %v1631 = vpop.permute.xlu0 %1630
  %1632 = vrot.lane.b32.xlu0 %v1564, 20
  %v1633 = vpop.permute.xlu0 %1632
  %1634 = vrot.lane.b32.xlu0 %v903, 20
  %v1635 = vpop.permute.xlu0 %1634
  %1636 = vrot.lane.b32.xlu0 %v905, 20
  %v1637 = vpop.permute.xlu0 %1636
  %1638 = vrot.lane.b32.xlu0 %v908, 20
  %v1639 = vpop.permute.xlu0 %1638
  %1640 = vrot.lane.b32.xlu0 %v910, 20
  %v1641 = vpop.permute.xlu0 %1640
  %1642 = vrot.lane.b32.xlu0 %v913, 20
  %v1643 = vpop.permute.xlu0 %1642
  %1644 = vrot.lane.b32.xlu0 %v915, 20
  %v1645 = vpop.permute.xlu0 %1644
  %1646 = vrot.lane.b32.xlu0 %v918, 20
  %v1647 = vpop.permute.xlu0 %1646
  %1648 = vrot.lane.b32.xlu0 %v920, 20
  %v1649 = vpop.permute.xlu0 %1648
  %1650 = vrot.lane.b32.xlu0 %v923, 20
  %v1651 = vpop.permute.xlu0 %1650
  %1652 = vrot.lane.b32.xlu0 %v925, 20
  %v1653 = vpop.permute.xlu0 %1652
  %1654 = vrot.lane.b32.xlu0 %v928, 20
  %v1655 = vpop.permute.xlu0 %1654
  %1656 = vrot.lane.b32.xlu0 %v930, 20
  %v1657 = vpop.permute.xlu0 %1656
  %1658 = vrot.lane.b32.xlu0 %v933, 20
  %v1659 = vpop.permute.xlu0 %1658
  %1660 = vrot.lane.b32.xlu0 %v935, 20
  %v1661 = vpop.permute.xlu0 %1660
  %1662 = vrot.lane.b32.xlu0 %v938, 20
  %v1663 = vpop.permute.xlu0 %1662
  %1664 = vrot.lane.b32.xlu0 %v940, 20
  %v1665 = vpop.permute.xlu0 %1664
  %1666 = vrot.lane.b32.xlu0 %v943, 20
  %v1667 = vpop.permute.xlu0 %1666
  %1668 = vrot.lane.b32.xlu0 %v945, 20
  %v1669 = vpop.permute.xlu0 %1668
  %1670 = vrot.lane.b32.xlu0 %v948, 20
  %v1671 = vpop.permute.xlu0 %1670
  %1672 = vrot.lane.b32.xlu0 %v950, 20
  %v1673 = vpop.permute.xlu0 %1672
  %1674 = vrot.lane.b32.xlu0 %v953, 20
  %v1675 = vpop.permute.xlu0 %1674
  %1676 = vrot.lane.b32.xlu0 %v955, 20
  %v1677 = vpop.permute.xlu0 %1676
  %1678 = vrot.lane.b32.xlu0 %v958, 20
  %v1679 = vpop.permute.xlu0 %1678
  %1680 = vrot.lane.b32.xlu0 %v960, 20
  %v1681 = vpop.permute.xlu0 %1680
  %1682 = vrot.lane.b32.xlu0 %v963, 20
  %v1683 = vpop.permute.xlu0 %1682
  %1684 = vrot.lane.b32.xlu0 %v965, 20
  %v1685 = vpop.permute.xlu0 %1684
  %1686 = vrot.lane.b32.xlu0 %v968, 20
  %v1687 = vpop.permute.xlu0 %1686
  %1688 = vrot.lane.b32.xlu0 %v970, 20
  %v1689 = vpop.permute.xlu0 %1688
  %1690 = vrot.lane.b32.xlu0 %v973, 20
  %v1691 = vpop.permute.xlu0 %1690
  %1692 = vrot.lane.b32.xlu0 %v975, 20
  %v1693 = vpop.permute.xlu0 %1692
  %1694 = vrot.lane.b32.xlu0 %v1567, 20
  %v1695 = vpop.permute.xlu0 %1694
  %1696 = vrot.lane.b32.xlu0 %v1569, 20
  %v1697 = vpop.permute.xlu0 %1696
  %1762 = vrot.lane.b32.xlu0 %v352, 24
  %v1763 = vpop.permute.xlu0 %1762
  %1764 = vrot.lane.b32.xlu0 %v163, 24
  %v1765 = vpop.permute.xlu0 %1764
  %1766 = vrot.lane.b32.xlu0 %v353, 24
  %v1767 = vpop.permute.xlu0 %1766
  %1768 = vrot.lane.b32.xlu0 %v166, 24
  %v1769 = vpop.permute.xlu0 %1768
  %1770 = vrot.lane.b32.xlu0 %v354, 24
  %v1771 = vpop.permute.xlu0 %1770
  %1772 = vrot.lane.b32.xlu0 %v169, 24
  %v1773 = vpop.permute.xlu0 %1772
  %1774 = vrot.lane.b32.xlu0 %v355, 24
  %v1775 = vpop.permute.xlu0 %1774
  %1776 = vrot.lane.b32.xlu0 %v172, 24
  %v1777 = vpop.permute.xlu0 %1776
  %1778 = vrot.lane.b32.xlu0 %v356, 24
  %v1779 = vpop.permute.xlu0 %1778
  %1780 = vrot.lane.b32.xlu0 %v175, 24
  %v1781 = vpop.permute.xlu0 %1780
  %1782 = vrot.lane.b32.xlu0 %v357, 24
  %v1783 = vpop.permute.xlu0 %1782
  %1784 = vrot.lane.b32.xlu0 %v178, 24
  %v1785 = vpop.permute.xlu0 %1784
  %1786 = vrot.lane.b32.xlu0 %v358, 24
  %v1787 = vpop.permute.xlu0 %1786
  %1788 = vrot.lane.b32.xlu0 %v181, 24
  %v1789 = vpop.permute.xlu0 %1788
  %1790 = vrot.lane.b32.xlu0 %v359, 24
  %v1791 = vpop.permute.xlu0 %1790
  %1792 = vrot.lane.b32.xlu0 %v184, 24
  %v1793 = vpop.permute.xlu0 %1792
  %1794 = vrot.lane.b32.xlu0 %v360, 24
  %v1795 = vpop.permute.xlu0 %1794
  %1796 = vrot.lane.b32.xlu0 %v187, 24
  %v1797 = vpop.permute.xlu0 %1796
  %1798 = vrot.lane.b32.xlu0 %v361, 24
  %v1799 = vpop.permute.xlu0 %1798
  %1800 = vrot.lane.b32.xlu0 %v190, 24
  %v1801 = vpop.permute.xlu0 %1800
  %1802 = vrot.lane.b32.xlu0 %v362, 24
  %v1803 = vpop.permute.xlu0 %1802
  %1804 = vrot.lane.b32.xlu0 %v193, 24
  %v1805 = vpop.permute.xlu0 %1804
  %1806 = vrot.lane.b32.xlu0 %v363, 24
  %v1807 = vpop.permute.xlu0 %1806
  %1808 = vrot.lane.b32.xlu0 %v196, 24
  %v1809 = vpop.permute.xlu0 %1808
  %1810 = vrot.lane.b32.xlu0 %v364, 24
  %v1811 = vpop.permute.xlu0 %1810
  %1812 = vrot.lane.b32.xlu0 %v199, 24
  %v1813 = vpop.permute.xlu0 %1812
  %1814 = vrot.lane.b32.xlu0 %v365, 24
  %v1815 = vpop.permute.xlu0 %1814
  %1816 = vrot.lane.b32.xlu0 %v202, 24
  %v1817 = vpop.permute.xlu0 %1816
  %1818 = vrot.lane.b32.xlu0 %v366, 24
  %v1819 = vpop.permute.xlu0 %1818
  %1820 = vrot.lane.b32.xlu0 %v205, 24
  %v1821 = vpop.permute.xlu0 %1820
  %1822 = vrot.lane.b32.xlu0 %v350, 24
  %v1823 = vpop.permute.xlu0 %1822
  %1824 = vrot.lane.b32.xlu0 %v157, 24
  %v1825 = vpop.permute.xlu0 %1824
  %1826 = vrot.lane.b32.xlu0 %v368, 24
  %v1827 = vpop.permute.xlu0 %1826
  %1828 = vrot.lane.b32.xlu0 %v211, 24
  %v1829 = vpop.permute.xlu0 %1828
  %1830 = vrot.lane.b32.xlu0 %v369, 24
  %v1831 = vpop.permute.xlu0 %1830
  %1832 = vrot.lane.b32.xlu0 %v214, 24
  %v1833 = vpop.permute.xlu0 %1832
  %1834 = vrot.lane.b32.xlu0 %v370, 24
  %v1835 = vpop.permute.xlu0 %1834
  %1836 = vrot.lane.b32.xlu0 %v217, 24
  %v1837 = vpop.permute.xlu0 %1836
  %1838 = vrot.lane.b32.xlu0 %v371, 24
  %v1839 = vpop.permute.xlu0 %1838
  %1840 = vrot.lane.b32.xlu0 %v220, 24
  %v1841 = vpop.permute.xlu0 %1840
  %1842 = vrot.lane.b32.xlu0 %v372, 24
  %v1843 = vpop.permute.xlu0 %1842
  %1844 = vrot.lane.b32.xlu0 %v223, 24
  %v1845 = vpop.permute.xlu0 %1844
  %1846 = vrot.lane.b32.xlu0 %v373, 24
  %v1847 = vpop.permute.xlu0 %1846
  %1848 = vrot.lane.b32.xlu0 %v226, 24
  %v1849 = vpop.permute.xlu0 %1848
  %1850 = vrot.lane.b32.xlu0 %v374, 24
  %v1851 = vpop.permute.xlu0 %1850
  %1852 = vrot.lane.b32.xlu0 %v229, 24
  %v1853 = vpop.permute.xlu0 %1852
  %1854 = vrot.lane.b32.xlu0 %v375, 24
  %v1855 = vpop.permute.xlu0 %1854
  %1856 = vrot.lane.b32.xlu0 %v232, 24
  %v1857 = vpop.permute.xlu0 %1856
  %1858 = vrot.lane.b32.xlu0 %v376, 24
  %v1859 = vpop.permute.xlu0 %1858
  %1860 = vrot.lane.b32.xlu0 %v235, 24
  %v1861 = vpop.permute.xlu0 %1860
  %1862 = vrot.lane.b32.xlu0 %v377, 24
  %v1863 = vpop.permute.xlu0 %1862
  %1864 = vrot.lane.b32.xlu0 %v238, 24
  %v1865 = vpop.permute.xlu0 %1864
  %1866 = vrot.lane.b32.xlu0 %v378, 24
  %v1867 = vpop.permute.xlu0 %1866
  %1868 = vrot.lane.b32.xlu0 %v241, 24
  %v1869 = vpop.permute.xlu0 %1868
  %1870 = vrot.lane.b32.xlu0 %v379, 24
  %v1871 = vpop.permute.xlu0 %1870
  %1872 = vrot.lane.b32.xlu0 %v244, 24
  %v1873 = vpop.permute.xlu0 %1872
  %1874 = vrot.lane.b32.xlu0 %v380, 24
  %v1875 = vpop.permute.xlu0 %1874
  %1876 = vrot.lane.b32.xlu0 %v247, 24
  %v1877 = vpop.permute.xlu0 %1876
  %1878 = vrot.lane.b32.xlu0 %v381, 24
  %v1879 = vpop.permute.xlu0 %1878
  %1880 = vrot.lane.b32.xlu0 %v250, 24
  %v1881 = vpop.permute.xlu0 %1880
  %1882 = vrot.lane.b32.xlu0 %v382, 24
  %v1883 = vpop.permute.xlu0 %1882
  %1884 = vrot.lane.b32.xlu0 %v253, 24
  %v1885 = vpop.permute.xlu0 %1884
  %1948 = vrot.lane.b32.xlu0 %v491, 28
  %v1949 = vpop.permute.xlu0 %1948
  %1950 = vrot.lane.b32.xlu0 %v493, 28
  %v1951 = vpop.permute.xlu0 %1950
  %1952 = vrot.lane.b32.xlu0 %v496, 28
  %v1953 = vpop.permute.xlu0 %1952
  %1954 = vrot.lane.b32.xlu0 %v498, 28
  %v1955 = vpop.permute.xlu0 %1954
  %1956 = vrot.lane.b32.xlu0 %v501, 28
  %v1957 = vpop.permute.xlu0 %1956
  %1958 = vrot.lane.b32.xlu0 %v503, 28
  %v1959 = vpop.permute.xlu0 %1958
  %1960 = vrot.lane.b32.xlu0 %v506, 28
  %v1961 = vpop.permute.xlu0 %1960
  %1962 = vrot.lane.b32.xlu0 %v508, 28
  %v1963 = vpop.permute.xlu0 %1962
  %1964 = vrot.lane.b32.xlu0 %v511, 28
  %v1965 = vpop.permute.xlu0 %1964
  %1966 = vrot.lane.b32.xlu0 %v513, 28
  %v1967 = vpop.permute.xlu0 %1966
  %1968 = vrot.lane.b32.xlu0 %v516, 28
  %v1969 = vpop.permute.xlu0 %1968
  %1970 = vrot.lane.b32.xlu0 %v518, 28
  %v1971 = vpop.permute.xlu0 %1970
  %1972 = vrot.lane.b32.xlu0 %v521, 28
  %v1973 = vpop.permute.xlu0 %1972
  %1974 = vrot.lane.b32.xlu0 %v523, 28
  %v1975 = vpop.permute.xlu0 %1974
  %1976 = vrot.lane.b32.xlu0 %v526, 28
  %v1977 = vpop.permute.xlu0 %1976
  %1978 = vrot.lane.b32.xlu0 %v528, 28
  %v1979 = vpop.permute.xlu0 %1978
  %1980 = vrot.lane.b32.xlu0 %v531, 28
  %v1981 = vpop.permute.xlu0 %1980
  %1982 = vrot.lane.b32.xlu0 %v533, 28
  %v1983 = vpop.permute.xlu0 %1982
  %1984 = vrot.lane.b32.xlu0 %v536, 28
  %v1985 = vpop.permute.xlu0 %1984
  %1986 = vrot.lane.b32.xlu0 %v538, 28
  %v1987 = vpop.permute.xlu0 %1986
  %1988 = vrot.lane.b32.xlu0 %v541, 28
  %v1989 = vpop.permute.xlu0 %1988
  %1990 = vrot.lane.b32.xlu0 %v543, 28
  %v1991 = vpop.permute.xlu0 %1990
  %1992 = vrot.lane.b32.xlu0 %v546, 28
  %v1993 = vpop.permute.xlu0 %1992
  %1994 = vrot.lane.b32.xlu0 %v548, 28
  %v1995 = vpop.permute.xlu0 %1994
  %1996 = vrot.lane.b32.xlu0 %v551, 28
  %v1997 = vpop.permute.xlu0 %1996
  %1998 = vrot.lane.b32.xlu0 %v553, 28
  %v1999 = vpop.permute.xlu0 %1998
  %2000 = vrot.lane.b32.xlu0 %v556, 28
  %v2001 = vpop.permute.xlu0 %2000
  %2002 = vrot.lane.b32.xlu0 %v558, 28
  %v2003 = vpop.permute.xlu0 %2002
  %2004 = vrot.lane.b32.xlu0 %v1360, 28
  %v2005 = vpop.permute.xlu0 %2004
  %2006 = vrot.lane.b32.xlu0 %v1362, 28
  %v2007 = vpop.permute.xlu0 %2006
  %2008 = vrot.lane.b32.xlu0 %v481, 28
  %v2009 = vpop.permute.xlu0 %2008
  %2010 = vrot.lane.b32.xlu0 %v483, 28
  %v2011 = vpop.permute.xlu0 %2010
  %2012 = vrot.lane.b32.xlu0 %v566, 28
  %v2013 = vpop.permute.xlu0 %2012
  %2014 = vrot.lane.b32.xlu0 %v568, 28
  %v2015 = vpop.permute.xlu0 %2014
  %2016 = vrot.lane.b32.xlu0 %v571, 28
  %v2017 = vpop.permute.xlu0 %2016
  %2018 = vrot.lane.b32.xlu0 %v573, 28
  %v2019 = vpop.permute.xlu0 %2018
  %2020 = vrot.lane.b32.xlu0 %v576, 28
  %v2021 = vpop.permute.xlu0 %2020
  %2022 = vrot.lane.b32.xlu0 %v578, 28
  %v2023 = vpop.permute.xlu0 %2022
  %2024 = vrot.lane.b32.xlu0 %v581, 28
  %v2025 = vpop.permute.xlu0 %2024
  %2026 = vrot.lane.b32.xlu0 %v583, 28
  %v2027 = vpop.permute.xlu0 %2026
  %2028 = vrot.lane.b32.xlu0 %v586, 28
  %v2029 = vpop.permute.xlu0 %2028
  %2030 = vrot.lane.b32.xlu0 %v588, 28
  %v2031 = vpop.permute.xlu0 %2030
  %2032 = vrot.lane.b32.xlu0 %v591, 28
  %v2033 = vpop.permute.xlu0 %2032
  %2034 = vrot.lane.b32.xlu0 %v593, 28
  %v2035 = vpop.permute.xlu0 %2034
  %2036 = vrot.lane.b32.xlu0 %v596, 28
  %v2037 = vpop.permute.xlu0 %2036
  %2038 = vrot.lane.b32.xlu0 %v598, 28
  %v2039 = vpop.permute.xlu0 %2038
  %2040 = vrot.lane.b32.xlu0 %v601, 28
  %v2041 = vpop.permute.xlu0 %2040
  %2042 = vrot.lane.b32.xlu0 %v603, 28
  %v2043 = vpop.permute.xlu0 %2042
  %2044 = vrot.lane.b32.xlu0 %v606, 28
  %v2045 = vpop.permute.xlu0 %2044
  %2046 = vrot.lane.b32.xlu0 %v608, 28
  %v2047 = vpop.permute.xlu0 %2046
  %2048 = vrot.lane.b32.xlu0 %v611, 28
  %v2049 = vpop.permute.xlu0 %2048
  %2050 = vrot.lane.b32.xlu0 %v613, 28
  %v2051 = vpop.permute.xlu0 %2050
  %2052 = vrot.lane.b32.xlu0 %v616, 28
  %v2053 = vpop.permute.xlu0 %2052
  %2054 = vrot.lane.b32.xlu0 %v618, 28
  %v2055 = vpop.permute.xlu0 %2054
  %2056 = vrot.lane.b32.xlu0 %v621, 28
  %v2057 = vpop.permute.xlu0 %2056
  %2058 = vrot.lane.b32.xlu0 %v623, 28
  %v2059 = vpop.permute.xlu0 %2058
  %2060 = vrot.lane.b32.xlu0 %v626, 28
  %v2061 = vpop.permute.xlu0 %2060
  %2062 = vrot.lane.b32.xlu0 %v628, 28
  %v2063 = vpop.permute.xlu0 %2062
  %2064 = vrot.lane.b32.xlu0 %v631, 28
  %v2065 = vpop.permute.xlu0 %2064
  %2066 = vrot.lane.b32.xlu0 %v633, 28
  %v2067 = vpop.permute.xlu0 %2066
  %2068 = vrot.lane.b32.xlu0 %v1365, 28
  %v2069 = vpop.permute.xlu0 %2068
  %2070 = vrot.lane.b32.xlu0 %v1367, 28
  %v2071 = vpop.permute.xlu0 %2070
  %2134 = vrot.lane.b32.xlu0 %v833, 32
  %v2135 = vpop.permute.xlu0 %2134
  %2136 = vrot.lane.b32.xlu0 %v835, 32
  %v2137 = vpop.permute.xlu0 %2136
  %2138 = vrot.lane.b32.xlu0 %v838, 32
  %v2139 = vpop.permute.xlu0 %2138
  %2140 = vrot.lane.b32.xlu0 %v840, 32
  %v2141 = vpop.permute.xlu0 %2140
  %2142 = vrot.lane.b32.xlu0 %v843, 32
  %v2143 = vpop.permute.xlu0 %2142
  %2144 = vrot.lane.b32.xlu0 %v845, 32
  %v2145 = vpop.permute.xlu0 %2144
  %2146 = vrot.lane.b32.xlu0 %v848, 32
  %v2147 = vpop.permute.xlu0 %2146
  %2148 = vrot.lane.b32.xlu0 %v850, 32
  %v2149 = vpop.permute.xlu0 %2148
  %2150 = vrot.lane.b32.xlu0 %v853, 32
  %v2151 = vpop.permute.xlu0 %2150
  %2152 = vrot.lane.b32.xlu0 %v855, 32
  %v2153 = vpop.permute.xlu0 %2152
  %2154 = vrot.lane.b32.xlu0 %v858, 32
  %v2155 = vpop.permute.xlu0 %2154
  %2156 = vrot.lane.b32.xlu0 %v860, 32
  %v2157 = vpop.permute.xlu0 %2156
  %2158 = vrot.lane.b32.xlu0 %v863, 32
  %v2159 = vpop.permute.xlu0 %2158
  %2160 = vrot.lane.b32.xlu0 %v865, 32
  %v2161 = vpop.permute.xlu0 %2160
  %2162 = vrot.lane.b32.xlu0 %v868, 32
  %v2163 = vpop.permute.xlu0 %2162
  %2164 = vrot.lane.b32.xlu0 %v870, 32
  %v2165 = vpop.permute.xlu0 %2164
  %2166 = vrot.lane.b32.xlu0 %v873, 32
  %v2167 = vpop.permute.xlu0 %2166
  %2168 = vrot.lane.b32.xlu0 %v875, 32
  %v2169 = vpop.permute.xlu0 %2168
  %2170 = vrot.lane.b32.xlu0 %v878, 32
  %v2171 = vpop.permute.xlu0 %2170
  %2172 = vrot.lane.b32.xlu0 %v880, 32
  %v2173 = vpop.permute.xlu0 %2172
  %2174 = vrot.lane.b32.xlu0 %v883, 32
  %v2175 = vpop.permute.xlu0 %2174
  %2176 = vrot.lane.b32.xlu0 %v885, 32
  %v2177 = vpop.permute.xlu0 %2176
  %2178 = vrot.lane.b32.xlu0 %v888, 32
  %v2179 = vpop.permute.xlu0 %2178
  %2180 = vrot.lane.b32.xlu0 %v890, 32
  %v2181 = vpop.permute.xlu0 %2180
  %2182 = vrot.lane.b32.xlu0 %v893, 32
  %v2183 = vpop.permute.xlu0 %2182
  %2184 = vrot.lane.b32.xlu0 %v895, 32
  %v2185 = vpop.permute.xlu0 %2184
  %2186 = vrot.lane.b32.xlu0 %v898, 32
  %v2187 = vpop.permute.xlu0 %2186
  %2188 = vrot.lane.b32.xlu0 %v900, 32
  %v2189 = vpop.permute.xlu0 %2188
  %2190 = vrot.lane.b32.xlu0 %v1562, 32
  %v2191 = vpop.permute.xlu0 %2190
  %2192 = vrot.lane.b32.xlu0 %v1564, 32
  %v2193 = vpop.permute.xlu0 %2192
  %2194 = vrot.lane.b32.xlu0 %v823, 32
  %v2195 = vpop.permute.xlu0 %2194
  %2196 = vrot.lane.b32.xlu0 %v825, 32
  %v2197 = vpop.permute.xlu0 %2196
  %2198 = vrot.lane.b32.xlu0 %v908, 32
  %v2199 = vpop.permute.xlu0 %2198
  %2200 = vrot.lane.b32.xlu0 %v910, 32
  %v2201 = vpop.permute.xlu0 %2200
  %2202 = vrot.lane.b32.xlu0 %v913, 32
  %v2203 = vpop.permute.xlu0 %2202
  %2204 = vrot.lane.b32.xlu0 %v915, 32
  %v2205 = vpop.permute.xlu0 %2204
  %2206 = vrot.lane.b32.xlu0 %v918, 32
  %v2207 = vpop.permute.xlu0 %2206
  %2208 = vrot.lane.b32.xlu0 %v920, 32
  %v2209 = vpop.permute.xlu0 %2208
  %2210 = vrot.lane.b32.xlu0 %v923, 32
  %v2211 = vpop.permute.xlu0 %2210
  %2212 = vrot.lane.b32.xlu0 %v925, 32
  %v2213 = vpop.permute.xlu0 %2212
  %2214 = vrot.lane.b32.xlu0 %v928, 32
  %v2215 = vpop.permute.xlu0 %2214
  %2216 = vrot.lane.b32.xlu0 %v930, 32
  %v2217 = vpop.permute.xlu0 %2216
  %2218 = vrot.lane.b32.xlu0 %v933, 32
  %v2219 = vpop.permute.xlu0 %2218
  %2220 = vrot.lane.b32.xlu0 %v935, 32
  %v2221 = vpop.permute.xlu0 %2220
  %2222 = vrot.lane.b32.xlu0 %v938, 32
  %v2223 = vpop.permute.xlu0 %2222
  %2224 = vrot.lane.b32.xlu0 %v940, 32
  %v2225 = vpop.permute.xlu0 %2224
  %2226 = vrot.lane.b32.xlu0 %v943, 32
  %v2227 = vpop.permute.xlu0 %2226
  %2228 = vrot.lane.b32.xlu0 %v945, 32
  %v2229 = vpop.permute.xlu0 %2228
  %2230 = vrot.lane.b32.xlu0 %v948, 32
  %v2231 = vpop.permute.xlu0 %2230
  %2232 = vrot.lane.b32.xlu0 %v950, 32
  %v2233 = vpop.permute.xlu0 %2232
  %2234 = vrot.lane.b32.xlu0 %v953, 32
  %v2235 = vpop.permute.xlu0 %2234
  %2236 = vrot.lane.b32.xlu0 %v955, 32
  %v2237 = vpop.permute.xlu0 %2236
  %2238 = vrot.lane.b32.xlu0 %v958, 32
  %v2239 = vpop.permute.xlu0 %2238
  %2240 = vrot.lane.b32.xlu0 %v960, 32
  %v2241 = vpop.permute.xlu0 %2240
  %2242 = vrot.lane.b32.xlu0 %v963, 32
  %v2243 = vpop.permute.xlu0 %2242
  %2244 = vrot.lane.b32.xlu0 %v965, 32
  %v2245 = vpop.permute.xlu0 %2244
  %2246 = vrot.lane.b32.xlu0 %v968, 32
  %v2247 = vpop.permute.xlu0 %2246
  %2248 = vrot.lane.b32.xlu0 %v970, 32
  %v2249 = vpop.permute.xlu0 %2248
  %2250 = vrot.lane.b32.xlu0 %v973, 32
  %v2251 = vpop.permute.xlu0 %2250
  %2252 = vrot.lane.b32.xlu0 %v975, 32
  %v2253 = vpop.permute.xlu0 %2252
  %2254 = vrot.lane.b32.xlu0 %v1567, 32
  %v2255 = vpop.permute.xlu0 %2254
  %2256 = vrot.lane.b32.xlu0 %v1569, 32
  %v2257 = vpop.permute.xlu0 %2256
  %vm2320 = vcmask 31744
  %v2321 = vsel %vm2320, %v350, %v635
  %v2322 = vsel %vm2320, %v157, %v637
  %v2323 = vsel %vm2320, %v351, %v639
  %v2324 = vsel %vm2320, %v160, %v641
  %v2325 = vsel %vm2320, %v352, %v643
  %v2326 = vsel %vm2320, %v163, %v645
  %v2327 = vsel %vm2320, %v353, %v647
  %v2328 = vsel %vm2320, %v166, %v649
  %v2329 = vsel %vm2320, %v354, %v651
  %v2330 = vsel %vm2320, %v169, %v653
  %v2331 = vsel %vm2320, %v355, %v655
  %v2332 = vsel %vm2320, %v172, %v657
  %v2333 = vsel %vm2320, %v356, %v659
  %v2334 = vsel %vm2320, %v175, %v661
  %v2335 = vsel %vm2320, %v357, %v663
  %v2336 = vsel %vm2320, %v178, %v665
  %v2337 = vsel %vm2320, %v358, %v667
  %v2338 = vsel %vm2320, %v181, %v669
  %v2339 = vsel %vm2320, %v359, %v671
  %v2340 = vsel %vm2320, %v184, %v673
  %v2341 = vsel %vm2320, %v360, %v675
  %v2342 = vsel %vm2320, %v187, %v677
  %v2343 = vsel %vm2320, %v361, %v679
  %v2344 = vsel %vm2320, %v190, %v681
  %v2345 = vsel %vm2320, %v362, %v683
  %v2346 = vsel %vm2320, %v193, %v685
  %v2347 = vsel %vm2320, %v363, %v687
  %v2348 = vsel %vm2320, %v196, %v689
  %v2349 = vsel %vm2320, %v364, %v691
  %v2350 = vsel %vm2320, %v199, %v693
  %v2351 = vsel %vm2320, %v365, %v695
  %v2352 = vsel %vm2320, %v202, %v697
  %v2353 = vsel %vm2320, %v367, %v699
  %v2354 = vsel %vm2320, %v208, %v701
  %v2355 = vsel %vm2320, %v368, %v703
  %v2356 = vsel %vm2320, %v211, %v705
  %v2357 = vsel %vm2320, %v369, %v707
  %v2358 = vsel %vm2320, %v214, %v709
  %v2359 = vsel %vm2320, %v370, %v711
  %v2360 = vsel %vm2320, %v217, %v713
  %v2361 = vsel %vm2320, %v371, %v715
  %v2362 = vsel %vm2320, %v220, %v717
  %v2363 = vsel %vm2320, %v372, %v719
  %v2364 = vsel %vm2320, %v223, %v721
  %v2365 = vsel %vm2320, %v373, %v723
  %v2366 = vsel %vm2320, %v226, %v725
  %v2367 = vsel %vm2320, %v374, %v727
  %v2368 = vsel %vm2320, %v229, %v729
  %v2369 = vsel %vm2320, %v375, %v731
  %v2370 = vsel %vm2320, %v232, %v733
  %v2371 = vsel %vm2320, %v376, %v735
  %v2372 = vsel %vm2320, %v235, %v737
  %v2373 = vsel %vm2320, %v377, %v739
  %v2374 = vsel %vm2320, %v238, %v741
  %v2375 = vsel %vm2320, %v378, %v743
  %v2376 = vsel %vm2320, %v241, %v745
  %v2377 = vsel %vm2320, %v379, %v747
  %v2378 = vsel %vm2320, %v244, %v749
  %v2379 = vsel %vm2320, %v380, %v751
  %v2380 = vsel %vm2320, %v247, %v753
  %v2381 = vsel %vm2320, %v381, %v755
  %v2382 = vsel %vm2320, %v250, %v757
  %vm2383 = vcmask 64512
  %v2384 = vsel %vm2383, %v2321, %v977
  %v2385 = vsel %vm2383, %v2322, %v979
  %v2386 = vsel %vm2383, %v2323, %v981
  %v2387 = vsel %vm2383, %v2324, %v983
  %v2388 = vsel %vm2383, %v2325, %v985
  %v2389 = vsel %vm2383, %v2326, %v987
  %v2390 = vsel %vm2383, %v2327, %v989
  %v2391 = vsel %vm2383, %v2328, %v991
  %v2392 = vsel %vm2383, %v2329, %v993
  %v2393 = vsel %vm2383, %v2330, %v995
  %v2394 = vsel %vm2383, %v2331, %v997
  %v2395 = vsel %vm2383, %v2332, %v999
  %v2396 = vsel %vm2383, %v2333, %v1001
  %v2397 = vsel %vm2383, %v2334, %v1003
  %v2398 = vsel %vm2383, %v2335, %v1005
  %v2399 = vsel %vm2383, %v2336, %v1007
  %v2400 = vsel %vm2383, %v2337, %v1009
  %v2401 = vsel %vm2383, %v2338, %v1011
  %v2402 = vsel %vm2383, %v2339, %v1013
  %v2403 = vsel %vm2383, %v2340, %v1015
  %v2404 = vsel %vm2383, %v2341, %v1017
  %v2405 = vsel %vm2383, %v2342, %v1019
  %v2406 = vsel %vm2383, %v2343, %v1021
  %v2407 = vsel %vm2383, %v2344, %v1023
  %v2408 = vsel %vm2383, %v2345, %v1025
  %v2409 = vsel %vm2383, %v2346, %v1027
  %v2410 = vsel %vm2383, %v2347, %v1029
  %v2411 = vsel %vm2383, %v2348, %v1031
  %v2412 = vsel %vm2383, %v2349, %v1033
  %v2413 = vsel %vm2383, %v2350, %v1035
  %v2414 = vsel %vm2383, %v2351, %v1037
  %v2415 = vsel %vm2383, %v2352, %v1039
  %v2416 = vsel %vm2383, %v2353, %v1041
  %v2417 = vsel %vm2383, %v2354, %v1043
  %v2418 = vsel %vm2383, %v2355, %v1045
  %v2419 = vsel %vm2383, %v2356, %v1047
  %v2420 = vsel %vm2383, %v2357, %v1049
  %v2421 = vsel %vm2383, %v2358, %v1051
  %v2422 = vsel %vm2383, %v2359, %v1053
  %v2423 = vsel %vm2383, %v2360, %v1055
  %v2424 = vsel %vm2383, %v2361, %v1057
  %v2425 = vsel %vm2383, %v2362, %v1059
  %v2426 = vsel %vm2383, %v2363, %v1061
  %v2427 = vsel %vm2383, %v2364, %v1063
  %v2428 = vsel %vm2383, %v2365, %v1065
  %v2429 = vsel %vm2383, %v2366, %v1067
  %v2430 = vsel %vm2383, %v2367, %v1069
  %v2431 = vsel %vm2383, %v2368, %v1071
  %v2432 = vsel %vm2383, %v2369, %v1073
  %v2433 = vsel %vm2383, %v2370, %v1075
  %v2434 = vsel %vm2383, %v2371, %v1077
  %v2435 = vsel %vm2383, %v2372, %v1079
  %v2436 = vsel %vm2383, %v2373, %v1081
  %v2437 = vsel %vm2383, %v2374, %v1083
  %v2438 = vsel %vm2383, %v2375, %v1085
  %v2439 = vsel %vm2383, %v2376, %v1087
  %v2440 = vsel %vm2383, %v2377, %v1089
  %v2441 = vsel %vm2383, %v2378, %v1091
  %v2442 = vsel %vm2383, %v2379, %v1093
  %v2443 = vsel %vm2383, %v2380, %v1095
  %v2444 = vsel %vm2383, %v2381, %v1097
  %v2445 = vsel %vm2383, %v2382, %v1099
  %vm2446 = vcmask 97280
  %v2447 = vsel %vm2446, %v2384, %v1165
  %v2448 = vsel %vm2446, %v2385, %v1167
  %v2449 = vsel %vm2446, %v2386, %v1169
  %v2450 = vsel %vm2446, %v2387, %v1171
  %v2451 = vsel %vm2446, %v2388, %v1173
  %v2452 = vsel %vm2446, %v2389, %v1175
  %v2453 = vsel %vm2446, %v2390, %v1177
  %v2454 = vsel %vm2446, %v2391, %v1179
  %v2455 = vsel %vm2446, %v2392, %v1181
  %v2456 = vsel %vm2446, %v2393, %v1183
  %v2457 = vsel %vm2446, %v2394, %v1185
  %v2458 = vsel %vm2446, %v2395, %v1187
  %v2459 = vsel %vm2446, %v2396, %v1189
  %v2460 = vsel %vm2446, %v2397, %v1191
  %v2461 = vsel %vm2446, %v2398, %v1193
  %v2462 = vsel %vm2446, %v2399, %v1195
  %v2463 = vsel %vm2446, %v2400, %v1197
  %v2464 = vsel %vm2446, %v2401, %v1199
  %v2465 = vsel %vm2446, %v2402, %v1201
  %v2466 = vsel %vm2446, %v2403, %v1203
  %v2467 = vsel %vm2446, %v2404, %v1205
  %v2468 = vsel %vm2446, %v2405, %v1207
  %v2469 = vsel %vm2446, %v2406, %v1209
  %v2470 = vsel %vm2446, %v2407, %v1211
  %v2471 = vsel %vm2446, %v2408, %v1213
  %v2472 = vsel %vm2446, %v2409, %v1215
  %v2473 = vsel %vm2446, %v2410, %v1217
  %v2474 = vsel %vm2446, %v2411, %v1219
  %v2475 = vsel %vm2446, %v2412, %v1221
  %v2476 = vsel %vm2446, %v2413, %v1223
  %v2477 = vsel %vm2446, %v2414, %v1225
  %v2478 = vsel %vm2446, %v2415, %v1227
  %v2479 = vsel %vm2446, %v2384, %v1229
  %v2480 = vsel %vm2446, %v2385, %v1231
  %v2481 = vsel %vm2446, %v2416, %v1233
  %v2482 = vsel %vm2446, %v2417, %v1235
  %v2483 = vsel %vm2446, %v2418, %v1237
  %v2484 = vsel %vm2446, %v2419, %v1239
  %v2485 = vsel %vm2446, %v2420, %v1241
  %v2486 = vsel %vm2446, %v2421, %v1243
  %v2487 = vsel %vm2446, %v2422, %v1245
  %v2488 = vsel %vm2446, %v2423, %v1247
  %v2489 = vsel %vm2446, %v2424, %v1249
  %v2490 = vsel %vm2446, %v2425, %v1251
  %v2491 = vsel %vm2446, %v2426, %v1253
  %v2492 = vsel %vm2446, %v2427, %v1255
  %v2493 = vsel %vm2446, %v2428, %v1257
  %v2494 = vsel %vm2446, %v2429, %v1259
  %v2495 = vsel %vm2446, %v2430, %v1261
  %v2496 = vsel %vm2446, %v2431, %v1263
  %v2497 = vsel %vm2446, %v2432, %v1265
  %v2498 = vsel %vm2446, %v2433, %v1267
  %v2499 = vsel %vm2446, %v2434, %v1269
  %v2500 = vsel %vm2446, %v2435, %v1271
  %v2501 = vsel %vm2446, %v2436, %v1273
  %v2502 = vsel %vm2446, %v2437, %v1275
  %v2503 = vsel %vm2446, %v2438, %v1277
  %v2504 = vsel %vm2446, %v2439, %v1279
  %v2505 = vsel %vm2446, %v2440, %v1281
  %v2506 = vsel %vm2446, %v2441, %v1283
  %v2507 = vsel %vm2446, %v2442, %v1285
  %v2508 = vsel %vm2446, %v2443, %v1287
  %v2509 = vsel %vm2446, %v2444, %v1289
  %v2510 = vsel %vm2446, %v2445, %v1291
  %vm2511 = vcmask 130048
  %v2512 = vsel %vm2511, %v2447, %v1369
  %v2513 = vsel %vm2511, %v2448, %v1371
  %v2514 = vsel %vm2511, %v2449, %v1373
  %v2515 = vsel %vm2511, %v2450, %v1375
  %v2516 = vsel %vm2511, %v2451, %v1377
  %v2517 = vsel %vm2511, %v2452, %v1379
  %v2518 = vsel %vm2511, %v2453, %v1381
  %v2519 = vsel %vm2511, %v2454, %v1383
  %v2520 = vsel %vm2511, %v2455, %v1385
  %v2521 = vsel %vm2511, %v2456, %v1387
  %v2522 = vsel %vm2511, %v2457, %v1389
  %v2523 = vsel %vm2511, %v2458, %v1391
  %v2524 = vsel %vm2511, %v2459, %v1393
  %v2525 = vsel %vm2511, %v2460, %v1395
  %v2526 = vsel %vm2511, %v2461, %v1397
  %v2527 = vsel %vm2511, %v2462, %v1399
  %v2528 = vsel %vm2511, %v2463, %v1401
  %v2529 = vsel %vm2511, %v2464, %v1403
  %v2530 = vsel %vm2511, %v2465, %v1405
  %v2531 = vsel %vm2511, %v2466, %v1407
  %v2532 = vsel %vm2511, %v2467, %v1409
  %v2533 = vsel %vm2511, %v2468, %v1411
  %v2534 = vsel %vm2511, %v2469, %v1413
  %v2535 = vsel %vm2511, %v2470, %v1415
  %v2536 = vsel %vm2511, %v2471, %v1417
  %v2537 = vsel %vm2511, %v2472, %v1419
  %v2538 = vsel %vm2511, %v2473, %v1421
  %v2539 = vsel %vm2511, %v2474, %v1423
  %v2540 = vsel %vm2511, %v2475, %v1425
  %v2541 = vsel %vm2511, %v2476, %v1427
  %v2542 = vsel %vm2511, %v2477, %v1429
  %v2543 = vsel %vm2511, %v2478, %v1431
  %v2544 = vsel %vm2511, %v2479, %v1433
  %v2545 = vsel %vm2511, %v2480, %v1435
  %v2546 = vsel %vm2511, %v2481, %v1437
  %v2547 = vsel %vm2511, %v2482, %v1439
  %v2548 = vsel %vm2511, %v2483, %v1441
  %v2549 = vsel %vm2511, %v2484, %v1443
  %v2550 = vsel %vm2511, %v2485, %v1445
  %v2551 = vsel %vm2511, %v2486, %v1447
  %v2552 = vsel %vm2511, %v2487, %v1449
  %v2553 = vsel %vm2511, %v2488, %v1451
  %v2554 = vsel %vm2511, %v2489, %v1453
  %v2555 = vsel %vm2511, %v2490, %v1455
  %v2556 = vsel %vm2511, %v2491, %v1457
  %v2557 = vsel %vm2511, %v2492, %v1459
  %v2558 = vsel %vm2511, %v2493, %v1461
  %v2559 = vsel %vm2511, %v2494, %v1463
  %v2560 = vsel %vm2511, %v2495, %v1465
  %v2561 = vsel %vm2511, %v2496, %v1467
  %v2562 = vsel %vm2511, %v2497, %v1469
  %v2563 = vsel %vm2511, %v2498, %v1471
  %v2564 = vsel %vm2511, %v2499, %v1473
  %v2565 = vsel %vm2511, %v2500, %v1475
  %v2566 = vsel %vm2511, %v2501, %v1477
  %v2567 = vsel %vm2511, %v2502, %v1479
  %v2568 = vsel %vm2511, %v2503, %v1481
  %v2569 = vsel %vm2511, %v2504, %v1483
  %v2570 = vsel %vm2511, %v2505, %v1485
  %v2571 = vsel %vm2511, %v2506, %v1487
  %v2572 = vsel %vm2511, %v2507, %v1489
  %v2573 = vsel %vm2511, %v2508, %v1491
  %v2574 = vsel %vm2511, %v2509, %v1493
  %v2575 = vsel %vm2511, %v2510, %v1495
  %vm2576 = vcmask 162816
  %v2577 = vsel %vm2576, %v2512, %v1571
  %v2578 = vsel %vm2576, %v2513, %v1573
  %v2579 = vsel %vm2576, %v2514, %v1575
  %v2580 = vsel %vm2576, %v2515, %v1577
  %v2581 = vsel %vm2576, %v2516, %v1579
  %v2582 = vsel %vm2576, %v2517, %v1581
  %v2583 = vsel %vm2576, %v2518, %v1583
  %v2584 = vsel %vm2576, %v2519, %v1585
  %v2585 = vsel %vm2576, %v2520, %v1587
  %v2586 = vsel %vm2576, %v2521, %v1589
  %v2587 = vsel %vm2576, %v2522, %v1591
  %v2588 = vsel %vm2576, %v2523, %v1593
  %v2589 = vsel %vm2576, %v2524, %v1595
  %v2590 = vsel %vm2576, %v2525, %v1597
  %v2591 = vsel %vm2576, %v2526, %v1599
  %v2592 = vsel %vm2576, %v2527, %v1601
  %v2593 = vsel %vm2576, %v2528, %v1603
  %v2594 = vsel %vm2576, %v2529, %v1605
  %v2595 = vsel %vm2576, %v2530, %v1607
  %v2596 = vsel %vm2576, %v2531, %v1609
  %v2597 = vsel %vm2576, %v2532, %v1611
  %v2598 = vsel %vm2576, %v2533, %v1613
  %v2599 = vsel %vm2576, %v2534, %v1615
  %v2600 = vsel %vm2576, %v2535, %v1617
  %v2601 = vsel %vm2576, %v2536, %v1619
  %v2602 = vsel %vm2576, %v2537, %v1621
  %v2603 = vsel %vm2576, %v2538, %v1623
  %v2604 = vsel %vm2576, %v2539, %v1625
  %v2605 = vsel %vm2576, %v2540, %v1627
  %v2606 = vsel %vm2576, %v2541, %v1629
  %v2607 = vsel %vm2576, %v2542, %v1631
  %v2608 = vsel %vm2576, %v2543, %v1633
  %v2609 = vsel %vm2576, %v2544, %v1635
  %v2610 = vsel %vm2576, %v2545, %v1637
  %v2611 = vsel %vm2576, %v2546, %v1639
  %v2612 = vsel %vm2576, %v2547, %v1641
  %v2613 = vsel %vm2576, %v2548, %v1643
  %v2614 = vsel %vm2576, %v2549, %v1645
  %v2615 = vsel %vm2576, %v2550, %v1647
  %v2616 = vsel %vm2576, %v2551, %v1649
  %v2617 = vsel %vm2576, %v2552, %v1651
  %v2618 = vsel %vm2576, %v2553, %v1653
  %v2619 = vsel %vm2576, %v2554, %v1655
  %v2620 = vsel %vm2576, %v2555, %v1657
  %v2621 = vsel %vm2576, %v2556, %v1659
  %v2622 = vsel %vm2576, %v2557, %v1661
  %v2623 = vsel %vm2576, %v2558, %v1663
  %v2624 = vsel %vm2576, %v2559, %v1665
  %v2625 = vsel %vm2576, %v2560, %v1667
  %v2626 = vsel %vm2576, %v2561, %v1669
  %v2627 = vsel %vm2576, %v2562, %v1671
  %v2628 = vsel %vm2576, %v2563, %v1673
  %v2629 = vsel %vm2576, %v2564, %v1675
  %v2630 = vsel %vm2576, %v2565, %v1677
  %v2631 = vsel %vm2576, %v2566, %v1679
  %v2632 = vsel %vm2576, %v2567, %v1681
  %v2633 = vsel %vm2576, %v2568, %v1683
  %v2634 = vsel %vm2576, %v2569, %v1685
  %v2635 = vsel %vm2576, %v2570, %v1687
  %v2636 = vsel %vm2576, %v2571, %v1689
  %v2637 = vsel %vm2576, %v2572, %v1691
  %v2638 = vsel %vm2576, %v2573, %v1693
  %v2639 = vsel %vm2576, %v2574, %v1695
  %v2640 = vsel %vm2576, %v2575, %v1697
  %vm2641 = vcmask 195584
  %v2642 = vsel %vm2641, %v2577, %v1763
  %v2643 = vsel %vm2641, %v2578, %v1765
  %v2644 = vsel %vm2641, %v2579, %v1767
  %v2645 = vsel %vm2641, %v2580, %v1769
  %v2646 = vsel %vm2641, %v2581, %v1771
  %v2647 = vsel %vm2641, %v2582, %v1773
  %v2648 = vsel %vm2641, %v2583, %v1775
  %v2649 = vsel %vm2641, %v2584, %v1777
  %v2650 = vsel %vm2641, %v2585, %v1779
  %v2651 = vsel %vm2641, %v2586, %v1781
  %v2652 = vsel %vm2641, %v2587, %v1783
  %v2653 = vsel %vm2641, %v2588, %v1785
  %v2654 = vsel %vm2641, %v2589, %v1787
  %v2655 = vsel %vm2641, %v2590, %v1789
  %v2656 = vsel %vm2641, %v2591, %v1791
  %v2657 = vsel %vm2641, %v2592, %v1793
  %v2658 = vsel %vm2641, %v2593, %v1795
  %v2659 = vsel %vm2641, %v2594, %v1797
  %v2660 = vsel %vm2641, %v2595, %v1799
  %v2661 = vsel %vm2641, %v2596, %v1801
  %v2662 = vsel %vm2641, %v2597, %v1803
  %v2663 = vsel %vm2641, %v2598, %v1805
  %v2664 = vsel %vm2641, %v2599, %v1807
  %v2665 = vsel %vm2641, %v2600, %v1809
  %v2666 = vsel %vm2641, %v2601, %v1811
  %v2667 = vsel %vm2641, %v2602, %v1813
  %v2668 = vsel %vm2641, %v2603, %v1815
  %v2669 = vsel %vm2641, %v2604, %v1817
  %v2670 = vsel %vm2641, %v2605, %v1819
  %v2671 = vsel %vm2641, %v2606, %v1821
  %v2672 = vsel %vm2641, %v2607, %v1823
  %v2673 = vsel %vm2641, %v2608, %v1825
  %v2674 = vsel %vm2641, %v2609, %v1827
  %v2675 = vsel %vm2641, %v2610, %v1829
  %v2676 = vsel %vm2641, %v2611, %v1831
  %v2677 = vsel %vm2641, %v2612, %v1833
  %v2678 = vsel %vm2641, %v2613, %v1835
  %v2679 = vsel %vm2641, %v2614, %v1837
  %v2680 = vsel %vm2641, %v2615, %v1839
  %v2681 = vsel %vm2641, %v2616, %v1841
  %v2682 = vsel %vm2641, %v2617, %v1843
  %v2683 = vsel %vm2641, %v2618, %v1845
  %v2684 = vsel %vm2641, %v2619, %v1847
  %v2685 = vsel %vm2641, %v2620, %v1849
  %v2686 = vsel %vm2641, %v2621, %v1851
  %v2687 = vsel %vm2641, %v2622, %v1853
  %v2688 = vsel %vm2641, %v2623, %v1855
  %v2689 = vsel %vm2641, %v2624, %v1857
  %v2690 = vsel %vm2641, %v2625, %v1859
  %v2691 = vsel %vm2641, %v2626, %v1861
  %v2692 = vsel %vm2641, %v2627, %v1863
  %v2693 = vsel %vm2641, %v2628, %v1865
  %v2694 = vsel %vm2641, %v2629, %v1867
  %v2695 = vsel %vm2641, %v2630, %v1869
  %v2696 = vsel %vm2641, %v2631, %v1871
  %v2697 = vsel %vm2641, %v2632, %v1873
  %v2698 = vsel %vm2641, %v2633, %v1875
  %v2699 = vsel %vm2641, %v2634, %v1877
  %v2700 = vsel %vm2641, %v2635, %v1879
  %v2701 = vsel %vm2641, %v2636, %v1881
  %v2702 = vsel %vm2641, %v2637, %v1883
  %v2703 = vsel %vm2641, %v2638, %v1885
  %v2704 = vsel %vm2641, %v2639, %v1823
  %v2705 = vsel %vm2641, %v2640, %v1825
  %vm2706 = vcmask 228352
  %v2707 = vsel %vm2706, %v2642, %v1949
  %v2708 = vsel %vm2706, %v2643, %v1951
  %v2709 = vsel %vm2706, %v2644, %v1953
  %v2710 = vsel %vm2706, %v2645, %v1955
  %v2711 = vsel %vm2706, %v2646, %v1957
  %v2712 = vsel %vm2706, %v2647, %v1959
  %v2713 = vsel %vm2706, %v2648, %v1961
  %v2714 = vsel %vm2706, %v2649, %v1963
  %v2715 = vsel %vm2706, %v2650, %v1965
  %v2716 = vsel %vm2706, %v2651, %v1967
  %v2717 = vsel %vm2706, %v2652, %v1969
  %v2718 = vsel %vm2706, %v2653, %v1971
  %v2719 = vsel %vm2706, %v2654, %v1973
  %v2720 = vsel %vm2706, %v2655, %v1975
  %v2721 = vsel %vm2706, %v2656, %v1977
  %v2722 = vsel %vm2706, %v2657, %v1979
  %v2723 = vsel %vm2706, %v2658, %v1981
  %v2724 = vsel %vm2706, %v2659, %v1983
  %v2725 = vsel %vm2706, %v2660, %v1985
  %v2726 = vsel %vm2706, %v2661, %v1987
  %v2727 = vsel %vm2706, %v2662, %v1989
  %v2728 = vsel %vm2706, %v2663, %v1991
  %v2729 = vsel %vm2706, %v2664, %v1993
  %v2730 = vsel %vm2706, %v2665, %v1995
  %v2731 = vsel %vm2706, %v2666, %v1997
  %v2732 = vsel %vm2706, %v2667, %v1999
  %v2733 = vsel %vm2706, %v2668, %v2001
  %v2734 = vsel %vm2706, %v2669, %v2003
  %v2735 = vsel %vm2706, %v2670, %v2005
  %v2736 = vsel %vm2706, %v2671, %v2007
  %v2737 = vsel %vm2706, %v2672, %v2009
  %v2738 = vsel %vm2706, %v2673, %v2011
  %v2739 = vsel %vm2706, %v2674, %v2013
  %v2740 = vsel %vm2706, %v2675, %v2015
  %v2741 = vsel %vm2706, %v2676, %v2017
  %v2742 = vsel %vm2706, %v2677, %v2019
  %v2743 = vsel %vm2706, %v2678, %v2021
  %v2744 = vsel %vm2706, %v2679, %v2023
  %v2745 = vsel %vm2706, %v2680, %v2025
  %v2746 = vsel %vm2706, %v2681, %v2027
  %v2747 = vsel %vm2706, %v2682, %v2029
  %v2748 = vsel %vm2706, %v2683, %v2031
  %v2749 = vsel %vm2706, %v2684, %v2033
  %v2750 = vsel %vm2706, %v2685, %v2035
  %v2751 = vsel %vm2706, %v2686, %v2037
  %v2752 = vsel %vm2706, %v2687, %v2039
  %v2753 = vsel %vm2706, %v2688, %v2041
  %v2754 = vsel %vm2706, %v2689, %v2043
  %v2755 = vsel %vm2706, %v2690, %v2045
  %v2756 = vsel %vm2706, %v2691, %v2047
  %v2757 = vsel %vm2706, %v2692, %v2049
  %v2758 = vsel %vm2706, %v2693, %v2051
  %v2759 = vsel %vm2706, %v2694, %v2053
  %v2760 = vsel %vm2706, %v2695, %v2055
  %v2761 = vsel %vm2706, %v2696, %v2057
  %v2762 = vsel %vm2706, %v2697, %v2059
  %v2763 = vsel %vm2706, %v2698, %v2061
  %v2764 = vsel %vm2706, %v2699, %v2063
  %v2765 = vsel %vm2706, %v2700, %v2065
  %v2766 = vsel %vm2706, %v2701, %v2067
  %v2767 = vsel %vm2706, %v2702, %v2069
  %v2768 = vsel %vm2706, %v2703, %v2071
  %v2769 = vsel %vm2706, %v2704, %v2009
  %v2770 = vsel %vm2706, %v2705, %v2011
  %vm2771 = vcmask 261120
  %v2772 = vsel %vm2771, %v2707, %v2135
  %v2773 = vsel %vm2771, %v2708, %v2137
  %v2774 = vsel %vm2771, %v2709, %v2139
  %v2775 = vsel %vm2771, %v2710, %v2141
  %v2776 = vsel %vm2771, %v2711, %v2143
  %v2777 = vsel %vm2771, %v2712, %v2145
  %v2778 = vsel %vm2771, %v2713, %v2147
  %v2779 = vsel %vm2771, %v2714, %v2149
  %v2780 = vsel %vm2771, %v2715, %v2151
  %v2781 = vsel %vm2771, %v2716, %v2153
  %v2782 = vsel %vm2771, %v2717, %v2155
  %v2783 = vsel %vm2771, %v2718, %v2157
  %v2784 = vsel %vm2771, %v2719, %v2159
  %v2785 = vsel %vm2771, %v2720, %v2161
  %v2786 = vsel %vm2771, %v2721, %v2163
  %v2787 = vsel %vm2771, %v2722, %v2165
  %v2788 = vsel %vm2771, %v2723, %v2167
  %v2789 = vsel %vm2771, %v2724, %v2169
  %v2790 = vsel %vm2771, %v2725, %v2171
  %v2791 = vsel %vm2771, %v2726, %v2173
  %v2792 = vsel %vm2771, %v2727, %v2175
  %v2793 = vsel %vm2771, %v2728, %v2177
  %v2794 = vsel %vm2771, %v2729, %v2179
  %v2795 = vsel %vm2771, %v2730, %v2181
  %v2796 = vsel %vm2771, %v2731, %v2183
  %v2797 = vsel %vm2771, %v2732, %v2185
  %v2798 = vsel %vm2771, %v2733, %v2187
  %v2799 = vsel %vm2771, %v2734, %v2189
  %v2800 = vsel %vm2771, %v2735, %v2191
  %v2801 = vsel %vm2771, %v2736, %v2193
  %v2802 = vsel %vm2771, %v2737, %v2195
  %v2803 = vsel %vm2771, %v2738, %v2197
  %v2804 = vsel %vm2771, %v2739, %v2199
  %v2805 = vsel %vm2771, %v2740, %v2201
  %v2806 = vsel %vm2771, %v2741, %v2203
  %v2807 = vsel %vm2771, %v2742, %v2205
  %v2808 = vsel %vm2771, %v2743, %v2207
  %v2809 = vsel %vm2771, %v2744, %v2209
  %v2810 = vsel %vm2771, %v2745, %v2211
  %v2811 = vsel %vm2771, %v2746, %v2213
  %v2812 = vsel %vm2771, %v2747, %v2215
  %v2813 = vsel %vm2771, %v2748, %v2217
  %v2814 = vsel %vm2771, %v2749, %v2219
  %v2815 = vsel %vm2771, %v2750, %v2221
  %v2816 = vsel %vm2771, %v2751, %v2223
  %v2817 = vsel %vm2771, %v2752, %v2225
  %v2818 = vsel %vm2771, %v2753, %v2227
  %v2819 = vsel %vm2771, %v2754, %v2229
  %v2820 = vsel %vm2771, %v2755, %v2231
  %v2821 = vsel %vm2771, %v2756, %v2233
  %v2822 = vsel %vm2771, %v2757, %v2235
  %v2823 = vsel %vm2771, %v2758, %v2237
  %v2824 = vsel %vm2771, %v2759, %v2239
  %v2825 = vsel %vm2771, %v2760, %v2241
  %v2826 = vsel %vm2771, %v2761, %v2243
  %v2827 = vsel %vm2771, %v2762, %v2245
  %v2828 = vsel %vm2771, %v2763, %v2247
  %v2829 = vsel %vm2771, %v2764, %v2249
  %v2830 = vsel %vm2771, %v2765, %v2251
  %v2831 = vsel %vm2771, %v2766, %v2253
  %v2832 = vsel %vm2771, %v2767, %v2255
  %v2833 = vsel %vm2771, %v2768, %v2257
  %v2834 = vsel %vm2771, %v2769, %v2195
  %v2835 = vsel %vm2771, %v2770, %v2197
  %v2836 = vld [vmem:[%s1] sm:$0xff]
  %v2837 = vld [vmem:[%s1 + $0x8] sm:$0xff]
  %v2838 = vld [vmem:[%s1 + $0x10] sm:$0xff]
  %v2839 = vld [vmem:[%s1 + $0x18] sm:$0xff]
  %v2840 = vld [vmem:[%s1 + $0x20] sm:$0xf]
  %vm2841 = vcmask 293888
  %v2843 = vsel %vm2841, %v2772, 0
  %v2846 = vsel %vm2841, %v2773, 0
  %v2849 = vsel %vm2841, %v2774, 0
  %v2852 = vsel %vm2841, %v2775, 0
  %v2855 = vsel %vm2841, %v2776, 0
  %v2858 = vsel %vm2841, %v2777, 0
  %v2861 = vsel %vm2841, %v2778, 0
  %v2864 = vsel %vm2841, %v2779, 0
  %v2867 = vsel %vm2841, %v2780, 0
  %v2870 = vsel %vm2841, %v2781, 0
  %v2873 = vsel %vm2841, %v2782, 0
  %v2876 = vsel %vm2841, %v2783, 0
  %v2879 = vsel %vm2841, %v2784, 0
  %v2882 = vsel %vm2841, %v2785, 0
  %v2885 = vsel %vm2841, %v2786, 0
  %v2888 = vsel %vm2841, %v2787, 0
  %v2891 = vsel %vm2841, %v2788, 0
  %v2894 = vsel %vm2841, %v2789, 0
  %v2897 = vsel %vm2841, %v2790, 0
  %v2900 = vsel %vm2841, %v2791, 0
  %v2903 = vsel %vm2841, %v2792, 0
  %v2906 = vsel %vm2841, %v2793, 0
  %v2909 = vsel %vm2841, %v2794, 0
  %v2912 = vsel %vm2841, %v2795, 0
  %v2915 = vsel %vm2841, %v2796, 0
  %v2918 = vsel %vm2841, %v2797, 0
  %v2921 = vsel %vm2841, %v2798, 0
  %v2924 = vsel %vm2841, %v2799, 0
  %v2927 = vsel %vm2841, %v2800, 0
  %v2930 = vsel %vm2841, %v2801, 0
  %v2933 = vsel %vm2841, %v2802, 0
  %v2936 = vsel %vm2841, %v2803, 0
  %v2939 = vsel %vm2841, %v2804, 0
  %v2942 = vsel %vm2841, %v2805, 0
  %v2945 = vsel %vm2841, %v2806, 0
  %v2948 = vsel %vm2841, %v2807, 0
  %v2951 = vsel %vm2841, %v2808, 0
  %v2954 = vsel %vm2841, %v2809, 0
  %v2957 = vsel %vm2841, %v2810, 0
  %v2960 = vsel %vm2841, %v2811, 0
  %v2963 = vsel %vm2841, %v2812, 0
  %v2966 = vsel %vm2841, %v2813, 0
  %v2969 = vsel %vm2841, %v2814, 0
  %v2972 = vsel %vm2841, %v2815, 0
  %v2975 = vsel %vm2841, %v2816, 0
  %v2978 = vsel %vm2841, %v2817, 0
  %v2981 = vsel %vm2841, %v2818, 0
  %v2984 = vsel %vm2841, %v2819, 0
  %v2987 = vsel %vm2841, %v2820, 0
  %v2990 = vsel %vm2841, %v2821, 0
  %v2993 = vsel %vm2841, %v2822, 0
  %v2996 = vsel %vm2841, %v2823, 0
  %v2999 = vsel %vm2841, %v2824, 0
  %v3002 = vsel %vm2841, %v2825, 0
  %v3005 = vsel %vm2841, %v2826, 0
  %v3008 = vsel %vm2841, %v2827, 0
  %v3011 = vsel %vm2841, %v2828, 0
  %v3014 = vsel %vm2841, %v2829, 0
  %v3017 = vsel %vm2841, %v2830, 0
  %v3020 = vsel %vm2841, %v2831, 0
  %v3023 = vsel %vm2841, %v2832, 0
  %v3026 = vsel %vm2841, %v2833, 0
  %v3029 = vsel %vm2841, %v2834, 0
  %v3032 = vsel %vm2841, %v2835, 0
  %vm3034 = vcmask 1043456
  %v3036 = vsel %vm3034, %v2840, 0
  %3038 = vmatprep.subr.mxu0 0.0
  %3039 = vmatpush1.msra.mxu0 %v2836
  %3040 = vmatprep.subr.mxu0 0.0
  %3041 = vmatpush1.msra.mxu0 %v2837
  %3042 = vmatprep.subr.mxu0 0.0
  %3043 = vmatpush1.msra.mxu0 %v2838
  %3044 = vmatprep.subr.mxu0 0.0
  %3045 = vmatpush1.msra.mxu0 %v2839
  %3046 = vmatprep.subr.mxu0 0.0
  %3047 = vmatpush1.msra.mxu0 %v3036
  %3048 = vmatprep.subr.mxu0 0.0
  %3049 = vmatpush1.msra.mxu0 0.0
  %3050 = vmatprep.subr.mxu0 0.0
  %3051 = vmatpush1.msra.mxu0 0.0
  %3052 = vmatprep.subr.mxu0 0.0
  %3053 = vmatpush1.msra.mxu0 0.0
  %3054 = vmatprep.subr.mxu0 0.0
  %3055 = vmatpush1.msra.mxu0 0.0
  %3056 = vmatprep.subr.mxu0 0.0
  %3057 = vmatpush1.msra.mxu0 0.0
  %3058 = vmatprep.subr.mxu0 0.0
  %3059 = vmatpush1.msra.mxu0 0.0
  %3060 = vmatprep.subr.mxu0 0.0
  %3061 = vmatpush1.msra.mxu0 0.0
  %3062 = vmatprep.subr.mxu0 0.0
  %3063 = vmatpush1.msra.mxu0 0.0
  %3064 = vmatprep.subr.mxu0 0.0
  %3065 = vmatpush1.msra.mxu0 0.0
  %3066 = vmatprep.subr.mxu0 0.0
  %3067 = vmatpush1.msra.mxu0 0.0
  %3068 = vmatprep.subr.mxu0 0.0
  %3069 = vmatpush1.msra.mxu0 0.0
  %3070 = vmatprep.subr.mxu0 0.0
  %3071 = vmatpush1.msra.mxu0 0.0
  %3072 = vmatprep.subr.mxu0 0.0
  %3073 = vmatpush1.msra.mxu0 0.0
  %3074 = vmatprep.subr.mxu0 0.0
  %3075 = vmatpush1.msra.mxu0 0.0
  %3076 = vmatprep.subr.mxu0 0.0
  %3077 = vmatpush1.msra.mxu0 0.0
  %3078 = vmatprep.subr.mxu0 0.0
  %3079 = vmatpush1.msra.mxu0 0.0
  %3080 = vmatprep.subr.mxu0 0.0
  %3081 = vmatpush1.msra.mxu0 0.0
  %3082 = vmatprep.subr.mxu0 0.0
  %3083 = vmatpush1.msra.mxu0 0.0
  %3084 = vmatprep.subr.mxu0 0.0
  %3085 = vmatpush1.msra.mxu0 0.0
  %3086 = vmatprep.subr.mxu0 0.0
  %3087 = vmatpush1.msra.mxu0 0.0
  %3088 = vmatprep.subr.mxu0 0.0
  %3089 = vmatpush1.msra.mxu0 0.0
  %3090 = vmatprep.subr.mxu0 0.0
  %3091 = vmatpush1.msra.mxu0 0.0
  %3092 = vmatprep.subr.mxu0 0.0
  %3093 = vmatpush1.msra.mxu0 0.0
  %3094 = vmatprep.subr.mxu0 0.0
  %3095 = vmatpush1.msra.mxu0 0.0
  %3096 = vmatprep.subr.mxu0 0.0
  %3097 = vmatpush1.msra.mxu0 0.0
  %3098 = vmatprep.subr.mxu0 0.0
  %3099 = vmatpush1.msra.mxu0 0.0
  %3100 = vmatprep.subr.mxu0 0.0
  %3101 = vmatpush1.msra.mxu0 0.0
  %3102 = vmatprep.mubr.f32.mxu0 0.0
  %3103 = vmatmul.mubr.f32.gmra.mrb[0].mxu0 %v2843
  %v3104 = vpop.f32.mrb[0].mxu0
  %v3105 = vadd.f32 0.0, %v3104
  %v3106 = vpop.f32.mrb[0].mxu0
  %3107 = vmatprep.mubr.f32.mxu0 0.0
  %3108 = vmatmul.mubr.f32.gmra.mrb[0].mxu0 %v2846
  %v3109 = vpop.f32.mrb[0].mxu0
  %v3110 = vadd.f32 0.0, %v3109
  %v3111 = vpop.f32.mrb[0].mxu0
  %3112 = vmatprep.mubr.f32.mxu0 0.0
  %3113 = vmatmul.mubr.f32.gmra.mrb[0].mxu0 %v2849
  %v3114 = vpop.f32.mrb[0].mxu0
  %v3115 = vadd.f32 0.0, %v3114
  %v3116 = vpop.f32.mrb[0].mxu0
  %3117 = vmatprep.mubr.f32.mxu0 0.0
  %3118 = vmatmul.mubr.f32.gmra.mrb[0].mxu0 %v2852
  %v3119 = vpop.f32.mrb[0].mxu0
  %v3120 = vadd.f32 0.0, %v3119
  %v3121 = vpop.f32.mrb[0].mxu0
  %3122 = vmatprep.mubr.f32.mxu0 0.0
  %3123 = vmatmul.mubr.f32.gmra.mrb[0].mxu0 %v2855
  %v3124 = vpop.f32.mrb[0].mxu0
  %v3125 = vadd.f32 0.0, %v3124
  %v3126 = vpop.f32.mrb[0].mxu0
  %3127 = vmatprep.mubr.f32.mxu0 0.0
  %3128 = vmatmul.mubr.f32.gmra.mrb[0].mxu0 %v2858
  %v3129 = vpop.f32.mrb[0].mxu0
  %v3130 = vadd.f32 0.0, %v3129
  %v3131 = vpop.f32.mrb[0].mxu0
  %3132 = vmatprep.mubr.f32.mxu0 0.0
  %3133 = vmatmul.mubr.f32.gmra.mrb[0].mxu0 %v2861
  %v3134 = vpop.f32.mrb[0].mxu0
  %v3135 = vadd.f32 0.0, %v3134
  %v3136 = vpop.f32.mrb[0].mxu0
  %3137 = vmatprep.mubr.f32.mxu0 0.0
  %3138 = vmatmul.mubr.f32.gmra.mrb[0].mxu0 %v2864
  %v3139 = vpop.f32.mrb[0].mxu0
  %v3140 = vadd.f32 0.0, %v3139
  %v3141 = vpop.f32.mrb[0].mxu0
  %3142 = vmatprep.mubr.f32.mxu0 0.0
  %3143 = vmatmul.mubr.f32.gmra.mrb[0].mxu0 %v2867
  %v3144 = vpop.f32.mrb[0].mxu0
  %v3145 = vadd.f32 0.0, %v3144
  %v3146 = vpop.f32.mrb[0].mxu0
  %3147 = vmatprep.mubr.f32.mxu0 0.0
  %3148 = vmatmul.mubr.f32.gmra.mrb[0].mxu0 %v2870
  %v3149 = vpop.f32.mrb[0].mxu0
  %v3150 = vadd.f32 0.0, %v3149
  %v3151 = vpop.f32.mrb[0].mxu0
  %3152 = vmatprep.mubr.f32.mxu0 0.0
  %3153 = vmatmul.mubr.f32.gmra.mrb[0].mxu0 %v2873
  %v3154 = vpop.f32.mrb[0].mxu0
  %v3155 = vadd.f32 0.0, %v3154
  %v3156 = vpop.f32.mrb[0].mxu0
  %3157 = vmatprep.mubr.f32.mxu0 0.0
  %3158 = vmatmul.mubr.f32.gmra.mrb[0].mxu0 %v2876
  %v3159 = vpop.f32.mrb[0].mxu0
  %v3160 = vadd.f32 0.0, %v3159
  %v3161 = vpop.f32.mrb[0].mxu0
  %3162 = vmatprep.mubr.f32.mxu0 0.0
  %3163 = vmatmul.mubr.f32.gmra.mrb[0].mxu0 %v2879
  %v3164 = vpop.f32.mrb[0].mxu0
  %v3165 = vadd.f32 0.0, %v3164
  %v3166 = vpop.f32.mrb[0].mxu0
  %3167 = vmatprep.mubr.f32.mxu0 0.0
  %3168 = vmatmul.mubr.f32.gmra.mrb[0].mxu0 %v2882
  %v3169 = vpop.f32.mrb[0].mxu0
  %v3170 = vadd.f32 0.0, %v3169
  %v3171 = vpop.f32.mrb[0].mxu0
  %3172 = vmatprep.mubr.f32.mxu0 0.0
  %3173 = vmatmul.mubr.f32.gmra.mrb[0].mxu0 %v2885
  %v3174 = vpop.f32.mrb[0].mxu0
  %v3175 = vadd.f32 0.0, %v3174
  %v3176 = vpop.f32.mrb[0].mxu0
  %3177 = vmatprep.mubr.f32.mxu0 0.0
  %3178 = vmatmul.mubr.f32.gmra.mrb[0].mxu0 %v2888
  %v3179 = vpop.f32.mrb[0].mxu0
  %v3180 = vadd.f32 0.0, %v3179
  %v3181 = vpop.f32.mrb[0].mxu0
  %3182 = vmatprep.mubr.f32.mxu0 0.0
  %3183 = vmatmul.mubr.f32.gmra.mrb[0].mxu0 %v2891
  %v3184 = vpop.f32.mrb[0].mxu0
  %v3185 = vadd.f32 0.0, %v3184
  %v3186 = vpop.f32.mrb[0].mxu0
  %3187 = vmatprep.mubr.f32.mxu0 0.0
  %3188 = vmatmul.mubr.f32.gmra.mrb[0].mxu0 %v2894
  %v3189 = vpop.f32.mrb[0].mxu0
  %v3190 = vadd.f32 0.0, %v3189
  %v3191 = vpop.f32.mrb[0].mxu0
  %3192 = vmatprep.mubr.f32.mxu0 0.0
  %3193 = vmatmul.mubr.f32.gmra.mrb[0].mxu0 %v2897
  %v3194 = vpop.f32.mrb[0].mxu0
  %v3195 = vadd.f32 0.0, %v3194
  %v3196 = vpop.f32.mrb[0].mxu0
  %3197 = vmatprep.mubr.f32.mxu0 0.0
  %3198 = vmatmul.mubr.f32.gmra.mrb[0].mxu0 %v2900
  %v3199 = vpop.f32.mrb[0].mxu0
  %v3200 = vadd.f32 0.0, %v3199
  %v3201 = vpop.f32.mrb[0].mxu0
  %3202 = vmatprep.mubr.f32.mxu0 0.0
  %3203 = vmatmul.mubr.f32.gmra.mrb[0].mxu0 %v2903
  %v3204 = vpop.f32.mrb[0].mxu0
  %v3205 = vadd.f32 0.0, %v3204
  %v3206 = vpop.f32.mrb[0].mxu0
  %3207 = vmatprep.mubr.f32.mxu0 0.0
  %3208 = vmatmul.mubr.f32.gmra.mrb[0].mxu0 %v2906
  %v3209 = vpop.f32.mrb[0].mxu0
  %v3210 = vadd.f32 0.0, %v3209
  %v3211 = vpop.f32.mrb[0].mxu0
  %3212 = vmatprep.mubr.f32.mxu0 0.0
  %3213 = vmatmul.mubr.f32.gmra.mrb[0].mxu0 %v2909
  %v3214 = vpop.f32.mrb[0].mxu0
  %v3215 = vadd.f32 0.0, %v3214
  %v3216 = vpop.f32.mrb[0].mxu0
  %3217 = vmatprep.mubr.f32.mxu0 0.0
  %3218 = vmatmul.mubr.f32.gmra.mrb[0].mxu0 %v2912
  %v3219 = vpop.f32.mrb[0].mxu0
  %v3220 = vadd.f32 0.0, %v3219
  %v3221 = vpop.f32.mrb[0].mxu0
  %3222 = vmatprep.mubr.f32.mxu0 0.0
  %3223 = vmatmul.mubr.f32.gmra.mrb[0].mxu0 %v2915
  %v3224 = vpop.f32.mrb[0].mxu0
  %v3225 = vadd.f32 0.0, %v3224
  %v3226 = vpop.f32.mrb[0].mxu0
  %3227 = vmatprep.mubr.f32.mxu0 0.0
  %3228 = vmatmul.mubr.f32.gmra.mrb[0].mxu0 %v2918
  %v3229 = vpop.f32.mrb[0].mxu0
  %v3230 = vadd.f32 0.0, %v3229
  %v3231 = vpop.f32.mrb[0].mxu0
  %3232 = vmatprep.mubr.f32.mxu0 0.0
  %3233 = vmatmul.mubr.f32.gmra.mrb[0].mxu0 %v2921
  %v3234 = vpop.f32.mrb[0].mxu0
  %v3235 = vadd.f32 0.0, %v3234
  %v3236 = vpop.f32.mrb[0].mxu0
  %3237 = vmatprep.mubr.f32.mxu0 0.0
  %3238 = vmatmul.mubr.f32.gmra.mrb[0].mxu0 %v2924
  %v3239 = vpop.f32.mrb[0].mxu0
  %v3240 = vadd.f32 0.0, %v3239
  %v3241 = vpop.f32.mrb[0].mxu0
  %3242 = vmatprep.mubr.f32.mxu0 0.0
  %3243 = vmatmul.mubr.f32.gmra.mrb[0].mxu0 %v2927
  %v3244 = vpop.f32.mrb[0].mxu0
  %v3245 = vadd.f32 0.0, %v3244
  %v3246 = vpop.f32.mrb[0].mxu0
  %3247 = vmatprep.mubr.f32.mxu0 0.0
  %3248 = vmatmul.mubr.f32.gmra.mrb[0].mxu0 %v2930
  %v3249 = vpop.f32.mrb[0].mxu0
  %v3250 = vadd.f32 0.0, %v3249
  %v3251 = vpop.f32.mrb[0].mxu0
  %3252 = vmatprep.mubr.f32.mxu0 0.0
  %3253 = vmatmul.mubr.f32.gmra.mrb[0].mxu0 %v2933
  %v3254 = vpop.f32.mrb[0].mxu0
  %v3255 = vadd.f32 0.0, %v3254
  %v3256 = vpop.f32.mrb[0].mxu0
  %3257 = vmatprep.mubr.f32.mxu0 0.0
  %3258 = vmatmul.mubr.f32.gmra.mrb[0].mxu0 %v2936
  %v3259 = vpop.f32.mrb[0].mxu0
  %v3260 = vadd.f32 0.0, %v3259
  %v3261 = vpop.f32.mrb[0].mxu0
  %3262 = vmatprep.mubr.f32.mxu0 0.0
  %3263 = vmatmul.mubr.f32.gmra.mrb[0].mxu0 %v2939
  %v3264 = vpop.f32.mrb[0].mxu0
  %v3265 = vadd.f32 0.0, %v3264
  %v3266 = vpop.f32.mrb[0].mxu0
  %3267 = vmatprep.mubr.f32.mxu0 0.0
  %3268 = vmatmul.mubr.f32.gmra.mrb[0].mxu0 %v2942
  %v3269 = vpop.f32.mrb[0].mxu0
  %v3270 = vadd.f32 0.0, %v3269
  %v3271 = vpop.f32.mrb[0].mxu0
  %3272 = vmatprep.mubr.f32.mxu0 0.0
  %3273 = vmatmul.mubr.f32.gmra.mrb[0].mxu0 %v2945
  %v3274 = vpop.f32.mrb[0].mxu0
  %v3275 = vadd.f32 0.0, %v3274
  %v3276 = vpop.f32.mrb[0].mxu0
  %3277 = vmatprep.mubr.f32.mxu0 0.0
  %3278 = vmatmul.mubr.f32.gmra.mrb[0].mxu0 %v2948
  %v3279 = vpop.f32.mrb[0].mxu0
  %v3280 = vadd.f32 0.0, %v3279
  %v3281 = vpop.f32.mrb[0].mxu0
  %3282 = vmatprep.mubr.f32.mxu0 0.0
  %3283 = vmatmul.mubr.f32.gmra.mrb[0].mxu0 %v2951
  %v3284 = vpop.f32.mrb[0].mxu0
  %v3285 = vadd.f32 0.0, %v3284
  %v3286 = vpop.f32.mrb[0].mxu0
  %3287 = vmatprep.mubr.f32.mxu0 0.0
  %3288 = vmatmul.mubr.f32.gmra.mrb[0].mxu0 %v2954
  %v3289 = vpop.f32.mrb[0].mxu0
  %v3290 = vadd.f32 0.0, %v3289
  %v3291 = vpop.f32.mrb[0].mxu0
  %3292 = vmatprep.mubr.f32.mxu0 0.0
  %3293 = vmatmul.mubr.f32.gmra.mrb[0].mxu0 %v2957
  %v3294 = vpop.f32.mrb[0].mxu0
  %v3295 = vadd.f32 0.0, %v3294
  %v3296 = vpop.f32.mrb[0].mxu0
  %3297 = vmatprep.mubr.f32.mxu0 0.0
  %3298 = vmatmul.mubr.f32.gmra.mrb[0].mxu0 %v2960
  %v3299 = vpop.f32.mrb[0].mxu0
  %v3300 = vadd.f32 0.0, %v3299
  %v3301 = vpop.f32.mrb[0].mxu0
  %3302 = vmatprep.mubr.f32.mxu0 0.0
  %3303 = vmatmul.mubr.f32.gmra.mrb[0].mxu0 %v2963
  %v3304 = vpop.f32.mrb[0].mxu0
  %v3305 = vadd.f32 0.0, %v3304
  %v3306 = vpop.f32.mrb[0].mxu0
  %3307 = vmatprep.mubr.f32.mxu0 0.0
  %3308 = vmatmul.mubr.f32.gmra.mrb[0].mxu0 %v2966
  %v3309 = vpop.f32.mrb[0].mxu0
  %v3310 = vadd.f32 0.0, %v3309
  %v3311 = vpop.f32.mrb[0].mxu0
  %3312 = vmatprep.mubr.f32.mxu0 0.0
  %3313 = vmatmul.mubr.f32.gmra.mrb[0].mxu0 %v2969
  %v3314 = vpop.f32.mrb[0].mxu0
  %v3315 = vadd.f32 0.0, %v3314
  %v3316 = vpop.f32.mrb[0].mxu0
  %3317 = vmatprep.mubr.f32.mxu0 0.0
  %3318 = vmatmul.mubr.f32.gmra.mrb[0].mxu0 %v2972
  %v3319 = vpop.f32.mrb[0].mxu0
  %v3320 = vadd.f32 0.0, %v3319
  %v3321 = vpop.f32.mrb[0].mxu0
  %3322 = vmatprep.mubr.f32.mxu0 0.0
  %3323 = vmatmul.mubr.f32.gmra.mrb[0].mxu0 %v2975
  %v3324 = vpop.f32.mrb[0].mxu0
  %v3325 = vadd.f32 0.0, %v3324
  %v3326 = vpop.f32.mrb[0].mxu0
  %3327 = vmatprep.mubr.f32.mxu0 0.0
  %3328 = vmatmul.mubr.f32.gmra.mrb[0].mxu0 %v2978
  %v3329 = vpop.f32.mrb[0].mxu0
  %v3330 = vadd.f32 0.0, %v3329
  %v3331 = vpop.f32.mrb[0].mxu0
  %3332 = vmatprep.mubr.f32.mxu0 0.0
  %3333 = vmatmul.mubr.f32.gmra.mrb[0].mxu0 %v2981
  %v3334 = vpop.f32.mrb[0].mxu0
  %v3335 = vadd.f32 0.0, %v3334
  %v3336 = vpop.f32.mrb[0].mxu0
  %3337 = vmatprep.mubr.f32.mxu0 0.0
  %3338 = vmatmul.mubr.f32.gmra.mrb[0].mxu0 %v2984
  %v3339 = vpop.f32.mrb[0].mxu0
  %v3340 = vadd.f32 0.0, %v3339
  %v3341 = vpop.f32.mrb[0].mxu0
  %3342 = vmatprep.mubr.f32.mxu0 0.0
  %3343 = vmatmul.mubr.f32.gmra.mrb[0].mxu0 %v2987
  %v3344 = vpop.f32.mrb[0].mxu0
  %v3345 = vadd.f32 0.0, %v3344
  %v3346 = vpop.f32.mrb[0].mxu0
  %3347 = vmatprep.mubr.f32.mxu0 0.0
  %3348 = vmatmul.mubr.f32.gmra.mrb[0].mxu0 %v2990
  %v3349 = vpop.f32.mrb[0].mxu0
  %v3350 = vadd.f32 0.0, %v3349
  %v3351 = vpop.f32.mrb[0].mxu0
  %3352 = vmatprep.mubr.f32.mxu0 0.0
  %3353 = vmatmul.mubr.f32.gmra.mrb[0].mxu0 %v2993
  %v3354 = vpop.f32.mrb[0].mxu0
  %v3355 = vadd.f32 0.0, %v3354
  %v3356 = vpop.f32.mrb[0].mxu0
  %3357 = vmatprep.mubr.f32.mxu0 0.0
  %3358 = vmatmul.mubr.f32.gmra.mrb[0].mxu0 %v2996
  %v3359 = vpop.f32.mrb[0].mxu0
  %v3360 = vadd.f32 0.0, %v3359
  %v3361 = vpop.f32.mrb[0].mxu0
  %3362 = vmatprep.mubr.f32.mxu0 0.0
  %3363 = vmatmul.mubr.f32.gmra.mrb[0].mxu0 %v2999
  %v3364 = vpop.f32.mrb[0].mxu0
  %v3365 = vadd.f32 0.0, %v3364
  %v3366 = vpop.f32.mrb[0].mxu0
  %3367 = vmatprep.mubr.f32.mxu0 0.0
  %3368 = vmatmul.mubr.f32.gmra.mrb[0].mxu0 %v3002
  %v3369 = vpop.f32.mrb[0].mxu0
  %v3370 = vadd.f32 0.0, %v3369
  %v3371 = vpop.f32.mrb[0].mxu0
  %3372 = vmatprep.mubr.f32.mxu0 0.0
  %3373 = vmatmul.mubr.f32.gmra.mrb[0].mxu0 %v3005
  %v3374 = vpop.f32.mrb[0].mxu0
  %v3375 = vadd.f32 0.0, %v3374
  %v3376 = vpop.f32.mrb[0].mxu0
  %3377 = vmatprep.mubr.f32.mxu0 0.0
  %3378 = vmatmul.mubr.f32.gmra.mrb[0].mxu0 %v3008
  %v3379 = vpop.f32.mrb[0].mxu0
  %v3380 = vadd.f32 0.0, %v3379
  %v3381 = vpop.f32.mrb[0].mxu0
  %3382 = vmatprep.mubr.f32.mxu0 0.0
  %3383 = vmatmul.mubr.f32.gmra.mrb[0].mxu0 %v3011
  %v3384 = vpop.f32.mrb[0].mxu0
  %v3385 = vadd.f32 0.0, %v3384
  %v3386 = vpop.f32.mrb[0].mxu0
  %3387 = vmatprep.mubr.f32.mxu0 0.0
  %3388 = vmatmul.mubr.f32.gmra.mrb[0].mxu0 %v3014
  %v3389 = vpop.f32.mrb[0].mxu0
  %v3390 = vadd.f32 0.0, %v3389
  %v3391 = vpop.f32.mrb[0].mxu0
  %3392 = vmatprep.mubr.f32.mxu0 0.0
  %3393 = vmatmul.mubr.f32.gmra.mrb[0].mxu0 %v3017
  %v3394 = vpop.f32.mrb[0].mxu0
  %v3395 = vadd.f32 0.0, %v3394
  %v3396 = vpop.f32.mrb[0].mxu0
  %3397 = vmatprep.mubr.f32.mxu0 0.0
  %3398 = vmatmul.mubr.f32.gmra.mrb[0].mxu0 %v3020
  %v3399 = vpop.f32.mrb[0].mxu0
  %v3400 = vadd.f32 0.0, %v3399
  %v3401 = vpop.f32.mrb[0].mxu0
  %3402 = vmatprep.mubr.f32.mxu0 0.0
  %3403 = vmatmul.mubr.f32.gmra.mrb[0].mxu0 %v3023
  %v3404 = vpop.f32.mrb[0].mxu0
  %v3405 = vadd.f32 0.0, %v3404
  %v3406 = vpop.f32.mrb[0].mxu0
  %3407 = vmatprep.mubr.f32.mxu0 0.0
  %3408 = vmatmul.mubr.f32.gmra.mrb[0].mxu0 %v3026
  %v3409 = vpop.f32.mrb[0].mxu0
  %v3410 = vadd.f32 0.0, %v3409
  %v3411 = vpop.f32.mrb[0].mxu0
  %3412 = vmatprep.mubr.f32.mxu0 0.0
  %3413 = vmatmul.mubr.f32.gmra.mrb[0].mxu0 %v3029
  %v3414 = vpop.f32.mrb[0].mxu0
  %v3415 = vadd.f32 0.0, %v3414
  %v3416 = vpop.f32.mrb[0].mxu0
  %3417 = vmatprep.mubr.f32.mxu0 0.0
  %3418 = vmatmul.mubr.f32.gmra.mrb[0].mxu0 %v3032
  %v3419 = vpop.f32.mrb[0].mxu0
  %v3420 = vadd.f32 0.0, %v3419
  %v3421 = vpop.f32.mrb[0].mxu0
  %3422 = vdwg.mxu0
  %v3423 = vld [vmem:[%s2] sm:$0x1]
  %v3425 = vlaneseq
  %v3426 = vshrl.u32 %v3425, 7
  %v3427 = vsub.s32 0, %v3426
  %v3428 = vrot.slane %v3423, %v3427
  %v3430 = vmul.f32 %v3105, %v3428
  %v3431 = vmul.f32 %v3110, %v3428
  %v3432 = vmul.f32 %v3115, %v3428
  %v3433 = vmul.f32 %v3120, %v3428
  %v3434 = vmul.f32 %v3125, %v3428
  %v3435 = vmul.f32 %v3130, %v3428
  %v3436 = vmul.f32 %v3135, %v3428
  %v3437 = vmul.f32 %v3140, %v3428
  %v3438 = vmul.f32 %v3145, %v3428
  %v3439 = vmul.f32 %v3150, %v3428
  %v3440 = vmul.f32 %v3155, %v3428
  %v3441 = vmul.f32 %v3160, %v3428
  %v3442 = vmul.f32 %v3165, %v3428
  %v3443 = vmul.f32 %v3170, %v3428
  %v3444 = vmul.f32 %v3175, %v3428
  %v3445 = vmul.f32 %v3180, %v3428
  %v3446 = vmul.f32 %v3185, %v3428
  %v3447 = vmul.f32 %v3190, %v3428
  %v3448 = vmul.f32 %v3195, %v3428
  %v3449 = vmul.f32 %v3200, %v3428
  %v3450 = vmul.f32 %v3205, %v3428
  %v3451 = vmul.f32 %v3210, %v3428
  %v3452 = vmul.f32 %v3215, %v3428
  %v3453 = vmul.f32 %v3220, %v3428
  %v3454 = vmul.f32 %v3225, %v3428
  %v3455 = vmul.f32 %v3230, %v3428
  %v3456 = vmul.f32 %v3235, %v3428
  %v3457 = vmul.f32 %v3240, %v3428
  %v3458 = vmul.f32 %v3245, %v3428
  %v3459 = vmul.f32 %v3250, %v3428
  %v3460 = vmul.f32 %v3255, %v3428
  %v3461 = vmul.f32 %v3260, %v3428
  %v3462 = vmul.f32 %v3265, %v3428
  %v3463 = vmul.f32 %v3270, %v3428
  %v3464 = vmul.f32 %v3275, %v3428
  %v3465 = vmul.f32 %v3280, %v3428
  %v3466 = vmul.f32 %v3285, %v3428
  %v3467 = vmul.f32 %v3290, %v3428
  %v3468 = vmul.f32 %v3295, %v3428
  %v3469 = vmul.f32 %v3300, %v3428
  %v3470 = vmul.f32 %v3305, %v3428
  %v3471 = vmul.f32 %v3310, %v3428
  %v3472 = vmul.f32 %v3315, %v3428
  %v3473 = vmul.f32 %v3320, %v3428
  %v3474 = vmul.f32 %v3325, %v3428
  %v3475 = vmul.f32 %v3330, %v3428
  %v3476 = vmul.f32 %v3335, %v3428
  %v3477 = vmul.f32 %v3340, %v3428
  %v3478 = vmul.f32 %v3345, %v3428
  %v3479 = vmul.f32 %v3350, %v3428
  %v3480 = vmul.f32 %v3355, %v3428
  %v3481 = vmul.f32 %v3360, %v3428
  %v3482 = vmul.f32 %v3365, %v3428
  %v3483 = vmul.f32 %v3370, %v3428
  %v3484 = vmul.f32 %v3375, %v3428
  %v3485 = vmul.f32 %v3380, %v3428
  %v3486 = vmul.f32 %v3385, %v3428
  %v3487 = vmul.f32 %v3390, %v3428
  %v3488 = vmul.f32 %v3395, %v3428
  %v3489 = vmul.f32 %v3400, %v3428
  %v3490 = vmul.f32 %v3405, %v3428
  %v3491 = vmul.f32 %v3410, %v3428
  %v3492 = vmul.f32 %v3415, %v3428
  %v3493 = vmul.f32 %v3420, %v3428
  %v3494 = vld [vmem:[%s3] sm:$0x1]
  %v3496 = vlaneseq
  %v3497 = vshrl.u32 %v3496, 7
  %v3498 = vsub.s32 0, %v3497
  %v3499 = vrot.slane %v3494, %v3498
  %v3501 = vadd.f32 %v3430, %v3499
  %v3502 = vadd.f32 %v3431, %v3499
  %v3503 = vadd.f32 %v3432, %v3499
  %v3504 = vadd.f32 %v3433, %v3499
  %v3505 = vadd.f32 %v3434, %v3499
  %v3506 = vadd.f32 %v3435, %v3499
  %v3507 = vadd.f32 %v3436, %v3499
  %v3508 = vadd.f32 %v3437, %v3499
  %v3509 = vadd.f32 %v3438, %v3499
  %v3510 = vadd.f32 %v3439, %v3499
  %v3511 = vadd.f32 %v3440, %v3499
  %v3512 = vadd.f32 %v3441, %v3499
  %v3513 = vadd.f32 %v3442, %v3499
  %v3514 = vadd.f32 %v3443, %v3499
  %v3515 = vadd.f32 %v3444, %v3499
  %v3516 = vadd.f32 %v3445, %v3499
  %v3517 = vadd.f32 %v3446, %v3499
  %v3518 = vadd.f32 %v3447, %v3499
  %v3519 = vadd.f32 %v3448, %v3499
  %v3520 = vadd.f32 %v3449, %v3499
  %v3521 = vadd.f32 %v3450, %v3499
  %v3522 = vadd.f32 %v3451, %v3499
  %v3523 = vadd.f32 %v3452, %v3499
  %v3524 = vadd.f32 %v3453, %v3499
  %v3525 = vadd.f32 %v3454, %v3499
  %v3526 = vadd.f32 %v3455, %v3499
  %v3527 = vadd.f32 %v3456, %v3499
  %v3528 = vadd.f32 %v3457, %v3499
  %v3529 = vadd.f32 %v3458, %v3499
  %v3530 = vadd.f32 %v3459, %v3499
  %v3531 = vadd.f32 %v3460, %v3499
  %v3532 = vadd.f32 %v3461, %v3499
  %v3533 = vadd.f32 %v3462, %v3499
  %v3534 = vadd.f32 %v3463, %v3499
  %v3535 = vadd.f32 %v3464, %v3499
  %v3536 = vadd.f32 %v3465, %v3499
  %v3537 = vadd.f32 %v3466, %v3499
  %v3538 = vadd.f32 %v3467, %v3499
  %v3539 = vadd.f32 %v3468, %v3499
  %v3540 = vadd.f32 %v3469, %v3499
  %v3541 = vadd.f32 %v3470, %v3499
  %v3542 = vadd.f32 %v3471, %v3499
  %v3543 = vadd.f32 %v3472, %v3499
  %v3544 = vadd.f32 %v3473, %v3499
  %v3545 = vadd.f32 %v3474, %v3499
  %v3546 = vadd.f32 %v3475, %v3499
  %v3547 = vadd.f32 %v3476, %v3499
  %v3548 = vadd.f32 %v3477, %v3499
  %v3549 = vadd.f32 %v3478, %v3499
  %v3550 = vadd.f32 %v3479, %v3499
  %v3551 = vadd.f32 %v3480, %v3499
  %v3552 = vadd.f32 %v3481, %v3499
  %v3553 = vadd.f32 %v3482, %v3499
  %v3554 = vadd.f32 %v3483, %v3499
  %v3555 = vadd.f32 %v3484, %v3499
  %v3556 = vadd.f32 %v3485, %v3499
  %v3557 = vadd.f32 %v3486, %v3499
  %v3558 = vadd.f32 %v3487, %v3499
  %v3559 = vadd.f32 %v3488, %v3499
  %v3560 = vadd.f32 %v3489, %v3499
  %v3561 = vadd.f32 %v3490, %v3499
  %v3562 = vadd.f32 %v3491, %v3499
  %v3563 = vadd.f32 %v3492, %v3499
  %v3564 = vadd.f32 %v3493, %v3499
  %v3565 = vmax.f32 %v3501, 0.0
  %v3566 = vmax.f32 %v3502, 0.0
  %v3567 = vmax.f32 %v3503, 0.0
  %v3568 = vmax.f32 %v3504, 0.0
  %v3569 = vmax.f32 %v3505, 0.0
  %v3570 = vmax.f32 %v3506, 0.0
  %v3571 = vmax.f32 %v3507, 0.0
  %v3572 = vmax.f32 %v3508, 0.0
  %v3573 = vmax.f32 %v3509, 0.0
  %v3574 = vmax.f32 %v3510, 0.0
  %v3575 = vmax.f32 %v3511, 0.0
  %v3576 = vmax.f32 %v3512, 0.0
  %v3577 = vmax.f32 %v3513, 0.0
  %v3578 = vmax.f32 %v3514, 0.0
  %v3579 = vmax.f32 %v3515, 0.0
  %v3580 = vmax.f32 %v3516, 0.0
  %v3581 = vmax.f32 %v3517, 0.0
  %v3582 = vmax.f32 %v3518, 0.0
  %v3583 = vmax.f32 %v3519, 0.0
  %v3584 = vmax.f32 %v3520, 0.0
  %v3585 = vmax.f32 %v3521, 0.0
  %v3586 = vmax.f32 %v3522, 0.0
  %v3587 = vmax.f32 %v3523, 0.0
  %v3588 = vmax.f32 %v3524, 0.0
  %v3589 = vmax.f32 %v3525, 0.0
  %v3590 = vmax.f32 %v3526, 0.0
  %v3591 = vmax.f32 %v3527, 0.0
  %v3592 = vmax.f32 %v3528, 0.0
  %v3593 = vmax.f32 %v3529, 0.0
  %v3594 = vmax.f32 %v3530, 0.0
  %v3595 = vmax.f32 %v3531, 0.0
  %v3596 = vmax.f32 %v3532, 0.0
  %v3597 = vmax.f32 %v3533, 0.0
  %v3598 = vmax.f32 %v3534, 0.0
  %v3599 = vmax.f32 %v3535, 0.0
  %v3600 = vmax.f32 %v3536, 0.0
  %v3601 = vmax.f32 %v3537, 0.0
  %v3602 = vmax.f32 %v3538, 0.0
  %v3603 = vmax.f32 %v3539, 0.0
  %v3604 = vmax.f32 %v3540, 0.0
  %v3605 = vmax.f32 %v3541, 0.0
  %v3606 = vmax.f32 %v3542, 0.0
  %v3607 = vmax.f32 %v3543, 0.0
  %v3608 = vmax.f32 %v3544, 0.0
  %v3609 = vmax.f32 %v3545, 0.0
  %v3610 = vmax.f32 %v3546, 0.0
  %v3611 = vmax.f32 %v3547, 0.0
  %v3612 = vmax.f32 %v3548, 0.0
  %v3613 = vmax.f32 %v3549, 0.0
  %v3614 = vmax.f32 %v3550, 0.0
  %v3615 = vmax.f32 %v3551, 0.0
  %v3616 = vmax.f32 %v3552, 0.0
  %v3617 = vmax.f32 %v3553, 0.0
  %v3618 = vmax.f32 %v3554, 0.0
  %v3619 = vmax.f32 %v3555, 0.0
  %v3620 = vmax.f32 %v3556, 0.0
  %v3621 = vmax.f32 %v3557, 0.0
  %v3622 = vmax.f32 %v3558, 0.0
  %v3623 = vmax.f32 %v3559, 0.0
  %v3624 = vmax.f32 %v3560, 0.0
  %v3625 = vmax.f32 %v3561, 0.0
  %v3626 = vmax.f32 %v3562, 0.0
  %v3627 = vmax.f32 %v3563, 0.0
  %v3628 = vmax.f32 %v3564, 0.0
  %v3693 = vrot.slane %v3565, 7
  %v3694 = vrot.slane %v3566, 7
  %v3695 = vsel %vm155, %v3693, %v3694
  %v3696 = vrot.slane %v3567, 7
  %v3697 = vrot.slane %v3568, 7
  %v3698 = vsel %vm155, %v3696, %v3697
  %v3699 = vrot.slane %v3569, 7
  %v3700 = vrot.slane %v3570, 7
  %v3701 = vsel %vm155, %v3699, %v3700
  %v3702 = vrot.slane %v3571, 7
  %v3703 = vrot.slane %v3572, 7
  %v3704 = vsel %vm155, %v3702, %v3703
  %v3705 = vrot.slane %v3573, 7
  %v3706 = vrot.slane %v3574, 7
  %v3707 = vsel %vm155, %v3705, %v3706
  %v3708 = vrot.slane %v3575, 7
  %v3709 = vrot.slane %v3576, 7
  %v3710 = vsel %vm155, %v3708, %v3709
  %v3711 = vrot.slane %v3577, 7
  %v3712 = vrot.slane %v3578, 7
  %v3713 = vsel %vm155, %v3711, %v3712
  %v3714 = vrot.slane %v3579, 7
  %v3715 = vrot.slane %v3580, 7
  %v3716 = vsel %vm155, %v3714, %v3715
  %v3717 = vrot.slane %v3581, 7
  %v3718 = vrot.slane %v3582, 7
  %v3719 = vsel %vm155, %v3717, %v3718
  %v3720 = vrot.slane %v3583, 7
  %v3721 = vrot.slane %v3584, 7
  %v3722 = vsel %vm155, %v3720, %v3721
  %v3723 = vrot.slane %v3585, 7
  %v3724 = vrot.slane %v3586, 7
  %v3725 = vsel %vm155, %v3723, %v3724
  %v3726 = vrot.slane %v3587, 7
  %v3727 = vrot.slane %v3588, 7
  %v3728 = vsel %vm155, %v3726, %v3727
  %v3729 = vrot.slane %v3589, 7
  %v3730 = vrot.slane %v3590, 7
  %v3731 = vsel %vm155, %v3729, %v3730
  %v3732 = vrot.slane %v3591, 7
  %v3733 = vrot.slane %v3592, 7
  %v3734 = vsel %vm155, %v3732, %v3733
  %v3735 = vrot.slane %v3593, 7
  %v3736 = vrot.slane %v3594, 7
  %v3737 = vsel %vm155, %v3735, %v3736
  %v3738 = vrot.slane %v3595, 7
  %v3739 = vrot.slane %v3596, 7
  %v3740 = vsel %vm155, %v3738, %v3739
  %v3741 = vrot.slane %v3597, 7
  %v3742 = vrot.slane %v3598, 7
  %v3743 = vsel %vm155, %v3741, %v3742
  %v3744 = vrot.slane %v3599, 7
  %v3745 = vrot.slane %v3600, 7
  %v3746 = vsel %vm155, %v3744, %v3745
  %v3747 = vrot.slane %v3601, 7
  %v3748 = vrot.slane %v3602, 7
  %v3749 = vsel %vm155, %v3747, %v3748
  %v3750 = vrot.slane %v3603, 7
  %v3751 = vrot.slane %v3604, 7
  %v3752 = vsel %vm155, %v3750, %v3751
  %v3753 = vrot.slane %v3605, 7
  %v3754 = vrot.slane %v3606, 7
  %v3755 = vsel %vm155, %v3753, %v3754
  %v3756 = vrot.slane %v3607, 7
  %v3757 = vrot.slane %v3608, 7
  %v3758 = vsel %vm155, %v3756, %v3757
  %v3759 = vrot.slane %v3609, 7
  %v3760 = vrot.slane %v3610, 7
  %v3761 = vsel %vm155, %v3759, %v3760
  %v3762 = vrot.slane %v3611, 7
  %v3763 = vrot.slane %v3612, 7
  %v3764 = vsel %vm155, %v3762, %v3763
  %v3765 = vrot.slane %v3613, 7
  %v3766 = vrot.slane %v3614, 7
  %v3767 = vsel %vm155, %v3765, %v3766
  %v3768 = vrot.slane %v3615, 7
  %v3769 = vrot.slane %v3616, 7
  %v3770 = vsel %vm155, %v3768, %v3769
  %v3771 = vrot.slane %v3617, 7
  %v3772 = vrot.slane %v3618, 7
  %v3773 = vsel %vm155, %v3771, %v3772
  %v3774 = vrot.slane %v3619, 7
  %v3775 = vrot.slane %v3620, 7
  %v3776 = vsel %vm155, %v3774, %v3775
  %v3777 = vrot.slane %v3621, 7
  %v3778 = vrot.slane %v3622, 7
  %v3779 = vsel %vm155, %v3777, %v3778
  %v3780 = vrot.slane %v3623, 7
  %v3781 = vrot.slane %v3624, 7
  %v3782 = vsel %vm155, %v3780, %v3781
  %v3783 = vrot.slane %v3625, 7
  %v3784 = vrot.slane %v3626, 7
  %v3785 = vsel %vm155, %v3783, %v3784
  %v3786 = vrot.slane %v3627, 7
  %v3787 = vrot.slane %v3628, 7
  %v3788 = vsel %vm155, %v3786, %v3787
  %v3883 = vsel %vm155, 0.0, %v3693
  %v3884 = vsel %vm155, 0.0, %v3696
  %v3885 = vsel %vm155, 0.0, %v3699
  %v3886 = vsel %vm155, 0.0, %v3702
  %v3887 = vsel %vm155, 0.0, %v3705
  %v3888 = vsel %vm155, 0.0, %v3708
  %v3889 = vsel %vm155, 0.0, %v3711
  %v3890 = vsel %vm155, 0.0, %v3714
  %v3891 = vsel %vm155, 0.0, %v3717
  %v3892 = vsel %vm155, 0.0, %v3720
  %v3893 = vsel %vm155, 0.0, %v3723
  %v3894 = vsel %vm155, 0.0, %v3726
  %v3895 = vsel %vm155, 0.0, %v3729
  %v3896 = vsel %vm155, 0.0, %v3732
  %v3897 = vsel %vm155, 0.0, %v3735
  %v3898 = vsel %vm155, 0.0, %v3738
  %v3899 = vsel %vm155, 0.0, %v3741
  %v3900 = vsel %vm155, 0.0, %v3744
  %v3901 = vsel %vm155, 0.0, %v3747
  %v3902 = vsel %vm155, 0.0, %v3750
  %v3903 = vsel %vm155, 0.0, %v3753
  %v3904 = vsel %vm155, 0.0, %v3756
  %v3905 = vsel %vm155, 0.0, %v3759
  %v3906 = vsel %vm155, 0.0, %v3762
  %v3907 = vsel %vm155, 0.0, %v3765
  %v3908 = vsel %vm155, 0.0, %v3768
  %v3909 = vsel %vm155, 0.0, %v3771
  %v3910 = vsel %vm155, 0.0, %v3774
  %v3911 = vsel %vm155, 0.0, %v3777
  %v3912 = vsel %vm155, 0.0, %v3780
  %v3913 = vsel %vm155, 0.0, %v3783
  %v3914 = vsel %vm155, 0.0, %v3786
  %v3915 = vsel %vm155, %v3694, 0.0
  %v3916 = vsel %vm155, %v3697, 0.0
  %v3917 = vsel %vm155, %v3700, 0.0
  %v3918 = vsel %vm155, %v3703, 0.0
  %v3919 = vsel %vm155, %v3706, 0.0
  %v3920 = vsel %vm155, %v3709, 0.0
  %v3921 = vsel %vm155, %v3712, 0.0
  %v3922 = vsel %vm155, %v3715, 0.0
  %v3923 = vsel %vm155, %v3718, 0.0
  %v3924 = vsel %vm155, %v3721, 0.0
  %v3925 = vsel %vm155, %v3724, 0.0
  %v3926 = vsel %vm155, %v3727, 0.0
  %v3927 = vsel %vm155, %v3730, 0.0
  %v3928 = vsel %vm155, %v3733, 0.0
  %v3929 = vsel %vm155, %v3736, 0.0
  %v3930 = vsel %vm155, %v3739, 0.0
  %v3931 = vsel %vm155, %v3742, 0.0
  %v3932 = vsel %vm155, %v3745, 0.0
  %v3933 = vsel %vm155, %v3748, 0.0
  %v3934 = vsel %vm155, %v3751, 0.0
  %v3935 = vsel %vm155, %v3754, 0.0
  %v3936 = vsel %vm155, %v3757, 0.0
  %v3937 = vsel %vm155, %v3760, 0.0
  %v3938 = vsel %vm155, %v3763, 0.0
  %v3939 = vsel %vm155, %v3766, 0.0
  %v3940 = vsel %vm155, %v3769, 0.0
  %v3941 = vsel %vm155, %v3772, 0.0
  %v3942 = vsel %vm155, %v3775, 0.0
  %v3943 = vsel %vm155, %v3778, 0.0
  %v3944 = vsel %vm155, %v3781, 0.0
  %v3945 = vsel %vm155, %v3784, 0.0
  %v3946 = vsel %vm155, %v3787, 0.0
  %v4007 = vrot.slane %v3883, 1
  %v4008 = vrot.slane %v3695, 1
  %v4009 = vsel %vm478, %v4007, %v4008
  %v4010 = vrot.slane %v3915, 1
  %v4011 = vsel %vm478, %v4008, %v4010
  %v4012 = vrot.slane %v3884, 1
  %v4013 = vrot.slane %v3698, 1
  %v4014 = vsel %vm478, %v4012, %v4013
  %v4015 = vrot.slane %v3916, 1
  %v4016 = vsel %vm478, %v4013, %v4015
  %v4017 = vrot.slane %v3885, 1
  %v4018 = vrot.slane %v3701, 1
  %v4019 = vsel %vm478, %v4017, %v4018
  %v4020 = vrot.slane %v3917, 1
  %v4021 = vsel %vm478, %v4018, %v4020
  %v4022 = vrot.slane %v3886, 1
  %v4023 = vrot.slane %v3704, 1
  %v4024 = vsel %vm478, %v4022, %v4023
  %v4025 = vrot.slane %v3918, 1
  %v4026 = vsel %vm478, %v4023, %v4025
  %v4027 = vrot.slane %v3887, 1
  %v4028 = vrot.slane %v3707, 1
  %v4029 = vsel %vm478, %v4027, %v4028
  %v4030 = vrot.slane %v3919, 1
  %v4031 = vsel %vm478, %v4028, %v4030
  %v4032 = vrot.slane %v3888, 1
  %v4033 = vrot.slane %v3710, 1
  %v4034 = vsel %vm478, %v4032, %v4033
  %v4035 = vrot.slane %v3920, 1
  %v4036 = vsel %vm478, %v4033, %v4035
  %v4037 = vrot.slane %v3889, 1
  %v4038 = vrot.slane %v3713, 1
  %v4039 = vsel %vm478, %v4037, %v4038
  %v4040 = vrot.slane %v3921, 1
  %v4041 = vsel %vm478, %v4038, %v4040
  %v4042 = vrot.slane %v3890, 1
  %v4043 = vrot.slane %v3716, 1
  %v4044 = vsel %vm478, %v4042, %v4043
  %v4045 = vrot.slane %v3922, 1
  %v4046 = vsel %vm478, %v4043, %v4045
  %v4047 = vrot.slane %v3891, 1
  %v4048 = vrot.slane %v3719, 1
  %v4049 = vsel %vm478, %v4047, %v4048
  %v4050 = vrot.slane %v3923, 1
  %v4051 = vsel %vm478, %v4048, %v4050
  %v4052 = vrot.slane %v3892, 1
  %v4053 = vrot.slane %v3722, 1
  %v4054 = vsel %vm478, %v4052, %v4053
  %v4055 = vrot.slane %v3924, 1
  %v4056 = vsel %vm478, %v4053, %v4055
  %v4057 = vrot.slane %v3893, 1
  %v4058 = vrot.slane %v3725, 1
  %v4059 = vsel %vm478, %v4057, %v4058
  %v4060 = vrot.slane %v3925, 1
  %v4061 = vsel %vm478, %v4058, %v4060
  %v4062 = vrot.slane %v3894, 1
  %v4063 = vrot.slane %v3728, 1
  %v4064 = vsel %vm478, %v4062, %v4063
  %v4065 = vrot.slane %v3926, 1
  %v4066 = vsel %vm478, %v4063, %v4065
  %v4067 = vrot.slane %v3895, 1
  %v4068 = vrot.slane %v3731, 1
  %v4069 = vsel %vm478, %v4067, %v4068
  %v4070 = vrot.slane %v3927, 1
  %v4071 = vsel %vm478, %v4068, %v4070
  %v4072 = vrot.slane %v3896, 1
  %v4073 = vrot.slane %v3734, 1
  %v4074 = vsel %vm478, %v4072, %v4073
  %v4075 = vrot.slane %v3928, 1
  %v4076 = vsel %vm478, %v4073, %v4075
  %v4077 = vrot.slane %v3897, 1
  %v4078 = vrot.slane %v3737, 1
  %v4079 = vsel %vm478, %v4077, %v4078
  %v4080 = vrot.slane %v3929, 1
  %v4081 = vsel %vm478, %v4078, %v4080
  %v4082 = vrot.slane %v3899, 1
  %v4083 = vrot.slane %v3743, 1
  %v4084 = vsel %vm478, %v4082, %v4083
  %v4085 = vrot.slane %v3931, 1
  %v4086 = vsel %vm478, %v4083, %v4085
  %v4087 = vrot.slane %v3900, 1
  %v4088 = vrot.slane %v3746, 1
  %v4089 = vsel %vm478, %v4087, %v4088
  %v4090 = vrot.slane %v3932, 1
  %v4091 = vsel %vm478, %v4088, %v4090
  %v4092 = vrot.slane %v3901, 1
  %v4093 = vrot.slane %v3749, 1
  %v4094 = vsel %vm478, %v4092, %v4093
  %v4095 = vrot.slane %v3933, 1
  %v4096 = vsel %vm478, %v4093, %v4095
  %v4097 = vrot.slane %v3902, 1
  %v4098 = vrot.slane %v3752, 1
  %v4099 = vsel %vm478, %v4097, %v4098
  %v4100 = vrot.slane %v3934, 1
  %v4101 = vsel %vm478, %v4098, %v4100
  %v4102 = vrot.slane %v3903, 1
  %v4103 = vrot.slane %v3755, 1
  %v4104 = vsel %vm478, %v4102, %v4103
  %v4105 = vrot.slane %v3935, 1
  %v4106 = vsel %vm478, %v4103, %v4105
  %v4107 = vrot.slane %v3904, 1
  %v4108 = vrot.slane %v3758, 1
  %v4109 = vsel %vm478, %v4107, %v4108
  %v4110 = vrot.slane %v3936, 1
  %v4111 = vsel %vm478, %v4108, %v4110
  %v4112 = vrot.slane %v3905, 1
  %v4113 = vrot.slane %v3761, 1
  %v4114 = vsel %vm478, %v4112, %v4113
  %v4115 = vrot.slane %v3937, 1
  %v4116 = vsel %vm478, %v4113, %v4115
  %v4117 = vrot.slane %v3906, 1
  %v4118 = vrot.slane %v3764, 1
  %v4119 = vsel %vm478, %v4117, %v4118
  %v4120 = vrot.slane %v3938, 1
  %v4121 = vsel %vm478, %v4118, %v4120
  %v4122 = vrot.slane %v3907, 1
  %v4123 = vrot.slane %v3767, 1
  %v4124 = vsel %vm478, %v4122, %v4123
  %v4125 = vrot.slane %v3939, 1
  %v4126 = vsel %vm478, %v4123, %v4125
  %v4127 = vrot.slane %v3908, 1
  %v4128 = vrot.slane %v3770, 1
  %v4129 = vsel %vm478, %v4127, %v4128
  %v4130 = vrot.slane %v3940, 1
  %v4131 = vsel %vm478, %v4128, %v4130
  %v4132 = vrot.slane %v3909, 1
  %v4133 = vrot.slane %v3773, 1
  %v4134 = vsel %vm478, %v4132, %v4133
  %v4135 = vrot.slane %v3941, 1
  %v4136 = vsel %vm478, %v4133, %v4135
  %v4137 = vrot.slane %v3910, 1
  %v4138 = vrot.slane %v3776, 1
  %v4139 = vsel %vm478, %v4137, %v4138
  %v4140 = vrot.slane %v3942, 1
  %v4141 = vsel %vm478, %v4138, %v4140
  %v4142 = vrot.slane %v3911, 1
  %v4143 = vrot.slane %v3779, 1
  %v4144 = vsel %vm478, %v4142, %v4143
  %v4145 = vrot.slane %v3943, 1
  %v4146 = vsel %vm478, %v4143, %v4145
  %v4147 = vrot.slane %v3912, 1
  %v4148 = vrot.slane %v3782, 1
  %v4149 = vsel %vm478, %v4147, %v4148
  %v4150 = vrot.slane %v3944, 1
  %v4151 = vsel %vm478, %v4148, %v4150
  %v4152 = vrot.slane %v3913, 1
  %v4153 = vrot.slane %v3785, 1
  %v4154 = vsel %vm478, %v4152, %v4153
  %v4155 = vrot.slane %v3945, 1
  %v4156 = vsel %vm478, %v4153, %v4155
  %4157 = vrot.lane.b32.xlu0 %v4009, 4
  %v4158 = vpop.permute.xlu0 %4157
  %4159 = vrot.lane.b32.xlu0 %v4011, 4
  %v4160 = vpop.permute.xlu0 %4159
  %4161 = vrot.lane.b32.xlu0 %v4014, 4
  %v4162 = vpop.permute.xlu0 %4161
  %4163 = vrot.lane.b32.xlu0 %v4016, 4
  %v4164 = vpop.permute.xlu0 %4163
  %4165 = vrot.lane.b32.xlu0 %v4019, 4
  %v4166 = vpop.permute.xlu0 %4165
  %4167 = vrot.lane.b32.xlu0 %v4021, 4
  %v4168 = vpop.permute.xlu0 %4167
  %4169 = vrot.lane.b32.xlu0 %v4024, 4
  %v4170 = vpop.permute.xlu0 %4169
  %4171 = vrot.lane.b32.xlu0 %v4026, 4
  %v4172 = vpop.permute.xlu0 %4171
  %4173 = vrot.lane.b32.xlu0 %v4029, 4
  %v4174 = vpop.permute.xlu0 %4173
  %4175 = vrot.lane.b32.xlu0 %v4031, 4
  %v4176 = vpop.permute.xlu0 %4175
  %4177 = vrot.lane.b32.xlu0 %v4034, 4
  %v4178 = vpop.permute.xlu0 %4177
  %4179 = vrot.lane.b32.xlu0 %v4036, 4
  %v4180 = vpop.permute.xlu0 %4179
  %4181 = vrot.lane.b32.xlu0 %v4039, 4
  %v4182 = vpop.permute.xlu0 %4181
  %4183 = vrot.lane.b32.xlu0 %v4041, 4
  %v4184 = vpop.permute.xlu0 %4183
  %4185 = vrot.lane.b32.xlu0 %v4044, 4
  %v4186 = vpop.permute.xlu0 %4185
  %4187 = vrot.lane.b32.xlu0 %v4046, 4
  %v4188 = vpop.permute.xlu0 %4187
  %4189 = vrot.lane.b32.xlu0 %v4049, 4
  %v4190 = vpop.permute.xlu0 %4189
  %4191 = vrot.lane.b32.xlu0 %v4051, 4
  %v4192 = vpop.permute.xlu0 %4191
  %4193 = vrot.lane.b32.xlu0 %v4054, 4
  %v4194 = vpop.permute.xlu0 %4193
  %4195 = vrot.lane.b32.xlu0 %v4056, 4
  %v4196 = vpop.permute.xlu0 %4195
  %4197 = vrot.lane.b32.xlu0 %v4059, 4
  %v4198 = vpop.permute.xlu0 %4197
  %4199 = vrot.lane.b32.xlu0 %v4061, 4
  %v4200 = vpop.permute.xlu0 %4199
  %4201 = vrot.lane.b32.xlu0 %v4064, 4
  %v4202 = vpop.permute.xlu0 %4201
  %4203 = vrot.lane.b32.xlu0 %v4066, 4
  %v4204 = vpop.permute.xlu0 %4203
  %4205 = vrot.lane.b32.xlu0 %v4069, 4
  %v4206 = vpop.permute.xlu0 %4205
  %4207 = vrot.lane.b32.xlu0 %v4071, 4
  %v4208 = vpop.permute.xlu0 %4207
  %4209 = vrot.lane.b32.xlu0 %v4074, 4
  %v4210 = vpop.permute.xlu0 %4209
  %4211 = vrot.lane.b32.xlu0 %v4076, 4
  %v4212 = vpop.permute.xlu0 %4211
  %4213 = vrot.lane.b32.xlu0 %v4079, 4
  %v4214 = vpop.permute.xlu0 %4213
  %4215 = vrot.lane.b32.xlu0 %v4081, 4
  %v4216 = vpop.permute.xlu0 %4215
  %4217 = vrot.lane.b32.xlu0 %v4084, 4
  %v4218 = vpop.permute.xlu0 %4217
  %4219 = vrot.lane.b32.xlu0 %v4086, 4
  %v4220 = vpop.permute.xlu0 %4219
  %4221 = vrot.lane.b32.xlu0 %v4089, 4
  %v4222 = vpop.permute.xlu0 %4221
  %4223 = vrot.lane.b32.xlu0 %v4091, 4
  %v4224 = vpop.permute.xlu0 %4223
  %4225 = vrot.lane.b32.xlu0 %v4094, 4
  %v4226 = vpop.permute.xlu0 %4225
  %4227 = vrot.lane.b32.xlu0 %v4096, 4
  %v4228 = vpop.permute.xlu0 %4227
  %4229 = vrot.lane.b32.xlu0 %v4099, 4
  %v4230 = vpop.permute.xlu0 %4229
  %4231 = vrot.lane.b32.xlu0 %v4101, 4
  %v4232 = vpop.permute.xlu0 %4231
  %4233 = vrot.lane.b32.xlu0 %v4104, 4
  %v4234 = vpop.permute.xlu0 %4233
  %4235 = vrot.lane.b32.xlu0 %v4106, 4
  %v4236 = vpop.permute.xlu0 %4235
  %4237 = vrot.lane.b32.xlu0 %v4109, 4
  %v4238 = vpop.permute.xlu0 %4237
  %4239 = vrot.lane.b32.xlu0 %v4111, 4
  %v4240 = vpop.permute.xlu0 %4239
  %4241 = vrot.lane.b32.xlu0 %v4114, 4
  %v4242 = vpop.permute.xlu0 %4241
  %4243 = vrot.lane.b32.xlu0 %v4116, 4
  %v4244 = vpop.permute.xlu0 %4243
  %4245 = vrot.lane.b32.xlu0 %v4119, 4
  %v4246 = vpop.permute.xlu0 %4245
  %4247 = vrot.lane.b32.xlu0 %v4121, 4
  %v4248 = vpop.permute.xlu0 %4247
  %4249 = vrot.lane.b32.xlu0 %v4124, 4
  %v4250 = vpop.permute.xlu0 %4249
  %4251 = vrot.lane.b32.xlu0 %v4126, 4
  %v4252 = vpop.permute.xlu0 %4251
  %4253 = vrot.lane.b32.xlu0 %v4129, 4
  %v4254 = vpop.permute.xlu0 %4253
  %4255 = vrot.lane.b32.xlu0 %v4131, 4
  %v4256 = vpop.permute.xlu0 %4255
  %4257 = vrot.lane.b32.xlu0 %v4134, 4
  %v4258 = vpop.permute.xlu0 %4257
  %4259 = vrot.lane.b32.xlu0 %v4136, 4
  %v4260 = vpop.permute.xlu0 %4259
  %4261 = vrot.lane.b32.xlu0 %v4139, 4
  %v4262 = vpop.permute.xlu0 %4261
  %4263 = vrot.lane.b32.xlu0 %v4141, 4
  %v4264 = vpop.permute.xlu0 %4263
  %4265 = vrot.lane.b32.xlu0 %v4144, 4
  %v4266 = vpop.permute.xlu0 %4265
  %4267 = vrot.lane.b32.xlu0 %v4146, 4
  %v4268 = vpop.permute.xlu0 %4267
  %4269 = vrot.lane.b32.xlu0 %v4149, 4
  %v4270 = vpop.permute.xlu0 %4269
  %4271 = vrot.lane.b32.xlu0 %v4151, 4
  %v4272 = vpop.permute.xlu0 %4271
  %4273 = vrot.lane.b32.xlu0 %v4154, 4
  %v4274 = vpop.permute.xlu0 %4273
  %4275 = vrot.lane.b32.xlu0 %v4156, 4
  %v4276 = vpop.permute.xlu0 %4275
  %v4337 = vrot.slane %v3883, 2
  %v4338 = vrot.slane %v3695, 2
  %v4339 = vsel %vm820, %v4337, %v4338
  %v4340 = vrot.slane %v3915, 2
  %v4341 = vsel %vm820, %v4338, %v4340
  %v4342 = vrot.slane %v3884, 2
  %v4343 = vrot.slane %v3698, 2
  %v4344 = vsel %vm820, %v4342, %v4343
  %v4345 = vrot.slane %v3916, 2
  %v4346 = vsel %vm820, %v4343, %v4345
  %v4347 = vrot.slane %v3885, 2
  %v4348 = vrot.slane %v3701, 2
  %v4349 = vsel %vm820, %v4347, %v4348
  %v4350 = vrot.slane %v3917, 2
  %v4351 = vsel %vm820, %v4348, %v4350
  %v4352 = vrot.slane %v3886, 2
  %v4353 = vrot.slane %v3704, 2
  %v4354 = vsel %vm820, %v4352, %v4353
  %v4355 = vrot.slane %v3918, 2
  %v4356 = vsel %vm820, %v4353, %v4355
  %v4357 = vrot.slane %v3887, 2
  %v4358 = vrot.slane %v3707, 2
  %v4359 = vsel %vm820, %v4357, %v4358
  %v4360 = vrot.slane %v3919, 2
  %v4361 = vsel %vm820, %v4358, %v4360
  %v4362 = vrot.slane %v3888, 2
  %v4363 = vrot.slane %v3710, 2
  %v4364 = vsel %vm820, %v4362, %v4363
  %v4365 = vrot.slane %v3920, 2
  %v4366 = vsel %vm820, %v4363, %v4365
  %v4367 = vrot.slane %v3889, 2
  %v4368 = vrot.slane %v3713, 2
  %v4369 = vsel %vm820, %v4367, %v4368
  %v4370 = vrot.slane %v3921, 2
  %v4371 = vsel %vm820, %v4368, %v4370
  %v4372 = vrot.slane %v3890, 2
  %v4373 = vrot.slane %v3716, 2
  %v4374 = vsel %vm820, %v4372, %v4373
  %v4375 = vrot.slane %v3922, 2
  %v4376 = vsel %vm820, %v4373, %v4375
  %v4377 = vrot.slane %v3891, 2
  %v4378 = vrot.slane %v3719, 2
  %v4379 = vsel %vm820, %v4377, %v4378
  %v4380 = vrot.slane %v3923, 2
  %v4381 = vsel %vm820, %v4378, %v4380
  %v4382 = vrot.slane %v3892, 2
  %v4383 = vrot.slane %v3722, 2
  %v4384 = vsel %vm820, %v4382, %v4383
  %v4385 = vrot.slane %v3924, 2
  %v4386 = vsel %vm820, %v4383, %v4385
  %v4387 = vrot.slane %v3893, 2
  %v4388 = vrot.slane %v3725, 2
  %v4389 = vsel %vm820, %v4387, %v4388
  %v4390 = vrot.slane %v3925, 2
  %v4391 = vsel %vm820, %v4388, %v4390
  %v4392 = vrot.slane %v3894, 2
  %v4393 = vrot.slane %v3728, 2
  %v4394 = vsel %vm820, %v4392, %v4393
  %v4395 = vrot.slane %v3926, 2
  %v4396 = vsel %vm820, %v4393, %v4395
  %v4397 = vrot.slane %v3895, 2
  %v4398 = vrot.slane %v3731, 2
  %v4399 = vsel %vm820, %v4397, %v4398
  %v4400 = vrot.slane %v3927, 2
  %v4401 = vsel %vm820, %v4398, %v4400
  %v4402 = vrot.slane %v3896, 2
  %v4403 = vrot.slane %v3734, 2
  %v4404 = vsel %vm820, %v4402, %v4403
  %v4405 = vrot.slane %v3928, 2
  %v4406 = vsel %vm820, %v4403, %v4405
  %v4407 = vrot.slane %v3897, 2
  %v4408 = vrot.slane %v3737, 2
  %v4409 = vsel %vm820, %v4407, %v4408
  %v4410 = vrot.slane %v3929, 2
  %v4411 = vsel %vm820, %v4408, %v4410
  %v4412 = vrot.slane %v3899, 2
  %v4413 = vrot.slane %v3743, 2
  %v4414 = vsel %vm820, %v4412, %v4413
  %v4415 = vrot.slane %v3931, 2
  %v4416 = vsel %vm820, %v4413, %v4415
  %v4417 = vrot.slane %v3900, 2
  %v4418 = vrot.slane %v3746, 2
  %v4419 = vsel %vm820, %v4417, %v4418
  %v4420 = vrot.slane %v3932, 2
  %v4421 = vsel %vm820, %v4418, %v4420
  %v4422 = vrot.slane %v3901, 2
  %v4423 = vrot.slane %v3749, 2
  %v4424 = vsel %vm820, %v4422, %v4423
  %v4425 = vrot.slane %v3933, 2
  %v4426 = vsel %vm820, %v4423, %v4425
  %v4427 = vrot.slane %v3902, 2
  %v4428 = vrot.slane %v3752, 2
  %v4429 = vsel %vm820, %v4427, %v4428
  %v4430 = vrot.slane %v3934, 2
  %v4431 = vsel %vm820, %v4428, %v4430
  %v4432 = vrot.slane %v3903, 2
  %v4433 = vrot.slane %v3755, 2
  %v4434 = vsel %vm820, %v4432, %v4433
  %v4435 = vrot.slane %v3935, 2
  %v4436 = vsel %vm820, %v4433, %v4435
  %v4437 = vrot.slane %v3904, 2
  %v4438 = vrot.slane %v3758, 2
  %v4439 = vsel %vm820, %v4437, %v4438
  %v4440 = vrot.slane %v3936, 2
  %v4441 = vsel %vm820, %v4438, %v4440
  %v4442 = vrot.slane %v3905, 2
  %v4443 = vrot.slane %v3761, 2
  %v4444 = vsel %vm820, %v4442, %v4443
  %v4445 = vrot.slane %v3937, 2
  %v4446 = vsel %vm820, %v4443, %v4445
  %v4447 = vrot.slane %v3906, 2
  %v4448 = vrot.slane %v3764, 2
  %v4449 = vsel %vm820, %v4447, %v4448
  %v4450 = vrot.slane %v3938, 2
  %v4451 = vsel %vm820, %v4448, %v4450
  %v4452 = vrot.slane %v3907, 2
  %v4453 = vrot.slane %v3767, 2
  %v4454 = vsel %vm820, %v4452, %v4453
  %v4455 = vrot.slane %v3939, 2
  %v4456 = vsel %vm820, %v4453, %v4455
  %v4457 = vrot.slane %v3908, 2
  %v4458 = vrot.slane %v3770, 2
  %v4459 = vsel %vm820, %v4457, %v4458
  %v4460 = vrot.slane %v3940, 2
  %v4461 = vsel %vm820, %v4458, %v4460
  %v4462 = vrot.slane %v3909, 2
  %v4463 = vrot.slane %v3773, 2
  %v4464 = vsel %vm820, %v4462, %v4463
  %v4465 = vrot.slane %v3941, 2
  %v4466 = vsel %vm820, %v4463, %v4465
  %v4467 = vrot.slane %v3910, 2
  %v4468 = vrot.slane %v3776, 2
  %v4469 = vsel %vm820, %v4467, %v4468
  %v4470 = vrot.slane %v3942, 2
  %v4471 = vsel %vm820, %v4468, %v4470
  %v4472 = vrot.slane %v3911, 2
  %v4473 = vrot.slane %v3779, 2
  %v4474 = vsel %vm820, %v4472, %v4473
  %v4475 = vrot.slane %v3943, 2
  %v4476 = vsel %vm820, %v4473, %v4475
  %v4477 = vrot.slane %v3912, 2
  %v4478 = vrot.slane %v3782, 2
  %v4479 = vsel %vm820, %v4477, %v4478
  %v4480 = vrot.slane %v3944, 2
  %v4481 = vsel %vm820, %v4478, %v4480
  %v4482 = vrot.slane %v3913, 2
  %v4483 = vrot.slane %v3785, 2
  %v4484 = vsel %vm820, %v4482, %v4483
  %v4485 = vrot.slane %v3945, 2
  %v4486 = vsel %vm820, %v4483, %v4485
  %4487 = vrot.lane.b32.xlu0 %v4339, 8
  %v4488 = vpop.permute.xlu0 %4487
  %4489 = vrot.lane.b32.xlu0 %v4341, 8
  %v4490 = vpop.permute.xlu0 %4489
  %4491 = vrot.lane.b32.xlu0 %v4344, 8
  %v4492 = vpop.permute.xlu0 %4491
  %4493 = vrot.lane.b32.xlu0 %v4346, 8
  %v4494 = vpop.permute.xlu0 %4493
  %4495 = vrot.lane.b32.xlu0 %v4349, 8
  %v4496 = vpop.permute.xlu0 %4495
  %4497 = vrot.lane.b32.xlu0 %v4351, 8
  %v4498 = vpop.permute.xlu0 %4497
  %4499 = vrot.lane.b32.xlu0 %v4354, 8
  %v4500 = vpop.permute.xlu0 %4499
  %4501 = vrot.lane.b32.xlu0 %v4356, 8
  %v4502 = vpop.permute.xlu0 %4501
  %4503 = vrot.lane.b32.xlu0 %v4359, 8
  %v4504 = vpop.permute.xlu0 %4503
  %4505 = vrot.lane.b32.xlu0 %v4361, 8
  %v4506 = vpop.permute.xlu0 %4505
  %4507 = vrot.lane.b32.xlu0 %v4364, 8
  %v4508 = vpop.permute.xlu0 %4507
  %4509 = vrot.lane.b32.xlu0 %v4366, 8
  %v4510 = vpop.permute.xlu0 %4509
  %4511 = vrot.lane.b32.xlu0 %v4369, 8
  %v4512 = vpop.permute.xlu0 %4511
  %4513 = vrot.lane.b32.xlu0 %v4371, 8
  %v4514 = vpop.permute.xlu0 %4513
  %4515 = vrot.lane.b32.xlu0 %v4374, 8
  %v4516 = vpop.permute.xlu0 %4515
  %4517 = vrot.lane.b32.xlu0 %v4376, 8
  %v4518 = vpop.permute.xlu0 %4517
  %4519 = vrot.lane.b32.xlu0 %v4379, 8
  %v4520 = vpop.permute.xlu0 %4519
  %4521 = vrot.lane.b32.xlu0 %v4381, 8
  %v4522 = vpop.permute.xlu0 %4521
  %4523 = vrot.lane.b32.xlu0 %v4384, 8
  %v4524 = vpop.permute.xlu0 %4523
  %4525 = vrot.lane.b32.xlu0 %v4386, 8
  %v4526 = vpop.permute.xlu0 %4525
  %4527 = vrot.lane.b32.xlu0 %v4389, 8
  %v4528 = vpop.permute.xlu0 %4527
  %4529 = vrot.lane.b32.xlu0 %v4391, 8
  %v4530 = vpop.permute.xlu0 %4529
  %4531 = vrot.lane.b32.xlu0 %v4394, 8
  %v4532 = vpop.permute.xlu0 %4531
  %4533 = vrot.lane.b32.xlu0 %v4396, 8
  %v4534 = vpop.permute.xlu0 %4533
  %4535 = vrot.lane.b32.xlu0 %v4399, 8
  %v4536 = vpop.permute.xlu0 %4535
  %4537 = vrot.lane.b32.xlu0 %v4401, 8
  %v4538 = vpop.permute.xlu0 %4537
  %4539 = vrot.lane.b32.xlu0 %v4404, 8
  %v4540 = vpop.permute.xlu0 %4539
  %4541 = vrot.lane.b32.xlu0 %v4406, 8
  %v4542 = vpop.permute.xlu0 %4541
  %4543 = vrot.lane.b32.xlu0 %v4409, 8
  %v4544 = vpop.permute.xlu0 %4543
  %4545 = vrot.lane.b32.xlu0 %v4411, 8
  %v4546 = vpop.permute.xlu0 %4545
  %4547 = vrot.lane.b32.xlu0 %v4414, 8
  %v4548 = vpop.permute.xlu0 %4547
  %4549 = vrot.lane.b32.xlu0 %v4416, 8
  %v4550 = vpop.permute.xlu0 %4549
  %4551 = vrot.lane.b32.xlu0 %v4419, 8
  %v4552 = vpop.permute.xlu0 %4551
  %4553 = vrot.lane.b32.xlu0 %v4421, 8
  %v4554 = vpop.permute.xlu0 %4553
  %4555 = vrot.lane.b32.xlu0 %v4424, 8
  %v4556 = vpop.permute.xlu0 %4555
  %4557 = vrot.lane.b32.xlu0 %v4426, 8
  %v4558 = vpop.permute.xlu0 %4557
  %4559 = vrot.lane.b32.xlu0 %v4429, 8
  %v4560 = vpop.permute.xlu0 %4559
  %4561 = vrot.lane.b32.xlu0 %v4431, 8
  %v4562 = vpop.permute.xlu0 %4561
  %4563 = vrot.lane.b32.xlu0 %v4434, 8
  %v4564 = vpop.permute.xlu0 %4563
  %4565 = vrot.lane.b32.xlu0 %v4436, 8
  %v4566 = vpop.permute.xlu0 %4565
  %4567 = vrot.lane.b32.xlu0 %v4439, 8
  %v4568 = vpop.permute.xlu0 %4567
  %4569 = vrot.lane.b32.xlu0 %v4441, 8
  %v4570 = vpop.permute.xlu0 %4569
  %4571 = vrot.lane.b32.xlu0 %v4444, 8
  %v4572 = vpop.permute.xlu0 %4571
  %4573 = vrot.lane.b32.xlu0 %v4446, 8
  %v4574 = vpop.permute.xlu0 %4573
  %4575 = vrot.lane.b32.xlu0 %v4449, 8
  %v4576 = vpop.permute.xlu0 %4575
  %4577 = vrot.lane.b32.xlu0 %v4451, 8
  %v4578 = vpop.permute.xlu0 %4577
  %4579 = vrot.lane.b32.xlu0 %v4454, 8
  %v4580 = vpop.permute.xlu0 %4579
  %4581 = vrot.lane.b32.xlu0 %v4456, 8
  %v4582 = vpop.permute.xlu0 %4581
  %4583 = vrot.lane.b32.xlu0 %v4459, 8
  %v4584 = vpop.permute.xlu0 %4583
  %4585 = vrot.lane.b32.xlu0 %v4461, 8
  %v4586 = vpop.permute.xlu0 %4585
  %4587 = vrot.lane.b32.xlu0 %v4464, 8
  %v4588 = vpop.permute.xlu0 %4587
  %4589 = vrot.lane.b32.xlu0 %v4466, 8
  %v4590 = vpop.permute.xlu0 %4589
  %4591 = vrot.lane.b32.xlu0 %v4469, 8
  %v4592 = vpop.permute.xlu0 %4591
  %4593 = vrot.lane.b32.xlu0 %v4471, 8
  %v4594 = vpop.permute.xlu0 %4593
  %4595 = vrot.lane.b32.xlu0 %v4474, 8
  %v4596 = vpop.permute.xlu0 %4595
  %4597 = vrot.lane.b32.xlu0 %v4476, 8
  %v4598 = vpop.permute.xlu0 %4597
  %4599 = vrot.lane.b32.xlu0 %v4479, 8
  %v4600 = vpop.permute.xlu0 %4599
  %4601 = vrot.lane.b32.xlu0 %v4481, 8
  %v4602 = vpop.permute.xlu0 %4601
  %4603 = vrot.lane.b32.xlu0 %v4484, 8
  %v4604 = vpop.permute.xlu0 %4603
  %4605 = vrot.lane.b32.xlu0 %v4486, 8
  %v4606 = vpop.permute.xlu0 %4605
  %4669 = vrot.lane.b32.xlu0 %v3883, 12
  %v4670 = vpop.permute.xlu0 %4669
  %4671 = vrot.lane.b32.xlu0 %v3695, 12
  %v4672 = vpop.permute.xlu0 %4671
  %4673 = vrot.lane.b32.xlu0 %v3884, 12
  %v4674 = vpop.permute.xlu0 %4673
  %4675 = vrot.lane.b32.xlu0 %v3698, 12
  %v4676 = vpop.permute.xlu0 %4675
  %4677 = vrot.lane.b32.xlu0 %v3885, 12
  %v4678 = vpop.permute.xlu0 %4677
  %4679 = vrot.lane.b32.xlu0 %v3701, 12
  %v4680 = vpop.permute.xlu0 %4679
  %4681 = vrot.lane.b32.xlu0 %v3886, 12
  %v4682 = vpop.permute.xlu0 %4681
  %4683 = vrot.lane.b32.xlu0 %v3704, 12
  %v4684 = vpop.permute.xlu0 %4683
  %4685 = vrot.lane.b32.xlu0 %v3887, 12
  %v4686 = vpop.permute.xlu0 %4685
  %4687 = vrot.lane.b32.xlu0 %v3707, 12
  %v4688 = vpop.permute.xlu0 %4687
  %4689 = vrot.lane.b32.xlu0 %v3888, 12
  %v4690 = vpop.permute.xlu0 %4689
  %4691 = vrot.lane.b32.xlu0 %v3710, 12
  %v4692 = vpop.permute.xlu0 %4691
  %4693 = vrot.lane.b32.xlu0 %v3889, 12
  %v4694 = vpop.permute.xlu0 %4693
  %4695 = vrot.lane.b32.xlu0 %v3713, 12
  %v4696 = vpop.permute.xlu0 %4695
  %4697 = vrot.lane.b32.xlu0 %v3890, 12
  %v4698 = vpop.permute.xlu0 %4697
  %4699 = vrot.lane.b32.xlu0 %v3716, 12
  %v4700 = vpop.permute.xlu0 %4699
  %4701 = vrot.lane.b32.xlu0 %v3891, 12
  %v4702 = vpop.permute.xlu0 %4701
  %4703 = vrot.lane.b32.xlu0 %v3719, 12
  %v4704 = vpop.permute.xlu0 %4703
  %4705 = vrot.lane.b32.xlu0 %v3892, 12
  %v4706 = vpop.permute.xlu0 %4705
  %4707 = vrot.lane.b32.xlu0 %v3722, 12
  %v4708 = vpop.permute.xlu0 %4707
  %4709 = vrot.lane.b32.xlu0 %v3893, 12
  %v4710 = vpop.permute.xlu0 %4709
  %4711 = vrot.lane.b32.xlu0 %v3725, 12
  %v4712 = vpop.permute.xlu0 %4711
  %4713 = vrot.lane.b32.xlu0 %v3894, 12
  %v4714 = vpop.permute.xlu0 %4713
  %4715 = vrot.lane.b32.xlu0 %v3728, 12
  %v4716 = vpop.permute.xlu0 %4715
  %4717 = vrot.lane.b32.xlu0 %v3895, 12
  %v4718 = vpop.permute.xlu0 %4717
  %4719 = vrot.lane.b32.xlu0 %v3731, 12
  %v4720 = vpop.permute.xlu0 %4719
  %4721 = vrot.lane.b32.xlu0 %v3896, 12
  %v4722 = vpop.permute.xlu0 %4721
  %4723 = vrot.lane.b32.xlu0 %v3734, 12
  %v4724 = vpop.permute.xlu0 %4723
  %4725 = vrot.lane.b32.xlu0 %v3897, 12
  %v4726 = vpop.permute.xlu0 %4725
  %4727 = vrot.lane.b32.xlu0 %v3737, 12
  %v4728 = vpop.permute.xlu0 %4727
  %4729 = vrot.lane.b32.xlu0 %v3898, 12
  %v4730 = vpop.permute.xlu0 %4729
  %4731 = vrot.lane.b32.xlu0 %v3740, 12
  %v4732 = vpop.permute.xlu0 %4731
  %4733 = vrot.lane.b32.xlu0 %v3899, 12
  %v4734 = vpop.permute.xlu0 %4733
  %4735 = vrot.lane.b32.xlu0 %v3743, 12
  %v4736 = vpop.permute.xlu0 %4735
  %4737 = vrot.lane.b32.xlu0 %v3900, 12
  %v4738 = vpop.permute.xlu0 %4737
  %4739 = vrot.lane.b32.xlu0 %v3746, 12
  %v4740 = vpop.permute.xlu0 %4739
  %4741 = vrot.lane.b32.xlu0 %v3901, 12
  %v4742 = vpop.permute.xlu0 %4741
  %4743 = vrot.lane.b32.xlu0 %v3749, 12
  %v4744 = vpop.permute.xlu0 %4743
  %4745 = vrot.lane.b32.xlu0 %v3902, 12
  %v4746 = vpop.permute.xlu0 %4745
  %4747 = vrot.lane.b32.xlu0 %v3752, 12
  %v4748 = vpop.permute.xlu0 %4747
  %4749 = vrot.lane.b32.xlu0 %v3903, 12
  %v4750 = vpop.permute.xlu0 %4749
  %4751 = vrot.lane.b32.xlu0 %v3755, 12
  %v4752 = vpop.permute.xlu0 %4751
  %4753 = vrot.lane.b32.xlu0 %v3904, 12
  %v4754 = vpop.permute.xlu0 %4753
  %4755 = vrot.lane.b32.xlu0 %v3758, 12
  %v4756 = vpop.permute.xlu0 %4755
  %4757 = vrot.lane.b32.xlu0 %v3905, 12
  %v4758 = vpop.permute.xlu0 %4757
  %4759 = vrot.lane.b32.xlu0 %v3761, 12
  %v4760 = vpop.permute.xlu0 %4759
  %4761 = vrot.lane.b32.xlu0 %v3906, 12
  %v4762 = vpop.permute.xlu0 %4761
  %4763 = vrot.lane.b32.xlu0 %v3764, 12
  %v4764 = vpop.permute.xlu0 %4763
  %4765 = vrot.lane.b32.xlu0 %v3907, 12
  %v4766 = vpop.permute.xlu0 %4765
  %4767 = vrot.lane.b32.xlu0 %v3767, 12
  %v4768 = vpop.permute.xlu0 %4767
  %4769 = vrot.lane.b32.xlu0 %v3908, 12
  %v4770 = vpop.permute.xlu0 %4769
  %4771 = vrot.lane.b32.xlu0 %v3770, 12
  %v4772 = vpop.permute.xlu0 %4771
  %4773 = vrot.lane.b32.xlu0 %v3909, 12
  %v4774 = vpop.permute.xlu0 %4773
  %4775 = vrot.lane.b32.xlu0 %v3773, 12
  %v4776 = vpop.permute.xlu0 %4775
  %4777 = vrot.lane.b32.xlu0 %v3910, 12
  %v4778 = vpop.permute.xlu0 %4777
  %4779 = vrot.lane.b32.xlu0 %v3776, 12
  %v4780 = vpop.permute.xlu0 %4779
  %4781 = vrot.lane.b32.xlu0 %v3911, 12
  %v4782 = vpop.permute.xlu0 %4781
  %4783 = vrot.lane.b32.xlu0 %v3779, 12
  %v4784 = vpop.permute.xlu0 %4783
  %4785 = vrot.lane.b32.xlu0 %v3912, 12
  %v4786 = vpop.permute.xlu0 %4785
  %4787 = vrot.lane.b32.xlu0 %v3782, 12
  %v4788 = vpop.permute.xlu0 %4787
  %4789 = vrot.lane.b32.xlu0 %v3913, 12
  %v4790 = vpop.permute.xlu0 %4789
  %4791 = vrot.lane.b32.xlu0 %v3785, 12
  %v4792 = vpop.permute.xlu0 %4791
  %4793 = vrot.lane.b32.xlu0 %v3914, 12
  %v4794 = vpop.permute.xlu0 %4793
  %4795 = vrot.lane.b32.xlu0 %v3788, 12
  %v4796 = vpop.permute.xlu0 %4795
  %v4863 = vrot.slane %v3898, 1
  %v4864 = vrot.slane %v3740, 1
  %v4865 = vsel %vm478, %v4863, %v4864
  %v4866 = vrot.slane %v3930, 1
  %v4867 = vsel %vm478, %v4864, %v4866
  %v4868 = vrot.slane %v3914, 1
  %v4869 = vrot.slane %v3788, 1
  %v4870 = vsel %vm478, %v4868, %v4869
  %v4871 = vrot.slane %v3946, 1
  %v4872 = vsel %vm478, %v4869, %v4871
  %4873 = vrot.lane.b32.xlu0 %v4009, 16
  %v4874 = vpop.permute.xlu0 %4873
  %4875 = vrot.lane.b32.xlu0 %v4011, 16
  %v4876 = vpop.permute.xlu0 %4875
  %4877 = vrot.lane.b32.xlu0 %v4014, 16
  %v4878 = vpop.permute.xlu0 %4877
  %4879 = vrot.lane.b32.xlu0 %v4016, 16
  %v4880 = vpop.permute.xlu0 %4879
  %4881 = vrot.lane.b32.xlu0 %v4019, 16
  %v4882 = vpop.permute.xlu0 %4881
  %4883 = vrot.lane.b32.xlu0 %v4021, 16
  %v4884 = vpop.permute.xlu0 %4883
  %4885 = vrot.lane.b32.xlu0 %v4024, 16
  %v4886 = vpop.permute.xlu0 %4885
  %4887 = vrot.lane.b32.xlu0 %v4026, 16
  %v4888 = vpop.permute.xlu0 %4887
  %4889 = vrot.lane.b32.xlu0 %v4029, 16
  %v4890 = vpop.permute.xlu0 %4889
  %4891 = vrot.lane.b32.xlu0 %v4031, 16
  %v4892 = vpop.permute.xlu0 %4891
  %4893 = vrot.lane.b32.xlu0 %v4034, 16
  %v4894 = vpop.permute.xlu0 %4893
  %4895 = vrot.lane.b32.xlu0 %v4036, 16
  %v4896 = vpop.permute.xlu0 %4895
  %4897 = vrot.lane.b32.xlu0 %v4039, 16
  %v4898 = vpop.permute.xlu0 %4897
  %4899 = vrot.lane.b32.xlu0 %v4041, 16
  %v4900 = vpop.permute.xlu0 %4899
  %4901 = vrot.lane.b32.xlu0 %v4044, 16
  %v4902 = vpop.permute.xlu0 %4901
  %4903 = vrot.lane.b32.xlu0 %v4046, 16
  %v4904 = vpop.permute.xlu0 %4903
  %4905 = vrot.lane.b32.xlu0 %v4049, 16
  %v4906 = vpop.permute.xlu0 %4905
  %4907 = vrot.lane.b32.xlu0 %v4051, 16
  %v4908 = vpop.permute.xlu0 %4907
  %4909 = vrot.lane.b32.xlu0 %v4054, 16
  %v4910 = vpop.permute.xlu0 %4909
  %4911 = vrot.lane.b32.xlu0 %v4056, 16
  %v4912 = vpop.permute.xlu0 %4911
  %4913 = vrot.lane.b32.xlu0 %v4059, 16
  %v4914 = vpop.permute.xlu0 %4913
  %4915 = vrot.lane.b32.xlu0 %v4061, 16
  %v4916 = vpop.permute.xlu0 %4915
  %4917 = vrot.lane.b32.xlu0 %v4064, 16
  %v4918 = vpop.permute.xlu0 %4917
  %4919 = vrot.lane.b32.xlu0 %v4066, 16
  %v4920 = vpop.permute.xlu0 %4919
  %4921 = vrot.lane.b32.xlu0 %v4069, 16
  %v4922 = vpop.permute.xlu0 %4921
  %4923 = vrot.lane.b32.xlu0 %v4071, 16
  %v4924 = vpop.permute.xlu0 %4923
  %4925 = vrot.lane.b32.xlu0 %v4074, 16
  %v4926 = vpop.permute.xlu0 %4925
  %4927 = vrot.lane.b32.xlu0 %v4076, 16
  %v4928 = vpop.permute.xlu0 %4927
  %4929 = vrot.lane.b32.xlu0 %v4079, 16
  %v4930 = vpop.permute.xlu0 %4929
  %4931 = vrot.lane.b32.xlu0 %v4081, 16
  %v4932 = vpop.permute.xlu0 %4931
  %4933 = vrot.lane.b32.xlu0 %v4865, 16
  %v4934 = vpop.permute.xlu0 %4933
  %4935 = vrot.lane.b32.xlu0 %v4867, 16
  %v4936 = vpop.permute.xlu0 %4935
  %4937 = vrot.lane.b32.xlu0 %v4084, 16
  %v4938 = vpop.permute.xlu0 %4937
  %4939 = vrot.lane.b32.xlu0 %v4086, 16
  %v4940 = vpop.permute.xlu0 %4939
  %4941 = vrot.lane.b32.xlu0 %v4089, 16
  %v4942 = vpop.permute.xlu0 %4941
  %4943 = vrot.lane.b32.xlu0 %v4091, 16
  %v4944 = vpop.permute.xlu0 %4943
  %4945 = vrot.lane.b32.xlu0 %v4094, 16
  %v4946 = vpop.permute.xlu0 %4945
  %4947 = vrot.lane.b32.xlu0 %v4096, 16
  %v4948 = vpop.permute.xlu0 %4947
  %4949 = vrot.lane.b32.xlu0 %v4099, 16
  %v4950 = vpop.permute.xlu0 %4949
  %4951 = vrot.lane.b32.xlu0 %v4101, 16
  %v4952 = vpop.permute.xlu0 %4951
  %4953 = vrot.lane.b32.xlu0 %v4104, 16
  %v4954 = vpop.permute.xlu0 %4953
  %4955 = vrot.lane.b32.xlu0 %v4106, 16
  %v4956 = vpop.permute.xlu0 %4955
  %4957 = vrot.lane.b32.xlu0 %v4109, 16
  %v4958 = vpop.permute.xlu0 %4957
  %4959 = vrot.lane.b32.xlu0 %v4111, 16
  %v4960 = vpop.permute.xlu0 %4959
  %4961 = vrot.lane.b32.xlu0 %v4114, 16
  %v4962 = vpop.permute.xlu0 %4961
  %4963 = vrot.lane.b32.xlu0 %v4116, 16
  %v4964 = vpop.permute.xlu0 %4963
  %4965 = vrot.lane.b32.xlu0 %v4119, 16
  %v4966 = vpop.permute.xlu0 %4965
  %4967 = vrot.lane.b32.xlu0 %v4121, 16
  %v4968 = vpop.permute.xlu0 %4967
  %4969 = vrot.lane.b32.xlu0 %v4124, 16
  %v4970 = vpop.permute.xlu0 %4969
  %4971 = vrot.lane.b32.xlu0 %v4126, 16
  %v4972 = vpop.permute.xlu0 %4971
  %4973 = vrot.lane.b32.xlu0 %v4129, 16
  %v4974 = vpop.permute.xlu0 %4973
  %4975 = vrot.lane.b32.xlu0 %v4131, 16
  %v4976 = vpop.permute.xlu0 %4975
  %4977 = vrot.lane.b32.xlu0 %v4134, 16
  %v4978 = vpop.permute.xlu0 %4977
  %4979 = vrot.lane.b32.xlu0 %v4136, 16
  %v4980 = vpop.permute.xlu0 %4979
  %4981 = vrot.lane.b32.xlu0 %v4139, 16
  %v4982 = vpop.permute.xlu0 %4981
  %4983 = vrot.lane.b32.xlu0 %v4141, 16
  %v4984 = vpop.permute.xlu0 %4983
  %4985 = vrot.lane.b32.xlu0 %v4144, 16
  %v4986 = vpop.permute.xlu0 %4985
  %4987 = vrot.lane.b32.xlu0 %v4146, 16
  %v4988 = vpop.permute.xlu0 %4987
  %4989 = vrot.lane.b32.xlu0 %v4149, 16
  %v4990 = vpop.permute.xlu0 %4989
  %4991 = vrot.lane.b32.xlu0 %v4151, 16
  %v4992 = vpop.permute.xlu0 %4991
  %4993 = vrot.lane.b32.xlu0 %v4154, 16
  %v4994 = vpop.permute.xlu0 %4993
  %4995 = vrot.lane.b32.xlu0 %v4156, 16
  %v4996 = vpop.permute.xlu0 %4995
  %4997 = vrot.lane.b32.xlu0 %v4870, 16
  %v4998 = vpop.permute.xlu0 %4997
  %4999 = vrot.lane.b32.xlu0 %v4872, 16
  %v5000 = vpop.permute.xlu0 %4999
  %v5065 = vrot.slane %v3898, 2
  %v5066 = vrot.slane %v3740, 2
  %v5067 = vsel %vm820, %v5065, %v5066
  %v5068 = vrot.slane %v3930, 2
  %v5069 = vsel %vm820, %v5066, %v5068
  %v5070 = vrot.slane %v3914, 2
  %v5071 = vrot.slane %v3788, 2
  %v5072 = vsel %vm820, %v5070, %v5071
  %v5073 = vrot.slane %v3946, 2
  %v5074 = vsel %vm820, %v5071, %v5073
  %5075 = vrot.lane.b32.xlu0 %v4339, 20
  %v5076 = vpop.permute.xlu0 %5075
  %5077 = vrot.lane.b32.xlu0 %v4341, 20
  %v5078 = vpop.permute.xlu0 %5077
  %5079 = vrot.lane.b32.xlu0 %v4344, 20
  %v5080 = vpop.permute.xlu0 %5079
  %5081 = vrot.lane.b32.xlu0 %v4346, 20
  %v5082 = vpop.permute.xlu0 %5081
  %5083 = vrot.lane.b32.xlu0 %v4349, 20
  %v5084 = vpop.permute.xlu0 %5083
  %5085 = vrot.lane.b32.xlu0 %v4351, 20
  %v5086 = vpop.permute.xlu0 %5085
  %5087 = vrot.lane.b32.xlu0 %v4354, 20
  %v5088 = vpop.permute.xlu0 %5087
  %5089 = vrot.lane.b32.xlu0 %v4356, 20
  %v5090 = vpop.permute.xlu0 %5089
  %5091 = vrot.lane.b32.xlu0 %v4359, 20
  %v5092 = vpop.permute.xlu0 %5091
  %5093 = vrot.lane.b32.xlu0 %v4361, 20
  %v5094 = vpop.permute.xlu0 %5093
  %5095 = vrot.lane.b32.xlu0 %v4364, 20
  %v5096 = vpop.permute.xlu0 %5095
  %5097 = vrot.lane.b32.xlu0 %v4366, 20
  %v5098 = vpop.permute.xlu0 %5097
  %5099 = vrot.lane.b32.xlu0 %v4369, 20
  %v5100 = vpop.permute.xlu0 %5099
  %5101 = vrot.lane.b32.xlu0 %v4371, 20
  %v5102 = vpop.permute.xlu0 %5101
  %5103 = vrot.lane.b32.xlu0 %v4374, 20
  %v5104 = vpop.permute.xlu0 %5103
  %5105 = vrot.lane.b32.xlu0 %v4376, 20
  %v5106 = vpop.permute.xlu0 %5105
  %5107 = vrot.lane.b32.xlu0 %v4379, 20
  %v5108 = vpop.permute.xlu0 %5107
  %5109 = vrot.lane.b32.xlu0 %v4381, 20
  %v5110 = vpop.permute.xlu0 %5109
  %5111 = vrot.lane.b32.xlu0 %v4384, 20
  %v5112 = vpop.permute.xlu0 %5111
  %5113 = vrot.lane.b32.xlu0 %v4386, 20
  %v5114 = vpop.permute.xlu0 %5113
  %5115 = vrot.lane.b32.xlu0 %v4389, 20
  %v5116 = vpop.permute.xlu0 %5115
  %5117 = vrot.lane.b32.xlu0 %v4391, 20
  %v5118 = vpop.permute.xlu0 %5117
  %5119 = vrot.lane.b32.xlu0 %v4394, 20
  %v5120 = vpop.permute.xlu0 %5119
  %5121 = vrot.lane.b32.xlu0 %v4396, 20
  %v5122 = vpop.permute.xlu0 %5121
  %5123 = vrot.lane.b32.xlu0 %v4399, 20
  %v5124 = vpop.permute.xlu0 %5123
  %5125 = vrot.lane.b32.xlu0 %v4401, 20
  %v5126 = vpop.permute.xlu0 %5125
  %5127 = vrot.lane.b32.xlu0 %v4404, 20
  %v5128 = vpop.permute.xlu0 %5127
  %5129 = vrot.lane.b32.xlu0 %v4406, 20
  %v5130 = vpop.permute.xlu0 %5129
  %5131 = vrot.lane.b32.xlu0 %v4409, 20
  %v5132 = vpop.permute.xlu0 %5131
  %5133 = vrot.lane.b32.xlu0 %v4411, 20
  %v5134 = vpop.permute.xlu0 %5133
  %5135 = vrot.lane.b32.xlu0 %v5067, 20
  %v5136 = vpop.permute.xlu0 %5135
  %5137 = vrot.lane.b32.xlu0 %v5069, 20
  %v5138 = vpop.permute.xlu0 %5137
  %5139 = vrot.lane.b32.xlu0 %v4414, 20
  %v5140 = vpop.permute.xlu0 %5139
  %5141 = vrot.lane.b32.xlu0 %v4416, 20
  %v5142 = vpop.permute.xlu0 %5141
  %5143 = vrot.lane.b32.xlu0 %v4419, 20
  %v5144 = vpop.permute.xlu0 %5143
  %5145 = vrot.lane.b32.xlu0 %v4421, 20
  %v5146 = vpop.permute.xlu0 %5145
  %5147 = vrot.lane.b32.xlu0 %v4424, 20
  %v5148 = vpop.permute.xlu0 %5147
  %5149 = vrot.lane.b32.xlu0 %v4426, 20
  %v5150 = vpop.permute.xlu0 %5149
  %5151 = vrot.lane.b32.xlu0 %v4429, 20
  %v5152 = vpop.permute.xlu0 %5151
  %5153 = vrot.lane.b32.xlu0 %v4431, 20
  %v5154 = vpop.permute.xlu0 %5153
  %5155 = vrot.lane.b32.xlu0 %v4434, 20
  %v5156 = vpop.permute.xlu0 %5155
  %5157 = vrot.lane.b32.xlu0 %v4436, 20
  %v5158 = vpop.permute.xlu0 %5157
  %5159 = vrot.lane.b32.xlu0 %v4439, 20
  %v5160 = vpop.permute.xlu0 %5159
  %5161 = vrot.lane.b32.xlu0 %v4441, 20
  %v5162 = vpop.permute.xlu0 %5161
  %5163 = vrot.lane.b32.xlu0 %v4444, 20
  %v5164 = vpop.permute.xlu0 %5163
  %5165 = vrot.lane.b32.xlu0 %v4446, 20
  %v5166 = vpop.permute.xlu0 %5165
  %5167 = vrot.lane.b32.xlu0 %v4449, 20
  %v5168 = vpop.permute.xlu0 %5167
  %5169 = vrot.lane.b32.xlu0 %v4451, 20
  %v5170 = vpop.permute.xlu0 %5169
  %5171 = vrot.lane.b32.xlu0 %v4454, 20
  %v5172 = vpop.permute.xlu0 %5171
  %5173 = vrot.lane.b32.xlu0 %v4456, 20
  %v5174 = vpop.permute.xlu0 %5173
  %5175 = vrot.lane.b32.xlu0 %v4459, 20
  %v5176 = vpop.permute.xlu0 %5175
  %5177 = vrot.lane.b32.xlu0 %v4461, 20
  %v5178 = vpop.permute.xlu0 %5177
  %5179 = vrot.lane.b32.xlu0 %v4464, 20
  %v5180 = vpop.permute.xlu0 %5179
  %5181 = vrot.lane.b32.xlu0 %v4466, 20
  %v5182 = vpop.permute.xlu0 %5181
  %5183 = vrot.lane.b32.xlu0 %v4469, 20
  %v5184 = vpop.permute.xlu0 %5183
  %5185 = vrot.lane.b32.xlu0 %v4471, 20
  %v5186 = vpop.permute.xlu0 %5185
  %5187 = vrot.lane.b32.xlu0 %v4474, 20
  %v5188 = vpop.permute.xlu0 %5187
  %5189 = vrot.lane.b32.xlu0 %v4476, 20
  %v5190 = vpop.permute.xlu0 %5189
  %5191 = vrot.lane.b32.xlu0 %v4479, 20
  %v5192 = vpop.permute.xlu0 %5191
  %5193 = vrot.lane.b32.xlu0 %v4481, 20
  %v5194 = vpop.permute.xlu0 %5193
  %5195 = vrot.lane.b32.xlu0 %v4484, 20
  %v5196 = vpop.permute.xlu0 %5195
  %5197 = vrot.lane.b32.xlu0 %v4486, 20
  %v5198 = vpop.permute.xlu0 %5197
  %5199 = vrot.lane.b32.xlu0 %v5072, 20
  %v5200 = vpop.permute.xlu0 %5199
  %5201 = vrot.lane.b32.xlu0 %v5074, 20
  %v5202 = vpop.permute.xlu0 %5201
  %5267 = vrot.lane.b32.xlu0 %v3884, 24
  %v5268 = vpop.permute.xlu0 %5267
  %5269 = vrot.lane.b32.xlu0 %v3698, 24
  %v5270 = vpop.permute.xlu0 %5269
  %5271 = vrot.lane.b32.xlu0 %v3885, 24
  %v5272 = vpop.permute.xlu0 %5271
  %5273 = vrot.lane.b32.xlu0 %v3701, 24
  %v5274 = vpop.permute.xlu0 %5273
  %5275 = vrot.lane.b32.xlu0 %v3886, 24
  %v5276 = vpop.permute.xlu0 %5275
  %5277 = vrot.lane.b32.xlu0 %v3704, 24
  %v5278 = vpop.permute.xlu0 %5277
  %5279 = vrot.lane.b32.xlu0 %v3887, 24
  %v5280 = vpop.permute.xlu0 %5279
  %5281 = vrot.lane.b32.xlu0 %v3707, 24
  %v5282 = vpop.permute.xlu0 %5281
  %5283 = vrot.lane.b32.xlu0 %v3888, 24
  %v5284 = vpop.permute.xlu0 %5283
  %5285 = vrot.lane.b32.xlu0 %v3710, 24
  %v5286 = vpop.permute.xlu0 %5285
  %5287 = vrot.lane.b32.xlu0 %v3889, 24
  %v5288 = vpop.permute.xlu0 %5287
  %5289 = vrot.lane.b32.xlu0 %v3713, 24
  %v5290 = vpop.permute.xlu0 %5289
  %5291 = vrot.lane.b32.xlu0 %v3890, 24
  %v5292 = vpop.permute.xlu0 %5291
  %5293 = vrot.lane.b32.xlu0 %v3716, 24
  %v5294 = vpop.permute.xlu0 %5293
  %5295 = vrot.lane.b32.xlu0 %v3891, 24
  %v5296 = vpop.permute.xlu0 %5295
  %5297 = vrot.lane.b32.xlu0 %v3719, 24
  %v5298 = vpop.permute.xlu0 %5297
  %5299 = vrot.lane.b32.xlu0 %v3892, 24
  %v5300 = vpop.permute.xlu0 %5299
  %5301 = vrot.lane.b32.xlu0 %v3722, 24
  %v5302 = vpop.permute.xlu0 %5301
  %5303 = vrot.lane.b32.xlu0 %v3893, 24
  %v5304 = vpop.permute.xlu0 %5303
  %5305 = vrot.lane.b32.xlu0 %v3725, 24
  %v5306 = vpop.permute.xlu0 %5305
  %5307 = vrot.lane.b32.xlu0 %v3894, 24
  %v5308 = vpop.permute.xlu0 %5307
  %5309 = vrot.lane.b32.xlu0 %v3728, 24
  %v5310 = vpop.permute.xlu0 %5309
  %5311 = vrot.lane.b32.xlu0 %v3895, 24
  %v5312 = vpop.permute.xlu0 %5311
  %5313 = vrot.lane.b32.xlu0 %v3731, 24
  %v5314 = vpop.permute.xlu0 %5313
  %5315 = vrot.lane.b32.xlu0 %v3896, 24
  %v5316 = vpop.permute.xlu0 %5315
  %5317 = vrot.lane.b32.xlu0 %v3734, 24
  %v5318 = vpop.permute.xlu0 %5317
  %5319 = vrot.lane.b32.xlu0 %v3897, 24
  %v5320 = vpop.permute.xlu0 %5319
  %5321 = vrot.lane.b32.xlu0 %v3737, 24
  %v5322 = vpop.permute.xlu0 %5321
  %5323 = vrot.lane.b32.xlu0 %v3898, 24
  %v5324 = vpop.permute.xlu0 %5323
  %5325 = vrot.lane.b32.xlu0 %v3740, 24
  %v5326 = vpop.permute.xlu0 %5325
  %5327 = vrot.lane.b32.xlu0 %v3900, 24
  %v5328 = vpop.permute.xlu0 %5327
  %5329 = vrot.lane.b32.xlu0 %v3746, 24
  %v5330 = vpop.permute.xlu0 %5329
  %5331 = vrot.lane.b32.xlu0 %v3901, 24
  %v5332 = vpop.permute.xlu0 %5331
  %5333 = vrot.lane.b32.xlu0 %v3749, 24
  %v5334 = vpop.permute.xlu0 %5333
  %5335 = vrot.lane.b32.xlu0 %v3902, 24
  %v5336 = vpop.permute.xlu0 %5335
  %5337 = vrot.lane.b32.xlu0 %v3752, 24
  %v5338 = vpop.permute.xlu0 %5337
  %5339 = vrot.lane.b32.xlu0 %v3903, 24
  %v5340 = vpop.permute.xlu0 %5339
  %5341 = vrot.lane.b32.xlu0 %v3755, 24
  %v5342 = vpop.permute.xlu0 %5341
  %5343 = vrot.lane.b32.xlu0 %v3904, 24
  %v5344 = vpop.permute.xlu0 %5343
  %5345 = vrot.lane.b32.xlu0 %v3758, 24
  %v5346 = vpop.permute.xlu0 %5345
  %5347 = vrot.lane.b32.xlu0 %v3905, 24
  %v5348 = vpop.permute.xlu0 %5347
  %5349 = vrot.lane.b32.xlu0 %v3761, 24
  %v5350 = vpop.permute.xlu0 %5349
  %5351 = vrot.lane.b32.xlu0 %v3906, 24
  %v5352 = vpop.permute.xlu0 %5351
  %5353 = vrot.lane.b32.xlu0 %v3764, 24
  %v5354 = vpop.permute.xlu0 %5353
  %5355 = vrot.lane.b32.xlu0 %v3907, 24
  %v5356 = vpop.permute.xlu0 %5355
  %5357 = vrot.lane.b32.xlu0 %v3767, 24
  %v5358 = vpop.permute.xlu0 %5357
  %5359 = vrot.lane.b32.xlu0 %v3908, 24
  %v5360 = vpop.permute.xlu0 %5359
  %5361 = vrot.lane.b32.xlu0 %v3770, 24
  %v5362 = vpop.permute.xlu0 %5361
  %5363 = vrot.lane.b32.xlu0 %v3909, 24
  %v5364 = vpop.permute.xlu0 %5363
  %5365 = vrot.lane.b32.xlu0 %v3773, 24
  %v5366 = vpop.permute.xlu0 %5365
  %5367 = vrot.lane.b32.xlu0 %v3910, 24
  %v5368 = vpop.permute.xlu0 %5367
  %5369 = vrot.lane.b32.xlu0 %v3776, 24
  %v5370 = vpop.permute.xlu0 %5369
  %5371 = vrot.lane.b32.xlu0 %v3911, 24
  %v5372 = vpop.permute.xlu0 %5371
  %5373 = vrot.lane.b32.xlu0 %v3779, 24
  %v5374 = vpop.permute.xlu0 %5373
  %5375 = vrot.lane.b32.xlu0 %v3912, 24
  %v5376 = vpop.permute.xlu0 %5375
  %5377 = vrot.lane.b32.xlu0 %v3782, 24
  %v5378 = vpop.permute.xlu0 %5377
  %5379 = vrot.lane.b32.xlu0 %v3913, 24
  %v5380 = vpop.permute.xlu0 %5379
  %5381 = vrot.lane.b32.xlu0 %v3785, 24
  %v5382 = vpop.permute.xlu0 %5381
  %5383 = vrot.lane.b32.xlu0 %v3914, 24
  %v5384 = vpop.permute.xlu0 %5383
  %5385 = vrot.lane.b32.xlu0 %v3788, 24
  %v5386 = vpop.permute.xlu0 %5385
  %5447 = vrot.lane.b32.xlu0 %v4014, 28
  %v5448 = vpop.permute.xlu0 %5447
  %5449 = vrot.lane.b32.xlu0 %v4016, 28
  %v5450 = vpop.permute.xlu0 %5449
  %5451 = vrot.lane.b32.xlu0 %v4019, 28
  %v5452 = vpop.permute.xlu0 %5451
  %5453 = vrot.lane.b32.xlu0 %v4021, 28
  %v5454 = vpop.permute.xlu0 %5453
  %5455 = vrot.lane.b32.xlu0 %v4024, 28
  %v5456 = vpop.permute.xlu0 %5455
  %5457 = vrot.lane.b32.xlu0 %v4026, 28
  %v5458 = vpop.permute.xlu0 %5457
  %5459 = vrot.lane.b32.xlu0 %v4029, 28
  %v5460 = vpop.permute.xlu0 %5459
  %5461 = vrot.lane.b32.xlu0 %v4031, 28
  %v5462 = vpop.permute.xlu0 %5461
  %5463 = vrot.lane.b32.xlu0 %v4034, 28
  %v5464 = vpop.permute.xlu0 %5463
  %5465 = vrot.lane.b32.xlu0 %v4036, 28
  %v5466 = vpop.permute.xlu0 %5465
  %5467 = vrot.lane.b32.xlu0 %v4039, 28
  %v5468 = vpop.permute.xlu0 %5467
  %5469 = vrot.lane.b32.xlu0 %v4041, 28
  %v5470 = vpop.permute.xlu0 %5469
  %5471 = vrot.lane.b32.xlu0 %v4044, 28
  %v5472 = vpop.permute.xlu0 %5471
  %5473 = vrot.lane.b32.xlu0 %v4046, 28
  %v5474 = vpop.permute.xlu0 %5473
  %5475 = vrot.lane.b32.xlu0 %v4049, 28
  %v5476 = vpop.permute.xlu0 %5475
  %5477 = vrot.lane.b32.xlu0 %v4051, 28
  %v5478 = vpop.permute.xlu0 %5477
  %5479 = vrot.lane.b32.xlu0 %v4054, 28
  %v5480 = vpop.permute.xlu0 %5479
  %5481 = vrot.lane.b32.xlu0 %v4056, 28
  %v5482 = vpop.permute.xlu0 %5481
  %5483 = vrot.lane.b32.xlu0 %v4059, 28
  %v5484 = vpop.permute.xlu0 %5483
  %5485 = vrot.lane.b32.xlu0 %v4061, 28
  %v5486 = vpop.permute.xlu0 %5485
  %5487 = vrot.lane.b32.xlu0 %v4064, 28
  %v5488 = vpop.permute.xlu0 %5487
  %5489 = vrot.lane.b32.xlu0 %v4066, 28
  %v5490 = vpop.permute.xlu0 %5489
  %5491 = vrot.lane.b32.xlu0 %v4069, 28
  %v5492 = vpop.permute.xlu0 %5491
  %5493 = vrot.lane.b32.xlu0 %v4071, 28
  %v5494 = vpop.permute.xlu0 %5493
  %5495 = vrot.lane.b32.xlu0 %v4074, 28
  %v5496 = vpop.permute.xlu0 %5495
  %5497 = vrot.lane.b32.xlu0 %v4076, 28
  %v5498 = vpop.permute.xlu0 %5497
  %5499 = vrot.lane.b32.xlu0 %v4079, 28
  %v5500 = vpop.permute.xlu0 %5499
  %5501 = vrot.lane.b32.xlu0 %v4081, 28
  %v5502 = vpop.permute.xlu0 %5501
  %5503 = vrot.lane.b32.xlu0 %v4865, 28
  %v5504 = vpop.permute.xlu0 %5503
  %5505 = vrot.lane.b32.xlu0 %v4867, 28
  %v5506 = vpop.permute.xlu0 %5505
  %5507 = vrot.lane.b32.xlu0 %v4089, 28
  %v5508 = vpop.permute.xlu0 %5507
  %5509 = vrot.lane.b32.xlu0 %v4091, 28
  %v5510 = vpop.permute.xlu0 %5509
  %5511 = vrot.lane.b32.xlu0 %v4094, 28
  %v5512 = vpop.permute.xlu0 %5511
  %5513 = vrot.lane.b32.xlu0 %v4096, 28
  %v5514 = vpop.permute.xlu0 %5513
  %5515 = vrot.lane.b32.xlu0 %v4099, 28
  %v5516 = vpop.permute.xlu0 %5515
  %5517 = vrot.lane.b32.xlu0 %v4101, 28
  %v5518 = vpop.permute.xlu0 %5517
  %5519 = vrot.lane.b32.xlu0 %v4104, 28
  %v5520 = vpop.permute.xlu0 %5519
  %5521 = vrot.lane.b32.xlu0 %v4106, 28
  %v5522 = vpop.permute.xlu0 %5521
  %5523 = vrot.lane.b32.xlu0 %v4109, 28
  %v5524 = vpop.permute.xlu0 %5523
  %5525 = vrot.lane.b32.xlu0 %v4111, 28
  %v5526 = vpop.permute.xlu0 %5525
  %5527 = vrot.lane.b32.xlu0 %v4114, 28
  %v5528 = vpop.permute.xlu0 %5527
  %5529 = vrot.lane.b32.xlu0 %v4116, 28
  %v5530 = vpop.permute.xlu0 %5529
  %5531 = vrot.lane.b32.xlu0 %v4119, 28
  %v5532 = vpop.permute.xlu0 %5531
  %5533 = vrot.lane.b32.xlu0 %v4121, 28
  %v5534 = vpop.permute.xlu0 %5533
  %5535 = vrot.lane.b32.xlu0 %v4124, 28
  %v5536 = vpop.permute.xlu0 %5535
  %5537 = vrot.lane.b32.xlu0 %v4126, 28
  %v5538 = vpop.permute.xlu0 %5537
  %5539 = vrot.lane.b32.xlu0 %v4129, 28
  %v5540 = vpop.permute.xlu0 %5539
  %5541 = vrot.lane.b32.xlu0 %v4131, 28
  %v5542 = vpop.permute.xlu0 %5541
  %5543 = vrot.lane.b32.xlu0 %v4134, 28
  %v5544 = vpop.permute.xlu0 %5543
  %5545 = vrot.lane.b32.xlu0 %v4136, 28
  %v5546 = vpop.permute.xlu0 %5545
  %5547 = vrot.lane.b32.xlu0 %v4139, 28
  %v5548 = vpop.permute.xlu0 %5547
  %5549 = vrot.lane.b32.xlu0 %v4141, 28
  %v5550 = vpop.permute.xlu0 %5549
  %5551 = vrot.lane.b32.xlu0 %v4144, 28
  %v5552 = vpop.permute.xlu0 %5551
  %5553 = vrot.lane.b32.xlu0 %v4146, 28
  %v5554 = vpop.permute.xlu0 %5553
  %5555 = vrot.lane.b32.xlu0 %v4149, 28
  %v5556 = vpop.permute.xlu0 %5555
  %5557 = vrot.lane.b32.xlu0 %v4151, 28
  %v5558 = vpop.permute.xlu0 %5557
  %5559 = vrot.lane.b32.xlu0 %v4154, 28
  %v5560 = vpop.permute.xlu0 %5559
  %5561 = vrot.lane.b32.xlu0 %v4156, 28
  %v5562 = vpop.permute.xlu0 %5561
  %5563 = vrot.lane.b32.xlu0 %v4870, 28
  %v5564 = vpop.permute.xlu0 %5563
  %5565 = vrot.lane.b32.xlu0 %v4872, 28
  %v5566 = vpop.permute.xlu0 %5565
  %5627 = vrot.lane.b32.xlu0 %v4344, 32
  %v5628 = vpop.permute.xlu0 %5627
  %5629 = vrot.lane.b32.xlu0 %v4346, 32
  %v5630 = vpop.permute.xlu0 %5629
  %5631 = vrot.lane.b32.xlu0 %v4349, 32
  %v5632 = vpop.permute.xlu0 %5631
  %5633 = vrot.lane.b32.xlu0 %v4351, 32
  %v5634 = vpop.permute.xlu0 %5633
  %5635 = vrot.lane.b32.xlu0 %v4354, 32
  %v5636 = vpop.permute.xlu0 %5635
  %5637 = vrot.lane.b32.xlu0 %v4356, 32
  %v5638 = vpop.permute.xlu0 %5637
  %5639 = vrot.lane.b32.xlu0 %v4359, 32
  %v5640 = vpop.permute.xlu0 %5639
  %5641 = vrot.lane.b32.xlu0 %v4361, 32
  %v5642 = vpop.permute.xlu0 %5641
  %5643 = vrot.lane.b32.xlu0 %v4364, 32
  %v5644 = vpop.permute.xlu0 %5643
  %5645 = vrot.lane.b32.xlu0 %v4366, 32
  %v5646 = vpop.permute.xlu0 %5645
  %5647 = vrot.lane.b32.xlu0 %v4369, 32
  %v5648 = vpop.permute.xlu0 %5647
  %5649 = vrot.lane.b32.xlu0 %v4371, 32
  %v5650 = vpop.permute.xlu0 %5649
  %5651 = vrot.lane.b32.xlu0 %v4374, 32
  %v5652 = vpop.permute.xlu0 %5651
  %5653 = vrot.lane.b32.xlu0 %v4376, 32
  %v5654 = vpop.permute.xlu0 %5653
  %5655 = vrot.lane.b32.xlu0 %v4379, 32
  %v5656 = vpop.permute.xlu0 %5655
  %5657 = vrot.lane.b32.xlu0 %v4381, 32
  %v5658 = vpop.permute.xlu0 %5657
  %5659 = vrot.lane.b32.xlu0 %v4384, 32
  %v5660 = vpop.permute.xlu0 %5659
  %5661 = vrot.lane.b32.xlu0 %v4386, 32
  %v5662 = vpop.permute.xlu0 %5661
  %5663 = vrot.lane.b32.xlu0 %v4389, 32
  %v5664 = vpop.permute.xlu0 %5663
  %5665 = vrot.lane.b32.xlu0 %v4391, 32
  %v5666 = vpop.permute.xlu0 %5665
  %5667 = vrot.lane.b32.xlu0 %v4394, 32
  %v5668 = vpop.permute.xlu0 %5667
  %5669 = vrot.lane.b32.xlu0 %v4396, 32
  %v5670 = vpop.permute.xlu0 %5669
  %5671 = vrot.lane.b32.xlu0 %v4399, 32
  %v5672 = vpop.permute.xlu0 %5671
  %5673 = vrot.lane.b32.xlu0 %v4401, 32
  %v5674 = vpop.permute.xlu0 %5673
  %5675 = vrot.lane.b32.xlu0 %v4404, 32
  %v5676 = vpop.permute.xlu0 %5675
  %5677 = vrot.lane.b32.xlu0 %v4406, 32
  %v5678 = vpop.permute.xlu0 %5677
  %5679 = vrot.lane.b32.xlu0 %v4409, 32
  %v5680 = vpop.permute.xlu0 %5679
  %5681 = vrot.lane.b32.xlu0 %v4411, 32
  %v5682 = vpop.permute.xlu0 %5681
  %5683 = vrot.lane.b32.xlu0 %v5067, 32
  %v5684 = vpop.permute.xlu0 %5683
  %5685 = vrot.lane.b32.xlu0 %v5069, 32
  %v5686 = vpop.permute.xlu0 %5685
  %5687 = vrot.lane.b32.xlu0 %v4419, 32
  %v5688 = vpop.permute.xlu0 %5687
  %5689 = vrot.lane.b32.xlu0 %v4421, 32
  %v5690 = vpop.permute.xlu0 %5689
  %5691 = vrot.lane.b32.xlu0 %v4424, 32
  %v5692 = vpop.permute.xlu0 %5691
  %5693 = vrot.lane.b32.xlu0 %v4426, 32
  %v5694 = vpop.permute.xlu0 %5693
  %5695 = vrot.lane.b32.xlu0 %v4429, 32
  %v5696 = vpop.permute.xlu0 %5695
  %5697 = vrot.lane.b32.xlu0 %v4431, 32
  %v5698 = vpop.permute.xlu0 %5697
  %5699 = vrot.lane.b32.xlu0 %v4434, 32
  %v5700 = vpop.permute.xlu0 %5699
  %5701 = vrot.lane.b32.xlu0 %v4436, 32
  %v5702 = vpop.permute.xlu0 %5701
  %5703 = vrot.lane.b32.xlu0 %v4439, 32
  %v5704 = vpop.permute.xlu0 %5703
  %5705 = vrot.lane.b32.xlu0 %v4441, 32
  %v5706 = vpop.permute.xlu0 %5705
  %5707 = vrot.lane.b32.xlu0 %v4444, 32
  %v5708 = vpop.permute.xlu0 %5707
  %5709 = vrot.lane.b32.xlu0 %v4446, 32
  %v5710 = vpop.permute.xlu0 %5709
  %5711 = vrot.lane.b32.xlu0 %v4449, 32
  %v5712 = vpop.permute.xlu0 %5711
  %5713 = vrot.lane.b32.xlu0 %v4451, 32
  %v5714 = vpop.permute.xlu0 %5713
  %5715 = vrot.lane.b32.xlu0 %v4454, 32
  %v5716 = vpop.permute.xlu0 %5715
  %5717 = vrot.lane.b32.xlu0 %v4456, 32
  %v5718 = vpop.permute.xlu0 %5717
  %5719 = vrot.lane.b32.xlu0 %v4459, 32
  %v5720 = vpop.permute.xlu0 %5719
  %5721 = vrot.lane.b32.xlu0 %v4461, 32
  %v5722 = vpop.permute.xlu0 %5721
  %5723 = vrot.lane.b32.xlu0 %v4464, 32
  %v5724 = vpop.permute.xlu0 %5723
  %5725 = vrot.lane.b32.xlu0 %v4466, 32
  %v5726 = vpop.permute.xlu0 %5725
  %5727 = vrot.lane.b32.xlu0 %v4469, 32
  %v5728 = vpop.permute.xlu0 %5727
  %5729 = vrot.lane.b32.xlu0 %v4471, 32
  %v5730 = vpop.permute.xlu0 %5729
  %5731 = vrot.lane.b32.xlu0 %v4474, 32
  %v5732 = vpop.permute.xlu0 %5731
  %5733 = vrot.lane.b32.xlu0 %v4476, 32
  %v5734 = vpop.permute.xlu0 %5733
  %5735 = vrot.lane.b32.xlu0 %v4479, 32
  %v5736 = vpop.permute.xlu0 %5735
  %5737 = vrot.lane.b32.xlu0 %v4481, 32
  %v5738 = vpop.permute.xlu0 %5737
  %5739 = vrot.lane.b32.xlu0 %v4484, 32
  %v5740 = vpop.permute.xlu0 %5739
  %5741 = vrot.lane.b32.xlu0 %v4486, 32
  %v5742 = vpop.permute.xlu0 %5741
  %5743 = vrot.lane.b32.xlu0 %v5072, 32
  %v5744 = vpop.permute.xlu0 %5743
  %5745 = vrot.lane.b32.xlu0 %v5074, 32
  %v5746 = vpop.permute.xlu0 %5745
  %v5807 = vsel %vm2320, %v3883, %v4158
  %v5808 = vsel %vm2320, %v3695, %v4160
  %v5809 = vsel %vm2320, %v3884, %v4162
  %v5810 = vsel %vm2320, %v3698, %v4164
  %v5811 = vsel %vm2320, %v3885, %v4166
  %v5812 = vsel %vm2320, %v3701, %v4168
  %v5813 = vsel %vm2320, %v3886, %v4170
  %v5814 = vsel %vm2320, %v3704, %v4172
  %v5815 = vsel %vm2320, %v3887, %v4174
  %v5816 = vsel %vm2320, %v3707, %v4176
  %v5817 = vsel %vm2320, %v3888, %v4178
  %v5818 = vsel %vm2320, %v3710, %v4180
  %v5819 = vsel %vm2320, %v3889, %v4182
  %v5820 = vsel %vm2320, %v3713, %v4184
  %v5821 = vsel %vm2320, %v3890, %v4186
  %v5822 = vsel %vm2320, %v3716, %v4188
  %v5823 = vsel %vm2320, %v3891, %v4190
  %v5824 = vsel %vm2320, %v3719, %v4192
  %v5825 = vsel %vm2320, %v3892, %v4194
  %v5826 = vsel %vm2320, %v3722, %v4196
  %v5827 = vsel %vm2320, %v3893, %v4198
  %v5828 = vsel %vm2320, %v3725, %v4200
  %v5829 = vsel %vm2320, %v3894, %v4202
  %v5830 = vsel %vm2320, %v3728, %v4204
  %v5831 = vsel %vm2320, %v3895, %v4206
  %v5832 = vsel %vm2320, %v3731, %v4208
  %v5833 = vsel %vm2320, %v3896, %v4210
  %v5834 = vsel %vm2320, %v3734, %v4212
  %v5835 = vsel %vm2320, %v3897, %v4214
  %v5836 = vsel %vm2320, %v3737, %v4216
  %v5837 = vsel %vm2320, %v3899, %v4218
  %v5838 = vsel %vm2320, %v3743, %v4220
  %v5839 = vsel %vm2320, %v3900, %v4222
  %v5840 = vsel %vm2320, %v3746, %v4224
  %v5841 = vsel %vm2320, %v3901, %v4226
  %v5842 = vsel %vm2320, %v3749, %v4228
  %v5843 = vsel %vm2320, %v3902, %v4230
  %v5844 = vsel %vm2320, %v3752, %v4232
  %v5845 = vsel %vm2320, %v3903, %v4234
  %v5846 = vsel %vm2320, %v3755, %v4236
  %v5847 = vsel %vm2320, %v3904, %v4238
  %v5848 = vsel %vm2320, %v3758, %v4240
  %v5849 = vsel %vm2320, %v3905, %v4242
  %v5850 = vsel %vm2320, %v3761, %v4244
  %v5851 = vsel %vm2320, %v3906, %v4246
  %v5852 = vsel %vm2320, %v3764, %v4248
  %v5853 = vsel %vm2320, %v3907, %v4250
  %v5854 = vsel %vm2320, %v3767, %v4252
  %v5855 = vsel %vm2320, %v3908, %v4254
  %v5856 = vsel %vm2320, %v3770, %v4256
  %v5857 = vsel %vm2320, %v3909, %v4258
  %v5858 = vsel %vm2320, %v3773, %v4260
  %v5859 = vsel %vm2320, %v3910, %v4262
  %v5860 = vsel %vm2320, %v3776, %v4264
  %v5861 = vsel %vm2320, %v3911, %v4266
  %v5862 = vsel %vm2320, %v3779, %v4268
  %v5863 = vsel %vm2320, %v3912, %v4270
  %v5864 = vsel %vm2320, %v3782, %v4272
  %v5865 = vsel %vm2320, %v3913, %v4274
  %v5866 = vsel %vm2320, %v3785, %v4276
  %v5867 = vsel %vm2383, %v5807, %v4488
  %v5868 = vsel %vm2383, %v5808, %v4490
  %v5869 = vsel %vm2383, %v5809, %v4492
  %v5870 = vsel %vm2383, %v5810, %v4494
  %v5871 = vsel %vm2383, %v5811, %v4496
  %v5872 = vsel %vm2383, %v5812, %v4498
  %v5873 = vsel %vm2383, %v5813, %v4500
  %v5874 = vsel %vm2383, %v5814, %v4502
  %v5875 = vsel %vm2383, %v5815, %v4504
  %v5876 = vsel %vm2383, %v5816, %v4506
  %v5877 = vsel %vm2383, %v5817, %v4508
  %v5878 = vsel %vm2383, %v5818, %v4510
  %v5879 = vsel %vm2383, %v5819, %v4512
  %v5880 = vsel %vm2383, %v5820, %v4514
  %v5881 = vsel %vm2383, %v5821, %v4516
  %v5882 = vsel %vm2383, %v5822, %v4518
  %v5883 = vsel %vm2383, %v5823, %v4520
  %v5884 = vsel %vm2383, %v5824, %v4522
  %v5885 = vsel %vm2383, %v5825, %v4524
  %v5886 = vsel %vm2383, %v5826, %v4526
  %v5887 = vsel %vm2383, %v5827, %v4528
  %v5888 = vsel %vm2383, %v5828, %v4530
  %v5889 = vsel %vm2383, %v5829, %v4532
  %v5890 = vsel %vm2383, %v5830, %v4534
  %v5891 = vsel %vm2383, %v5831, %v4536
  %v5892 = vsel %vm2383, %v5832, %v4538
  %v5893 = vsel %vm2383, %v5833, %v4540
  %v5894 = vsel %vm2383, %v5834, %v4542
  %v5895 = vsel %vm2383, %v5835, %v4544
  %v5896 = vsel %vm2383, %v5836, %v4546
  %v5897 = vsel %vm2383, %v5837, %v4548
  %v5898 = vsel %vm2383, %v5838, %v4550
  %v5899 = vsel %vm2383, %v5839, %v4552
  %v5900 = vsel %vm2383, %v5840, %v4554
  %v5901 = vsel %vm2383, %v5841, %v4556
  %v5902 = vsel %vm2383, %v5842, %v4558
  %v5903 = vsel %vm2383, %v5843, %v4560
  %v5904 = vsel %vm2383, %v5844, %v4562
  %v5905 = vsel %vm2383, %v5845, %v4564
  %v5906 = vsel %vm2383, %v5846, %v4566
  %v5907 = vsel %vm2383, %v5847, %v4568
  %v5908 = vsel %vm2383, %v5848, %v4570
  %v5909 = vsel %vm2383, %v5849, %v4572
  %v5910 = vsel %vm2383, %v5850, %v4574
  %v5911 = vsel %vm2383, %v5851, %v4576
  %v5912 = vsel %vm2383, %v5852, %v4578
  %v5913 = vsel %vm2383, %v5853, %v4580
  %v5914 = vsel %vm2383, %v5854, %v4582
  %v5915 = vsel %vm2383, %v5855, %v4584
  %v5916 = vsel %vm2383, %v5856, %v4586
  %v5917 = vsel %vm2383, %v5857, %v4588
  %v5918 = vsel %vm2383, %v5858, %v4590
  %v5919 = vsel %vm2383, %v5859, %v4592
  %v5920 = vsel %vm2383, %v5860, %v4594
  %v5921 = vsel %vm2383, %v5861, %v4596
  %v5922 = vsel %vm2383, %v5862, %v4598
  %v5923 = vsel %vm2383, %v5863, %v4600
  %v5924 = vsel %vm2383, %v5864, %v4602
  %v5925 = vsel %vm2383, %v5865, %v4604
  %v5926 = vsel %vm2383, %v5866, %v4606
  %v5927 = vsel %vm2446, %v2384, %v4670
  %v5928 = vsel %vm2446, %v2385, %v4672
  %v5929 = vsel %vm2446, %v5867, %v4674
  %v5930 = vsel %vm2446, %v5868, %v4676
  %v5931 = vsel %vm2446, %v5869, %v4678
  %v5932 = vsel %vm2446, %v5870, %v4680
  %v5933 = vsel %vm2446, %v5871, %v4682
  %v5934 = vsel %vm2446, %v5872, %v4684
  %v5935 = vsel %vm2446, %v5873, %v4686
  %v5936 = vsel %vm2446, %v5874, %v4688
  %v5937 = vsel %vm2446, %v5875, %v4690
  %v5938 = vsel %vm2446, %v5876, %v4692
  %v5939 = vsel %vm2446, %v5877, %v4694
  %v5940 = vsel %vm2446, %v5878, %v4696
  %v5941 = vsel %vm2446, %v5879, %v4698
  %v5942 = vsel %vm2446, %v5880, %v4700
  %v5943 = vsel %vm2446, %v5881, %v4702
  %v5944 = vsel %vm2446, %v5882, %v4704
  %v5945 = vsel %vm2446, %v5883, %v4706
  %v5946 = vsel %vm2446, %v5884, %v4708
  %v5947 = vsel %vm2446, %v5885, %v4710
  %v5948 = vsel %vm2446, %v5886, %v4712
  %v5949 = vsel %vm2446, %v5887, %v4714
  %v5950 = vsel %vm2446, %v5888, %v4716
  %v5951 = vsel %vm2446, %v5889, %v4718
  %v5952 = vsel %vm2446, %v5890, %v4720
  %v5953 = vsel %vm2446, %v5891, %v4722
  %v5954 = vsel %vm2446, %v5892, %v4724
  %v5955 = vsel %vm2446, %v5893, %v4726
  %v5956 = vsel %vm2446, %v5894, %v4728
  %v5957 = vsel %vm2446, %v5895, %v4730
  %v5958 = vsel %vm2446, %v5896, %v4732
  %v5959 = vsel %vm2446, %v2384, %v4734
  %v5960 = vsel %vm2446, %v2385, %v4736
  %v5961 = vsel %vm2446, %v5897, %v4738
  %v5962 = vsel %vm2446, %v5898, %v4740
  %v5963 = vsel %vm2446, %v5899, %v4742
  %v5964 = vsel %vm2446, %v5900, %v4744
  %v5965 = vsel %vm2446, %v5901, %v4746
  %v5966 = vsel %vm2446, %v5902, %v4748
  %v5967 = vsel %vm2446, %v5903, %v4750
  %v5968 = vsel %vm2446, %v5904, %v4752
  %v5969 = vsel %vm2446, %v5905, %v4754
  %v5970 = vsel %vm2446, %v5906, %v4756
  %v5971 = vsel %vm2446, %v5907, %v4758
  %v5972 = vsel %vm2446, %v5908, %v4760
  %v5973 = vsel %vm2446, %v5909, %v4762
  %v5974 = vsel %vm2446, %v5910, %v4764
  %v5975 = vsel %vm2446, %v5911, %v4766
  %v5976 = vsel %vm2446, %v5912, %v4768
  %v5977 = vsel %vm2446, %v5913, %v4770
  %v5978 = vsel %vm2446, %v5914, %v4772
  %v5979 = vsel %vm2446, %v5915, %v4774
  %v5980 = vsel %vm2446, %v5916, %v4776
  %v5981 = vsel %vm2446, %v5917, %v4778
  %v5982 = vsel %vm2446, %v5918, %v4780
  %v5983 = vsel %vm2446, %v5919, %v4782
  %v5984 = vsel %vm2446, %v5920, %v4784
  %v5985 = vsel %vm2446, %v5921, %v4786
  %v5986 = vsel %vm2446, %v5922, %v4788
  %v5987 = vsel %vm2446, %v5923, %v4790
  %v5988 = vsel %vm2446, %v5924, %v4792
  %v5989 = vsel %vm2446, %v5925, %v4794
  %v5990 = vsel %vm2446, %v5926, %v4796
  %v5991 = vsel %vm2511, %v5927, %v4874
  %v5992 = vsel %vm2511, %v5928, %v4876
  %v5993 = vsel %vm2511, %v5929, %v4878
  %v5994 = vsel %vm2511, %v5930, %v4880
  %v5995 = vsel %vm2511, %v5931, %v4882
  %v5996 = vsel %vm2511, %v5932, %v4884
  %v5997 = vsel %vm2511, %v5933, %v4886
  %v5998 = vsel %vm2511, %v5934, %v4888
  %v5999 = vsel %vm2511, %v5935, %v4890
  %v6000 = vsel %vm2511, %v5936, %v4892
  %v6001 = vsel %vm2511, %v5937, %v4894
  %v6002 = vsel %vm2511, %v5938, %v4896
  %v6003 = vsel %vm2511, %v5939, %v4898
  %v6004 = vsel %vm2511, %v5940, %v4900
  %v6005 = vsel %vm2511, %v5941, %v4902
  %v6006 = vsel %vm2511, %v5942, %v4904
  %v6007 = vsel %vm2511, %v5943, %v4906
  %v6008 = vsel %vm2511, %v5944, %v4908
  %v6009 = vsel %vm2511, %v5945, %v4910
  %v6010 = vsel %vm2511, %v5946, %v4912
  %v6011 = vsel %vm2511, %v5947, %v4914
  %v6012 = vsel %vm2511, %v5948, %v4916
  %v6013 = vsel %vm2511, %v5949, %v4918
  %v6014 = vsel %vm2511, %v5950, %v4920
  %v6015 = vsel %vm2511, %v5951, %v4922
  %v6016 = vsel %vm2511, %v5952, %v4924
  %v6017 = vsel %vm2511, %v5953, %v4926
  %v6018 = vsel %vm2511, %v5954, %v4928
  %v6019 = vsel %vm2511, %v5955, %v4930
  %v6020 = vsel %vm2511, %v5956, %v4932
  %v6021 = vsel %vm2511, %v5957, %v4934
  %v6022 = vsel %vm2511, %v5958, %v4936
  %v6023 = vsel %vm2511, %v5959, %v4938
  %v6024 = vsel %vm2511, %v5960, %v4940
  %v6025 = vsel %vm2511, %v5961, %v4942
  %v6026 = vsel %vm2511, %v5962, %v4944
  %v6027 = vsel %vm2511, %v5963, %v4946
  %v6028 = vsel %vm2511, %v5964, %v4948
  %v6029 = vsel %vm2511, %v5965, %v4950
  %v6030 = vsel %vm2511, %v5966, %v4952
  %v6031 = vsel %vm2511, %v5967, %v4954
  %v6032 = vsel %vm2511, %v5968, %v4956
  %v6033 = vsel %vm2511, %v5969, %v4958
  %v6034 = vsel %vm2511, %v5970, %v4960
  %v6035 = vsel %vm2511, %v5971, %v4962
  %v6036 = vsel %vm2511, %v5972, %v4964
  %v6037 = vsel %vm2511, %v5973, %v4966
  %v6038 = vsel %vm2511, %v5974, %v4968
  %v6039 = vsel %vm2511, %v5975, %v4970
  %v6040 = vsel %vm2511, %v5976, %v4972
  %v6041 = vsel %vm2511, %v5977, %v4974
  %v6042 = vsel %vm2511, %v5978, %v4976
  %v6043 = vsel %vm2511, %v5979, %v4978
  %v6044 = vsel %vm2511, %v5980, %v4980
  %v6045 = vsel %vm2511, %v5981, %v4982
  %v6046 = vsel %vm2511, %v5982, %v4984
  %v6047 = vsel %vm2511, %v5983, %v4986
  %v6048 = vsel %vm2511, %v5984, %v4988
  %v6049 = vsel %vm2511, %v5985, %v4990
  %v6050 = vsel %vm2511, %v5986, %v4992
  %v6051 = vsel %vm2511, %v5987, %v4994
  %v6052 = vsel %vm2511, %v5988, %v4996
  %v6053 = vsel %vm2511, %v5989, %v4998
  %v6054 = vsel %vm2511, %v5990, %v5000
  %v6055 = vsel %vm2576, %v5991, %v5076
  %v6056 = vsel %vm2576, %v5992, %v5078
  %v6057 = vsel %vm2576, %v5993, %v5080
  %v6058 = vsel %vm2576, %v5994, %v5082
  %v6059 = vsel %vm2576, %v5995, %v5084
  %v6060 = vsel %vm2576, %v5996, %v5086
  %v6061 = vsel %vm2576, %v5997, %v5088
  %v6062 = vsel %vm2576, %v5998, %v5090
  %v6063 = vsel %vm2576, %v5999, %v5092
  %v6064 = vsel %vm2576, %v6000, %v5094
  %v6065 = vsel %vm2576, %v6001, %v5096
  %v6066 = vsel %vm2576, %v6002, %v5098
  %v6067 = vsel %vm2576, %v6003, %v5100
  %v6068 = vsel %vm2576, %v6004, %v5102
  %v6069 = vsel %vm2576, %v6005, %v5104
  %v6070 = vsel %vm2576, %v6006, %v5106
  %v6071 = vsel %vm2576, %v6007, %v5108
  %v6072 = vsel %vm2576, %v6008, %v5110
  %v6073 = vsel %vm2576, %v6009, %v5112
  %v6074 = vsel %vm2576, %v6010, %v5114
  %v6075 = vsel %vm2576, %v6011, %v5116
  %v6076 = vsel %vm2576, %v6012, %v5118
  %v6077 = vsel %vm2576, %v6013, %v5120
  %v6078 = vsel %vm2576, %v6014, %v5122
  %v6079 = vsel %vm2576, %v6015, %v5124
  %v6080 = vsel %vm2576, %v6016, %v5126
  %v6081 = vsel %vm2576, %v6017, %v5128
  %v6082 = vsel %vm2576, %v6018, %v5130
  %v6083 = vsel %vm2576, %v6019, %v5132
  %v6084 = vsel %vm2576, %v6020, %v5134
  %v6085 = vsel %vm2576, %v6021, %v5136
  %v6086 = vsel %vm2576, %v6022, %v5138
  %v6087 = vsel %vm2576, %v6023, %v5140
  %v6088 = vsel %vm2576, %v6024, %v5142
  %v6089 = vsel %vm2576, %v6025, %v5144
  %v6090 = vsel %vm2576, %v6026, %v5146
  %v6091 = vsel %vm2576, %v6027, %v5148
  %v6092 = vsel %vm2576, %v6028, %v5150
  %v6093 = vsel %vm2576, %v6029, %v5152
  %v6094 = vsel %vm2576, %v6030, %v5154
  %v6095 = vsel %vm2576, %v6031, %v5156
  %v6096 = vsel %vm2576, %v6032, %v5158
  %v6097 = vsel %vm2576, %v6033, %v5160
  %v6098 = vsel %vm2576, %v6034, %v5162
  %v6099 = vsel %vm2576, %v6035, %v5164
  %v6100 = vsel %vm2576, %v6036, %v5166
  %v6101 = vsel %vm2576, %v6037, %v5168
  %v6102 = vsel %vm2576, %v6038, %v5170
  %v6103 = vsel %vm2576, %v6039, %v5172
  %v6104 = vsel %vm2576, %v6040, %v5174
  %v6105 = vsel %vm2576, %v6041, %v5176
  %v6106 = vsel %vm2576, %v6042, %v5178
  %v6107 = vsel %vm2576, %v6043, %v5180
  %v6108 = vsel %vm2576, %v6044, %v5182
  %v6109 = vsel %vm2576, %v6045, %v5184
  %v6110 = vsel %vm2576, %v6046, %v5186
  %v6111 = vsel %vm2576, %v6047, %v5188
  %v6112 = vsel %vm2576, %v6048, %v5190
  %v6113 = vsel %vm2576, %v6049, %v5192
  %v6114 = vsel %vm2576, %v6050, %v5194
  %v6115 = vsel %vm2576, %v6051, %v5196
  %v6116 = vsel %vm2576, %v6052, %v5198
  %v6117 = vsel %vm2576, %v6053, %v5200
  %v6118 = vsel %vm2576, %v6054, %v5202
  %v6119 = vsel %vm2641, %v6055, %v5268
  %v6120 = vsel %vm2641, %v6056, %v5270
  %v6121 = vsel %vm2641, %v6057, %v5272
  %v6122 = vsel %vm2641, %v6058, %v5274
  %v6123 = vsel %vm2641, %v6059, %v5276
  %v6124 = vsel %vm2641, %v6060, %v5278
  %v6125 = vsel %vm2641, %v6061, %v5280
  %v6126 = vsel %vm2641, %v6062, %v5282
  %v6127 = vsel %vm2641, %v6063, %v5284
  %v6128 = vsel %vm2641, %v6064, %v5286
  %v6129 = vsel %vm2641, %v6065, %v5288
  %v6130 = vsel %vm2641, %v6066, %v5290
  %v6131 = vsel %vm2641, %v6067, %v5292
  %v6132 = vsel %vm2641, %v6068, %v5294
  %v6133 = vsel %vm2641, %v6069, %v5296
  %v6134 = vsel %vm2641, %v6070, %v5298
  %v6135 = vsel %vm2641, %v6071, %v5300
  %v6136 = vsel %vm2641, %v6072, %v5302
  %v6137 = vsel %vm2641, %v6073, %v5304
  %v6138 = vsel %vm2641, %v6074, %v5306
  %v6139 = vsel %vm2641, %v6075, %v5308
  %v6140 = vsel %vm2641, %v6076, %v5310
  %v6141 = vsel %vm2641, %v6077, %v5312
  %v6142 = vsel %vm2641, %v6078, %v5314
  %v6143 = vsel %vm2641, %v6079, %v5316
  %v6144 = vsel %vm2641, %v6080, %v5318
  %v6145 = vsel %vm2641, %v6081, %v5320
  %v6146 = vsel %vm2641, %v6082, %v5322
  %v6147 = vsel %vm2641, %v6083, %v5324
  %v6148 = vsel %vm2641, %v6084, %v5326
  %v6149 = vsel %vm2641, %v6085, %v1823
  %v6150 = vsel %vm2641, %v6086, %v1825
  %v6151 = vsel %vm2641, %v6087, %v5328
  %v6152 = vsel %vm2641, %v6088, %v5330
  %v6153 = vsel %vm2641, %v6089, %v5332
  %v6154 = vsel %vm2641, %v6090, %v5334
  %v6155 = vsel %vm2641, %v6091, %v5336
  %v6156 = vsel %vm2641, %v6092, %v5338
  %v6157 = vsel %vm2641, %v6093, %v5340
  %v6158 = vsel %vm2641, %v6094, %v5342
  %v6159 = vsel %vm2641, %v6095, %v5344
  %v6160 = vsel %vm2641, %v6096, %v5346
  %v6161 = vsel %vm2641, %v6097, %v5348
  %v6162 = vsel %vm2641, %v6098, %v5350
  %v6163 = vsel %vm2641, %v6099, %v5352
  %v6164 = vsel %vm2641, %v6100, %v5354
  %v6165 = vsel %vm2641, %v6101, %v5356
  %v6166 = vsel %vm2641, %v6102, %v5358
  %v6167 = vsel %vm2641, %v6103, %v5360
  %v6168 = vsel %vm2641, %v6104, %v5362
  %v6169 = vsel %vm2641, %v6105, %v5364
  %v6170 = vsel %vm2641, %v6106, %v5366
  %v6171 = vsel %vm2641, %v6107, %v5368
  %v6172 = vsel %vm2641, %v6108, %v5370
  %v6173 = vsel %vm2641, %v6109, %v5372
  %v6174 = vsel %vm2641, %v6110, %v5374
  %v6175 = vsel %vm2641, %v6111, %v5376
  %v6176 = vsel %vm2641, %v6112, %v5378
  %v6177 = vsel %vm2641, %v6113, %v5380
  %v6178 = vsel %vm2641, %v6114, %v5382
  %v6179 = vsel %vm2641, %v6115, %v5384
  %v6180 = vsel %vm2641, %v6116, %v5386
  %v6181 = vsel %vm2641, %v6117, %v1823
  %v6182 = vsel %vm2641, %v6118, %v1825
  %v6183 = vsel %vm2706, %v6119, %v5448
  %v6184 = vsel %vm2706, %v6120, %v5450
  %v6185 = vsel %vm2706, %v6121, %v5452
  %v6186 = vsel %vm2706, %v6122, %v5454
  %v6187 = vsel %vm2706, %v6123, %v5456
  %v6188 = vsel %vm2706, %v6124, %v5458
  %v6189 = vsel %vm2706, %v6125, %v5460
  %v6190 = vsel %vm2706, %v6126, %v5462
  %v6191 = vsel %vm2706, %v6127, %v5464
  %v6192 = vsel %vm2706, %v6128, %v5466
  %v6193 = vsel %vm2706, %v6129, %v5468
  %v6194 = vsel %vm2706, %v6130, %v5470
  %v6195 = vsel %vm2706, %v6131, %v5472
  %v6196 = vsel %vm2706, %v6132, %v5474
  %v6197 = vsel %vm2706, %v6133, %v5476
  %v6198 = vsel %vm2706, %v6134, %v5478
  %v6199 = vsel %vm2706, %v6135, %v5480
  %v6200 = vsel %vm2706, %v6136, %v5482
  %v6201 = vsel %vm2706, %v6137, %v5484
  %v6202 = vsel %vm2706, %v6138, %v5486
  %v6203 = vsel %vm2706, %v6139, %v5488
  %v6204 = vsel %vm2706, %v6140, %v5490
  %v6205 = vsel %vm2706, %v6141, %v5492
  %v6206 = vsel %vm2706, %v6142, %v5494
  %v6207 = vsel %vm2706, %v6143, %v5496
  %v6208 = vsel %vm2706, %v6144, %v5498
  %v6209 = vsel %vm2706, %v6145, %v5500
  %v6210 = vsel %vm2706, %v6146, %v5502
  %v6211 = vsel %vm2706, %v6147, %v5504
  %v6212 = vsel %vm2706, %v6148, %v5506
  %v6213 = vsel %vm2706, %v6149, %v2009
  %v6214 = vsel %vm2706, %v6150, %v2011
  %v6215 = vsel %vm2706, %v6151, %v5508
  %v6216 = vsel %vm2706, %v6152, %v5510
  %v6217 = vsel %vm2706, %v6153, %v5512
  %v6218 = vsel %vm2706, %v6154, %v5514
  %v6219 = vsel %vm2706, %v6155, %v5516
  %v6220 = vsel %vm2706, %v6156, %v5518
  %v6221 = vsel %vm2706, %v6157, %v5520
  %v6222 = vsel %vm2706, %v6158, %v5522
  %v6223 = vsel %vm2706, %v6159, %v5524
  %v6224 = vsel %vm2706, %v6160, %v5526
  %v6225 = vsel %vm2706, %v6161, %v5528
  %v6226 = vsel %vm2706, %v6162, %v5530
  %v6227 = vsel %vm2706, %v6163, %v5532
  %v6228 = vsel %vm2706, %v6164, %v5534
  %v6229 = vsel %vm2706, %v6165, %v5536
  %v6230 = vsel %vm2706, %v6166, %v5538
  %v6231 = vsel %vm2706, %v6167, %v5540
  %v6232 = vsel %vm2706, %v6168, %v5542
  %v6233 = vsel %vm2706, %v6169, %v5544
  %v6234 = vsel %vm2706, %v6170, %v5546
  %v6235 = vsel %vm2706, %v6171, %v5548
  %v6236 = vsel %vm2706, %v6172, %v5550
  %v6237 = vsel %vm2706, %v6173, %v5552
  %v6238 = vsel %vm2706, %v6174, %v5554
  %v6239 = vsel %vm2706, %v6175, %v5556
  %v6240 = vsel %vm2706, %v6176, %v5558
  %v6241 = vsel %vm2706, %v6177, %v5560
  %v6242 = vsel %vm2706, %v6178, %v5562
  %v6243 = vsel %vm2706, %v6179, %v5564
  %v6244 = vsel %vm2706, %v6180, %v5566
  %v6245 = vsel %vm2706, %v6181, %v2009
  %v6246 = vsel %vm2706, %v6182, %v2011
  %v6247 = vsel %vm2771, %v6183, %v5628
  %v6248 = vsel %vm2771, %v6184, %v5630
  %v6249 = vsel %vm2771, %v6185, %v5632
  %v6250 = vsel %vm2771, %v6186, %v5634
  %v6251 = vsel %vm2771, %v6187, %v5636
  %v6252 = vsel %vm2771, %v6188, %v5638
  %v6253 = vsel %vm2771, %v6189, %v5640
  %v6254 = vsel %vm2771, %v6190, %v5642
  %v6255 = vsel %vm2771, %v6191, %v5644
  %v6256 = vsel %vm2771, %v6192, %v5646
  %v6257 = vsel %vm2771, %v6193, %v5648
  %v6258 = vsel %vm2771, %v6194, %v5650
  %v6259 = vsel %vm2771, %v6195, %v5652
  %v6260 = vsel %vm2771, %v6196, %v5654
  %v6261 = vsel %vm2771, %v6197, %v5656
  %v6262 = vsel %vm2771, %v6198, %v5658
  %v6263 = vsel %vm2771, %v6199, %v5660
  %v6264 = vsel %vm2771, %v6200, %v5662
  %v6265 = vsel %vm2771, %v6201, %v5664
  %v6266 = vsel %vm2771, %v6202, %v5666
  %v6267 = vsel %vm2771, %v6203, %v5668
  %v6268 = vsel %vm2771, %v6204, %v5670
  %v6269 = vsel %vm2771, %v6205, %v5672
  %v6270 = vsel %vm2771, %v6206, %v5674
  %v6271 = vsel %vm2771, %v6207, %v5676
  %v6272 = vsel %vm2771, %v6208, %v5678
  %v6273 = vsel %vm2771, %v6209, %v5680
  %v6274 = vsel %vm2771, %v6210, %v5682
  %v6275 = vsel %vm2771, %v6211, %v5684
  %v6276 = vsel %vm2771, %v6212, %v5686
  %v6277 = vsel %vm2771, %v6213, %v2195
  %v6278 = vsel %vm2771, %v6214, %v2197
  %v6279 = vsel %vm2771, %v6215, %v5688
  %v6280 = vsel %vm2771, %v6216, %v5690
  %v6281 = vsel %vm2771, %v6217, %v5692
  %v6282 = vsel %vm2771, %v6218, %v5694
  %v6283 = vsel %vm2771, %v6219, %v5696
  %v6284 = vsel %vm2771, %v6220, %v5698
  %v6285 = vsel %vm2771, %v6221, %v5700
  %v6286 = vsel %vm2771, %v6222, %v5702
  %v6287 = vsel %vm2771, %v6223, %v5704
  %v6288 = vsel %vm2771, %v6224, %v5706
  %v6289 = vsel %vm2771, %v6225, %v5708
  %v6290 = vsel %vm2771, %v6226, %v5710
  %v6291 = vsel %vm2771, %v6227, %v5712
  %v6292 = vsel %vm2771, %v6228, %v5714
  %v6293 = vsel %vm2771, %v6229, %v5716
  %v6294 = vsel %vm2771, %v6230, %v5718
  %v6295 = vsel %vm2771, %v6231, %v5720
  %v6296 = vsel %vm2771, %v6232, %v5722
  %v6297 = vsel %vm2771, %v6233, %v5724
  %v6298 = vsel %vm2771, %v6234, %v5726
  %v6299 = vsel %vm2771, %v6235, %v5728
  %v6300 = vsel %vm2771, %v6236, %v5730
  %v6301 = vsel %vm2771, %v6237, %v5732
  %v6302 = vsel %vm2771, %v6238, %v5734
  %v6303 = vsel %vm2771, %v6239, %v5736
  %v6304 = vsel %vm2771, %v6240, %v5738
  %v6305 = vsel %vm2771, %v6241, %v5740
  %v6306 = vsel %vm2771, %v6242, %v5742
  %v6307 = vsel %vm2771, %v6243, %v5744
  %v6308 = vsel %vm2771, %v6244, %v5746
  %v6309 = vsel %vm2771, %v6245, %v2195
  %v6310 = vsel %vm2771, %v6246, %v2197
  %v6311 = vld [vmem:[%s4] sm:$0xff]
  %v6312 = vld [vmem:[%s4 + $0x8] sm:$0xff]
  %v6313 = vld [vmem:[%s4 + $0x10] sm:$0xff]
  %v6314 = vld [vmem:[%s4 + $0x18] sm:$0xff]
  %v6315 = vld [vmem:[%s4 + $0x20] sm:$0xf]
  %v6317 = vsel %vm2841, %v6247, 0
  %v6320 = vsel %vm2841, %v6248, 0
  %v6323 = vsel %vm2841, %v6249, 0
  %v6326 = vsel %vm2841, %v6250, 0
  %v6329 = vsel %vm2841, %v6251, 0
  %v6332 = vsel %vm2841, %v6252, 0
  %v6335 = vsel %vm2841, %v6253, 0
  %v6338 = vsel %vm2841, %v6254, 0
  %v6341 = vsel %vm2841, %v6255, 0
  %v6344 = vsel %vm2841, %v6256, 0
  %v6347 = vsel %vm2841, %v6257, 0
  %v6350 = vsel %vm2841, %v6258, 0
  %v6353 = vsel %vm2841, %v6259, 0
  %v6356 = vsel %vm2841, %v6260, 0
  %v6359 = vsel %vm2841, %v6261, 0
  %v6362 = vsel %vm2841, %v6262, 0
  %v6365 = vsel %vm2841, %v6263, 0
  %v6368 = vsel %vm2841, %v6264, 0
  %v6371 = vsel %vm2841, %v6265, 0
  %v6374 = vsel %vm2841, %v6266, 0
  %v6377 = vsel %vm2841, %v6267, 0
  %v6380 = vsel %vm2841, %v6268, 0
  %v6383 = vsel %vm2841, %v6269, 0
  %v6386 = vsel %vm2841, %v6270, 0
  %v6389 = vsel %vm2841, %v6271, 0
  %v6392 = vsel %vm2841, %v6272, 0
  %v6395 = vsel %vm2841, %v6273, 0
  %v6398 = vsel %vm2841, %v6274, 0
  %v6401 = vsel %vm2841, %v6275, 0
  %v6404 = vsel %vm2841, %v6276, 0
  %v6407 = vsel %vm2841, %v6277, 0
  %v6410 = vsel %vm2841, %v6278, 0
  %v6413 = vsel %vm2841, %v6279, 0
  %v6416 = vsel %vm2841, %v6280, 0
  %v6419 = vsel %vm2841, %v6281, 0
  %v6422 = vsel %vm2841, %v6282, 0
  %v6425 = vsel %vm2841, %v6283, 0
  %v6428 = vsel %vm2841, %v6284, 0
  %v6431 = vsel %vm2841, %v6285, 0
  %v6434 = vsel %vm2841, %v6286, 0
  %v6437 = vsel %vm2841, %v6287, 0
  %v6440 = vsel %vm2841, %v6288, 0
  %v6443 = vsel %vm2841, %v6289, 0
  %v6446 = vsel %vm2841, %v6290, 0
  %v6449 = vsel %vm2841, %v6291, 0
  %v6452 = vsel %vm2841, %v6292, 0
  %v6455 = vsel %vm2841, %v6293, 0
  %v6458 = vsel %vm2841, %v6294, 0
  %v6461 = vsel %vm2841, %v6295, 0
  %v6464 = vsel %vm2841, %v6296, 0
  %v6467 = vsel %vm2841, %v6297, 0
  %v6470 = vsel %vm2841, %v6298, 0
  %v6473 = vsel %vm2841, %v6299, 0
  %v6476 = vsel %vm2841, %v6300, 0
  %v6479 = vsel %vm2841, %v6301, 0
  %v6482 = vsel %vm2841, %v6302, 0
  %v6485 = vsel %vm2841, %v6303, 0
  %v6488 = vsel %vm2841, %v6304, 0
  %v6491 = vsel %vm2841, %v6305, 0
  %v6494 = vsel %vm2841, %v6306, 0
  %v6497 = vsel %vm2841, %v6307, 0
  %v6500 = vsel %vm2841, %v6308, 0
  %v6503 = vsel %vm2841, %v6309, 0
  %v6506 = vsel %vm2841, %v6310, 0
  %v6509 = vsel %vm3034, %v6315, 0
  %6511 = vmatprep.subr.mxu0 0.0
  %6512 = vmatpush1.msra.mxu0 %v6311
  %6513 = vmatprep.subr.mxu0 0.0
  %6514 = vmatpush1.msra.mxu0 %v6312
  %6515 = vmatprep.subr.mxu0 0.0
  %6516 = vmatpush1.msra.mxu0 %v6313
  %6517 = vmatprep.subr.mxu0 0.0
  %6518 = vmatpush1.msra.mxu0 %v6314
  %6519 = vmatprep.subr.mxu0 0.0
  %6520 = vmatpush1.msra.mxu0 %v6509
  %6521 = vmatprep.subr.mxu0 0.0
  %6522 = vmatpush1.msra.mxu0 0.0
  %6523 = vmatprep.subr.mxu0 0.0
  %6524 = vmatpush1.msra.mxu0 0.0
  %6525 = vmatprep.subr.mxu0 0.0
  %6526 = vmatpush1.msra.mxu0 0.0
  %6527 = vmatprep.subr.mxu0 0.0
  %6528 = vmatpush1.msra.mxu0 0.0
  %6529 = vmatprep.subr.mxu0 0.0
  %6530 = vmatpush1.msra.mxu0 0.0
  %6531 = vmatprep.subr.mxu0 0.0
  %6532 = vmatpush1.msra.mxu0 0.0
  %6533 = vmatprep.subr.mxu0 0.0
  %6534 = vmatpush1.msra.mxu0 0.0
  %6535 = vmatprep.subr.mxu0 0.0
  %6536 = vmatpush1.msra.mxu0 0.0
  %6537 = vmatprep.subr.mxu0 0.0
  %6538 = vmatpush1.msra.mxu0 0.0
  %6539 = vmatprep.subr.mxu0 0.0
  %6540 = vmatpush1.msra.mxu0 0.0
  %6541 = vmatprep.subr.mxu0 0.0
  %6542 = vmatpush1.msra.mxu0 0.0
  %6543 = vmatprep.subr.mxu0 0.0
  %6544 = vmatpush1.msra.mxu0 0.0
  %6545 = vmatprep.subr.mxu0 0.0
  %6546 = vmatpush1.msra.mxu0 0.0
  %6547 = vmatprep.subr.mxu0 0.0
  %6548 = vmatpush1.msra.mxu0 0.0
  %6549 = vmatprep.subr.mxu0 0.0
  %6550 = vmatpush1.msra.mxu0 0.0
  %6551 = vmatprep.subr.mxu0 0.0
  %6552 = vmatpush1.msra.mxu0 0.0
  %6553 = vmatprep.subr.mxu0 0.0
  %6554 = vmatpush1.msra.mxu0 0.0
  %6555 = vmatprep.subr.mxu0 0.0
  %6556 = vmatpush1.msra.mxu0 0.0
  %6557 = vmatprep.subr.mxu0 0.0
  %6558 = vmatpush1.msra.mxu0 0.0
  %6559 = vmatprep.subr.mxu0 0.0
  %6560 = vmatpush1.msra.mxu0 0.0
  %6561 = vmatprep.subr.mxu0 0.0
  %6562 = vmatpush1.msra.mxu0 0.0
  %6563 = vmatprep.subr.mxu0 0.0
  %6564 = vmatpush1.msra.mxu0 0.0
  %6565 = vmatprep.subr.mxu0 0.0
  %6566 = vmatpush1.msra.mxu0 0.0
  %6567 = vmatprep.subr.mxu0 0.0
  %6568 = vmatpush1.msra.mxu0 0.0
  %6569 = vmatprep.subr.mxu0 0.0
  %6570 = vmatpush1.msra.mxu0 0.0
  %6571 = vmatprep.subr.mxu0 0.0
  %6572 = vmatpush1.msra.mxu0 0.0
  %6573 = vmatprep.subr.mxu0 0.0
  %6574 = vmatpush1.msra.mxu0 0.0
  %6575 = vmatprep.mubr.f32.mxu0 0.0
  %6576 = vmatmul.mubr.f32.gmra.mrb[0].mxu0 %v6317
  %v6577 = vpop.f32.mrb[0].mxu0
  %v6578 = vadd.f32 0.0, %v6577
  %v6579 = vpop.f32.mrb[0].mxu0
  %6580 = vmatprep.mubr.f32.mxu0 0.0
  %6581 = vmatmul.mubr.f32.gmra.mrb[0].mxu0 %v6320
  %v6582 = vpop.f32.mrb[0].mxu0
  %v6583 = vadd.f32 0.0, %v6582
  %v6584 = vpop.f32.mrb[0].mxu0
  %6585 = vmatprep.mubr.f32.mxu0 0.0
  %6586 = vmatmul.mubr.f32.gmra.mrb[0].mxu0 %v6323
  %v6587 = vpop.f32.mrb[0].mxu0
  %v6588 = vadd.f32 0.0, %v6587
  %v6589 = vpop.f32.mrb[0].mxu0
  %6590 = vmatprep.mubr.f32.mxu0 0.0
  %6591 = vmatmul.mubr.f32.gmra.mrb[0].mxu0 %v6326
  %v6592 = vpop.f32.mrb[0].mxu0
  %v6593 = vadd.f32 0.0, %v6592
  %v6594 = vpop.f32.mrb[0].mxu0
  %6595 = vmatprep.mubr.f32.mxu0 0.0
  %6596 = vmatmul.mubr.f32.gmra.mrb[0].mxu0 %v6329
  %v6597 = vpop.f32.mrb[0].mxu0
  %v6598 = vadd.f32 0.0, %v6597
  %v6599 = vpop.f32.mrb[0].mxu0
  %6600 = vmatprep.mubr.f32.mxu0 0.0
  %6601 = vmatmul.mubr.f32.gmra.mrb[0].mxu0 %v6332
  %v6602 = vpop.f32.mrb[0].mxu0
  %v6603 = vadd.f32 0.0, %v6602
  %v6604 = vpop.f32.mrb[0].mxu0
  %6605 = vmatprep.mubr.f32.mxu0 0.0
  %6606 = vmatmul.mubr.f32.gmra.mrb[0].mxu0 %v6335
  %v6607 = vpop.f32.mrb[0].mxu0
  %v6608 = vadd.f32 0.0, %v6607
  %v6609 = vpop.f32.mrb[0].mxu0
  %6610 = vmatprep.mubr.f32.mxu0 0.0
  %6611 = vmatmul.mubr.f32.gmra.mrb[0].mxu0 %v6338
  %v6612 = vpop.f32.mrb[0].mxu0
  %v6613 = vadd.f32 0.0, %v6612
  %v6614 = vpop.f32.mrb[0].mxu0
  %6615 = vmatprep.mubr.f32.mxu0 0.0
  %6616 = vmatmul.mubr.f32.gmra.mrb[0].mxu0 %v6341
  %v6617 = vpop.f32.mrb[0].mxu0
  %v6618 = vadd.f32 0.0, %v6617
  %v6619 = vpop.f32.mrb[0].mxu0
  %6620 = vmatprep.mubr.f32.mxu0 0.0
  %6621 = vmatmul.mubr.f32.gmra.mrb[0].mxu0 %v6344
  %v6622 = vpop.f32.mrb[0].mxu0
  %v6623 = vadd.f32 0.0, %v6622
  %v6624 = vpop.f32.mrb[0].mxu0
  %6625 = vmatprep.mubr.f32.mxu0 0.0
  %6626 = vmatmul.mubr.f32.gmra.mrb[0].mxu0 %v6347
  %v6627 = vpop.f32.mrb[0].mxu0
  %v6628 = vadd.f32 0.0, %v6627
  %v6629 = vpop.f32.mrb[0].mxu0
  %6630 = vmatprep.mubr.f32.mxu0 0.0
  %6631 = vmatmul.mubr.f32.gmra.mrb[0].mxu0 %v6350
  %v6632 = vpop.f32.mrb[0].mxu0
  %v6633 = vadd.f32 0.0, %v6632
  %v6634 = vpop.f32.mrb[0].mxu0
  %6635 = vmatprep.mubr.f32.mxu0 0.0
  %6636 = vmatmul.mubr.f32.gmra.mrb[0].mxu0 %v6353
  %v6637 = vpop.f32.mrb[0].mxu0
  %v6638 = vadd.f32 0.0, %v6637
  %v6639 = vpop.f32.mrb[0].mxu0
  %6640 = vmatprep.mubr.f32.mxu0 0.0
  %6641 = vmatmul.mubr.f32.gmra.mrb[0].mxu0 %v6356
  %v6642 = vpop.f32.mrb[0].mxu0
  %v6643 = vadd.f32 0.0, %v6642
  %v6644 = vpop.f32.mrb[0].mxu0
  %6645 = vmatprep.mubr.f32.mxu0 0.0
  %6646 = vmatmul.mubr.f32.gmra.mrb[0].mxu0 %v6359
  %v6647 = vpop.f32.mrb[0].mxu0
  %v6648 = vadd.f32 0.0, %v6647
  %v6649 = vpop.f32.mrb[0].mxu0
  %6650 = vmatprep.mubr.f32.mxu0 0.0
  %6651 = vmatmul.mubr.f32.gmra.mrb[0].mxu0 %v6362
  %v6652 = vpop.f32.mrb[0].mxu0
  %v6653 = vadd.f32 0.0, %v6652
  %v6654 = vpop.f32.mrb[0].mxu0
  %6655 = vmatprep.mubr.f32.mxu0 0.0
  %6656 = vmatmul.mubr.f32.gmra.mrb[0].mxu0 %v6365
  %v6657 = vpop.f32.mrb[0].mxu0
  %v6658 = vadd.f32 0.0, %v6657
  %v6659 = vpop.f32.mrb[0].mxu0
  %6660 = vmatprep.mubr.f32.mxu0 0.0
  %6661 = vmatmul.mubr.f32.gmra.mrb[0].mxu0 %v6368
  %v6662 = vpop.f32.mrb[0].mxu0
  %v6663 = vadd.f32 0.0, %v6662
  %v6664 = vpop.f32.mrb[0].mxu0
  %6665 = vmatprep.mubr.f32.mxu0 0.0
  %6666 = vmatmul.mubr.f32.gmra.mrb[0].mxu0 %v6371
  %v6667 = vpop.f32.mrb[0].mxu0
  %v6668 = vadd.f32 0.0, %v6667
  %v6669 = vpop.f32.mrb[0].mxu0
  %6670 = vmatprep.mubr.f32.mxu0 0.0
  %6671 = vmatmul.mubr.f32.gmra.mrb[0].mxu0 %v6374
  %v6672 = vpop.f32.mrb[0].mxu0
  %v6673 = vadd.f32 0.0, %v6672
  %v6674 = vpop.f32.mrb[0].mxu0
  %6675 = vmatprep.mubr.f32.mxu0 0.0
  %6676 = vmatmul.mubr.f32.gmra.mrb[0].mxu0 %v6377
  %v6677 = vpop.f32.mrb[0].mxu0
  %v6678 = vadd.f32 0.0, %v6677
  %v6679 = vpop.f32.mrb[0].mxu0
  %6680 = vmatprep.mubr.f32.mxu0 0.0
  %6681 = vmatmul.mubr.f32.gmra.mrb[0].mxu0 %v6380
  %v6682 = vpop.f32.mrb[0].mxu0
  %v6683 = vadd.f32 0.0, %v6682
  %v6684 = vpop.f32.mrb[0].mxu0
  %6685 = vmatprep.mubr.f32.mxu0 0.0
  %6686 = vmatmul.mubr.f32.gmra.mrb[0].mxu0 %v6383
  %v6687 = vpop.f32.mrb[0].mxu0
  %v6688 = vadd.f32 0.0, %v6687
  %v6689 = vpop.f32.mrb[0].mxu0
  %6690 = vmatprep.mubr.f32.mxu0 0.0
  %6691 = vmatmul.mubr.f32.gmra.mrb[0].mxu0 %v6386
  %v6692 = vpop.f32.mrb[0].mxu0
  %v6693 = vadd.f32 0.0, %v6692
  %v6694 = vpop.f32.mrb[0].mxu0
  %6695 = vmatprep.mubr.f32.mxu0 0.0
  %6696 = vmatmul.mubr.f32.gmra.mrb[0].mxu0 %v6389
  %v6697 = vpop.f32.mrb[0].mxu0
  %v6698 = vadd.f32 0.0, %v6697
  %v6699 = vpop.f32.mrb[0].mxu0
  %6700 = vmatprep.mubr.f32.mxu0 0.0
  %6701 = vmatmul.mubr.f32.gmra.mrb[0].mxu0 %v6392
  %v6702 = vpop.f32.mrb[0].mxu0
  %v6703 = vadd.f32 0.0, %v6702
  %v6704 = vpop.f32.mrb[0].mxu0
  %6705 = vmatprep.mubr.f32.mxu0 0.0
  %6706 = vmatmul.mubr.f32.gmra.mrb[0].mxu0 %v6395
  %v6707 = vpop.f32.mrb[0].mxu0
  %v6708 = vadd.f32 0.0, %v6707
  %v6709 = vpop.f32.mrb[0].mxu0
  %6710 = vmatprep.mubr.f32.mxu0 0.0
  %6711 = vmatmul.mubr.f32.gmra.mrb[0].mxu0 %v6398
  %v6712 = vpop.f32.mrb[0].mxu0
  %v6713 = vadd.f32 0.0, %v6712
  %v6714 = vpop.f32.mrb[0].mxu0
  %6715 = vmatprep.mubr.f32.mxu0 0.0
  %6716 = vmatmul.mubr.f32.gmra.mrb[0].mxu0 %v6401
  %v6717 = vpop.f32.mrb[0].mxu0
  %v6718 = vadd.f32 0.0, %v6717
  %v6719 = vpop.f32.mrb[0].mxu0
  %6720 = vmatprep.mubr.f32.mxu0 0.0
  %6721 = vmatmul.mubr.f32.gmra.mrb[0].mxu0 %v6404
  %v6722 = vpop.f32.mrb[0].mxu0
  %v6723 = vadd.f32 0.0, %v6722
  %v6724 = vpop.f32.mrb[0].mxu0
  %6725 = vmatprep.mubr.f32.mxu0 0.0
  %6726 = vmatmul.mubr.f32.gmra.mrb[0].mxu0 %v6407
  %v6727 = vpop.f32.mrb[0].mxu0
  %v6728 = vadd.f32 0.0, %v6727
  %v6729 = vpop.f32.mrb[0].mxu0
  %6730 = vmatprep.mubr.f32.mxu0 0.0
  %6731 = vmatmul.mubr.f32.gmra.mrb[0].mxu0 %v6410
  %v6732 = vpop.f32.mrb[0].mxu0
  %v6733 = vadd.f32 0.0, %v6732
  %v6734 = vpop.f32.mrb[0].mxu0
  %6735 = vmatprep.mubr.f32.mxu0 0.0
  %6736 = vmatmul.mubr.f32.gmra.mrb[0].mxu0 %v6413
  %v6737 = vpop.f32.mrb[0].mxu0
  %v6738 = vadd.f32 0.0, %v6737
  %v6739 = vpop.f32.mrb[0].mxu0
  %6740 = vmatprep.mubr.f32.mxu0 0.0
  %6741 = vmatmul.mubr.f32.gmra.mrb[0].mxu0 %v6416
  %v6742 = vpop.f32.mrb[0].mxu0
  %v6743 = vadd.f32 0.0, %v6742
  %v6744 = vpop.f32.mrb[0].mxu0
  %6745 = vmatprep.mubr.f32.mxu0 0.0
  %6746 = vmatmul.mubr.f32.gmra.mrb[0].mxu0 %v6419
  %v6747 = vpop.f32.mrb[0].mxu0
  %v6748 = vadd.f32 0.0, %v6747
  %v6749 = vpop.f32.mrb[0].mxu0
  %6750 = vmatprep.mubr.f32.mxu0 0.0
  %6751 = vmatmul.mubr.f32.gmra.mrb[0].mxu0 %v6422
  %v6752 = vpop.f32.mrb[0].mxu0
  %v6753 = vadd.f32 0.0, %v6752
  %v6754 = vpop.f32.mrb[0].mxu0
  %6755 = vmatprep.mubr.f32.mxu0 0.0
  %6756 = vmatmul.mubr.f32.gmra.mrb[0].mxu0 %v6425
  %v6757 = vpop.f32.mrb[0].mxu0
  %v6758 = vadd.f32 0.0, %v6757
  %v6759 = vpop.f32.mrb[0].mxu0
  %6760 = vmatprep.mubr.f32.mxu0 0.0
  %6761 = vmatmul.mubr.f32.gmra.mrb[0].mxu0 %v6428
  %v6762 = vpop.f32.mrb[0].mxu0
  %v6763 = vadd.f32 0.0, %v6762
  %v6764 = vpop.f32.mrb[0].mxu0
  %6765 = vmatprep.mubr.f32.mxu0 0.0
  %6766 = vmatmul.mubr.f32.gmra.mrb[0].mxu0 %v6431
  %v6767 = vpop.f32.mrb[0].mxu0
  %v6768 = vadd.f32 0.0, %v6767
  %v6769 = vpop.f32.mrb[0].mxu0
  %6770 = vmatprep.mubr.f32.mxu0 0.0
  %6771 = vmatmul.mubr.f32.gmra.mrb[0].mxu0 %v6434
  %v6772 = vpop.f32.mrb[0].mxu0
  %v6773 = vadd.f32 0.0, %v6772
  %v6774 = vpop.f32.mrb[0].mxu0
  %6775 = vmatprep.mubr.f32.mxu0 0.0
  %6776 = vmatmul.mubr.f32.gmra.mrb[0].mxu0 %v6437
  %v6777 = vpop.f32.mrb[0].mxu0
  %v6778 = vadd.f32 0.0, %v6777
  %v6779 = vpop.f32.mrb[0].mxu0
  %6780 = vmatprep.mubr.f32.mxu0 0.0
  %6781 = vmatmul.mubr.f32.gmra.mrb[0].mxu0 %v6440
  %v6782 = vpop.f32.mrb[0].mxu0
  %v6783 = vadd.f32 0.0, %v6782
  %v6784 = vpop.f32.mrb[0].mxu0
  %6785 = vmatprep.mubr.f32.mxu0 0.0
  %6786 = vmatmul.mubr.f32.gmra.mrb[0].mxu0 %v6443
  %v6787 = vpop.f32.mrb[0].mxu0
  %v6788 = vadd.f32 0.0, %v6787
  %v6789 = vpop.f32.mrb[0].mxu0
  %6790 = vmatprep.mubr.f32.mxu0 0.0
  %6791 = vmatmul.mubr.f32.gmra.mrb[0].mxu0 %v6446
  %v6792 = vpop.f32.mrb[0].mxu0
  %v6793 = vadd.f32 0.0, %v6792
  %v6794 = vpop.f32.mrb[0].mxu0
  %6795 = vmatprep.mubr.f32.mxu0 0.0
  %6796 = vmatmul.mubr.f32.gmra.mrb[0].mxu0 %v6449
  %v6797 = vpop.f32.mrb[0].mxu0
  %v6798 = vadd.f32 0.0, %v6797
  %v6799 = vpop.f32.mrb[0].mxu0
  %6800 = vmatprep.mubr.f32.mxu0 0.0
  %6801 = vmatmul.mubr.f32.gmra.mrb[0].mxu0 %v6452
  %v6802 = vpop.f32.mrb[0].mxu0
  %v6803 = vadd.f32 0.0, %v6802
  %v6804 = vpop.f32.mrb[0].mxu0
  %6805 = vmatprep.mubr.f32.mxu0 0.0
  %6806 = vmatmul.mubr.f32.gmra.mrb[0].mxu0 %v6455
  %v6807 = vpop.f32.mrb[0].mxu0
  %v6808 = vadd.f32 0.0, %v6807
  %v6809 = vpop.f32.mrb[0].mxu0
  %6810 = vmatprep.mubr.f32.mxu0 0.0
  %6811 = vmatmul.mubr.f32.gmra.mrb[0].mxu0 %v6458
  %v6812 = vpop.f32.mrb[0].mxu0
  %v6813 = vadd.f32 0.0, %v6812
  %v6814 = vpop.f32.mrb[0].mxu0
  %6815 = vmatprep.mubr.f32.mxu0 0.0
  %6816 = vmatmul.mubr.f32.gmra.mrb[0].mxu0 %v6461
  %v6817 = vpop.f32.mrb[0].mxu0
  %v6818 = vadd.f32 0.0, %v6817
  %v6819 = vpop.f32.mrb[0].mxu0
  %6820 = vmatprep.mubr.f32.mxu0 0.0
  %6821 = vmatmul.mubr.f32.gmra.mrb[0].mxu0 %v6464
  %v6822 = vpop.f32.mrb[0].mxu0
  %v6823 = vadd.f32 0.0, %v6822
  %v6824 = vpop.f32.mrb[0].mxu0
  %6825 = vmatprep.mubr.f32.mxu0 0.0
  %6826 = vmatmul.mubr.f32.gmra.mrb[0].mxu0 %v6467
  %v6827 = vpop.f32.mrb[0].mxu0
  %v6828 = vadd.f32 0.0, %v6827
  %v6829 = vpop.f32.mrb[0].mxu0
  %6830 = vmatprep.mubr.f32.mxu0 0.0
  %6831 = vmatmul.mubr.f32.gmra.mrb[0].mxu0 %v6470
  %v6832 = vpop.f32.mrb[0].mxu0
  %v6833 = vadd.f32 0.0, %v6832
  %v6834 = vpop.f32.mrb[0].mxu0
  %6835 = vmatprep.mubr.f32.mxu0 0.0
  %6836 = vmatmul.mubr.f32.gmra.mrb[0].mxu0 %v6473
  %v6837 = vpop.f32.mrb[0].mxu0
  %v6838 = vadd.f32 0.0, %v6837
  %v6839 = vpop.f32.mrb[0].mxu0
  %6840 = vmatprep.mubr.f32.mxu0 0.0
  %6841 = vmatmul.mubr.f32.gmra.mrb[0].mxu0 %v6476
  %v6842 = vpop.f32.mrb[0].mxu0
  %v6843 = vadd.f32 0.0, %v6842
  %v6844 = vpop.f32.mrb[0].mxu0
  %6845 = vmatprep.mubr.f32.mxu0 0.0
  %6846 = vmatmul.mubr.f32.gmra.mrb[0].mxu0 %v6479
  %v6847 = vpop.f32.mrb[0].mxu0
  %v6848 = vadd.f32 0.0, %v6847
  %v6849 = vpop.f32.mrb[0].mxu0
  %6850 = vmatprep.mubr.f32.mxu0 0.0
  %6851 = vmatmul.mubr.f32.gmra.mrb[0].mxu0 %v6482
  %v6852 = vpop.f32.mrb[0].mxu0
  %v6853 = vadd.f32 0.0, %v6852
  %v6854 = vpop.f32.mrb[0].mxu0
  %6855 = vmatprep.mubr.f32.mxu0 0.0
  %6856 = vmatmul.mubr.f32.gmra.mrb[0].mxu0 %v6485
  %v6857 = vpop.f32.mrb[0].mxu0
  %v6858 = vadd.f32 0.0, %v6857
  %v6859 = vpop.f32.mrb[0].mxu0
  %6860 = vmatprep.mubr.f32.mxu0 0.0
  %6861 = vmatmul.mubr.f32.gmra.mrb[0].mxu0 %v6488
  %v6862 = vpop.f32.mrb[0].mxu0
  %v6863 = vadd.f32 0.0, %v6862
  %v6864 = vpop.f32.mrb[0].mxu0
  %6865 = vmatprep.mubr.f32.mxu0 0.0
  %6866 = vmatmul.mubr.f32.gmra.mrb[0].mxu0 %v6491
  %v6867 = vpop.f32.mrb[0].mxu0
  %v6868 = vadd.f32 0.0, %v6867
  %v6869 = vpop.f32.mrb[0].mxu0
  %6870 = vmatprep.mubr.f32.mxu0 0.0
  %6871 = vmatmul.mubr.f32.gmra.mrb[0].mxu0 %v6494
  %v6872 = vpop.f32.mrb[0].mxu0
  %v6873 = vadd.f32 0.0, %v6872
  %v6874 = vpop.f32.mrb[0].mxu0
  %6875 = vmatprep.mubr.f32.mxu0 0.0
  %6876 = vmatmul.mubr.f32.gmra.mrb[0].mxu0 %v6497
  %v6877 = vpop.f32.mrb[0].mxu0
  %v6878 = vadd.f32 0.0, %v6877
  %v6879 = vpop.f32.mrb[0].mxu0
  %6880 = vmatprep.mubr.f32.mxu0 0.0
  %6881 = vmatmul.mubr.f32.gmra.mrb[0].mxu0 %v6500
  %v6882 = vpop.f32.mrb[0].mxu0
  %v6883 = vadd.f32 0.0, %v6882
  %v6884 = vpop.f32.mrb[0].mxu0
  %6885 = vmatprep.mubr.f32.mxu0 0.0
  %6886 = vmatmul.mubr.f32.gmra.mrb[0].mxu0 %v6503
  %v6887 = vpop.f32.mrb[0].mxu0
  %v6888 = vadd.f32 0.0, %v6887
  %v6889 = vpop.f32.mrb[0].mxu0
  %6890 = vmatprep.mubr.f32.mxu0 0.0
  %6891 = vmatmul.mubr.f32.gmra.mrb[0].mxu0 %v6506
  %v6892 = vpop.f32.mrb[0].mxu0
  %v6893 = vadd.f32 0.0, %v6892
  %v6894 = vpop.f32.mrb[0].mxu0
  %6895 = vdwg.mxu0
  %v6896 = vld [vmem:[%s5] sm:$0x1]
  %v6898 = vlaneseq
  %v6899 = vshrl.u32 %v6898, 7
  %v6900 = vsub.s32 0, %v6899
  %v6901 = vrot.slane %v6896, %v6900
  %v6903 = vmul.f32 %v6578, %v6901
  %v6904 = vmul.f32 %v6583, %v6901
  %v6905 = vmul.f32 %v6588, %v6901
  %v6906 = vmul.f32 %v6593, %v6901
  %v6907 = vmul.f32 %v6598, %v6901
  %v6908 = vmul.f32 %v6603, %v6901
  %v6909 = vmul.f32 %v6608, %v6901
  %v6910 = vmul.f32 %v6613, %v6901
  %v6911 = vmul.f32 %v6618, %v6901
  %v6912 = vmul.f32 %v6623, %v6901
  %v6913 = vmul.f32 %v6628, %v6901
  %v6914 = vmul.f32 %v6633, %v6901
  %v6915 = vmul.f32 %v6638, %v6901
  %v6916 = vmul.f32 %v6643, %v6901
  %v6917 = vmul.f32 %v6648, %v6901
  %v6918 = vmul.f32 %v6653, %v6901
  %v6919 = vmul.f32 %v6658, %v6901
  %v6920 = vmul.f32 %v6663, %v6901
  %v6921 = vmul.f32 %v6668, %v6901
  %v6922 = vmul.f32 %v6673, %v6901
  %v6923 = vmul.f32 %v6678, %v6901
  %v6924 = vmul.f32 %v6683, %v6901
  %v6925 = vmul.f32 %v6688, %v6901
  %v6926 = vmul.f32 %v6693, %v6901
  %v6927 = vmul.f32 %v6698, %v6901
  %v6928 = vmul.f32 %v6703, %v6901
  %v6929 = vmul.f32 %v6708, %v6901
  %v6930 = vmul.f32 %v6713, %v6901
  %v6931 = vmul.f32 %v6718, %v6901
  %v6932 = vmul.f32 %v6723, %v6901
  %v6933 = vmul.f32 %v6728, %v6901
  %v6934 = vmul.f32 %v6733, %v6901
  %v6935 = vmul.f32 %v6738, %v6901
  %v6936 = vmul.f32 %v6743, %v6901
  %v6937 = vmul.f32 %v6748, %v6901
  %v6938 = vmul.f32 %v6753, %v6901
  %v6939 = vmul.f32 %v6758, %v6901
  %v6940 = vmul.f32 %v6763, %v6901
  %v6941 = vmul.f32 %v6768, %v6901
  %v6942 = vmul.f32 %v6773, %v6901
  %v6943 = vmul.f32 %v6778, %v6901
  %v6944 = vmul.f32 %v6783, %v6901
  %v6945 = vmul.f32 %v6788, %v6901
  %v6946 = vmul.f32 %v6793, %v6901
  %v6947 = vmul.f32 %v6798, %v6901
  %v6948 = vmul.f32 %v6803, %v6901
  %v6949 = vmul.f32 %v6808, %v6901
  %v6950 = vmul.f32 %v6813, %v6901
  %v6951 = vmul.f32 %v6818, %v6901
  %v6952 = vmul.f32 %v6823, %v6901
  %v6953 = vmul.f32 %v6828, %v6901
  %v6954 = vmul.f32 %v6833, %v6901
  %v6955 = vmul.f32 %v6838, %v6901
  %v6956 = vmul.f32 %v6843, %v6901
  %v6957 = vmul.f32 %v6848, %v6901
  %v6958 = vmul.f32 %v6853, %v6901
  %v6959 = vmul.f32 %v6858, %v6901
  %v6960 = vmul.f32 %v6863, %v6901
  %v6961 = vmul.f32 %v6868, %v6901
  %v6962 = vmul.f32 %v6873, %v6901
  %v6963 = vmul.f32 %v6878, %v6901
  %v6964 = vmul.f32 %v6883, %v6901
  %v6965 = vmul.f32 %v6888, %v6901
  %v6966 = vmul.f32 %v6893, %v6901
  %v6967 = vld [vmem:[%s6] sm:$0x1]
  %v6969 = vlaneseq
  %v6970 = vshrl.u32 %v6969, 7
  %v6971 = vsub.s32 0, %v6970
  %v6972 = vrot.slane %v6967, %v6971
  %v6974 = vadd.f32 %v6903, %v6972
  %v6975 = vadd.f32 %v6904, %v6972
  %v6976 = vadd.f32 %v6905, %v6972
  %v6977 = vadd.f32 %v6906, %v6972
  %v6978 = vadd.f32 %v6907, %v6972
  %v6979 = vadd.f32 %v6908, %v6972
  %v6980 = vadd.f32 %v6909, %v6972
  %v6981 = vadd.f32 %v6910, %v6972
  %v6982 = vadd.f32 %v6911, %v6972
  %v6983 = vadd.f32 %v6912, %v6972
  %v6984 = vadd.f32 %v6913, %v6972
  %v6985 = vadd.f32 %v6914, %v6972
  %v6986 = vadd.f32 %v6915, %v6972
  %v6987 = vadd.f32 %v6916, %v6972
  %v6988 = vadd.f32 %v6917, %v6972
  %v6989 = vadd.f32 %v6918, %v6972
  %v6990 = vadd.f32 %v6919, %v6972
  %v6991 = vadd.f32 %v6920, %v6972
  %v6992 = vadd.f32 %v6921, %v6972
  %v6993 = vadd.f32 %v6922, %v6972
  %v6994 = vadd.f32 %v6923, %v6972
  %v6995 = vadd.f32 %v6924, %v6972
  %v6996 = vadd.f32 %v6925, %v6972
  %v6997 = vadd.f32 %v6926, %v6972
  %v6998 = vadd.f32 %v6927, %v6972
  %v6999 = vadd.f32 %v6928, %v6972
  %v7000 = vadd.f32 %v6929, %v6972
  %v7001 = vadd.f32 %v6930, %v6972
  %v7002 = vadd.f32 %v6931, %v6972
  %v7003 = vadd.f32 %v6932, %v6972
  %v7004 = vadd.f32 %v6933, %v6972
  %v7005 = vadd.f32 %v6934, %v6972
  %v7006 = vadd.f32 %v6935, %v6972
  %v7007 = vadd.f32 %v6936, %v6972
  %v7008 = vadd.f32 %v6937, %v6972
  %v7009 = vadd.f32 %v6938, %v6972
  %v7010 = vadd.f32 %v6939, %v6972
  %v7011 = vadd.f32 %v6940, %v6972
  %v7012 = vadd.f32 %v6941, %v6972
  %v7013 = vadd.f32 %v6942, %v6972
  %v7014 = vadd.f32 %v6943, %v6972
  %v7015 = vadd.f32 %v6944, %v6972
  %v7016 = vadd.f32 %v6945, %v6972
  %v7017 = vadd.f32 %v6946, %v6972
  %v7018 = vadd.f32 %v6947, %v6972
  %v7019 = vadd.f32 %v6948, %v6972
  %v7020 = vadd.f32 %v6949, %v6972
  %v7021 = vadd.f32 %v6950, %v6972
  %v7022 = vadd.f32 %v6951, %v6972
  %v7023 = vadd.f32 %v6952, %v6972
  %v7024 = vadd.f32 %v6953, %v6972
  %v7025 = vadd.f32 %v6954, %v6972
  %v7026 = vadd.f32 %v6955, %v6972
  %v7027 = vadd.f32 %v6956, %v6972
  %v7028 = vadd.f32 %v6957, %v6972
  %v7029 = vadd.f32 %v6958, %v6972
  %v7030 = vadd.f32 %v6959, %v6972
  %v7031 = vadd.f32 %v6960, %v6972
  %v7032 = vadd.f32 %v6961, %v6972
  %v7033 = vadd.f32 %v6962, %v6972
  %v7034 = vadd.f32 %v6963, %v6972
  %v7035 = vadd.f32 %v6964, %v6972
  %v7036 = vadd.f32 %v6965, %v6972
  %v7037 = vadd.f32 %v6966, %v6972
  %v7038 = vmax.f32 %v6974, 0.0
  %v7039 = vmax.f32 %v6975, 0.0
  %v7040 = vmax.f32 %v6976, 0.0
  %v7041 = vmax.f32 %v6977, 0.0
  %v7042 = vmax.f32 %v6978, 0.0
  %v7043 = vmax.f32 %v6979, 0.0
  %v7044 = vmax.f32 %v6980, 0.0
  %v7045 = vmax.f32 %v6981, 0.0
  %v7046 = vmax.f32 %v6982, 0.0
  %v7047 = vmax.f32 %v6983, 0.0
  %v7048 = vmax.f32 %v6984, 0.0
  %v7049 = vmax.f32 %v6985, 0.0
  %v7050 = vmax.f32 %v6986, 0.0
  %v7051 = vmax.f32 %v6987, 0.0
  %v7052 = vmax.f32 %v6988, 0.0
  %v7053 = vmax.f32 %v6989, 0.0
  %v7054 = vmax.f32 %v6990, 0.0
  %v7055 = vmax.f32 %v6991, 0.0
  %v7056 = vmax.f32 %v6992, 0.0
  %v7057 = vmax.f32 %v6993, 0.0
  %v7058 = vmax.f32 %v6994, 0.0
  %v7059 = vmax.f32 %v6995, 0.0
  %v7060 = vmax.f32 %v6996, 0.0
  %v7061 = vmax.f32 %v6997, 0.0
  %v7062 = vmax.f32 %v6998, 0.0
  %v7063 = vmax.f32 %v6999, 0.0
  %v7064 = vmax.f32 %v7000, 0.0
  %v7065 = vmax.f32 %v7001, 0.0
  %v7066 = vmax.f32 %v7002, 0.0
  %v7067 = vmax.f32 %v7003, 0.0
  %v7068 = vmax.f32 %v7004, 0.0
  %v7069 = vmax.f32 %v7005, 0.0
  %v7070 = vmax.f32 %v7006, 0.0
  %v7071 = vmax.f32 %v7007, 0.0
  %v7072 = vmax.f32 %v7008, 0.0
  %v7073 = vmax.f32 %v7009, 0.0
  %v7074 = vmax.f32 %v7010, 0.0
  %v7075 = vmax.f32 %v7011, 0.0
  %v7076 = vmax.f32 %v7012, 0.0
  %v7077 = vmax.f32 %v7013, 0.0
  %v7078 = vmax.f32 %v7014, 0.0
  %v7079 = vmax.f32 %v7015, 0.0
  %v7080 = vmax.f32 %v7016, 0.0
  %v7081 = vmax.f32 %v7017, 0.0
  %v7082 = vmax.f32 %v7018, 0.0
  %v7083 = vmax.f32 %v7019, 0.0
  %v7084 = vmax.f32 %v7020, 0.0
  %v7085 = vmax.f32 %v7021, 0.0
  %v7086 = vmax.f32 %v7022, 0.0
  %v7087 = vmax.f32 %v7023, 0.0
  %v7088 = vmax.f32 %v7024, 0.0
  %v7089 = vmax.f32 %v7025, 0.0
  %v7090 = vmax.f32 %v7026, 0.0
  %v7091 = vmax.f32 %v7027, 0.0
  %v7092 = vmax.f32 %v7028, 0.0
  %v7093 = vmax.f32 %v7029, 0.0
  %v7094 = vmax.f32 %v7030, 0.0
  %v7095 = vmax.f32 %v7031, 0.0
  %v7096 = vmax.f32 %v7032, 0.0
  %v7097 = vmax.f32 %v7033, 0.0
  %v7098 = vmax.f32 %v7034, 0.0
  %v7099 = vmax.f32 %v7035, 0.0
  %v7100 = vmax.f32 %v7036, 0.0
  %v7101 = vmax.f32 %v7037, 0.0
  %v7134 = vrot.slane %v7040, 7
  %vm7135 = vcmask 1041409
  %v7136 = vsel %vm7135, %v7134, %v7038
  %v7137 = vrot.slane %v7042, 6
  %vm7138 = vcmask 1042434
  %v7139 = vsel %vm7138, %v7137, %v7136
  %v7140 = vrot.slane %v7044, 5
  %vm7141 = vcmask 1043459
  %v7142 = vsel %vm7141, %v7140, %v7139
  %v7143 = vrot.slane %v7046, 4
  %vm7144 = vcmask 1044484
  %v7145 = vsel %vm7144, %v7143, %v7142
  %v7146 = vrot.slane %v7048, 3
  %vm7147 = vcmask 1045509
  %v7148 = vsel %vm7147, %v7146, %v7145
  %v7149 = vrot.slane %v7050, 2
  %vm7150 = vcmask 1046534
  %v7151 = vsel %vm7150, %v7149, %v7148
  %v7152 = vrot.slane %v7052, 1
  %vm7153 = vcmask 1047559
  %v7154 = vsel %vm7153, %v7152, %v7151
  %v7155 = vrot.slane %v7056, 7
  %v7156 = vsel %vm7135, %v7155, %v7054
  %v7157 = vrot.slane %v7058, 6
  %v7158 = vsel %vm7138, %v7157, %v7156
  %v7159 = vrot.slane %v7060, 5
  %v7160 = vsel %vm7141, %v7159, %v7158
  %v7161 = vrot.slane %v7062, 4
  %v7162 = vsel %vm7144, %v7161, %v7160
  %v7163 = vrot.slane %v7064, 3
  %v7164 = vsel %vm7147, %v7163, %v7162
  %v7165 = vrot.slane %v7066, 2
  %v7166 = vsel %vm7150, %v7165, %v7164
  %v7167 = vrot.slane %v7068, 1
  %v7168 = vsel %vm7153, %v7167, %v7166
  %v7169 = vrot.slane %v7072, 7
  %v7170 = vsel %vm7135, %v7169, %v7070
  %v7171 = vrot.slane %v7074, 6
  %v7172 = vsel %vm7138, %v7171, %v7170
  %v7173 = vrot.slane %v7076, 5
  %v7174 = vsel %vm7141, %v7173, %v7172
  %v7175 = vrot.slane %v7078, 4
  %v7176 = vsel %vm7144, %v7175, %v7174
  %v7177 = vrot.slane %v7080, 3
  %v7178 = vsel %vm7147, %v7177, %v7176
  %v7179 = vrot.slane %v7082, 2
  %v7180 = vsel %vm7150, %v7179, %v7178
  %v7181 = vrot.slane %v7084, 1
  %v7182 = vsel %vm7153, %v7181, %v7180
  %v7183 = vrot.slane %v7088, 7
  %v7184 = vsel %vm7135, %v7183, %v7086
  %v7185 = vrot.slane %v7090, 6
  %v7186 = vsel %vm7138, %v7185, %v7184
  %v7187 = vrot.slane %v7092, 5
  %v7188 = vsel %vm7141, %v7187, %v7186
  %v7189 = vrot.slane %v7094, 4
  %v7190 = vsel %vm7144, %v7189, %v7188
  %v7191 = vrot.slane %v7096, 3
  %v7192 = vsel %vm7147, %v7191, %v7190
  %v7193 = vrot.slane %v7098, 2
  %v7194 = vsel %vm7150, %v7193, %v7192
  %v7195 = vrot.slane %v7100, 1
  %v7196 = vsel %vm7153, %v7195, %v7194
  %v7201 = vrot.slane %v7038, 1
  %v7202 = vsel %vm7135, %v7040, %v7201
  %v7203 = vrot.slane %v7042, 7
  %v7204 = vsel %vm7138, %v7203, %v7202
  %v7205 = vrot.slane %v7044, 6
  %v7206 = vsel %vm7141, %v7205, %v7204
  %v7207 = vrot.slane %v7046, 5
  %v7208 = vsel %vm7144, %v7207, %v7206
  %v7209 = vrot.slane %v7048, 4
  %v7210 = vsel %vm7147, %v7209, %v7208
  %v7211 = vrot.slane %v7050, 3
  %v7212 = vsel %vm7150, %v7211, %v7210
  %v7213 = vrot.slane %v7052, 2
  %v7214 = vsel %vm7153, %v7213, %v7212
  %v7215 = vrot.slane %v7054, 1
  %v7216 = vsel %vm7135, %v7056, %v7215
  %v7217 = vrot.slane %v7058, 7
  %v7218 = vsel %vm7138, %v7217, %v7216
  %v7219 = vrot.slane %v7060, 6
  %v7220 = vsel %vm7141, %v7219, %v7218
  %v7221 = vrot.slane %v7062, 5
  %v7222 = vsel %vm7144, %v7221, %v7220
  %v7223 = vrot.slane %v7064, 4
  %v7224 = vsel %vm7147, %v7223, %v7222
  %v7225 = vrot.slane %v7066, 3
  %v7226 = vsel %vm7150, %v7225, %v7224
  %v7227 = vrot.slane %v7068, 2
  %v7228 = vsel %vm7153, %v7227, %v7226
  %v7229 = vrot.slane %v7070, 1
  %v7230 = vsel %vm7135, %v7072, %v7229
  %v7231 = vrot.slane %v7074, 7
  %v7232 = vsel %vm7138, %v7231, %v7230
  %v7233 = vrot.slane %v7076, 6
  %v7234 = vsel %vm7141, %v7233, %v7232
  %v7235 = vrot.slane %v7078, 5
  %v7236 = vsel %vm7144, %v7235, %v7234
  %v7237 = vrot.slane %v7080, 4
  %v7238 = vsel %vm7147, %v7237, %v7236
  %v7239 = vrot.slane %v7082, 3
  %v7240 = vsel %vm7150, %v7239, %v7238
  %v7241 = vrot.slane %v7084, 2
  %v7242 = vsel %vm7153, %v7241, %v7240
  %v7243 = vrot.slane %v7086, 1
  %v7244 = vsel %vm7135, %v7088, %v7243
  %v7245 = vrot.slane %v7090, 7
  %v7246 = vsel %vm7138, %v7245, %v7244
  %v7247 = vrot.slane %v7092, 6
  %v7248 = vsel %vm7141, %v7247, %v7246
  %v7249 = vrot.slane %v7094, 5
  %v7250 = vsel %vm7144, %v7249, %v7248
  %v7251 = vrot.slane %v7096, 4
  %v7252 = vsel %vm7147, %v7251, %v7250
  %v7253 = vrot.slane %v7098, 3
  %v7254 = vsel %vm7150, %v7253, %v7252
  %v7255 = vrot.slane %v7100, 2
  %v7256 = vsel %vm7153, %v7255, %v7254
  %7257 = vrot.lane.b32.xlu0 %v7214, 8
  %v7258 = vpop.permute.xlu0 %7257
  %7259 = vrot.lane.b32.xlu0 %v7228, 8
  %v7260 = vpop.permute.xlu0 %7259
  %7261 = vrot.lane.b32.xlu0 %v7242, 8
  %v7262 = vpop.permute.xlu0 %7261
  %7263 = vrot.lane.b32.xlu0 %v7256, 8
  %v7264 = vpop.permute.xlu0 %7263
  %v7269 = vrot.slane %v7038, 2
  %v7270 = vrot.slane %v7040, 1
  %v7271 = vsel %vm7135, %v7270, %v7269
  %v7272 = vsel %vm7138, %v7042, %v7271
  %v7273 = vrot.slane %v7044, 7
  %v7274 = vsel %vm7141, %v7273, %v7272
  %v7275 = vrot.slane %v7046, 6
  %v7276 = vsel %vm7144, %v7275, %v7274
  %v7277 = vrot.slane %v7048, 5
  %v7278 = vsel %vm7147, %v7277, %v7276
  %v7279 = vrot.slane %v7050, 4
  %v7280 = vsel %vm7150, %v7279, %v7278
  %v7281 = vrot.slane %v7052, 3
  %v7282 = vsel %vm7153, %v7281, %v7280
  %v7283 = vrot.slane %v7054, 2
  %v7284 = vrot.slane %v7056, 1
  %v7285 = vsel %vm7135, %v7284, %v7283
  %v7286 = vsel %vm7138, %v7058, %v7285
  %v7287 = vrot.slane %v7060, 7
  %v7288 = vsel %vm7141, %v7287, %v7286
  %v7289 = vrot.slane %v7062, 6
  %v7290 = vsel %vm7144, %v7289, %v7288
  %v7291 = vrot.slane %v7064, 5
  %v7292 = vsel %vm7147, %v7291, %v7290
  %v7293 = vrot.slane %v7066, 4
  %v7294 = vsel %vm7150, %v7293, %v7292
  %v7295 = vrot.slane %v7068, 3
  %v7296 = vsel %vm7153, %v7295, %v7294
  %v7297 = vrot.slane %v7070, 2
  %v7298 = vrot.slane %v7072, 1
  %v7299 = vsel %vm7135, %v7298, %v7297
  %v7300 = vsel %vm7138, %v7074, %v7299
  %v7301 = vrot.slane %v7076, 7
  %v7302 = vsel %vm7141, %v7301, %v7300
  %v7303 = vrot.slane %v7078, 6
  %v7304 = vsel %vm7144, %v7303, %v7302
  %v7305 = vrot.slane %v7080, 5
  %v7306 = vsel %vm7147, %v7305, %v7304
  %v7307 = vrot.slane %v7082, 4
  %v7308 = vsel %vm7150, %v7307, %v7306
  %v7309 = vrot.slane %v7084, 3
  %v7310 = vsel %vm7153, %v7309, %v7308
  %v7311 = vrot.slane %v7086, 2
  %v7312 = vrot.slane %v7088, 1
  %v7313 = vsel %vm7135, %v7312, %v7311
  %v7314 = vsel %vm7138, %v7090, %v7313
  %v7315 = vrot.slane %v7092, 7
  %v7316 = vsel %vm7141, %v7315, %v7314
  %v7317 = vrot.slane %v7094, 6
  %v7318 = vsel %vm7144, %v7317, %v7316
  %v7319 = vrot.slane %v7096, 5
  %v7320 = vsel %vm7147, %v7319, %v7318
  %v7321 = vrot.slane %v7098, 4
  %v7322 = vsel %vm7150, %v7321, %v7320
  %v7323 = vrot.slane %v7100, 3
  %v7324 = vsel %vm7153, %v7323, %v7322
  %7325 = vrot.lane.b32.xlu0 %v7282, 16
  %v7326 = vpop.permute.xlu0 %7325
  %7327 = vrot.lane.b32.xlu0 %v7296, 16
  %v7328 = vpop.permute.xlu0 %7327
  %7329 = vrot.lane.b32.xlu0 %v7310, 16
  %v7330 = vpop.permute.xlu0 %7329
  %7331 = vrot.lane.b32.xlu0 %v7324, 16
  %v7332 = vpop.permute.xlu0 %7331
  %v7337 = vrot.slane %v7038, 3
  %v7338 = vrot.slane %v7040, 2
  %v7339 = vsel %vm7135, %v7338, %v7337
  %v7340 = vrot.slane %v7042, 1
  %v7341 = vsel %vm7138, %v7340, %v7339
  %v7342 = vsel %vm7141, %v7044, %v7341
  %v7343 = vrot.slane %v7046, 7
  %v7344 = vsel %vm7144, %v7343, %v7342
  %v7345 = vrot.slane %v7048, 6
  %v7346 = vsel %vm7147, %v7345, %v7344
  %v7347 = vrot.slane %v7050, 5
  %v7348 = vsel %vm7150, %v7347, %v7346
  %v7349 = vrot.slane %v7052, 4
  %v7350 = vsel %vm7153, %v7349, %v7348
  %v7351 = vrot.slane %v7054, 3
  %v7352 = vrot.slane %v7056, 2
  %v7353 = vsel %vm7135, %v7352, %v7351
  %v7354 = vrot.slane %v7058, 1
  %v7355 = vsel %vm7138, %v7354, %v7353
  %v7356 = vsel %vm7141, %v7060, %v7355
  %v7357 = vrot.slane %v7062, 7
  %v7358 = vsel %vm7144, %v7357, %v7356
  %v7359 = vrot.slane %v7064, 6
  %v7360 = vsel %vm7147, %v7359, %v7358
  %v7361 = vrot.slane %v7066, 5
  %v7362 = vsel %vm7150, %v7361, %v7360
  %v7363 = vrot.slane %v7068, 4
  %v7364 = vsel %vm7153, %v7363, %v7362
  %v7365 = vrot.slane %v7070, 3
  %v7366 = vrot.slane %v7072, 2
  %v7367 = vsel %vm7135, %v7366, %v7365
  %v7368 = vrot.slane %v7074, 1
  %v7369 = vsel %vm7138, %v7368, %v7367
  %v7370 = vsel %vm7141, %v7076, %v7369
  %v7371 = vrot.slane %v7078, 7
  %v7372 = vsel %vm7144, %v7371, %v7370
  %v7373 = vrot.slane %v7080, 6
  %v7374 = vsel %vm7147, %v7373, %v7372
  %v7375 = vrot.slane %v7082, 5
  %v7376 = vsel %vm7150, %v7375, %v7374
  %v7377 = vrot.slane %v7084, 4
  %v7378 = vsel %vm7153, %v7377, %v7376
  %v7379 = vrot.slane %v7086, 3
  %v7380 = vrot.slane %v7088, 2
  %v7381 = vsel %vm7135, %v7380, %v7379
  %v7382 = vrot.slane %v7090, 1
  %v7383 = vsel %vm7138, %v7382, %v7381
  %v7384 = vsel %vm7141, %v7092, %v7383
  %v7385 = vrot.slane %v7094, 7
  %v7386 = vsel %vm7144, %v7385, %v7384
  %v7387 = vrot.slane %v7096, 6
  %v7388 = vsel %vm7147, %v7387, %v7386
  %v7389 = vrot.slane %v7098, 5
  %v7390 = vsel %vm7150, %v7389, %v7388
  %v7391 = vrot.slane %v7100, 4
  %v7392 = vsel %vm7153, %v7391, %v7390
  %7393 = vrot.lane.b32.xlu0 %v7350, 24
  %v7394 = vpop.permute.xlu0 %7393
  %7395 = vrot.lane.b32.xlu0 %v7364, 24
  %v7396 = vpop.permute.xlu0 %7395
  %7397 = vrot.lane.b32.xlu0 %v7378, 24
  %v7398 = vpop.permute.xlu0 %7397
  %7399 = vrot.lane.b32.xlu0 %v7392, 24
  %v7400 = vpop.permute.xlu0 %7399
  %v7405 = vrot.slane %v7038, 4
  %v7406 = vrot.slane %v7040, 3
  %v7407 = vsel %vm7135, %v7406, %v7405
  %v7408 = vrot.slane %v7042, 2
  %v7409 = vsel %vm7138, %v7408, %v7407
  %v7410 = vrot.slane %v7044, 1
  %v7411 = vsel %vm7141, %v7410, %v7409
  %v7412 = vsel %vm7144, %v7046, %v7411
  %v7413 = vrot.slane %v7048, 7
  %v7414 = vsel %vm7147, %v7413, %v7412
  %v7415 = vrot.slane %v7050, 6
  %v7416 = vsel %vm7150, %v7415, %v7414
  %v7417 = vrot.slane %v7052, 5
  %v7418 = vsel %vm7153, %v7417, %v7416
  %v7419 = vrot.slane %v7054, 4
  %v7420 = vrot.slane %v7056, 3
  %v7421 = vsel %vm7135, %v7420, %v7419
  %v7422 = vrot.slane %v7058, 2
  %v7423 = vsel %vm7138, %v7422, %v7421
  %v7424 = vrot.slane %v7060, 1
  %v7425 = vsel %vm7141, %v7424, %v7423
  %v7426 = vsel %vm7144, %v7062, %v7425
  %v7427 = vrot.slane %v7064, 7
  %v7428 = vsel %vm7147, %v7427, %v7426
  %v7429 = vrot.slane %v7066, 6
  %v7430 = vsel %vm7150, %v7429, %v7428
  %v7431 = vrot.slane %v7068, 5
  %v7432 = vsel %vm7153, %v7431, %v7430
  %v7433 = vrot.slane %v7070, 4
  %v7434 = vrot.slane %v7072, 3
  %v7435 = vsel %vm7135, %v7434, %v7433
  %v7436 = vrot.slane %v7074, 2
  %v7437 = vsel %vm7138, %v7436, %v7435
  %v7438 = vrot.slane %v7076, 1
  %v7439 = vsel %vm7141, %v7438, %v7437
  %v7440 = vsel %vm7144, %v7078, %v7439
  %v7441 = vrot.slane %v7080, 7
  %v7442 = vsel %vm7147, %v7441, %v7440
  %v7443 = vrot.slane %v7082, 6
  %v7444 = vsel %vm7150, %v7443, %v7442
  %v7445 = vrot.slane %v7084, 5
  %v7446 = vsel %vm7153, %v7445, %v7444
  %v7447 = vrot.slane %v7086, 4
  %v7448 = vrot.slane %v7088, 3
  %v7449 = vsel %vm7135, %v7448, %v7447
  %v7450 = vrot.slane %v7090, 2
  %v7451 = vsel %vm7138, %v7450, %v7449
  %v7452 = vrot.slane %v7092, 1
  %v7453 = vsel %vm7141, %v7452, %v7451
  %v7454 = vsel %vm7144, %v7094, %v7453
  %v7455 = vrot.slane %v7096, 7
  %v7456 = vsel %vm7147, %v7455, %v7454
  %v7457 = vrot.slane %v7098, 6
  %v7458 = vsel %vm7150, %v7457, %v7456
  %v7459 = vrot.slane %v7100, 5
  %v7460 = vsel %vm7153, %v7459, %v7458
  %7461 = vrot.lane.b32.xlu0 %v7418, 32
  %v7462 = vpop.permute.xlu0 %7461
  %7463 = vrot.lane.b32.xlu0 %v7432, 32
  %v7464 = vpop.permute.xlu0 %7463
  %7465 = vrot.lane.b32.xlu0 %v7446, 32
  %v7466 = vpop.permute.xlu0 %7465
  %7467 = vrot.lane.b32.xlu0 %v7460, 32
  %v7468 = vpop.permute.xlu0 %7467
  %v7473 = vrot.slane %v7038, 5
  %v7474 = vrot.slane %v7040, 4
  %v7475 = vsel %vm7135, %v7474, %v7473
  %v7476 = vrot.slane %v7042, 3
  %v7477 = vsel %vm7138, %v7476, %v7475
  %v7478 = vrot.slane %v7044, 2
  %v7479 = vsel %vm7141, %v7478, %v7477
  %v7480 = vrot.slane %v7046, 1
  %v7481 = vsel %vm7144, %v7480, %v7479
  %v7482 = vsel %vm7147, %v7048, %v7481
  %v7483 = vrot.slane %v7050, 7
  %v7484 = vsel %vm7150, %v7483, %v7482
  %v7485 = vrot.slane %v7052, 6
  %v7486 = vsel %vm7153, %v7485, %v7484
  %v7487 = vrot.slane %v7054, 5
  %v7488 = vrot.slane %v7056, 4
  %v7489 = vsel %vm7135, %v7488, %v7487
  %v7490 = vrot.slane %v7058, 3
  %v7491 = vsel %vm7138, %v7490, %v7489
  %v7492 = vrot.slane %v7060, 2
  %v7493 = vsel %vm7141, %v7492, %v7491
  %v7494 = vrot.slane %v7062, 1
  %v7495 = vsel %vm7144, %v7494, %v7493
  %v7496 = vsel %vm7147, %v7064, %v7495
  %v7497 = vrot.slane %v7066, 7
  %v7498 = vsel %vm7150, %v7497, %v7496
  %v7499 = vrot.slane %v7068, 6
  %v7500 = vsel %vm7153, %v7499, %v7498
  %v7501 = vrot.slane %v7070, 5
  %v7502 = vrot.slane %v7072, 4
  %v7503 = vsel %vm7135, %v7502, %v7501
  %v7504 = vrot.slane %v7074, 3
  %v7505 = vsel %vm7138, %v7504, %v7503
  %v7506 = vrot.slane %v7076, 2
  %v7507 = vsel %vm7141, %v7506, %v7505
  %v7508 = vrot.slane %v7078, 1
  %v7509 = vsel %vm7144, %v7508, %v7507
  %v7510 = vsel %vm7147, %v7080, %v7509
  %v7511 = vrot.slane %v7082, 7
  %v7512 = vsel %vm7150, %v7511, %v7510
  %v7513 = vrot.slane %v7084, 6
  %v7514 = vsel %vm7153, %v7513, %v7512
  %v7515 = vrot.slane %v7086, 5
  %v7516 = vrot.slane %v7088, 4
  %v7517 = vsel %vm7135, %v7516, %v7515
  %v7518 = vrot.slane %v7090, 3
  %v7519 = vsel %vm7138, %v7518, %v7517
  %v7520 = vrot.slane %v7092, 2
  %v7521 = vsel %vm7141, %v7520, %v7519
  %v7522 = vrot.slane %v7094, 1
  %v7523 = vsel %vm7144, %v7522, %v7521
  %v7524 = vsel %vm7147, %v7096, %v7523
  %v7525 = vrot.slane %v7098, 7
  %v7526 = vsel %vm7150, %v7525, %v7524
  %v7527 = vrot.slane %v7100, 6
  %v7528 = vsel %vm7153, %v7527, %v7526
  %7529 = vrot.lane.b32.xlu0 %v7486, 40
  %v7530 = vpop.permute.xlu0 %7529
  %7531 = vrot.lane.b32.xlu0 %v7500, 40
  %v7532 = vpop.permute.xlu0 %7531
  %7533 = vrot.lane.b32.xlu0 %v7514, 40
  %v7534 = vpop.permute.xlu0 %7533
  %7535 = vrot.lane.b32.xlu0 %v7528, 40
  %v7536 = vpop.permute.xlu0 %7535
  %v7541 = vrot.slane %v7038, 6
  %v7542 = vrot.slane %v7040, 5
  %v7543 = vsel %vm7135, %v7542, %v7541
  %v7544 = vrot.slane %v7042, 4
  %v7545 = vsel %vm7138, %v7544, %v7543
  %v7546 = vrot.slane %v7044, 3
  %v7547 = vsel %vm7141, %v7546, %v7545
  %v7548 = vrot.slane %v7046, 2
  %v7549 = vsel %vm7144, %v7548, %v7547
  %v7550 = vrot.slane %v7048, 1
  %v7551 = vsel %vm7147, %v7550, %v7549
  %v7552 = vsel %vm7150, %v7050, %v7551
  %v7553 = vrot.slane %v7052, 7
  %v7554 = vsel %vm7153, %v7553, %v7552
  %v7555 = vrot.slane %v7054, 6
  %v7556 = vrot.slane %v7056, 5
  %v7557 = vsel %vm7135, %v7556, %v7555
  %v7558 = vrot.slane %v7058, 4
  %v7559 = vsel %vm7138, %v7558, %v7557
  %v7560 = vrot.slane %v7060, 3
  %v7561 = vsel %vm7141, %v7560, %v7559
  %v7562 = vrot.slane %v7062, 2
  %v7563 = vsel %vm7144, %v7562, %v7561
  %v7564 = vrot.slane %v7064, 1
  %v7565 = vsel %vm7147, %v7564, %v7563
  %v7566 = vsel %vm7150, %v7066, %v7565
  %v7567 = vrot.slane %v7068, 7
  %v7568 = vsel %vm7153, %v7567, %v7566
  %v7569 = vrot.slane %v7070, 6
  %v7570 = vrot.slane %v7072, 5
  %v7571 = vsel %vm7135, %v7570, %v7569
  %v7572 = vrot.slane %v7074, 4
  %v7573 = vsel %vm7138, %v7572, %v7571
  %v7574 = vrot.slane %v7076, 3
  %v7575 = vsel %vm7141, %v7574, %v7573
  %v7576 = vrot.slane %v7078, 2
  %v7577 = vsel %vm7144, %v7576, %v7575
  %v7578 = vrot.slane %v7080, 1
  %v7579 = vsel %vm7147, %v7578, %v7577
  %v7580 = vsel %vm7150, %v7082, %v7579
  %v7581 = vrot.slane %v7084, 7
  %v7582 = vsel %vm7153, %v7581, %v7580
  %v7583 = vrot.slane %v7086, 6
  %v7584 = vrot.slane %v7088, 5
  %v7585 = vsel %vm7135, %v7584, %v7583
  %v7586 = vrot.slane %v7090, 4
  %v7587 = vsel %vm7138, %v7586, %v7585
  %v7588 = vrot.slane %v7092, 3
  %v7589 = vsel %vm7141, %v7588, %v7587
  %v7590 = vrot.slane %v7094, 2
  %v7591 = vsel %vm7144, %v7590, %v7589
  %v7592 = vrot.slane %v7096, 1
  %v7593 = vsel %vm7147, %v7592, %v7591
  %v7594 = vsel %vm7150, %v7098, %v7593
  %v7595 = vrot.slane %v7100, 7
  %v7596 = vsel %vm7153, %v7595, %v7594
  %7597 = vrot.lane.b32.xlu0 %v7554, 48
  %v7598 = vpop.permute.xlu0 %7597
  %7599 = vrot.lane.b32.xlu0 %v7568, 48
  %v7600 = vpop.permute.xlu0 %7599
  %7601 = vrot.lane.b32.xlu0 %v7582, 48
  %v7602 = vpop.permute.xlu0 %7601
  %7603 = vrot.lane.b32.xlu0 %v7596, 48
  %v7604 = vpop.permute.xlu0 %7603
  %v7609 = vrot.slane %v7038, 7
  %v7610 = vrot.slane %v7040, 6
  %v7611 = vsel %vm7135, %v7610, %v7609
  %v7612 = vrot.slane %v7042, 5
  %v7613 = vsel %vm7138, %v7612, %v7611
  %v7614 = vrot.slane %v7044, 4
  %v7615 = vsel %vm7141, %v7614, %v7613
  %v7616 = vrot.slane %v7046, 3
  %v7617 = vsel %vm7144, %v7616, %v7615
  %v7618 = vrot.slane %v7048, 2
  %v7619 = vsel %vm7147, %v7618, %v7617
  %v7620 = vrot.slane %v7050, 1
  %v7621 = vsel %vm7150, %v7620, %v7619
  %v7622 = vsel %vm7153, %v7052, %v7621
  %v7623 = vrot.slane %v7054, 7
  %v7624 = vrot.slane %v7056, 6
  %v7625 = vsel %vm7135, %v7624, %v7623
  %v7626 = vrot.slane %v7058, 5
  %v7627 = vsel %vm7138, %v7626, %v7625
  %v7628 = vrot.slane %v7060, 4
  %v7629 = vsel %vm7141, %v7628, %v7627
  %v7630 = vrot.slane %v7062, 3
  %v7631 = vsel %vm7144, %v7630, %v7629
  %v7632 = vrot.slane %v7064, 2
  %v7633 = vsel %vm7147, %v7632, %v7631
  %v7634 = vrot.slane %v7066, 1
  %v7635 = vsel %vm7150, %v7634, %v7633
  %v7636 = vsel %vm7153, %v7068, %v7635
  %v7637 = vrot.slane %v7070, 7
  %v7638 = vrot.slane %v7072, 6
  %v7639 = vsel %vm7135, %v7638, %v7637
  %v7640 = vrot.slane %v7074, 5
  %v7641 = vsel %vm7138, %v7640, %v7639
  %v7642 = vrot.slane %v7076, 4
  %v7643 = vsel %vm7141, %v7642, %v7641
  %v7644 = vrot.slane %v7078, 3
  %v7645 = vsel %vm7144, %v7644, %v7643
  %v7646 = vrot.slane %v7080, 2
  %v7647 = vsel %vm7147, %v7646, %v7645
  %v7648 = vrot.slane %v7082, 1
  %v7649 = vsel %vm7150, %v7648, %v7647
  %v7650 = vsel %vm7153, %v7084, %v7649
  %v7651 = vrot.slane %v7086, 7
  %v7652 = vrot.slane %v7088, 6
  %v7653 = vsel %vm7135, %v7652, %v7651
  %v7654 = vrot.slane %v7090, 5
  %v7655 = vsel %vm7138, %v7654, %v7653
  %v7656 = vrot.slane %v7092, 4
  %v7657 = vsel %vm7141, %v7656, %v7655
  %v7658 = vrot.slane %v7094, 3
  %v7659 = vsel %vm7144, %v7658, %v7657
  %v7660 = vrot.slane %v7096, 2
  %v7661 = vsel %vm7147, %v7660, %v7659
  %v7662 = vrot.slane %v7098, 1
  %v7663 = vsel %vm7150, %v7662, %v7661
  %v7664 = vsel %vm7153, %v7100, %v7663
  %7665 = vrot.lane.b32.xlu0 %v7622, 56
  %v7666 = vpop.permute.xlu0 %7665
  %7667 = vrot.lane.b32.xlu0 %v7636, 56
  %v7668 = vpop.permute.xlu0 %7667
  %7669 = vrot.lane.b32.xlu0 %v7650, 56
  %v7670 = vpop.permute.xlu0 %7669
  %7671 = vrot.lane.b32.xlu0 %v7664, 56
  %v7672 = vpop.permute.xlu0 %7671
  %v7709 = vrot.slane %v7041, 7
  %v7710 = vsel %vm7135, %v7709, %v7039
  %v7711 = vrot.slane %v7043, 6
  %v7712 = vsel %vm7138, %v7711, %v7710
  %v7713 = vrot.slane %v7045, 5
  %v7714 = vsel %vm7141, %v7713, %v7712
  %v7715 = vrot.slane %v7047, 4
  %v7716 = vsel %vm7144, %v7715, %v7714
  %v7717 = vrot.slane %v7049, 3
  %v7718 = vsel %vm7147, %v7717, %v7716
  %v7719 = vrot.slane %v7051, 2
  %v7720 = vsel %vm7150, %v7719, %v7718
  %v7721 = vrot.slane %v7053, 1
  %v7722 = vsel %vm7153, %v7721, %v7720
  %v7723 = vrot.slane %v7057, 7
  %v7724 = vsel %vm7135, %v7723, %v7055
  %v7725 = vrot.slane %v7059, 6
  %v7726 = vsel %vm7138, %v7725, %v7724
  %v7727 = vrot.slane %v7061, 5
  %v7728 = vsel %vm7141, %v7727, %v7726
  %v7729 = vrot.slane %v7063, 4
  %v7730 = vsel %vm7144, %v7729, %v7728
  %v7731 = vrot.slane %v7065, 3
  %v7732 = vsel %vm7147, %v7731, %v7730
  %v7733 = vrot.slane %v7067, 2
  %v7734 = vsel %vm7150, %v7733, %v7732
  %v7735 = vrot.slane %v7069, 1
  %v7736 = vsel %vm7153, %v7735, %v7734
  %v7737 = vrot.slane %v7073, 7
  %v7738 = vsel %vm7135, %v7737, %v7071
  %v7739 = vrot.slane %v7075, 6
  %v7740 = vsel %vm7138, %v7739, %v7738
  %v7741 = vrot.slane %v7077, 5
  %v7742 = vsel %vm7141, %v7741, %v7740
  %v7743 = vrot.slane %v7079, 4
  %v7744 = vsel %vm7144, %v7743, %v7742
  %v7745 = vrot.slane %v7081, 3
  %v7746 = vsel %vm7147, %v7745, %v7744
  %v7747 = vrot.slane %v7083, 2
  %v7748 = vsel %vm7150, %v7747, %v7746
  %v7749 = vrot.slane %v7085, 1
  %v7750 = vsel %vm7153, %v7749, %v7748
  %v7751 = vrot.slane %v7089, 7
  %v7752 = vsel %vm7135, %v7751, %v7087
  %v7753 = vrot.slane %v7091, 6
  %v7754 = vsel %vm7138, %v7753, %v7752
  %v7755 = vrot.slane %v7093, 5
  %v7756 = vsel %vm7141, %v7755, %v7754
  %v7757 = vrot.slane %v7095, 4
  %v7758 = vsel %vm7144, %v7757, %v7756
  %v7759 = vrot.slane %v7097, 3
  %v7760 = vsel %vm7147, %v7759, %v7758
  %v7761 = vrot.slane %v7099, 2
  %v7762 = vsel %vm7150, %v7761, %v7760
  %v7763 = vrot.slane %v7101, 1
  %v7764 = vsel %vm7153, %v7763, %v7762
  %7765 = vrot.lane.b32.xlu0 %v7722, 64
  %v7766 = vpop.permute.xlu0 %7765
  %7767 = vrot.lane.b32.xlu0 %v7736, 64
  %v7768 = vpop.permute.xlu0 %7767
  %7769 = vrot.lane.b32.xlu0 %v7750, 64
  %v7770 = vpop.permute.xlu0 %7769
  %7771 = vrot.lane.b32.xlu0 %v7764, 64
  %v7772 = vpop.permute.xlu0 %7771
  %v7777 = vrot.slane %v7039, 1
  %v7778 = vsel %vm7135, %v7041, %v7777
  %v7779 = vrot.slane %v7043, 7
  %v7780 = vsel %vm7138, %v7779, %v7778
  %v7781 = vrot.slane %v7045, 6
  %v7782 = vsel %vm7141, %v7781, %v7780
  %v7783 = vrot.slane %v7047, 5
  %v7784 = vsel %vm7144, %v7783, %v7782
  %v7785 = vrot.slane %v7049, 4
  %v7786 = vsel %vm7147, %v7785, %v7784
  %v7787 = vrot.slane %v7051, 3
  %v7788 = vsel %vm7150, %v7787, %v7786
  %v7789 = vrot.slane %v7053, 2
  %v7790 = vsel %vm7153, %v7789, %v7788
  %v7791 = vrot.slane %v7055, 1
  %v7792 = vsel %vm7135, %v7057, %v7791
  %v7793 = vrot.slane %v7059, 7
  %v7794 = vsel %vm7138, %v7793, %v7792
  %v7795 = vrot.slane %v7061, 6
  %v7796 = vsel %vm7141, %v7795, %v7794
  %v7797 = vrot.slane %v7063, 5
  %v7798 = vsel %vm7144, %v7797, %v7796
  %v7799 = vrot.slane %v7065, 4
  %v7800 = vsel %vm7147, %v7799, %v7798
  %v7801 = vrot.slane %v7067, 3
  %v7802 = vsel %vm7150, %v7801, %v7800
  %v7803 = vrot.slane %v7069, 2
  %v7804 = vsel %vm7153, %v7803, %v7802
  %v7805 = vrot.slane %v7071, 1
  %v7806 = vsel %vm7135, %v7073, %v7805
  %v7807 = vrot.slane %v7075, 7
  %v7808 = vsel %vm7138, %v7807, %v7806
  %v7809 = vrot.slane %v7077, 6
  %v7810 = vsel %vm7141, %v7809, %v7808
  %v7811 = vrot.slane %v7079, 5
  %v7812 = vsel %vm7144, %v7811, %v7810
  %v7813 = vrot.slane %v7081, 4
  %v7814 = vsel %vm7147, %v7813, %v7812
  %v7815 = vrot.slane %v7083, 3
  %v7816 = vsel %vm7150, %v7815, %v7814
  %v7817 = vrot.slane %v7085, 2
  %v7818 = vsel %vm7153, %v7817, %v7816
  %v7819 = vrot.slane %v7087, 1
  %v7820 = vsel %vm7135, %v7089, %v7819
  %v7821 = vrot.slane %v7091, 7
  %v7822 = vsel %vm7138, %v7821, %v7820
  %v7823 = vrot.slane %v7093, 6
  %v7824 = vsel %vm7141, %v7823, %v7822
  %v7825 = vrot.slane %v7095, 5
  %v7826 = vsel %vm7144, %v7825, %v7824
  %v7827 = vrot.slane %v7097, 4
  %v7828 = vsel %vm7147, %v7827, %v7826
  %v7829 = vrot.slane %v7099, 3
  %v7830 = vsel %vm7150, %v7829, %v7828
  %v7831 = vrot.slane %v7101, 2
  %v7832 = vsel %vm7153, %v7831, %v7830
  %7833 = vrot.lane.b32.xlu0 %v7790, 72
  %v7834 = vpop.permute.xlu0 %7833
  %7835 = vrot.lane.b32.xlu0 %v7804, 72
  %v7836 = vpop.permute.xlu0 %7835
  %7837 = vrot.lane.b32.xlu0 %v7818, 72
  %v7838 = vpop.permute.xlu0 %7837
  %7839 = vrot.lane.b32.xlu0 %v7832, 72
  %v7840 = vpop.permute.xlu0 %7839
  %v7845 = vrot.slane %v7039, 2
  %v7846 = vrot.slane %v7041, 1
  %v7847 = vsel %vm7135, %v7846, %v7845
  %v7848 = vsel %vm7138, %v7043, %v7847
  %v7849 = vrot.slane %v7045, 7
  %v7850 = vsel %vm7141, %v7849, %v7848
  %v7851 = vrot.slane %v7047, 6
  %v7852 = vsel %vm7144, %v7851, %v7850
  %v7853 = vrot.slane %v7049, 5
  %v7854 = vsel %vm7147, %v7853, %v7852
  %v7855 = vrot.slane %v7051, 4
  %v7856 = vsel %vm7150, %v7855, %v7854
  %v7857 = vrot.slane %v7053, 3
  %v7858 = vsel %vm7153, %v7857, %v7856
  %v7859 = vrot.slane %v7055, 2
  %v7860 = vrot.slane %v7057, 1
  %v7861 = vsel %vm7135, %v7860, %v7859
  %v7862 = vsel %vm7138, %v7059, %v7861
  %v7863 = vrot.slane %v7061, 7
  %v7864 = vsel %vm7141, %v7863, %v7862
  %v7865 = vrot.slane %v7063, 6
  %v7866 = vsel %vm7144, %v7865, %v7864
  %v7867 = vrot.slane %v7065, 5
  %v7868 = vsel %vm7147, %v7867, %v7866
  %v7869 = vrot.slane %v7067, 4
  %v7870 = vsel %vm7150, %v7869, %v7868
  %v7871 = vrot.slane %v7069, 3
  %v7872 = vsel %vm7153, %v7871, %v7870
  %v7873 = vrot.slane %v7071, 2
  %v7874 = vrot.slane %v7073, 1
  %v7875 = vsel %vm7135, %v7874, %v7873
  %v7876 = vsel %vm7138, %v7075, %v7875
  %v7877 = vrot.slane %v7077, 7
  %v7878 = vsel %vm7141, %v7877, %v7876
  %v7879 = vrot.slane %v7079, 6
  %v7880 = vsel %vm7144, %v7879, %v7878
  %v7881 = vrot.slane %v7081, 5
  %v7882 = vsel %vm7147, %v7881, %v7880
  %v7883 = vrot.slane %v7083, 4
  %v7884 = vsel %vm7150, %v7883, %v7882
  %v7885 = vrot.slane %v7085, 3
  %v7886 = vsel %vm7153, %v7885, %v7884
  %v7887 = vrot.slane %v7087, 2
  %v7888 = vrot.slane %v7089, 1
  %v7889 = vsel %vm7135, %v7888, %v7887
  %v7890 = vsel %vm7138, %v7091, %v7889
  %v7891 = vrot.slane %v7093, 7
  %v7892 = vsel %vm7141, %v7891, %v7890
  %v7893 = vrot.slane %v7095, 6
  %v7894 = vsel %vm7144, %v7893, %v7892
  %v7895 = vrot.slane %v7097, 5
  %v7896 = vsel %vm7147, %v7895, %v7894
  %v7897 = vrot.slane %v7099, 4
  %v7898 = vsel %vm7150, %v7897, %v7896
  %v7899 = vrot.slane %v7101, 3
  %v7900 = vsel %vm7153, %v7899, %v7898
  %7901 = vrot.lane.b32.xlu0 %v7858, 80
  %v7902 = vpop.permute.xlu0 %7901
  %7903 = vrot.lane.b32.xlu0 %v7872, 80
  %v7904 = vpop.permute.xlu0 %7903
  %7905 = vrot.lane.b32.xlu0 %v7886, 80
  %v7906 = vpop.permute.xlu0 %7905
  %7907 = vrot.lane.b32.xlu0 %v7900, 80
  %v7908 = vpop.permute.xlu0 %7907
  %v7913 = vrot.slane %v7039, 3
  %v7914 = vrot.slane %v7041, 2
  %v7915 = vsel %vm7135, %v7914, %v7913
  %v7916 = vrot.slane %v7043, 1
  %v7917 = vsel %vm7138, %v7916, %v7915
  %v7918 = vsel %vm7141, %v7045, %v7917
  %v7919 = vrot.slane %v7047, 7
  %v7920 = vsel %vm7144, %v7919, %v7918
  %v7921 = vrot.slane %v7049, 6
  %v7922 = vsel %vm7147, %v7921, %v7920
  %v7923 = vrot.slane %v7051, 5
  %v7924 = vsel %vm7150, %v7923, %v7922
  %v7925 = vrot.slane %v7053, 4
  %v7926 = vsel %vm7153, %v7925, %v7924
  %v7927 = vrot.slane %v7055, 3
  %v7928 = vrot.slane %v7057, 2
  %v7929 = vsel %vm7135, %v7928, %v7927
  %v7930 = vrot.slane %v7059, 1
  %v7931 = vsel %vm7138, %v7930, %v7929
  %v7932 = vsel %vm7141, %v7061, %v7931
  %v7933 = vrot.slane %v7063, 7
  %v7934 = vsel %vm7144, %v7933, %v7932
  %v7935 = vrot.slane %v7065, 6
  %v7936 = vsel %vm7147, %v7935, %v7934
  %v7937 = vrot.slane %v7067, 5
  %v7938 = vsel %vm7150, %v7937, %v7936
  %v7939 = vrot.slane %v7069, 4
  %v7940 = vsel %vm7153, %v7939, %v7938
  %v7941 = vrot.slane %v7071, 3
  %v7942 = vrot.slane %v7073, 2
  %v7943 = vsel %vm7135, %v7942, %v7941
  %v7944 = vrot.slane %v7075, 1
  %v7945 = vsel %vm7138, %v7944, %v7943
  %v7946 = vsel %vm7141, %v7077, %v7945
  %v7947 = vrot.slane %v7079, 7
  %v7948 = vsel %vm7144, %v7947, %v7946
  %v7949 = vrot.slane %v7081, 6
  %v7950 = vsel %vm7147, %v7949, %v7948
  %v7951 = vrot.slane %v7083, 5
  %v7952 = vsel %vm7150, %v7951, %v7950
  %v7953 = vrot.slane %v7085, 4
  %v7954 = vsel %vm7153, %v7953, %v7952
  %v7955 = vrot.slane %v7087, 3
  %v7956 = vrot.slane %v7089, 2
  %v7957 = vsel %vm7135, %v7956, %v7955
  %v7958 = vrot.slane %v7091, 1
  %v7959 = vsel %vm7138, %v7958, %v7957
  %v7960 = vsel %vm7141, %v7093, %v7959
  %v7961 = vrot.slane %v7095, 7
  %v7962 = vsel %vm7144, %v7961, %v7960
  %v7963 = vrot.slane %v7097, 6
  %v7964 = vsel %vm7147, %v7963, %v7962
  %v7965 = vrot.slane %v7099, 5
  %v7966 = vsel %vm7150, %v7965, %v7964
  %v7967 = vrot.slane %v7101, 4
  %v7968 = vsel %vm7153, %v7967, %v7966
  %7969 = vrot.lane.b32.xlu0 %v7926, 88
  %v7970 = vpop.permute.xlu0 %7969
  %7971 = vrot.lane.b32.xlu0 %v7940, 88
  %v7972 = vpop.permute.xlu0 %7971
  %7973 = vrot.lane.b32.xlu0 %v7954, 88
  %v7974 = vpop.permute.xlu0 %7973
  %7975 = vrot.lane.b32.xlu0 %v7968, 88
  %v7976 = vpop.permute.xlu0 %7975
  %v7981 = vrot.slane %v7039, 4
  %v7982 = vrot.slane %v7041, 3
  %v7983 = vsel %vm7135, %v7982, %v7981
  %v7984 = vrot.slane %v7043, 2
  %v7985 = vsel %vm7138, %v7984, %v7983
  %v7986 = vrot.slane %v7045, 1
  %v7987 = vsel %vm7141, %v7986, %v7985
  %v7988 = vsel %vm7144, %v7047, %v7987
  %v7989 = vrot.slane %v7049, 7
  %v7990 = vsel %vm7147, %v7989, %v7988
  %v7991 = vrot.slane %v7051, 6
  %v7992 = vsel %vm7150, %v7991, %v7990
  %v7993 = vrot.slane %v7053, 5
  %v7994 = vsel %vm7153, %v7993, %v7992
  %v7995 = vrot.slane %v7055, 4
  %v7996 = vrot.slane %v7057, 3
  %v7997 = vsel %vm7135, %v7996, %v7995
  %v7998 = vrot.slane %v7059, 2
  %v7999 = vsel %vm7138, %v7998, %v7997
  %v8000 = vrot.slane %v7061, 1
  %v8001 = vsel %vm7141, %v8000, %v7999
  %v8002 = vsel %vm7144, %v7063, %v8001
  %v8003 = vrot.slane %v7065, 7
  %v8004 = vsel %vm7147, %v8003, %v8002
  %v8005 = vrot.slane %v7067, 6
  %v8006 = vsel %vm7150, %v8005, %v8004
  %v8007 = vrot.slane %v7069, 5
  %v8008 = vsel %vm7153, %v8007, %v8006
  %v8009 = vrot.slane %v7071, 4
  %v8010 = vrot.slane %v7073, 3
  %v8011 = vsel %vm7135, %v8010, %v8009
  %v8012 = vrot.slane %v7075, 2
  %v8013 = vsel %vm7138, %v8012, %v8011
  %v8014 = vrot.slane %v7077, 1
  %v8015 = vsel %vm7141, %v8014, %v8013
  %v8016 = vsel %vm7144, %v7079, %v8015
  %v8017 = vrot.slane %v7081, 7
  %v8018 = vsel %vm7147, %v8017, %v8016
  %v8019 = vrot.slane %v7083, 6
  %v8020 = vsel %vm7150, %v8019, %v8018
  %v8021 = vrot.slane %v7085, 5
  %v8022 = vsel %vm7153, %v8021, %v8020
  %v8023 = vrot.slane %v7087, 4
  %v8024 = vrot.slane %v7089, 3
  %v8025 = vsel %vm7135, %v8024, %v8023
  %v8026 = vrot.slane %v7091, 2
  %v8027 = vsel %vm7138, %v8026, %v8025
  %v8028 = vrot.slane %v7093, 1
  %v8029 = vsel %vm7141, %v8028, %v8027
  %v8030 = vsel %vm7144, %v7095, %v8029
  %v8031 = vrot.slane %v7097, 7
  %v8032 = vsel %vm7147, %v8031, %v8030
  %v8033 = vrot.slane %v7099, 6
  %v8034 = vsel %vm7150, %v8033, %v8032
  %v8035 = vrot.slane %v7101, 5
  %v8036 = vsel %vm7153, %v8035, %v8034
  %8037 = vrot.lane.b32.xlu0 %v7994, 96
  %v8038 = vpop.permute.xlu0 %8037
  %8039 = vrot.lane.b32.xlu0 %v8008, 96
  %v8040 = vpop.permute.xlu0 %8039
  %8041 = vrot.lane.b32.xlu0 %v8022, 96
  %v8042 = vpop.permute.xlu0 %8041
  %8043 = vrot.lane.b32.xlu0 %v8036, 96
  %v8044 = vpop.permute.xlu0 %8043
  %v8049 = vrot.slane %v7039, 5
  %v8050 = vrot.slane %v7041, 4
  %v8051 = vsel %vm7135, %v8050, %v8049
  %v8052 = vrot.slane %v7043, 3
  %v8053 = vsel %vm7138, %v8052, %v8051
  %v8054 = vrot.slane %v7045, 2
  %v8055 = vsel %vm7141, %v8054, %v8053
  %v8056 = vrot.slane %v7047, 1
  %v8057 = vsel %vm7144, %v8056, %v8055
  %v8058 = vsel %vm7147, %v7049, %v8057
  %v8059 = vrot.slane %v7051, 7
  %v8060 = vsel %vm7150, %v8059, %v8058
  %v8061 = vrot.slane %v7053, 6
  %v8062 = vsel %vm7153, %v8061, %v8060
  %v8063 = vrot.slane %v7055, 5
  %v8064 = vrot.slane %v7057, 4
  %v8065 = vsel %vm7135, %v8064, %v8063
  %v8066 = vrot.slane %v7059, 3
  %v8067 = vsel %vm7138, %v8066, %v8065
  %v8068 = vrot.slane %v7061, 2
  %v8069 = vsel %vm7141, %v8068, %v8067
  %v8070 = vrot.slane %v7063, 1
  %v8071 = vsel %vm7144, %v8070, %v8069
  %v8072 = vsel %vm7147, %v7065, %v8071
  %v8073 = vrot.slane %v7067, 7
  %v8074 = vsel %vm7150, %v8073, %v8072
  %v8075 = vrot.slane %v7069, 6
  %v8076 = vsel %vm7153, %v8075, %v8074
  %v8077 = vrot.slane %v7071, 5
  %v8078 = vrot.slane %v7073, 4
  %v8079 = vsel %vm7135, %v8078, %v8077
  %v8080 = vrot.slane %v7075, 3
  %v8081 = vsel %vm7138, %v8080, %v8079
  %v8082 = vrot.slane %v7077, 2
  %v8083 = vsel %vm7141, %v8082, %v8081
  %v8084 = vrot.slane %v7079, 1
  %v8085 = vsel %vm7144, %v8084, %v8083
  %v8086 = vsel %vm7147, %v7081, %v8085
  %v8087 = vrot.slane %v7083, 7
  %v8088 = vsel %vm7150, %v8087, %v8086
  %v8089 = vrot.slane %v7085, 6
  %v8090 = vsel %vm7153, %v8089, %v8088
  %v8091 = vrot.slane %v7087, 5
  %v8092 = vrot.slane %v7089, 4
  %v8093 = vsel %vm7135, %v8092, %v8091
  %v8094 = vrot.slane %v7091, 3
  %v8095 = vsel %vm7138, %v8094, %v8093
  %v8096 = vrot.slane %v7093, 2
  %v8097 = vsel %vm7141, %v8096, %v8095
  %v8098 = vrot.slane %v7095, 1
  %v8099 = vsel %vm7144, %v8098, %v8097
  %v8100 = vsel %vm7147, %v7097, %v8099
  %v8101 = vrot.slane %v7099, 7
  %v8102 = vsel %vm7150, %v8101, %v8100
  %v8103 = vrot.slane %v7101, 6
  %v8104 = vsel %vm7153, %v8103, %v8102
  %8105 = vrot.lane.b32.xlu0 %v8062, 104
  %v8106 = vpop.permute.xlu0 %8105
  %8107 = vrot.lane.b32.xlu0 %v8076, 104
  %v8108 = vpop.permute.xlu0 %8107
  %8109 = vrot.lane.b32.xlu0 %v8090, 104
  %v8110 = vpop.permute.xlu0 %8109
  %8111 = vrot.lane.b32.xlu0 %v8104, 104
  %v8112 = vpop.permute.xlu0 %8111
  %v8117 = vrot.slane %v7039, 6
  %v8118 = vrot.slane %v7041, 5
  %v8119 = vsel %vm7135, %v8118, %v8117
  %v8120 = vrot.slane %v7043, 4
  %v8121 = vsel %vm7138, %v8120, %v8119
  %v8122 = vrot.slane %v7045, 3
  %v8123 = vsel %vm7141, %v8122, %v8121
  %v8124 = vrot.slane %v7047, 2
  %v8125 = vsel %vm7144, %v8124, %v8123
  %v8126 = vrot.slane %v7049, 1
  %v8127 = vsel %vm7147, %v8126, %v8125
  %v8128 = vsel %vm7150, %v7051, %v8127
  %v8129 = vrot.slane %v7053, 7
  %v8130 = vsel %vm7153, %v8129, %v8128
  %v8131 = vrot.slane %v7055, 6
  %v8132 = vrot.slane %v7057, 5
  %v8133 = vsel %vm7135, %v8132, %v8131
  %v8134 = vrot.slane %v7059, 4
  %v8135 = vsel %vm7138, %v8134, %v8133
  %v8136 = vrot.slane %v7061, 3
  %v8137 = vsel %vm7141, %v8136, %v8135
  %v8138 = vrot.slane %v7063, 2
  %v8139 = vsel %vm7144, %v8138, %v8137
  %v8140 = vrot.slane %v7065, 1
  %v8141 = vsel %vm7147, %v8140, %v8139
  %v8142 = vsel %vm7150, %v7067, %v8141
  %v8143 = vrot.slane %v7069, 7
  %v8144 = vsel %vm7153, %v8143, %v8142
  %v8145 = vrot.slane %v7071, 6
  %v8146 = vrot.slane %v7073, 5
  %v8147 = vsel %vm7135, %v8146, %v8145
  %v8148 = vrot.slane %v7075, 4
  %v8149 = vsel %vm7138, %v8148, %v8147
  %v8150 = vrot.slane %v7077, 3
  %v8151 = vsel %vm7141, %v8150, %v8149
  %v8152 = vrot.slane %v7079, 2
  %v8153 = vsel %vm7144, %v8152, %v8151
  %v8154 = vrot.slane %v7081, 1
  %v8155 = vsel %vm7147, %v8154, %v8153
  %v8156 = vsel %vm7150, %v7083, %v8155
  %v8157 = vrot.slane %v7085, 7
  %v8158 = vsel %vm7153, %v8157, %v8156
  %v8159 = vrot.slane %v7087, 6
  %v8160 = vrot.slane %v7089, 5
  %v8161 = vsel %vm7135, %v8160, %v8159
  %v8162 = vrot.slane %v7091, 4
  %v8163 = vsel %vm7138, %v8162, %v8161
  %v8164 = vrot.slane %v7093, 3
  %v8165 = vsel %vm7141, %v8164, %v8163
  %v8166 = vrot.slane %v7095, 2
  %v8167 = vsel %vm7144, %v8166, %v8165
  %v8168 = vrot.slane %v7097, 1
  %v8169 = vsel %vm7147, %v8168, %v8167
  %v8170 = vsel %vm7150, %v7099, %v8169
  %v8171 = vrot.slane %v7101, 7
  %v8172 = vsel %vm7153, %v8171, %v8170
  %8173 = vrot.lane.b32.xlu0 %v8130, 112
  %v8174 = vpop.permute.xlu0 %8173
  %8175 = vrot.lane.b32.xlu0 %v8144, 112
  %v8176 = vpop.permute.xlu0 %8175
  %8177 = vrot.lane.b32.xlu0 %v8158, 112
  %v8178 = vpop.permute.xlu0 %8177
  %8179 = vrot.lane.b32.xlu0 %v8172, 112
  %v8180 = vpop.permute.xlu0 %8179
  %v8185 = vrot.slane %v7039, 7
  %v8186 = vrot.slane %v7041, 6
  %v8187 = vsel %vm7135, %v8186, %v8185
  %v8188 = vrot.slane %v7043, 5
  %v8189 = vsel %vm7138, %v8188, %v8187
  %v8190 = vrot.slane %v7045, 4
  %v8191 = vsel %vm7141, %v8190, %v8189
  %v8192 = vrot.slane %v7047, 3
  %v8193 = vsel %vm7144, %v8192, %v8191
  %v8194 = vrot.slane %v7049, 2
  %v8195 = vsel %vm7147, %v8194, %v8193
  %v8196 = vrot.slane %v7051, 1
  %v8197 = vsel %vm7150, %v8196, %v8195
  %v8198 = vsel %vm7153, %v7053, %v8197
  %v8199 = vrot.slane %v7055, 7
  %v8200 = vrot.slane %v7057, 6
  %v8201 = vsel %vm7135, %v8200, %v8199
  %v8202 = vrot.slane %v7059, 5
  %v8203 = vsel %vm7138, %v8202, %v8201
  %v8204 = vrot.slane %v7061, 4
  %v8205 = vsel %vm7141, %v8204, %v8203
  %v8206 = vrot.slane %v7063, 3
  %v8207 = vsel %vm7144, %v8206, %v8205
  %v8208 = vrot.slane %v7065, 2
  %v8209 = vsel %vm7147, %v8208, %v8207
  %v8210 = vrot.slane %v7067, 1
  %v8211 = vsel %vm7150, %v8210, %v8209
  %v8212 = vsel %vm7153, %v7069, %v8211
  %v8213 = vrot.slane %v7071, 7
  %v8214 = vrot.slane %v7073, 6
  %v8215 = vsel %vm7135, %v8214, %v8213
  %v8216 = vrot.slane %v7075, 5
  %v8217 = vsel %vm7138, %v8216, %v8215
  %v8218 = vrot.slane %v7077, 4
  %v8219 = vsel %vm7141, %v8218, %v8217
  %v8220 = vrot.slane %v7079, 3
  %v8221 = vsel %vm7144, %v8220, %v8219
  %v8222 = vrot.slane %v7081, 2
  %v8223 = vsel %vm7147, %v8222, %v8221
  %v8224 = vrot.slane %v7083, 1
  %v8225 = vsel %vm7150, %v8224, %v8223
  %v8226 = vsel %vm7153, %v7085, %v8225
  %v8227 = vrot.slane %v7087, 7
  %v8228 = vrot.slane %v7089, 6
  %v8229 = vsel %vm7135, %v8228, %v8227
  %v8230 = vrot.slane %v7091, 5
  %v8231 = vsel %vm7138, %v8230, %v8229
  %v8232 = vrot.slane %v7093, 4
  %v8233 = vsel %vm7141, %v8232, %v8231
  %v8234 = vrot.slane %v7095, 3
  %v8235 = vsel %vm7144, %v8234, %v8233
  %v8236 = vrot.slane %v7097, 2
  %v8237 = vsel %vm7147, %v8236, %v8235
  %v8238 = vrot.slane %v7099, 1
  %v8239 = vsel %vm7150, %v8238, %v8237
  %v8240 = vsel %vm7153, %v7101, %v8239
  %8241 = vrot.lane.b32.xlu0 %v8198, 120
  %v8242 = vpop.permute.xlu0 %8241
  %8243 = vrot.lane.b32.xlu0 %v8212, 120
  %v8244 = vpop.permute.xlu0 %8243
  %8245 = vrot.lane.b32.xlu0 %v8226, 120
  %v8246 = vpop.permute.xlu0 %8245
  %8247 = vrot.lane.b32.xlu0 %v8240, 120
  %v8248 = vpop.permute.xlu0 %8247
  %v8253 = vsel %vm2383, %v7154, %v7258
  %v8254 = vsel %vm2383, %v7168, %v7260
  %v8255 = vsel %vm2383, %v7182, %v7262
  %v8256 = vsel %vm2383, %v7196, %v7264
  %v8257 = vsel %vm2511, %v8253, %v7326
  %v8258 = vsel %vm2511, %v8254, %v7328
  %v8259 = vsel %vm2511, %v8255, %v7330
  %v8260 = vsel %vm2511, %v8256, %v7332
  %v8261 = vsel %vm2641, %v8257, %v7394
  %v8262 = vsel %vm2641, %v8258, %v7396
  %v8263 = vsel %vm2641, %v8259, %v7398
  %v8264 = vsel %vm2641, %v8260, %v7400
  %v8265 = vsel %vm2771, %v8261, %v7462
  %v8266 = vsel %vm2771, %v8262, %v7464
  %v8267 = vsel %vm2771, %v8263, %v7466
  %v8268 = vsel %vm2771, %v8264, %v7468
  %vm8269 = vcmask 326656
  %v8270 = vsel %vm8269, %v8265, %v7530
  %v8271 = vsel %vm8269, %v8266, %v7532
  %v8272 = vsel %vm8269, %v8267, %v7534
  %v8273 = vsel %vm8269, %v8268, %v7536
  %vm8274 = vcmask 392192
  %v8275 = vsel %vm8274, %v8270, %v7598
  %v8276 = vsel %vm8274, %v8271, %v7600
  %v8277 = vsel %vm8274, %v8272, %v7602
  %v8278 = vsel %vm8274, %v8273, %v7604
  %vm8279 = vcmask 457728
  %v8280 = vsel %vm8279, %v8275, %v7666
  %v8281 = vsel %vm8279, %v8276, %v7668
  %v8282 = vsel %vm8279, %v8277, %v7670
  %v8283 = vsel %vm8279, %v8278, %v7672
  %vm8284 = vcmask 523264
  %v8285 = vsel %vm8284, %v8280, %v7766
  %v8286 = vsel %vm8284, %v8281, %v7768
  %v8287 = vsel %vm8284, %v8282, %v7770
  %v8288 = vsel %vm8284, %v8283, %v7772
  %vm8289 = vcmask 588800
  %v8290 = vsel %vm8289, %v8285, %v7834
  %v8291 = vsel %vm8289, %v8286, %v7836
  %v8292 = vsel %vm8289, %v8287, %v7838
  %v8293 = vsel %vm8289, %v8288, %v7840
  %vm8294 = vcmask 654336
  %v8295 = vsel %vm8294, %v8290, %v7902
  %v8296 = vsel %vm8294, %v8291, %v7904
  %v8297 = vsel %vm8294, %v8292, %v7906
  %v8298 = vsel %vm8294, %v8293, %v7908
  %vm8299 = vcmask 719872
  %v8300 = vsel %vm8299, %v8295, %v7970
  %v8301 = vsel %vm8299, %v8296, %v7972
  %v8302 = vsel %vm8299, %v8297, %v7974
  %v8303 = vsel %vm8299, %v8298, %v7976
  %vm8304 = vcmask 785408
  %v8305 = vsel %vm8304, %v8300, %v8038
  %v8306 = vsel %vm8304, %v8301, %v8040
  %v8307 = vsel %vm8304, %v8302, %v8042
  %v8308 = vsel %vm8304, %v8303, %v8044
  %vm8309 = vcmask 850944
  %v8310 = vsel %vm8309, %v8305, %v8106
  %v8311 = vsel %vm8309, %v8306, %v8108
  %v8312 = vsel %vm8309, %v8307, %v8110
  %v8313 = vsel %vm8309, %v8308, %v8112
  %vm8314 = vcmask 916480
  %v8315 = vsel %vm8314, %v8310, %v8174
  %v8316 = vsel %vm8314, %v8311, %v8176
  %v8317 = vsel %vm8314, %v8312, %v8178
  %v8318 = vsel %vm8314, %v8313, %v8180
  %vm8319 = vcmask 982016
  %v8320 = vsel %vm8319, %v8315, %v8242
  %v8321 = vsel %vm8319, %v8316, %v8244
  %v8322 = vsel %vm8319, %v8317, %v8246
  %v8323 = vsel %vm8319, %v8318, %v8248
  %8324 = vst [vmem:[%s7] sm:$0xff] %v8320
  %8325 = vst [vmem:[%s7 + $0x8] sm:$0xff] %v8321
  %8326 = vst [vmem:[%s7 + $0x10] sm:$0xff] %v8322
  %8327 = vst [vmem:[%s7 + $0x18] sm:$0xff] %v8323
  // Predicated region
  $region30: #{d_conv_layer_forward.1} parent=0 // pred_check
    _
  $region31: #{d_conv_layer_forward.1} parent=0 // pred_check_branch
    %8329 = sbr.rel (0) target = $region33
  $region32: #{d_conv_layer_forward.1} parent=0 // pred_region
    _
  $region33: #{d_conv_layer_forward.1} parent=0 // pred_fallthru
    _
  // Predicated region
  $region34: #{d_conv_layer_forward.1} parent=0 // pred_check
    _
  $region35: #{d_conv_layer_forward.1} parent=0 // pred_check_branch
    %8331 = sbr.rel (0) target = $region37
  $region36: #{d_conv_layer_forward.1} parent=0 // pred_region
    _
  $region37: #{d_conv_layer_forward.1} parent=0 // pred_fallthru
    _

</llo_original>
